<compile_context>
chip_gen: v7x
topology: tpu7x:2x2x1
jax: 0.10.0
libtpu: 0.0.40
codegen_flags: <defaults>
</compile_context>

<pallas_src>
import math
import functools

import numpy as np
import jax
import jax.numpy as jnp
from jax.experimental import pallas as pl
from jax.experimental.pallas import tpu as pltpu

# ----------------------------- configuration -------------------------------
BATCH = 2
SEQ_LEN = 8
VIDEO_DIM = 16           # cfg.REDUCTION.INPUT_SIZE
EMBED_DIM = 32           # cfg.REDUCTION.OUTPUT_SIZE == VIDEO_MULTIHEAD.EMBED_DIM
NUM_HEADS = 4            # cfg.DYNAMIC_FILTER.VIDEO_MULTIHEAD.NUM_HEADS
NUM_LAYERS = 2           # cfg.DYNAMIC_FILTER.VIDEO_MULTIHEAD.NUM_LAYERS
FF_DIM = EMBED_DIM * 4   # feed_forward_hidden
LN_EPS = 1e-5            # torch.nn.LayerNorm default


# ------------------------------- fused kernel --------------------------------
def _layer_norm(v, g, b):
    mu = jnp.mean(v, axis=-1, keepdims=True)
    var = jnp.mean(jnp.square(v - mu), axis=-1, keepdims=True)
    return (v - mu) * jax.lax.rsqrt(var + LN_EPS) * g + b


def _transformer_kernel(video_ref, mask_ref, pe_ref, emb_w_ref, emb_b_ref,
                        wq_ref, wk_ref, wv_ref, bq_ref, bk_ref, bv_ref,
                        wo_ref, bo_ref, w1_ref, b1_ref, w2_ref, b2_ref,
                        ln1g_ref, ln1b_ref, ln2g_ref, ln2b_ref,
                        out_ref, *, num_layers, num_heads):
    B, L, Din = video_ref.shape
    D = emb_w_ref.shape[1]

    # ---- VIDEOEmbedding: linear(video) + positional (dropout = identity) ----
    video = video_ref[...].reshape(B * L, Din)
    x = jnp.dot(video, emb_w_ref[...], preferred_element_type=jnp.float32)
    x = x + emb_b_ref[...]
    x = (x.reshape(B, L, D) + pe_ref[...][None, :, :]).reshape(B * L, D)

    # ---- additive attention-mask bias, built ONCE from the (B, L) mask ----
    # Reference builds mask[b,h,i,j] = m[b,i]*m[b,j] and masked_fill(==0,-1e9);
    # that is head-independent, so one (B, L, L) additive bias suffices.
    m = mask_ref[...]                                          # (B, L)
    pair = m[:, :, None] * m[:, None, :]                       # (B, L, L)
    mask_bias = jnp.where(pair == 0.0, jnp.float32(-1e9), jnp.float32(0.0))

    for li in range(num_layers):
        # per-layer parameters read once (hoisted out of the head loop)
        bo = bo_ref[li]
        w1 = w1_ref[li]; b1 = b1_ref[li]
        w2 = w2_ref[li]; b2 = b2_ref[li]
        g1 = ln1g_ref[li]; beta1 = ln1b_ref[li]
        g2 = ln2g_ref[li]; beta2 = ln2b_ref[li]

        # ---- MultiHeadedAttention (per-head weights pre-split host-side;
        #      the 1/sqrt(dk) scale is already folded into Wq/bq) ----
        attn_out = None
        for h in range(num_heads):
            q = (jnp.dot(x, wq_ref[li, h], preferred_element_type=jnp.float32)
                 + bq_ref[li, h]).reshape(B, L, -1)
            k = (jnp.dot(x, wk_ref[li, h], preferred_element_type=jnp.float32)
                 + bk_ref[li, h]).reshape(B, L, -1)
            v = (jnp.dot(x, wv_ref[li, h], preferred_element_type=jnp.float32)
                 + bv_ref[li, h]).reshape(B, L, -1)

            s = jnp.einsum('bqd,bkd->bqk', q, k,
                           preferred_element_type=jnp.float32)
            s = s + mask_bias                                  # single vadd
            s = s - jnp.max(s, axis=-1, keepdims=True)
            e = jnp.exp(s)
            p = e * pl.reciprocal(jnp.sum(e, axis=-1, keepdims=True),
                                  approx=True)
            ctx = jnp.einsum('bqk,bkd->bqd', p, v,
                             preferred_element_type=jnp.float32)
            ctx = ctx.reshape(B * L, -1)
            # head-merge + output projection folded:
            #   concat_h(ctx_h) @ Wo == sum_h ctx_h @ Wo_h
            part = jnp.dot(ctx, wo_ref[li, h],
                           preferred_element_type=jnp.float32)
            attn_out = part if attn_out is None else attn_out + part
        attn_out = attn_out + bo

        # PyTorch module: norm(scores + dropout(scores)) == LayerNorm(2*attn)
        # in eval mode (the residual from x is NOT used here, exactly as in
        # the reference MultiHeadedAttention).
        attn_x = _layer_norm(attn_out + attn_out, g1, beta1)

        # ---- PositionwiseFeedForward + output SublayerConnection ----
        h1 = jnp.maximum(
            jnp.dot(attn_x, w1, preferred_element_type=jnp.float32) + b1, 0.0)
        ff = jnp.dot(h1, w2, preferred_element_type=jnp.float32) + b2
        x = _layer_norm(attn_x + ff, g2, beta2)

    out_ref[...] = x.reshape(B, L, D).astype(out_ref.dtype)


@jax.jit
def transformer_forward(params, video_input, lengths, video_mask):
    B, L, Din = video_input.shape
    D = EMBED_DIM

    pe = params["pe"][:L]
    vmem = pl.BlockSpec(memory_space=pltpu.MemorySpace.VMEM)
    kernel = functools.partial(_transformer_kernel,
                               num_layers=NUM_LAYERS, num_heads=NUM_HEADS)
    out = pl.pallas_call(
        kernel,
        out_shape=jax.ShapeDtypeStruct((B, L, D), jnp.float32),
        in_specs=[vmem] * 21,
        out_specs=vmem,
    )(video_input, video_mask.astype(jnp.float32), pe,
      params["emb_W"], params["emb_b"],
      params["Wq"], params["Wk"], params["Wv"],
      params["bq"], params["bk"], params["bv"],
      params["Wo"], params["bo"],
      params["W1"], params["b1"], params["W2"], params["b2"],
      params["ln1_g"], params["ln1_b"], params["ln2_g"], params["ln2_b"])
    return out, lengths


# --------------------------- parameter creation ------------------------------
def _init_linear(key, fan_in, fan_out):
    bound = 1.0 / math.sqrt(fan_in)
    kw, kb = jax.random.split(key)
    W = jax.random.uniform(kw, (fan_in, fan_out), jnp.float32, -bound, bound)
    b = jax.random.uniform(kb, (fan_out,), jnp.float32, -bound, bound)
    return W, b


def make_positional_embedding(max_len, d_model):
    pe = np.zeros((max_len, d_model), dtype=np.float32)
    position = np.arange(0, max_len, dtype=np.float32)[:, None]
    div_term = np.exp(np.arange(0, d_model, 2, dtype=np.float32)
                      * -(math.log(10000.0) / d_model))
    pe[:, 0::2] = np.sin(position * div_term)
    pe[:, 1::2] = np.cos(position * div_term)
    return jnp.asarray(pe)


def make_params(key):
    keys = jax.random.split(key, 1 + NUM_LAYERS)
    emb_W, emb_b = _init_linear(keys[0], VIDEO_DIM, EMBED_DIM)

    dk = EMBED_DIM // NUM_HEADS
    inv_sqrt_dk = 1.0 / math.sqrt(dk)

    Wq, Wk, Wv, bq, bk, bv = ([] for _ in range(6))
    Wo, bo, W1, b1, W2, b2 = ([] for _ in range(6))
    for li in range(NUM_LAYERS):
        lk = jax.random.split(keys[1 + li], 6)
        Wq_l, bq_l = _init_linear(lk[0], EMBED_DIM, EMBED_DIM)
        Wk_l, bk_l = _init_linear(lk[1], EMBED_DIM, EMBED_DIM)
        Wv_l, bv_l = _init_linear(lk[2], EMBED_DIM, EMBED_DIM)
        Wo_l, bo_l = _init_linear(lk[3], EMBED_DIM, EMBED_DIM)
        W1_l, b1_l = _init_linear(lk[4], EMBED_DIM, FF_DIM)
        W2_l, b2_l = _init_linear(lk[5], FF_DIM, EMBED_DIM)

        # fold the 1/sqrt(dk) attention scale into the Q projection (free)
        Wq_l = Wq_l * inv_sqrt_dk
        bq_l = bq_l * inv_sqrt_dk

        # pre-split projections per head: (D, D) -> (H, D, dk), bias -> (H,1,dk)
        # (column c of the Linear is output feature c; head h owns columns
        #  h*dk:(h+1)*dk, matching .view(B,-1,H,dk).transpose(1,2) in PyTorch)
        Wq.append(Wq_l.reshape(EMBED_DIM, NUM_HEADS, dk).transpose(1, 0, 2))
        Wk.append(Wk_l.reshape(EMBED_DIM, NUM_HEADS, dk).transpose(1, 0, 2))
        Wv.append(Wv_l.reshape(EMBED_DIM, NUM_HEADS, dk).transpose(1, 0, 2))
        bq.append(bq_l.reshape(NUM_HEADS, 1, dk))
        bk.append(bk_l.reshape(NUM_HEADS, 1, dk))
        bv.append(bv_l.reshape(NUM_HEADS, 1, dk))
        # output projection pre-split by head rows: (D, D) -> (H, dk, D)
        Wo.append(Wo_l.reshape(NUM_HEADS, dk, EMBED_DIM))
        bo.append(bo_l.reshape(1, EMBED_DIM))
        W1.append(W1_l); b1.append(b1_l.reshape(1, FF_DIM))
        W2.append(W2_l); b2.append(b2_l.reshape(1, EMBED_DIM))

    ones = jnp.ones((NUM_LAYERS, 1, EMBED_DIM), jnp.float32)
    zeros = jnp.zeros((NUM_LAYERS, 1, EMBED_DIM), jnp.float32)
    return {
        "emb_W": emb_W, "emb_b": emb_b.reshape(1, EMBED_DIM),
        "pe": make_positional_embedding(512, EMBED_DIM),
        "Wq": jnp.stack(Wq), "Wk": jnp.stack(Wk), "Wv": jnp.stack(Wv),
        "bq": jnp.stack(bq), "bk": jnp.stack(bk), "bv": jnp.stack(bv),
        "Wo": jnp.stack(Wo), "bo": jnp.stack(bo),
        "W1": jnp.stack(W1), "b1": jnp.stack(b1),
        "W2": jnp.stack(W2), "b2": jnp.stack(b2),
        "ln1_g": ones, "ln1_b": zeros, "ln2_g": ones, "ln2_b": zeros,
    }


# --------------------------------- main --------------------------------------
if __name__ == "__main__":
    key = jax.random.PRNGKey(0)
    k_param, k_inp = jax.random.split(key)

    params = make_params(k_param)
    video_input = jax.random.normal(k_inp, (BATCH, SEQ_LEN, VIDEO_DIM), jnp.float32)
    lengths = jnp.array([SEQ_LEN, 6], dtype=jnp.int32)
    # 1 = valid frame, 0 = padding
    video_mask = (jnp.arange(SEQ_LEN)[None, :] < lengths[:, None]).astype(jnp.float32)

    out, out_lengths = transformer_forward(params, video_input, lengths, video_mask)
    out = jax.block_until_ready(out)

    assert out.shape == (BATCH, SEQ_LEN, EMBED_DIM)
    assert bool(jnp.all(jnp.isfinite(out)))
    print("KERNEL_OK")
</pallas_src>

<mosaic_0001>
module attributes {stable_mosaic.version = 11 : i64} {
  func.func @_transformer_kernel(%arg0: memref<2x8x16xf32, #tpu.memory_space<vmem>>, %arg1: memref<2x8xf32, #tpu.memory_space<vmem>>, %arg2: memref<8x32xf32, #tpu.memory_space<vmem>>, %arg3: memref<16x32xf32, #tpu.memory_space<vmem>>, %arg4: memref<1x32xf32, #tpu.memory_space<vmem>>, %arg5: memref<2x4x32x8xf32, #tpu.memory_space<vmem>>, %arg6: memref<2x4x32x8xf32, #tpu.memory_space<vmem>>, %arg7: memref<2x4x32x8xf32, #tpu.memory_space<vmem>>, %arg8: memref<2x4x1x8xf32, #tpu.memory_space<vmem>>, %arg9: memref<2x4x1x8xf32, #tpu.memory_space<vmem>>, %arg10: memref<2x4x1x8xf32, #tpu.memory_space<vmem>>, %arg11: memref<2x4x8x32xf32, #tpu.memory_space<vmem>>, %arg12: memref<2x1x32xf32, #tpu.memory_space<vmem>>, %arg13: memref<2x32x128xf32, #tpu.memory_space<vmem>>, %arg14: memref<2x1x128xf32, #tpu.memory_space<vmem>>, %arg15: memref<2x128x32xf32, #tpu.memory_space<vmem>>, %arg16: memref<2x1x32xf32, #tpu.memory_space<vmem>>, %arg17: memref<2x1x32xf32, #tpu.memory_space<vmem>>, %arg18: memref<2x1x32xf32, #tpu.memory_space<vmem>>, %arg19: memref<2x1x32xf32, #tpu.memory_space<vmem>>, %arg20: memref<2x1x32xf32, #tpu.memory_space<vmem>>, %arg21: memref<2x8x32xf32, #tpu.memory_space<vmem>>) attributes {dimension_semantics = [], scalar_prefetch = 0 : i64, scratch_operands = 0 : i64, tpu.core_type = #tpu.core_type<tc>} {
    %c0 = arith.constant 0 : index
    %c0_0 = arith.constant 0 : index
    %c0_1 = arith.constant 0 : index
    %0 = vector.load %arg0[%c0, %c0_0, %c0_1] : memref<2x8x16xf32, #tpu.memory_space<vmem>>, vector<2x8x16xf32>
    %1 = vector.shape_cast %0 : vector<2x8x16xf32> to vector<16x16xf32>
    %c0_2 = arith.constant 0 : index
    %c0_3 = arith.constant 0 : index
    %2 = vector.load %arg3[%c0_2, %c0_3] : memref<16x32xf32, #tpu.memory_space<vmem>>, vector<16x32xf32>
    %cst = arith.constant dense<0.000000e+00> : vector<16x32xf32>
    %3 = tpu.matmul %1, %2, %cst {dimension_numbers = #tpu.dot_dimension_numbers<[1], [0], [0], [1], [0, 0, 1, 1], [], []>} : vector<16x16xf32>, vector<16x32xf32>, vector<16x32xf32> -> vector<16x32xf32>
    %c0_4 = arith.constant 0 : index
    %c0_5 = arith.constant 0 : index
    %4 = vector.load %arg4[%c0_4, %c0_5] : memref<1x32xf32, #tpu.memory_space<vmem>>, vector<1x32xf32>
    %5 = vector.broadcast %4 : vector<1x32xf32> to vector<16x32xf32>
    %6 = arith.addf %3, %5 : vector<16x32xf32>
    %7 = vector.shape_cast %6 : vector<16x32xf32> to vector<2x8x32xf32>
    %c0_6 = arith.constant 0 : index
    %c0_7 = arith.constant 0 : index
    %8 = vector.load %arg2[%c0_6, %c0_7] : memref<8x32xf32, #tpu.memory_space<vmem>>, vector<8x32xf32>
    %9 = vector.shape_cast %8 : vector<8x32xf32> to vector<1x8x32xf32>
    %10 = vector.broadcast %9 : vector<1x8x32xf32> to vector<2x8x32xf32>
    %11 = arith.addf %7, %10 : vector<2x8x32xf32>
    %12 = vector.shape_cast %11 : vector<2x8x32xf32> to vector<16x32xf32>
    %c0_8 = arith.constant 0 : index
    %c0_9 = arith.constant 0 : index
    %13 = vector.load %arg1[%c0_8, %c0_9] : memref<2x8xf32, #tpu.memory_space<vmem>>, vector<2x8xf32>
    %14 = vector.shape_cast %13 : vector<2x8xf32> to vector<2x8x1xf32>
    %15 = vector.shape_cast %13 : vector<2x8xf32> to vector<2x1x8xf32>
    %16 = vector.broadcast %14 : vector<2x8x1xf32> to vector<2x8x8xf32>
    %17 = vector.broadcast %15 : vector<2x1x8xf32> to vector<2x8x8xf32>
    %18 = arith.mulf %16, %17 : vector<2x8x8xf32>
    %cst_10 = arith.constant 0.000000e+00 : f32
    %19 = vector.broadcast %cst_10 : f32 to vector<2x8x8xf32>
    %20 = arith.cmpf oeq, %18, %19 : vector<2x8x8xf32>
    %cst_11 = arith.constant -1.000000e+09 : f32
    %cst_12 = arith.constant 0.000000e+00 : f32
    %21 = vector.broadcast %cst_11 : f32 to vector<2x8x8xf32>
    %22 = vector.broadcast %cst_12 : f32 to vector<2x8x8xf32>
    %23 = arith.select %20, %21, %22 : vector<2x8x8xi1>, vector<2x8x8xf32>
    %c0_13 = arith.constant 0 : index
    %c0_14 = arith.constant 0 : index
    %c0_15 = arith.constant 0 : index
    %24 = vector.load %arg12[%c0_13, %c0_14, %c0_15] : memref<2x1x32xf32, #tpu.memory_space<vmem>>, vector<1x1x32xf32>
    %25 = vector.shape_cast %24 : vector<1x1x32xf32> to vector<1x32xf32>
    %c0_16 = arith.constant 0 : index
    %c0_17 = arith.constant 0 : index
    %c0_18 = arith.constant 0 : index
    %26 = vector.load %arg13[%c0_16, %c0_17, %c0_18] : memref<2x32x128xf32, #tpu.memory_space<vmem>>, vector<1x32x128xf32>
    %27 = vector.shape_cast %26 : vector<1x32x128xf32> to vector<32x128xf32>
    %c0_19 = arith.constant 0 : index
    %c0_20 = arith.constant 0 : index
    %c0_21 = arith.constant 0 : index
    %28 = vector.load %arg14[%c0_19, %c0_20, %c0_21] : memref<2x1x128xf32, #tpu.memory_space<vmem>>, vector<1x1x128xf32>
    %29 = vector.shape_cast %28 : vector<1x1x128xf32> to vector<1x128xf32>
    %c0_22 = arith.constant 0 : index
    %c0_23 = arith.constant 0 : index
    %c0_24 = arith.constant 0 : index
    %30 = vector.load %arg15[%c0_22, %c0_23, %c0_24] : memref<2x128x32xf32, #tpu.memory_space<vmem>>, vector<1x128x32xf32>
    %31 = vector.shape_cast %30 : vector<1x128x32xf32> to vector<128x32xf32>
    %c0_25 = arith.constant 0 : index
    %c0_26 = arith.constant 0 : index
    %c0_27 = arith.constant 0 : index
    %32 = vector.load %arg16[%c0_25, %c0_26, %c0_27] : memref<2x1x32xf32, #tpu.memory_space<vmem>>, vector<1x1x32xf32>
    %33 = vector.shape_cast %32 : vector<1x1x32xf32> to vector<1x32xf32>
    %c0_28 = arith.constant 0 : index
    %c0_29 = arith.constant 0 : index
    %c0_30 = arith.constant 0 : index
    %34 = vector.load %arg17[%c0_28, %c0_29, %c0_30] : memref<2x1x32xf32, #tpu.memory_space<vmem>>, vector<1x1x32xf32>
    %35 = vector.shape_cast %34 : vector<1x1x32xf32> to vector<1x32xf32>
    %c0_31 = arith.constant 0 : index
    %c0_32 = arith.constant 0 : index
    %c0_33 = arith.constant 0 : index
    %36 = vector.load %arg18[%c0_31, %c0_32, %c0_33] : memref<2x1x32xf32, #tpu.memory_space<vmem>>, vector<1x1x32xf32>
    %37 = vector.shape_cast %36 : vector<1x1x32xf32> to vector<1x32xf32>
    %c0_34 = arith.constant 0 : index
    %c0_35 = arith.constant 0 : index
    %c0_36 = arith.constant 0 : index
    %38 = vector.load %arg19[%c0_34, %c0_35, %c0_36] : memref<2x1x32xf32, #tpu.memory_space<vmem>>, vector<1x1x32xf32>
    %39 = vector.shape_cast %38 : vector<1x1x32xf32> to vector<1x32xf32>
    %c0_37 = arith.constant 0 : index
    %c0_38 = arith.constant 0 : index
    %c0_39 = arith.constant 0 : index
    %40 = vector.load %arg20[%c0_37, %c0_38, %c0_39] : memref<2x1x32xf32, #tpu.memory_space<vmem>>, vector<1x1x32xf32>
    %41 = vector.shape_cast %40 : vector<1x1x32xf32> to vector<1x32xf32>
    %c0_40 = arith.constant 0 : index
    %c0_41 = arith.constant 0 : index
    %c0_42 = arith.constant 0 : index
    %c0_43 = arith.constant 0 : index
    %42 = vector.load %arg5[%c0_40, %c0_41, %c0_42, %c0_43] : memref<2x4x32x8xf32, #tpu.memory_space<vmem>>, vector<1x1x32x8xf32>
    %43 = vector.shape_cast %42 : vector<1x1x32x8xf32> to vector<32x8xf32>
    %cst_44 = arith.constant dense<0.000000e+00> : vector<16x8xf32>
    %44 = tpu.matmul %12, %43, %cst_44 {dimension_numbers = #tpu.dot_dimension_numbers<[1], [0], [0], [1], [0, 0, 1, 1], [], []>} : vector<16x32xf32>, vector<32x8xf32>, vector<16x8xf32> -> vector<16x8xf32>
    %c0_45 = arith.constant 0 : index
    %c0_46 = arith.constant 0 : index
    %c0_47 = arith.constant 0 : index
    %c0_48 = arith.constant 0 : index
    %45 = vector.load %arg8[%c0_45, %c0_46, %c0_47, %c0_48] : memref<2x4x1x8xf32, #tpu.memory_space<vmem>>, vector<1x1x1x8xf32>
    %46 = vector.shape_cast %45 : vector<1x1x1x8xf32> to vector<1x8xf32>
    %47 = vector.broadcast %46 : vector<1x8xf32> to vector<16x8xf32>
    %48 = arith.addf %44, %47 : vector<16x8xf32>
    %49 = vector.shape_cast %48 : vector<16x8xf32> to vector<2x8x8xf32>
    %c0_49 = arith.constant 0 : index
    %c0_50 = arith.constant 0 : index
    %c0_51 = arith.constant 0 : index
    %c0_52 = arith.constant 0 : index
    %50 = vector.load %arg6[%c0_49, %c0_50, %c0_51, %c0_52] : memref<2x4x32x8xf32, #tpu.memory_space<vmem>>, vector<1x1x32x8xf32>
    %51 = vector.shape_cast %50 : vector<1x1x32x8xf32> to vector<32x8xf32>
    %cst_53 = arith.constant dense<0.000000e+00> : vector<16x8xf32>
    %52 = tpu.matmul %12, %51, %cst_53 {dimension_numbers = #tpu.dot_dimension_numbers<[1], [0], [0], [1], [0, 0, 1, 1], [], []>} : vector<16x32xf32>, vector<32x8xf32>, vector<16x8xf32> -> vector<16x8xf32>
    %c0_54 = arith.constant 0 : index
    %c0_55 = arith.constant 0 : index
    %c0_56 = arith.constant 0 : index
    %c0_57 = arith.constant 0 : index
    %53 = vector.load %arg9[%c0_54, %c0_55, %c0_56, %c0_57] : memref<2x4x1x8xf32, #tpu.memory_space<vmem>>, vector<1x1x1x8xf32>
    %54 = vector.shape_cast %53 : vector<1x1x1x8xf32> to vector<1x8xf32>
    %55 = vector.broadcast %54 : vector<1x8xf32> to vector<16x8xf32>
    %56 = arith.addf %52, %55 : vector<16x8xf32>
    %57 = vector.shape_cast %56 : vector<16x8xf32> to vector<2x8x8xf32>
    %c0_58 = arith.constant 0 : index
    %c0_59 = arith.constant 0 : index
    %c0_60 = arith.constant 0 : index
    %c0_61 = arith.constant 0 : index
    %58 = vector.load %arg7[%c0_58, %c0_59, %c0_60, %c0_61] : memref<2x4x32x8xf32, #tpu.memory_space<vmem>>, vector<1x1x32x8xf32>
    %59 = vector.shape_cast %58 : vector<1x1x32x8xf32> to vector<32x8xf32>
    %cst_62 = arith.constant dense<0.000000e+00> : vector<16x8xf32>
    %60 = tpu.matmul %12, %59, %cst_62 {dimension_numbers = #tpu.dot_dimension_numbers<[1], [0], [0], [1], [0, 0, 1, 1], [], []>} : vector<16x32xf32>, vector<32x8xf32>, vector<16x8xf32> -> vector<16x8xf32>
    %c0_63 = arith.constant 0 : index
    %c0_64 = arith.constant 0 : index
    %c0_65 = arith.constant 0 : index
    %c0_66 = arith.constant 0 : index
    %61 = vector.load %arg10[%c0_63, %c0_64, %c0_65, %c0_66] : memref<2x4x1x8xf32, #tpu.memory_space<vmem>>, vector<1x1x1x8xf32>
    %62 = vector.shape_cast %61 : vector<1x1x1x8xf32> to vector<1x8xf32>
    %63 = vector.broadcast %62 : vector<1x8xf32> to vector<16x8xf32>
    %64 = arith.addf %60, %63 : vector<16x8xf32>
    %65 = vector.shape_cast %64 : vector<16x8xf32> to vector<2x8x8xf32>
    "tpu.trace_start"() <{level = 10 : i32, message = "bqd,bkd->bqk"}> : () -> ()
    %cst_67 = arith.constant dense<0.000000e+00> : vector<2x8x8xf32>
    %66 = tpu.matmul %49, %57, %cst_67 {dimension_numbers = #tpu.dot_dimension_numbers<[2], [2], [1], [1], [0, 0, 0, 1, 1, 1], [0], [0]>} : vector<2x8x8xf32>, vector<2x8x8xf32>, vector<2x8x8xf32> -> vector<2x8x8xf32>
    "tpu.trace_stop"() : () -> ()
    %67 = arith.addf %66, %23 : vector<2x8x8xf32>
    %cst_68 = arith.constant dense<0xFF800000> : vector<2x8xf32>
    %68 = vector.multi_reduction <maximumf>, %67, %cst_68 [2] : vector<2x8x8xf32> to vector<2x8xf32>
    %69 = vector.shape_cast %68 : vector<2x8xf32> to vector<2x8x1xf32>
    %70 = vector.broadcast %69 : vector<2x8x1xf32> to vector<2x8x8xf32>
    %71 = arith.subf %67, %70 : vector<2x8x8xf32>
    %72 = math.exp %71 : vector<2x8x8xf32>
    %cst_69 = arith.constant dense<0.000000e+00> : vector<2x8xf32>
    %73 = vector.multi_reduction <add>, %72, %cst_69 [2] : vector<2x8x8xf32> to vector<2x8xf32>
    %74 = vector.shape_cast %73 : vector<2x8xf32> to vector<2x8x1xf32>
    %75 = tpu.reciprocal %74 {approx = true} : vector<2x8x1xf32> -> vector<2x8x1xf32>
    %76 = vector.broadcast %75 : vector<2x8x1xf32> to vector<2x8x8xf32>
    %77 = arith.mulf %72, %76 : vector<2x8x8xf32>
    "tpu.trace_start"() <{level = 10 : i32, message = "bqk,bkd->bqd"}> : () -> ()
    %cst_70 = arith.constant dense<0.000000e+00> : vector<2x8x8xf32>
    %78 = tpu.matmul %77, %65, %cst_70 {dimension_numbers = #tpu.dot_dimension_numbers<[2], [1], [1], [2], [0, 0, 0, 1, 1, 2], [0], [0]>} : vector<2x8x8xf32>, vector<2x8x8xf32>, vector<2x8x8xf32> -> vector<2x8x8xf32>
    "tpu.trace_stop"() : () -> ()
    %79 = vector.shape_cast %78 : vector<2x8x8xf32> to vector<16x8xf32>
    %c0_71 = arith.constant 0 : index
    %c0_72 = arith.constant 0 : index
    %c0_73 = arith.constant 0 : index
    %c0_74 = arith.constant 0 : index
    %80 = vector.load %arg11[%c0_71, %c0_72, %c0_73, %c0_74] : memref<2x4x8x32xf32, #tpu.memory_space<vmem>>, vector<1x1x8x32xf32>
    %81 = vector.shape_cast %80 : vector<1x1x8x32xf32> to vector<8x32xf32>
    %cst_75 = arith.constant dense<0.000000e+00> : vector<16x32xf32>
    %82 = tpu.matmul %79, %81, %cst_75 {dimension_numbers = #tpu.dot_dimension_numbers<[1], [0], [0], [1], [0, 0, 1, 1], [], []>} : vector<16x8xf32>, vector<8x32xf32>, vector<16x32xf32> -> vector<16x32xf32>
    %c0_76 = arith.constant 0 : index
    %c1 = arith.constant 1 : index
    %c0_77 = arith.constant 0 : index
    %c0_78 = arith.constant 0 : index
    %83 = vector.load %arg5[%c0_76, %c1, %c0_77, %c0_78] : memref<2x4x32x8xf32, #tpu.memory_space<vmem>>, vector<1x1x32x8xf32>
    %84 = vector.shape_cast %83 : vector<1x1x32x8xf32> to vector<32x8xf32>
    %cst_79 = arith.constant dense<0.000000e+00> : vector<16x8xf32>
    %85 = tpu.matmul %12, %84, %cst_79 {dimension_numbers = #tpu.dot_dimension_numbers<[1], [0], [0], [1], [0, 0, 1, 1], [], []>} : vector<16x32xf32>, vector<32x8xf32>, vector<16x8xf32> -> vector<16x8xf32>
    %c0_80 = arith.constant 0 : index
    %c1_81 = arith.constant 1 : index
    %c0_82 = arith.constant 0 : index
    %c0_83 = arith.constant 0 : index
    %86 = vector.load %arg8[%c0_80, %c1_81, %c0_82, %c0_83] : memref<2x4x1x8xf32, #tpu.memory_space<vmem>>, vector<1x1x1x8xf32>
    %87 = vector.shape_cast %86 : vector<1x1x1x8xf32> to vector<1x8xf32>
    %88 = vector.broadcast %87 : vector<1x8xf32> to vector<16x8xf32>
    %89 = arith.addf %85, %88 : vector<16x8xf32>
    %90 = vector.shape_cast %89 : vector<16x8xf32> to vector<2x8x8xf32>
    %c0_84 = arith.constant 0 : index
    %c1_85 = arith.constant 1 : index
    %c0_86 = arith.constant 0 : index
    %c0_87 = arith.constant 0 : index
    %91 = vector.load %arg6[%c0_84, %c1_85, %c0_86, %c0_87] : memref<2x4x32x8xf32, #tpu.memory_space<vmem>>, vector<1x1x32x8xf32>
    %92 = vector.shape_cast %91 : vector<1x1x32x8xf32> to vector<32x8xf32>
    %cst_88 = arith.constant dense<0.000000e+00> : vector<16x8xf32>
    %93 = tpu.matmul %12, %92, %cst_88 {dimension_numbers = #tpu.dot_dimension_numbers<[1], [0], [0], [1], [0, 0, 1, 1], [], []>} : vector<16x32xf32>, vector<32x8xf32>, vector<16x8xf32> -> vector<16x8xf32>
    %c0_89 = arith.constant 0 : index
    %c1_90 = arith.constant 1 : index
    %c0_91 = arith.constant 0 : index
    %c0_92 = arith.constant 0 : index
    %94 = vector.load %arg9[%c0_89, %c1_90, %c0_91, %c0_92] : memref<2x4x1x8xf32, #tpu.memory_space<vmem>>, vector<1x1x1x8xf32>
    %95 = vector.shape_cast %94 : vector<1x1x1x8xf32> to vector<1x8xf32>
    %96 = vector.broadcast %95 : vector<1x8xf32> to vector<16x8xf32>
    %97 = arith.addf %93, %96 : vector<16x8xf32>
    %98 = vector.shape_cast %97 : vector<16x8xf32> to vector<2x8x8xf32>
    %c0_93 = arith.constant 0 : index
    %c1_94 = arith.constant 1 : index
    %c0_95 = arith.constant 0 : index
    %c0_96 = arith.constant 0 : index
    %99 = vector.load %arg7[%c0_93, %c1_94, %c0_95, %c0_96] : memref<2x4x32x8xf32, #tpu.memory_space<vmem>>, vector<1x1x32x8xf32>
    %100 = vector.shape_cast %99 : vector<1x1x32x8xf32> to vector<32x8xf32>
    %cst_97 = arith.constant dense<0.000000e+00> : vector<16x8xf32>
    %101 = tpu.matmul %12, %100, %cst_97 {dimension_numbers = #tpu.dot_dimension_numbers<[1], [0], [0], [1], [0, 0, 1, 1], [], []>} : vector<16x32xf32>, vector<32x8xf32>, vector<16x8xf32> -> vector<16x8xf32>
    %c0_98 = arith.constant 0 : index
    %c1_99 = arith.constant 1 : index
    %c0_100 = arith.constant 0 : index
    %c0_101 = arith.constant 0 : index
    %102 = vector.load %arg10[%c0_98, %c1_99, %c0_100, %c0_101] : memref<2x4x1x8xf32, #tpu.memory_space<vmem>>, vector<1x1x1x8xf32>
    %103 = vector.shape_cast %102 : vector<1x1x1x8xf32> to vector<1x8xf32>
    %104 = vector.broadcast %103 : vector<1x8xf32> to vector<16x8xf32>
    %105 = arith.addf %101, %104 : vector<16x8xf32>
    %106 = vector.shape_cast %105 : vector<16x8xf32> to vector<2x8x8xf32>
    "tpu.trace_start"() <{level = 10 : i32, message = "bqd,bkd->bqk"}> : () -> ()
    %cst_102 = arith.constant dense<0.000000e+00> : vector<2x8x8xf32>
    %107 = tpu.matmul %90, %98, %cst_102 {dimension_numbers = #tpu.dot_dimension_numbers<[2], [2], [1], [1], [0, 0, 0, 1, 1, 1], [0], [0]>} : vector<2x8x8xf32>, vector<2x8x8xf32>, vector<2x8x8xf32> -> vector<2x8x8xf32>
    "tpu.trace_stop"() : () -> ()
    %108 = arith.addf %107, %23 : vector<2x8x8xf32>
    %cst_103 = arith.constant dense<0xFF800000> : vector<2x8xf32>
    %109 = vector.multi_reduction <maximumf>, %108, %cst_103 [2] : vector<2x8x8xf32> to vector<2x8xf32>
    %110 = vector.shape_cast %109 : vector<2x8xf32> to vector<2x8x1xf32>
    %111 = vector.broadcast %110 : vector<2x8x1xf32> to vector<2x8x8xf32>
    %112 = arith.subf %108, %111 : vector<2x8x8xf32>
    %113 = math.exp %112 : vector<2x8x8xf32>
    %cst_104 = arith.constant dense<0.000000e+00> : vector<2x8xf32>
    %114 = vector.multi_reduction <add>, %113, %cst_104 [2] : vector<2x8x8xf32> to vector<2x8xf32>
    %115 = vector.shape_cast %114 : vector<2x8xf32> to vector<2x8x1xf32>
    %116 = tpu.reciprocal %115 {approx = true} : vector<2x8x1xf32> -> vector<2x8x1xf32>
    %117 = vector.broadcast %116 : vector<2x8x1xf32> to vector<2x8x8xf32>
    %118 = arith.mulf %113, %117 : vector<2x8x8xf32>
    "tpu.trace_start"() <{level = 10 : i32, message = "bqk,bkd->bqd"}> : () -> ()
    %cst_105 = arith.constant dense<0.000000e+00> : vector<2x8x8xf32>
    %119 = tpu.matmul %118, %106, %cst_105 {dimension_numbers = #tpu.dot_dimension_numbers<[2], [1], [1], [2], [0, 0, 0, 1, 1, 2], [0], [0]>} : vector<2x8x8xf32>, vector<2x8x8xf32>, vector<2x8x8xf32> -> vector<2x8x8xf32>
    "tpu.trace_stop"() : () -> ()
    %120 = vector.shape_cast %119 : vector<2x8x8xf32> to vector<16x8xf32>
    %c0_106 = arith.constant 0 : index
    %c1_107 = arith.constant 1 : index
    %c0_108 = arith.constant 0 : index
    %c0_109 = arith.constant 0 : index
    %121 = vector.load %arg11[%c0_106, %c1_107, %c0_108, %c0_109] : memref<2x4x8x32xf32, #tpu.memory_space<vmem>>, vector<1x1x8x32xf32>
    %122 = vector.shape_cast %121 : vector<1x1x8x32xf32> to vector<8x32xf32>
    %cst_110 = arith.constant dense<0.000000e+00> : vector<16x32xf32>
    %123 = tpu.matmul %120, %122, %cst_110 {dimension_numbers = #tpu.dot_dimension_numbers<[1], [0], [0], [1], [0, 0, 1, 1], [], []>} : vector<16x8xf32>, vector<8x32xf32>, vector<16x32xf32> -> vector<16x32xf32>
    %124 = arith.addf %82, %123 : vector<16x32xf32>
    %c0_111 = arith.constant 0 : index
    %c2 = arith.constant 2 : index
    %c0_112 = arith.constant 0 : index
    %c0_113 = arith.constant 0 : index
    %125 = vector.load %arg5[%c0_111, %c2, %c0_112, %c0_113] : memref<2x4x32x8xf32, #tpu.memory_space<vmem>>, vector<1x1x32x8xf32>
    %126 = vector.shape_cast %125 : vector<1x1x32x8xf32> to vector<32x8xf32>
    %cst_114 = arith.constant dense<0.000000e+00> : vector<16x8xf32>
    %127 = tpu.matmul %12, %126, %cst_114 {dimension_numbers = #tpu.dot_dimension_numbers<[1], [0], [0], [1], [0, 0, 1, 1], [], []>} : vector<16x32xf32>, vector<32x8xf32>, vector<16x8xf32> -> vector<16x8xf32>
    %c0_115 = arith.constant 0 : index
    %c2_116 = arith.constant 2 : index
    %c0_117 = arith.constant 0 : index
    %c0_118 = arith.constant 0 : index
    %128 = vector.load %arg8[%c0_115, %c2_116, %c0_117, %c0_118] : memref<2x4x1x8xf32, #tpu.memory_space<vmem>>, vector<1x1x1x8xf32>
    %129 = vector.shape_cast %128 : vector<1x1x1x8xf32> to vector<1x8xf32>
    %130 = vector.broadcast %129 : vector<1x8xf32> to vector<16x8xf32>
    %131 = arith.addf %127, %130 : vector<16x8xf32>
    %132 = vector.shape_cast %131 : vector<16x8xf32> to vector<2x8x8xf32>
    %c0_119 = arith.constant 0 : index
    %c2_120 = arith.constant 2 : index
    %c0_121 = arith.constant 0 : index
    %c0_122 = arith.constant 0 : index
    %133 = vector.load %arg6[%c0_119, %c2_120, %c0_121, %c0_122] : memref<2x4x32x8xf32, #tpu.memory_space<vmem>>, vector<1x1x32x8xf32>
    %134 = vector.shape_cast %133 : vector<1x1x32x8xf32> to vector<32x8xf32>
    %cst_123 = arith.constant dense<0.000000e+00> : vector<16x8xf32>
    %135 = tpu.matmul %12, %134, %cst_123 {dimension_numbers = #tpu.dot_dimension_numbers<[1], [0], [0], [1], [0, 0, 1, 1], [], []>} : vector<16x32xf32>, vector<32x8xf32>, vector<16x8xf32> -> vector<16x8xf32>
    %c0_124 = arith.constant 0 : index
    %c2_125 = arith.constant 2 : index
    %c0_126 = arith.constant 0 : index
    %c0_127 = arith.constant 0 : index
    %136 = vector.load %arg9[%c0_124, %c2_125, %c0_126, %c0_127] : memref<2x4x1x8xf32, #tpu.memory_space<vmem>>, vector<1x1x1x8xf32>
    %137 = vector.shape_cast %136 : vector<1x1x1x8xf32> to vector<1x8xf32>
    %138 = vector.broadcast %137 : vector<1x8xf32> to vector<16x8xf32>
    %139 = arith.addf %135, %138 : vector<16x8xf32>
    %140 = vector.shape_cast %139 : vector<16x8xf32> to vector<2x8x8xf32>
    %c0_128 = arith.constant 0 : index
    %c2_129 = arith.constant 2 : index
    %c0_130 = arith.constant 0 : index
    %c0_131 = arith.constant 0 : index
    %141 = vector.load %arg7[%c0_128, %c2_129, %c0_130, %c0_131] : memref<2x4x32x8xf32, #tpu.memory_space<vmem>>, vector<1x1x32x8xf32>
    %142 = vector.shape_cast %141 : vector<1x1x32x8xf32> to vector<32x8xf32>
    %cst_132 = arith.constant dense<0.000000e+00> : vector<16x8xf32>
    %143 = tpu.matmul %12, %142, %cst_132 {dimension_numbers = #tpu.dot_dimension_numbers<[1], [0], [0], [1], [0, 0, 1, 1], [], []>} : vector<16x32xf32>, vector<32x8xf32>, vector<16x8xf32> -> vector<16x8xf32>
    %c0_133 = arith.constant 0 : index
    %c2_134 = arith.constant 2 : index
    %c0_135 = arith.constant 0 : index
    %c0_136 = arith.constant 0 : index
    %144 = vector.load %arg10[%c0_133, %c2_134, %c0_135, %c0_136] : memref<2x4x1x8xf32, #tpu.memory_space<vmem>>, vector<1x1x1x8xf32>
    %145 = vector.shape_cast %144 : vector<1x1x1x8xf32> to vector<1x8xf32>
    %146 = vector.broadcast %145 : vector<1x8xf32> to vector<16x8xf32>
    %147 = arith.addf %143, %146 : vector<16x8xf32>
    %148 = vector.shape_cast %147 : vector<16x8xf32> to vector<2x8x8xf32>
    "tpu.trace_start"() <{level = 10 : i32, message = "bqd,bkd->bqk"}> : () -> ()
    %cst_137 = arith.constant dense<0.000000e+00> : vector<2x8x8xf32>
    %149 = tpu.matmul %132, %140, %cst_137 {dimension_numbers = #tpu.dot_dimension_numbers<[2], [2], [1], [1], [0, 0, 0, 1, 1, 1], [0], [0]>} : vector<2x8x8xf32>, vector<2x8x8xf32>, vector<2x8x8xf32> -> vector<2x8x8xf32>
    "tpu.trace_stop"() : () -> ()
    %150 = arith.addf %149, %23 : vector<2x8x8xf32>
    %cst_138 = arith.constant dense<0xFF800000> : vector<2x8xf32>
    %151 = vector.multi_reduction <maximumf>, %150, %cst_138 [2] : vector<2x8x8xf32> to vector<2x8xf32>
    %152 = vector.shape_cast %151 : vector<2x8xf32> to vector<2x8x1xf32>
    %153 = vector.broadcast %152 : vector<2x8x1xf32> to vector<2x8x8xf32>
    %154 = arith.subf %150, %153 : vector<2x8x8xf32>
    %155 = math.exp %154 : vector<2x8x8xf32>
    %cst_139 = arith.constant dense<0.000000e+00> : vector<2x8xf32>
    %156 = vector.multi_reduction <add>, %155, %cst_139 [2] : vector<2x8x8xf32> to vector<2x8xf32>
    %157 = vector.shape_cast %156 : vector<2x8xf32> to vector<2x8x1xf32>
    %158 = tpu.reciprocal %157 {approx = true} : vector<2x8x1xf32> -> vector<2x8x1xf32>
    %159 = vector.broadcast %158 : vector<2x8x1xf32> to vector<2x8x8xf32>
    %160 = arith.mulf %155, %159 : vector<2x8x8xf32>
    "tpu.trace_start"() <{level = 10 : i32, message = "bqk,bkd->bqd"}> : () -> ()
    %cst_140 = arith.constant dense<0.000000e+00> : vector<2x8x8xf32>
    %161 = tpu.matmul %160, %148, %cst_140 {dimension_numbers = #tpu.dot_dimension_numbers<[2], [1], [1], [2], [0, 0, 0, 1, 1, 2], [0], [0]>} : vector<2x8x8xf32>, vector<2x8x8xf32>, vector<2x8x8xf32> -> vector<2x8x8xf32>
    "tpu.trace_stop"() : () -> ()
    %162 = vector.shape_cast %161 : vector<2x8x8xf32> to vector<16x8xf32>
    %c0_141 = arith.constant 0 : index
    %c2_142 = arith.constant 2 : index
    %c0_143 = arith.constant 0 : index
    %c0_144 = arith.constant 0 : index
    %163 = vector.load %arg11[%c0_141, %c2_142, %c0_143, %c0_144] : memref<2x4x8x32xf32, #tpu.memory_space<vmem>>, vector<1x1x8x32xf32>
    %164 = vector.shape_cast %163 : vector<1x1x8x32xf32> to vector<8x32xf32>
    %cst_145 = arith.constant dense<0.000000e+00> : vector<16x32xf32>
    %165 = tpu.matmul %162, %164, %cst_145 {dimension_numbers = #tpu.dot_dimension_numbers<[1], [0], [0], [1], [0, 0, 1, 1], [], []>} : vector<16x8xf32>, vector<8x32xf32>, vector<16x32xf32> -> vector<16x32xf32>
    %166 = arith.addf %124, %165 : vector<16x32xf32>
    %c0_146 = arith.constant 0 : index
    %c3 = arith.constant 3 : index
    %c0_147 = arith.constant 0 : index
    %c0_148 = arith.constant 0 : index
    %167 = vector.load %arg5[%c0_146, %c3, %c0_147, %c0_148] : memref<2x4x32x8xf32, #tpu.memory_space<vmem>>, vector<1x1x32x8xf32>
    %168 = vector.shape_cast %167 : vector<1x1x32x8xf32> to vector<32x8xf32>
    %cst_149 = arith.constant dense<0.000000e+00> : vector<16x8xf32>
    %169 = tpu.matmul %12, %168, %cst_149 {dimension_numbers = #tpu.dot_dimension_numbers<[1], [0], [0], [1], [0, 0, 1, 1], [], []>} : vector<16x32xf32>, vector<32x8xf32>, vector<16x8xf32> -> vector<16x8xf32>
    %c0_150 = arith.constant 0 : index
    %c3_151 = arith.constant 3 : index
    %c0_152 = arith.constant 0 : index
    %c0_153 = arith.constant 0 : index
    %170 = vector.load %arg8[%c0_150, %c3_151, %c0_152, %c0_153] : memref<2x4x1x8xf32, #tpu.memory_space<vmem>>, vector<1x1x1x8xf32>
    %171 = vector.shape_cast %170 : vector<1x1x1x8xf32> to vector<1x8xf32>
    %172 = vector.broadcast %171 : vector<1x8xf32> to vector<16x8xf32>
    %173 = arith.addf %169, %172 : vector<16x8xf32>
    %174 = vector.shape_cast %173 : vector<16x8xf32> to vector<2x8x8xf32>
    %c0_154 = arith.constant 0 : index
    %c3_155 = arith.constant 3 : index
    %c0_156 = arith.constant 0 : index
    %c0_157 = arith.constant 0 : index
    %175 = vector.load %arg6[%c0_154, %c3_155, %c0_156, %c0_157] : memref<2x4x32x8xf32, #tpu.memory_space<vmem>>, vector<1x1x32x8xf32>
    %176 = vector.shape_cast %175 : vector<1x1x32x8xf32> to vector<32x8xf32>
    %cst_158 = arith.constant dense<0.000000e+00> : vector<16x8xf32>
    %177 = tpu.matmul %12, %176, %cst_158 {dimension_numbers = #tpu.dot_dimension_numbers<[1], [0], [0], [1], [0, 0, 1, 1], [], []>} : vector<16x32xf32>, vector<32x8xf32>, vector<16x8xf32> -> vector<16x8xf32>
    %c0_159 = arith.constant 0 : index
    %c3_160 = arith.constant 3 : index
    %c0_161 = arith.constant 0 : index
    %c0_162 = arith.constant 0 : index
    %178 = vector.load %arg9[%c0_159, %c3_160, %c0_161, %c0_162] : memref<2x4x1x8xf32, #tpu.memory_space<vmem>>, vector<1x1x1x8xf32>
    %179 = vector.shape_cast %178 : vector<1x1x1x8xf32> to vector<1x8xf32>
    %180 = vector.broadcast %179 : vector<1x8xf32> to vector<16x8xf32>
    %181 = arith.addf %177, %180 : vector<16x8xf32>
    %182 = vector.shape_cast %181 : vector<16x8xf32> to vector<2x8x8xf32>
    %c0_163 = arith.constant 0 : index
    %c3_164 = arith.constant 3 : index
    %c0_165 = arith.constant 0 : index
    %c0_166 = arith.constant 0 : index
    %183 = vector.load %arg7[%c0_163, %c3_164, %c0_165, %c0_166] : memref<2x4x32x8xf32, #tpu.memory_space<vmem>>, vector<1x1x32x8xf32>
    %184 = vector.shape_cast %183 : vector<1x1x32x8xf32> to vector<32x8xf32>
    %cst_167 = arith.constant dense<0.000000e+00> : vector<16x8xf32>
    %185 = tpu.matmul %12, %184, %cst_167 {dimension_numbers = #tpu.dot_dimension_numbers<[1], [0], [0], [1], [0, 0, 1, 1], [], []>} : vector<16x32xf32>, vector<32x8xf32>, vector<16x8xf32> -> vector<16x8xf32>
    %c0_168 = arith.constant 0 : index
    %c3_169 = arith.constant 3 : index
    %c0_170 = arith.constant 0 : index
    %c0_171 = arith.constant 0 : index
    %186 = vector.load %arg10[%c0_168, %c3_169, %c0_170, %c0_171] : memref<2x4x1x8xf32, #tpu.memory_space<vmem>>, vector<1x1x1x8xf32>
    %187 = vector.shape_cast %186 : vector<1x1x1x8xf32> to vector<1x8xf32>
    %188 = vector.broadcast %187 : vector<1x8xf32> to vector<16x8xf32>
    %189 = arith.addf %185, %188 : vector<16x8xf32>
    %190 = vector.shape_cast %189 : vector<16x8xf32> to vector<2x8x8xf32>
    "tpu.trace_start"() <{level = 10 : i32, message = "bqd,bkd->bqk"}> : () -> ()
    %cst_172 = arith.constant dense<0.000000e+00> : vector<2x8x8xf32>
    %191 = tpu.matmul %174, %182, %cst_172 {dimension_numbers = #tpu.dot_dimension_numbers<[2], [2], [1], [1], [0, 0, 0, 1, 1, 1], [0], [0]>} : vector<2x8x8xf32>, vector<2x8x8xf32>, vector<2x8x8xf32> -> vector<2x8x8xf32>
    "tpu.trace_stop"() : () -> ()
    %192 = arith.addf %191, %23 : vector<2x8x8xf32>
    %cst_173 = arith.constant dense<0xFF800000> : vector<2x8xf32>
    %193 = vector.multi_reduction <maximumf>, %192, %cst_173 [2] : vector<2x8x8xf32> to vector<2x8xf32>
    %194 = vector.shape_cast %193 : vector<2x8xf32> to vector<2x8x1xf32>
    %195 = vector.broadcast %194 : vector<2x8x1xf32> to vector<2x8x8xf32>
    %196 = arith.subf %192, %195 : vector<2x8x8xf32>
    %197 = math.exp %196 : vector<2x8x8xf32>
    %cst_174 = arith.constant dense<0.000000e+00> : vector<2x8xf32>
    %198 = vector.multi_reduction <add>, %197, %cst_174 [2] : vector<2x8x8xf32> to vector<2x8xf32>
    %199 = vector.shape_cast %198 : vector<2x8xf32> to vector<2x8x1xf32>
    %200 = tpu.reciprocal %199 {approx = true} : vector<2x8x1xf32> -> vector<2x8x1xf32>
    %201 = vector.broadcast %200 : vector<2x8x1xf32> to vector<2x8x8xf32>
    %202 = arith.mulf %197, %201 : vector<2x8x8xf32>
    "tpu.trace_start"() <{level = 10 : i32, message = "bqk,bkd->bqd"}> : () -> ()
    %cst_175 = arith.constant dense<0.000000e+00> : vector<2x8x8xf32>
    %203 = tpu.matmul %202, %190, %cst_175 {dimension_numbers = #tpu.dot_dimension_numbers<[2], [1], [1], [2], [0, 0, 0, 1, 1, 2], [0], [0]>} : vector<2x8x8xf32>, vector<2x8x8xf32>, vector<2x8x8xf32> -> vector<2x8x8xf32>
    "tpu.trace_stop"() : () -> ()
    %204 = vector.shape_cast %203 : vector<2x8x8xf32> to vector<16x8xf32>
    %c0_176 = arith.constant 0 : index
    %c3_177 = arith.constant 3 : index
    %c0_178 = arith.constant 0 : index
    %c0_179 = arith.constant 0 : index
    %205 = vector.load %arg11[%c0_176, %c3_177, %c0_178, %c0_179] : memref<2x4x8x32xf32, #tpu.memory_space<vmem>>, vector<1x1x8x32xf32>
    %206 = vector.shape_cast %205 : vector<1x1x8x32xf32> to vector<8x32xf32>
    %cst_180 = arith.constant dense<0.000000e+00> : vector<16x32xf32>
    %207 = tpu.matmul %204, %206, %cst_180 {dimension_numbers = #tpu.dot_dimension_numbers<[1], [0], [0], [1], [0, 0, 1, 1], [], []>} : vector<16x8xf32>, vector<8x32xf32>, vector<16x32xf32> -> vector<16x32xf32>
    %208 = arith.addf %166, %207 : vector<16x32xf32>
    %209 = vector.broadcast %25 : vector<1x32xf32> to vector<16x32xf32>
    %210 = arith.addf %208, %209 : vector<16x32xf32>
    %211 = arith.addf %210, %210 : vector<16x32xf32>
    %cst_181 = arith.constant dense<0.000000e+00> : vector<16xf32>
    %212 = vector.multi_reduction <add>, %211, %cst_181 [1] : vector<16x32xf32> to vector<16xf32>
    %213 = vector.shape_cast %212 : vector<16xf32> to vector<16x1xf32>
    %cst_182 = arith.constant 3.200000e+01 : f32
    %214 = vector.broadcast %cst_182 : f32 to vector<16x1xf32>
    %215 = arith.divf %213, %214 : vector<16x1xf32>
    %216 = vector.broadcast %215 : vector<16x1xf32> to vector<16x32xf32>
    %217 = arith.subf %211, %216 : vector<16x32xf32>
    %218 = arith.mulf %217, %217 : vector<16x32xf32>
    %cst_183 = arith.constant dense<0.000000e+00> : vector<16xf32>
    %219 = vector.multi_reduction <add>, %218, %cst_183 [1] : vector<16x32xf32> to vector<16xf32>
    %220 = vector.shape_cast %219 : vector<16xf32> to vector<16x1xf32>
    %cst_184 = arith.constant 3.200000e+01 : f32
    %221 = vector.broadcast %cst_184 : f32 to vector<16x1xf32>
    %222 = arith.divf %220, %221 : vector<16x1xf32>
    %223 = vector.broadcast %215 : vector<16x1xf32> to vector<16x32xf32>
    %224 = arith.subf %211, %223 : vector<16x32xf32>
    %cst_185 = arith.constant 9.99999974E-6 : f32
    %225 = vector.broadcast %cst_185 : f32 to vector<16x1xf32>
    %226 = arith.addf %222, %225 : vector<16x1xf32>
    %227 = math.rsqrt %226 : vector<16x1xf32>
    %228 = vector.broadcast %227 : vector<16x1xf32> to vector<16x32xf32>
    %229 = arith.mulf %224, %228 : vector<16x32xf32>
    %230 = vector.broadcast %35 : vector<1x32xf32> to vector<16x32xf32>
    %231 = arith.mulf %229, %230 : vector<16x32xf32>
    %232 = vector.broadcast %37 : vector<1x32xf32> to vector<16x32xf32>
    %233 = arith.addf %231, %232 : vector<16x32xf32>
    %cst_186 = arith.constant dense<0.000000e+00> : vector<16x128xf32>
    %234 = tpu.matmul %233, %27, %cst_186 {dimension_numbers = #tpu.dot_dimension_numbers<[1], [0], [0], [1], [0, 0, 1, 1], [], []>} : vector<16x32xf32>, vector<32x128xf32>, vector<16x128xf32> -> vector<16x128xf32>
    %235 = vector.broadcast %29 : vector<1x128xf32> to vector<16x128xf32>
    %236 = arith.addf %234, %235 : vector<16x128xf32>
    %cst_187 = arith.constant 0.000000e+00 : f32
    %237 = vector.broadcast %cst_187 : f32 to vector<16x128xf32>
    %238 = arith.maximumf %236, %237 : vector<16x128xf32>
    %cst_188 = arith.constant dense<0.000000e+00> : vector<16x32xf32>
    %239 = tpu.matmul %238, %31, %cst_188 {dimension_numbers = #tpu.dot_dimension_numbers<[1], [0], [0], [1], [0, 0, 1, 1], [], []>} : vector<16x128xf32>, vector<128x32xf32>, vector<16x32xf32> -> vector<16x32xf32>
    %240 = vector.broadcast %33 : vector<1x32xf32> to vector<16x32xf32>
    %241 = arith.addf %239, %240 : vector<16x32xf32>
    %242 = arith.addf %233, %241 : vector<16x32xf32>
    %cst_189 = arith.constant dense<0.000000e+00> : vector<16xf32>
    %243 = vector.multi_reduction <add>, %242, %cst_189 [1] : vector<16x32xf32> to vector<16xf32>
    %244 = vector.shape_cast %243 : vector<16xf32> to vector<16x1xf32>
    %cst_190 = arith.constant 3.200000e+01 : f32
    %245 = vector.broadcast %cst_190 : f32 to vector<16x1xf32>
    %246 = arith.divf %244, %245 : vector<16x1xf32>
    %247 = vector.broadcast %246 : vector<16x1xf32> to vector<16x32xf32>
    %248 = arith.subf %242, %247 : vector<16x32xf32>
    %249 = arith.mulf %248, %248 : vector<16x32xf32>
    %cst_191 = arith.constant dense<0.000000e+00> : vector<16xf32>
    %250 = vector.multi_reduction <add>, %249, %cst_191 [1] : vector<16x32xf32> to vector<16xf32>
    %251 = vector.shape_cast %250 : vector<16xf32> to vector<16x1xf32>
    %cst_192 = arith.constant 3.200000e+01 : f32
    %252 = vector.broadcast %cst_192 : f32 to vector<16x1xf32>
    %253 = arith.divf %251, %252 : vector<16x1xf32>
    %254 = vector.broadcast %246 : vector<16x1xf32> to vector<16x32xf32>
    %255 = arith.subf %242, %254 : vector<16x32xf32>
    %cst_193 = arith.constant 9.99999974E-6 : f32
    %256 = vector.broadcast %cst_193 : f32 to vector<16x1xf32>
    %257 = arith.addf %253, %256 : vector<16x1xf32>
    %258 = math.rsqrt %257 : vector<16x1xf32>
    %259 = vector.broadcast %258 : vector<16x1xf32> to vector<16x32xf32>
    %260 = arith.mulf %255, %259 : vector<16x32xf32>
    %261 = vector.broadcast %39 : vector<1x32xf32> to vector<16x32xf32>
    %262 = arith.mulf %260, %261 : vector<16x32xf32>
    %263 = vector.broadcast %41 : vector<1x32xf32> to vector<16x32xf32>
    %264 = arith.addf %262, %263 : vector<16x32xf32>
    %c1_194 = arith.constant 1 : index
    %c0_195 = arith.constant 0 : index
    %c0_196 = arith.constant 0 : index
    %265 = vector.load %arg12[%c1_194, %c0_195, %c0_196] : memref<2x1x32xf32, #tpu.memory_space<vmem>>, vector<1x1x32xf32>
    %266 = vector.shape_cast %265 : vector<1x1x32xf32> to vector<1x32xf32>
    %c1_197 = arith.constant 1 : index
    %c0_198 = arith.constant 0 : index
    %c0_199 = arith.constant 0 : index
    %267 = vector.load %arg13[%c1_197, %c0_198, %c0_199] : memref<2x32x128xf32, #tpu.memory_space<vmem>>, vector<1x32x128xf32>
    %268 = vector.shape_cast %267 : vector<1x32x128xf32> to vector<32x128xf32>
    %c1_200 = arith.constant 1 : index
    %c0_201 = arith.constant 0 : index
    %c0_202 = arith.constant 0 : index
    %269 = vector.load %arg14[%c1_200, %c0_201, %c0_202] : memref<2x1x128xf32, #tpu.memory_space<vmem>>, vector<1x1x128xf32>
    %270 = vector.shape_cast %269 : vector<1x1x128xf32> to vector<1x128xf32>
    %c1_203 = arith.constant 1 : index
    %c0_204 = arith.constant 0 : index
    %c0_205 = arith.constant 0 : index
    %271 = vector.load %arg15[%c1_203, %c0_204, %c0_205] : memref<2x128x32xf32, #tpu.memory_space<vmem>>, vector<1x128x32xf32>
    %272 = vector.shape_cast %271 : vector<1x128x32xf32> to vector<128x32xf32>
    %c1_206 = arith.constant 1 : index
    %c0_207 = arith.constant 0 : index
    %c0_208 = arith.constant 0 : index
    %273 = vector.load %arg16[%c1_206, %c0_207, %c0_208] : memref<2x1x32xf32, #tpu.memory_space<vmem>>, vector<1x1x32xf32>
    %274 = vector.shape_cast %273 : vector<1x1x32xf32> to vector<1x32xf32>
    %c1_209 = arith.constant 1 : index
    %c0_210 = arith.constant 0 : index
    %c0_211 = arith.constant 0 : index
    %275 = vector.load %arg17[%c1_209, %c0_210, %c0_211] : memref<2x1x32xf32, #tpu.memory_space<vmem>>, vector<1x1x32xf32>
    %276 = vector.shape_cast %275 : vector<1x1x32xf32> to vector<1x32xf32>
    %c1_212 = arith.constant 1 : index
    %c0_213 = arith.constant 0 : index
    %c0_214 = arith.constant 0 : index
    %277 = vector.load %arg18[%c1_212, %c0_213, %c0_214] : memref<2x1x32xf32, #tpu.memory_space<vmem>>, vector<1x1x32xf32>
    %278 = vector.shape_cast %277 : vector<1x1x32xf32> to vector<1x32xf32>
    %c1_215 = arith.constant 1 : index
    %c0_216 = arith.constant 0 : index
    %c0_217 = arith.constant 0 : index
    %279 = vector.load %arg19[%c1_215, %c0_216, %c0_217] : memref<2x1x32xf32, #tpu.memory_space<vmem>>, vector<1x1x32xf32>
    %280 = vector.shape_cast %279 : vector<1x1x32xf32> to vector<1x32xf32>
    %c1_218 = arith.constant 1 : index
    %c0_219 = arith.constant 0 : index
    %c0_220 = arith.constant 0 : index
    %281 = vector.load %arg20[%c1_218, %c0_219, %c0_220] : memref<2x1x32xf32, #tpu.memory_space<vmem>>, vector<1x1x32xf32>
    %282 = vector.shape_cast %281 : vector<1x1x32xf32> to vector<1x32xf32>
    %c1_221 = arith.constant 1 : index
    %c0_222 = arith.constant 0 : index
    %c0_223 = arith.constant 0 : index
    %c0_224 = arith.constant 0 : index
    %283 = vector.load %arg5[%c1_221, %c0_222, %c0_223, %c0_224] : memref<2x4x32x8xf32, #tpu.memory_space<vmem>>, vector<1x1x32x8xf32>
    %284 = vector.shape_cast %283 : vector<1x1x32x8xf32> to vector<32x8xf32>
    %cst_225 = arith.constant dense<0.000000e+00> : vector<16x8xf32>
    %285 = tpu.matmul %264, %284, %cst_225 {dimension_numbers = #tpu.dot_dimension_numbers<[1], [0], [0], [1], [0, 0, 1, 1], [], []>} : vector<16x32xf32>, vector<32x8xf32>, vector<16x8xf32> -> vector<16x8xf32>
    %c1_226 = arith.constant 1 : index
    %c0_227 = arith.constant 0 : index
    %c0_228 = arith.constant 0 : index
    %c0_229 = arith.constant 0 : index
    %286 = vector.load %arg8[%c1_226, %c0_227, %c0_228, %c0_229] : memref<2x4x1x8xf32, #tpu.memory_space<vmem>>, vector<1x1x1x8xf32>
    %287 = vector.shape_cast %286 : vector<1x1x1x8xf32> to vector<1x8xf32>
    %288 = vector.broadcast %287 : vector<1x8xf32> to vector<16x8xf32>
    %289 = arith.addf %285, %288 : vector<16x8xf32>
    %290 = vector.shape_cast %289 : vector<16x8xf32> to vector<2x8x8xf32>
    %c1_230 = arith.constant 1 : index
    %c0_231 = arith.constant 0 : index
    %c0_232 = arith.constant 0 : index
    %c0_233 = arith.constant 0 : index
    %291 = vector.load %arg6[%c1_230, %c0_231, %c0_232, %c0_233] : memref<2x4x32x8xf32, #tpu.memory_space<vmem>>, vector<1x1x32x8xf32>
    %292 = vector.shape_cast %291 : vector<1x1x32x8xf32> to vector<32x8xf32>
    %cst_234 = arith.constant dense<0.000000e+00> : vector<16x8xf32>
    %293 = tpu.matmul %264, %292, %cst_234 {dimension_numbers = #tpu.dot_dimension_numbers<[1], [0], [0], [1], [0, 0, 1, 1], [], []>} : vector<16x32xf32>, vector<32x8xf32>, vector<16x8xf32> -> vector<16x8xf32>
    %c1_235 = arith.constant 1 : index
    %c0_236 = arith.constant 0 : index
    %c0_237 = arith.constant 0 : index
    %c0_238 = arith.constant 0 : index
    %294 = vector.load %arg9[%c1_235, %c0_236, %c0_237, %c0_238] : memref<2x4x1x8xf32, #tpu.memory_space<vmem>>, vector<1x1x1x8xf32>
    %295 = vector.shape_cast %294 : vector<1x1x1x8xf32> to vector<1x8xf32>
    %296 = vector.broadcast %295 : vector<1x8xf32> to vector<16x8xf32>
    %297 = arith.addf %293, %296 : vector<16x8xf32>
    %298 = vector.shape_cast %297 : vector<16x8xf32> to vector<2x8x8xf32>
    %c1_239 = arith.constant 1 : index
    %c0_240 = arith.constant 0 : index
    %c0_241 = arith.constant 0 : index
    %c0_242 = arith.constant 0 : index
    %299 = vector.load %arg7[%c1_239, %c0_240, %c0_241, %c0_242] : memref<2x4x32x8xf32, #tpu.memory_space<vmem>>, vector<1x1x32x8xf32>
    %300 = vector.shape_cast %299 : vector<1x1x32x8xf32> to vector<32x8xf32>
    %cst_243 = arith.constant dense<0.000000e+00> : vector<16x8xf32>
    %301 = tpu.matmul %264, %300, %cst_243 {dimension_numbers = #tpu.dot_dimension_numbers<[1], [0], [0], [1], [0, 0, 1, 1], [], []>} : vector<16x32xf32>, vector<32x8xf32>, vector<16x8xf32> -> vector<16x8xf32>
    %c1_244 = arith.constant 1 : index
    %c0_245 = arith.constant 0 : index
    %c0_246 = arith.constant 0 : index
    %c0_247 = arith.constant 0 : index
    %302 = vector.load %arg10[%c1_244, %c0_245, %c0_246, %c0_247] : memref<2x4x1x8xf32, #tpu.memory_space<vmem>>, vector<1x1x1x8xf32>
    %303 = vector.shape_cast %302 : vector<1x1x1x8xf32> to vector<1x8xf32>
    %304 = vector.broadcast %303 : vector<1x8xf32> to vector<16x8xf32>
    %305 = arith.addf %301, %304 : vector<16x8xf32>
    %306 = vector.shape_cast %305 : vector<16x8xf32> to vector<2x8x8xf32>
    "tpu.trace_start"() <{level = 10 : i32, message = "bqd,bkd->bqk"}> : () -> ()
    %cst_248 = arith.constant dense<0.000000e+00> : vector<2x8x8xf32>
    %307 = tpu.matmul %290, %298, %cst_248 {dimension_numbers = #tpu.dot_dimension_numbers<[2], [2], [1], [1], [0, 0, 0, 1, 1, 1], [0], [0]>} : vector<2x8x8xf32>, vector<2x8x8xf32>, vector<2x8x8xf32> -> vector<2x8x8xf32>
    "tpu.trace_stop"() : () -> ()
    %308 = arith.addf %307, %23 : vector<2x8x8xf32>
    %cst_249 = arith.constant dense<0xFF800000> : vector<2x8xf32>
    %309 = vector.multi_reduction <maximumf>, %308, %cst_249 [2] : vector<2x8x8xf32> to vector<2x8xf32>
    %310 = vector.shape_cast %309 : vector<2x8xf32> to vector<2x8x1xf32>
    %311 = vector.broadcast %310 : vector<2x8x1xf32> to vector<2x8x8xf32>
    %312 = arith.subf %308, %311 : vector<2x8x8xf32>
    %313 = math.exp %312 : vector<2x8x8xf32>
    %cst_250 = arith.constant dense<0.000000e+00> : vector<2x8xf32>
    %314 = vector.multi_reduction <add>, %313, %cst_250 [2] : vector<2x8x8xf32> to vector<2x8xf32>
    %315 = vector.shape_cast %314 : vector<2x8xf32> to vector<2x8x1xf32>
    %316 = tpu.reciprocal %315 {approx = true} : vector<2x8x1xf32> -> vector<2x8x1xf32>
    %317 = vector.broadcast %316 : vector<2x8x1xf32> to vector<2x8x8xf32>
    %318 = arith.mulf %313, %317 : vector<2x8x8xf32>
    "tpu.trace_start"() <{level = 10 : i32, message = "bqk,bkd->bqd"}> : () -> ()
    %cst_251 = arith.constant dense<0.000000e+00> : vector<2x8x8xf32>
    %319 = tpu.matmul %318, %306, %cst_251 {dimension_numbers = #tpu.dot_dimension_numbers<[2], [1], [1], [2], [0, 0, 0, 1, 1, 2], [0], [0]>} : vector<2x8x8xf32>, vector<2x8x8xf32>, vector<2x8x8xf32> -> vector<2x8x8xf32>
    "tpu.trace_stop"() : () -> ()
    %320 = vector.shape_cast %319 : vector<2x8x8xf32> to vector<16x8xf32>
    %c1_252 = arith.constant 1 : index
    %c0_253 = arith.constant 0 : index
    %c0_254 = arith.constant 0 : index
    %c0_255 = arith.constant 0 : index
    %321 = vector.load %arg11[%c1_252, %c0_253, %c0_254, %c0_255] : memref<2x4x8x32xf32, #tpu.memory_space<vmem>>, vector<1x1x8x32xf32>
    %322 = vector.shape_cast %321 : vector<1x1x8x32xf32> to vector<8x32xf32>
    %cst_256 = arith.constant dense<0.000000e+00> : vector<16x32xf32>
    %323 = tpu.matmul %320, %322, %cst_256 {dimension_numbers = #tpu.dot_dimension_numbers<[1], [0], [0], [1], [0, 0, 1, 1], [], []>} : vector<16x8xf32>, vector<8x32xf32>, vector<16x32xf32> -> vector<16x32xf32>
    %c1_257 = arith.constant 1 : index
    %c1_258 = arith.constant 1 : index
    %c0_259 = arith.constant 0 : index
    %c0_260 = arith.constant 0 : index
    %324 = vector.load %arg5[%c1_257, %c1_258, %c0_259, %c0_260] : memref<2x4x32x8xf32, #tpu.memory_space<vmem>>, vector<1x1x32x8xf32>
    %325 = vector.shape_cast %324 : vector<1x1x32x8xf32> to vector<32x8xf32>
    %cst_261 = arith.constant dense<0.000000e+00> : vector<16x8xf32>
    %326 = tpu.matmul %264, %325, %cst_261 {dimension_numbers = #tpu.dot_dimension_numbers<[1], [0], [0], [1], [0, 0, 1, 1], [], []>} : vector<16x32xf32>, vector<32x8xf32>, vector<16x8xf32> -> vector<16x8xf32>
    %c1_262 = arith.constant 1 : index
    %c1_263 = arith.constant 1 : index
    %c0_264 = arith.constant 0 : index
    %c0_265 = arith.constant 0 : index
    %327 = vector.load %arg8[%c1_262, %c1_263, %c0_264, %c0_265] : memref<2x4x1x8xf32, #tpu.memory_space<vmem>>, vector<1x1x1x8xf32>
    %328 = vector.shape_cast %327 : vector<1x1x1x8xf32> to vector<1x8xf32>
    %329 = vector.broadcast %328 : vector<1x8xf32> to vector<16x8xf32>
    %330 = arith.addf %326, %329 : vector<16x8xf32>
    %331 = vector.shape_cast %330 : vector<16x8xf32> to vector<2x8x8xf32>
    %c1_266 = arith.constant 1 : index
    %c1_267 = arith.constant 1 : index
    %c0_268 = arith.constant 0 : index
    %c0_269 = arith.constant 0 : index
    %332 = vector.load %arg6[%c1_266, %c1_267, %c0_268, %c0_269] : memref<2x4x32x8xf32, #tpu.memory_space<vmem>>, vector<1x1x32x8xf32>
    %333 = vector.shape_cast %332 : vector<1x1x32x8xf32> to vector<32x8xf32>
    %cst_270 = arith.constant dense<0.000000e+00> : vector<16x8xf32>
    %334 = tpu.matmul %264, %333, %cst_270 {dimension_numbers = #tpu.dot_dimension_numbers<[1], [0], [0], [1], [0, 0, 1, 1], [], []>} : vector<16x32xf32>, vector<32x8xf32>, vector<16x8xf32> -> vector<16x8xf32>
    %c1_271 = arith.constant 1 : index
    %c1_272 = arith.constant 1 : index
    %c0_273 = arith.constant 0 : index
    %c0_274 = arith.constant 0 : index
    %335 = vector.load %arg9[%c1_271, %c1_272, %c0_273, %c0_274] : memref<2x4x1x8xf32, #tpu.memory_space<vmem>>, vector<1x1x1x8xf32>
    %336 = vector.shape_cast %335 : vector<1x1x1x8xf32> to vector<1x8xf32>
    %337 = vector.broadcast %336 : vector<1x8xf32> to vector<16x8xf32>
    %338 = arith.addf %334, %337 : vector<16x8xf32>
    %339 = vector.shape_cast %338 : vector<16x8xf32> to vector<2x8x8xf32>
    %c1_275 = arith.constant 1 : index
    %c1_276 = arith.constant 1 : index
    %c0_277 = arith.constant 0 : index
    %c0_278 = arith.constant 0 : index
    %340 = vector.load %arg7[%c1_275, %c1_276, %c0_277, %c0_278] : memref<2x4x32x8xf32, #tpu.memory_space<vmem>>, vector<1x1x32x8xf32>
    %341 = vector.shape_cast %340 : vector<1x1x32x8xf32> to vector<32x8xf32>
    %cst_279 = arith.constant dense<0.000000e+00> : vector<16x8xf32>
    %342 = tpu.matmul %264, %341, %cst_279 {dimension_numbers = #tpu.dot_dimension_numbers<[1], [0], [0], [1], [0, 0, 1, 1], [], []>} : vector<16x32xf32>, vector<32x8xf32>, vector<16x8xf32> -> vector<16x8xf32>
    %c1_280 = arith.constant 1 : index
    %c1_281 = arith.constant 1 : index
    %c0_282 = arith.constant 0 : index
    %c0_283 = arith.constant 0 : index
    %343 = vector.load %arg10[%c1_280, %c1_281, %c0_282, %c0_283] : memref<2x4x1x8xf32, #tpu.memory_space<vmem>>, vector<1x1x1x8xf32>
    %344 = vector.shape_cast %343 : vector<1x1x1x8xf32> to vector<1x8xf32>
    %345 = vector.broadcast %344 : vector<1x8xf32> to vector<16x8xf32>
    %346 = arith.addf %342, %345 : vector<16x8xf32>
    %347 = vector.shape_cast %346 : vector<16x8xf32> to vector<2x8x8xf32>
    "tpu.trace_start"() <{level = 10 : i32, message = "bqd,bkd->bqk"}> : () -> ()
    %cst_284 = arith.constant dense<0.000000e+00> : vector<2x8x8xf32>
    %348 = tpu.matmul %331, %339, %cst_284 {dimension_numbers = #tpu.dot_dimension_numbers<[2], [2], [1], [1], [0, 0, 0, 1, 1, 1], [0], [0]>} : vector<2x8x8xf32>, vector<2x8x8xf32>, vector<2x8x8xf32> -> vector<2x8x8xf32>
    "tpu.trace_stop"() : () -> ()
    %349 = arith.addf %348, %23 : vector<2x8x8xf32>
    %cst_285 = arith.constant dense<0xFF800000> : vector<2x8xf32>
    %350 = vector.multi_reduction <maximumf>, %349, %cst_285 [2] : vector<2x8x8xf32> to vector<2x8xf32>
    %351 = vector.shape_cast %350 : vector<2x8xf32> to vector<2x8x1xf32>
    %352 = vector.broadcast %351 : vector<2x8x1xf32> to vector<2x8x8xf32>
    %353 = arith.subf %349, %352 : vector<2x8x8xf32>
    %354 = math.exp %353 : vector<2x8x8xf32>
    %cst_286 = arith.constant dense<0.000000e+00> : vector<2x8xf32>
    %355 = vector.multi_reduction <add>, %354, %cst_286 [2] : vector<2x8x8xf32> to vector<2x8xf32>
    %356 = vector.shape_cast %355 : vector<2x8xf32> to vector<2x8x1xf32>
    %357 = tpu.reciprocal %356 {approx = true} : vector<2x8x1xf32> -> vector<2x8x1xf32>
    %358 = vector.broadcast %357 : vector<2x8x1xf32> to vector<2x8x8xf32>
    %359 = arith.mulf %354, %358 : vector<2x8x8xf32>
    "tpu.trace_start"() <{level = 10 : i32, message = "bqk,bkd->bqd"}> : () -> ()
    %cst_287 = arith.constant dense<0.000000e+00> : vector<2x8x8xf32>
    %360 = tpu.matmul %359, %347, %cst_287 {dimension_numbers = #tpu.dot_dimension_numbers<[2], [1], [1], [2], [0, 0, 0, 1, 1, 2], [0], [0]>} : vector<2x8x8xf32>, vector<2x8x8xf32>, vector<2x8x8xf32> -> vector<2x8x8xf32>
    "tpu.trace_stop"() : () -> ()
    %361 = vector.shape_cast %360 : vector<2x8x8xf32> to vector<16x8xf32>
    %c1_288 = arith.constant 1 : index
    %c1_289 = arith.constant 1 : index
    %c0_290 = arith.constant 0 : index
    %c0_291 = arith.constant 0 : index
    %362 = vector.load %arg11[%c1_288, %c1_289, %c0_290, %c0_291] : memref<2x4x8x32xf32, #tpu.memory_space<vmem>>, vector<1x1x8x32xf32>
    %363 = vector.shape_cast %362 : vector<1x1x8x32xf32> to vector<8x32xf32>
    %cst_292 = arith.constant dense<0.000000e+00> : vector<16x32xf32>
    %364 = tpu.matmul %361, %363, %cst_292 {dimension_numbers = #tpu.dot_dimension_numbers<[1], [0], [0], [1], [0, 0, 1, 1], [], []>} : vector<16x8xf32>, vector<8x32xf32>, vector<16x32xf32> -> vector<16x32xf32>
    %365 = arith.addf %323, %364 : vector<16x32xf32>
    %c1_293 = arith.constant 1 : index
    %c2_294 = arith.constant 2 : index
    %c0_295 = arith.constant 0 : index
    %c0_296 = arith.constant 0 : index
    %366 = vector.load %arg5[%c1_293, %c2_294, %c0_295, %c0_296] : memref<2x4x32x8xf32, #tpu.memory_space<vmem>>, vector<1x1x32x8xf32>
    %367 = vector.shape_cast %366 : vector<1x1x32x8xf32> to vector<32x8xf32>
    %cst_297 = arith.constant dense<0.000000e+00> : vector<16x8xf32>
    %368 = tpu.matmul %264, %367, %cst_297 {dimension_numbers = #tpu.dot_dimension_numbers<[1], [0], [0], [1], [0, 0, 1, 1], [], []>} : vector<16x32xf32>, vector<32x8xf32>, vector<16x8xf32> -> vector<16x8xf32>
    %c1_298 = arith.constant 1 : index
    %c2_299 = arith.constant 2 : index
    %c0_300 = arith.constant 0 : index
    %c0_301 = arith.constant 0 : index
    %369 = vector.load %arg8[%c1_298, %c2_299, %c0_300, %c0_301] : memref<2x4x1x8xf32, #tpu.memory_space<vmem>>, vector<1x1x1x8xf32>
    %370 = vector.shape_cast %369 : vector<1x1x1x8xf32> to vector<1x8xf32>
    %371 = vector.broadcast %370 : vector<1x8xf32> to vector<16x8xf32>
    %372 = arith.addf %368, %371 : vector<16x8xf32>
    %373 = vector.shape_cast %372 : vector<16x8xf32> to vector<2x8x8xf32>
    %c1_302 = arith.constant 1 : index
    %c2_303 = arith.constant 2 : index
    %c0_304 = arith.constant 0 : index
    %c0_305 = arith.constant 0 : index
    %374 = vector.load %arg6[%c1_302, %c2_303, %c0_304, %c0_305] : memref<2x4x32x8xf32, #tpu.memory_space<vmem>>, vector<1x1x32x8xf32>
    %375 = vector.shape_cast %374 : vector<1x1x32x8xf32> to vector<32x8xf32>
    %cst_306 = arith.constant dense<0.000000e+00> : vector<16x8xf32>
    %376 = tpu.matmul %264, %375, %cst_306 {dimension_numbers = #tpu.dot_dimension_numbers<[1], [0], [0], [1], [0, 0, 1, 1], [], []>} : vector<16x32xf32>, vector<32x8xf32>, vector<16x8xf32> -> vector<16x8xf32>
    %c1_307 = arith.constant 1 : index
    %c2_308 = arith.constant 2 : index
    %c0_309 = arith.constant 0 : index
    %c0_310 = arith.constant 0 : index
    %377 = vector.load %arg9[%c1_307, %c2_308, %c0_309, %c0_310] : memref<2x4x1x8xf32, #tpu.memory_space<vmem>>, vector<1x1x1x8xf32>
    %378 = vector.shape_cast %377 : vector<1x1x1x8xf32> to vector<1x8xf32>
    %379 = vector.broadcast %378 : vector<1x8xf32> to vector<16x8xf32>
    %380 = arith.addf %376, %379 : vector<16x8xf32>
    %381 = vector.shape_cast %380 : vector<16x8xf32> to vector<2x8x8xf32>
    %c1_311 = arith.constant 1 : index
    %c2_312 = arith.constant 2 : index
    %c0_313 = arith.constant 0 : index
    %c0_314 = arith.constant 0 : index
    %382 = vector.load %arg7[%c1_311, %c2_312, %c0_313, %c0_314] : memref<2x4x32x8xf32, #tpu.memory_space<vmem>>, vector<1x1x32x8xf32>
    %383 = vector.shape_cast %382 : vector<1x1x32x8xf32> to vector<32x8xf32>
    %cst_315 = arith.constant dense<0.000000e+00> : vector<16x8xf32>
    %384 = tpu.matmul %264, %383, %cst_315 {dimension_numbers = #tpu.dot_dimension_numbers<[1], [0], [0], [1], [0, 0, 1, 1], [], []>} : vector<16x32xf32>, vector<32x8xf32>, vector<16x8xf32> -> vector<16x8xf32>
    %c1_316 = arith.constant 1 : index
    %c2_317 = arith.constant 2 : index
    %c0_318 = arith.constant 0 : index
    %c0_319 = arith.constant 0 : index
    %385 = vector.load %arg10[%c1_316, %c2_317, %c0_318, %c0_319] : memref<2x4x1x8xf32, #tpu.memory_space<vmem>>, vector<1x1x1x8xf32>
    %386 = vector.shape_cast %385 : vector<1x1x1x8xf32> to vector<1x8xf32>
    %387 = vector.broadcast %386 : vector<1x8xf32> to vector<16x8xf32>
    %388 = arith.addf %384, %387 : vector<16x8xf32>
    %389 = vector.shape_cast %388 : vector<16x8xf32> to vector<2x8x8xf32>
    "tpu.trace_start"() <{level = 10 : i32, message = "bqd,bkd->bqk"}> : () -> ()
    %cst_320 = arith.constant dense<0.000000e+00> : vector<2x8x8xf32>
    %390 = tpu.matmul %373, %381, %cst_320 {dimension_numbers = #tpu.dot_dimension_numbers<[2], [2], [1], [1], [0, 0, 0, 1, 1, 1], [0], [0]>} : vector<2x8x8xf32>, vector<2x8x8xf32>, vector<2x8x8xf32> -> vector<2x8x8xf32>
    "tpu.trace_stop"() : () -> ()
    %391 = arith.addf %390, %23 : vector<2x8x8xf32>
    %cst_321 = arith.constant dense<0xFF800000> : vector<2x8xf32>
    %392 = vector.multi_reduction <maximumf>, %391, %cst_321 [2] : vector<2x8x8xf32> to vector<2x8xf32>
    %393 = vector.shape_cast %392 : vector<2x8xf32> to vector<2x8x1xf32>
    %394 = vector.broadcast %393 : vector<2x8x1xf32> to vector<2x8x8xf32>
    %395 = arith.subf %391, %394 : vector<2x8x8xf32>
    %396 = math.exp %395 : vector<2x8x8xf32>
    %cst_322 = arith.constant dense<0.000000e+00> : vector<2x8xf32>
    %397 = vector.multi_reduction <add>, %396, %cst_322 [2] : vector<2x8x8xf32> to vector<2x8xf32>
    %398 = vector.shape_cast %397 : vector<2x8xf32> to vector<2x8x1xf32>
    %399 = tpu.reciprocal %398 {approx = true} : vector<2x8x1xf32> -> vector<2x8x1xf32>
    %400 = vector.broadcast %399 : vector<2x8x1xf32> to vector<2x8x8xf32>
    %401 = arith.mulf %396, %400 : vector<2x8x8xf32>
    "tpu.trace_start"() <{level = 10 : i32, message = "bqk,bkd->bqd"}> : () -> ()
    %cst_323 = arith.constant dense<0.000000e+00> : vector<2x8x8xf32>
    %402 = tpu.matmul %401, %389, %cst_323 {dimension_numbers = #tpu.dot_dimension_numbers<[2], [1], [1], [2], [0, 0, 0, 1, 1, 2], [0], [0]>} : vector<2x8x8xf32>, vector<2x8x8xf32>, vector<2x8x8xf32> -> vector<2x8x8xf32>
    "tpu.trace_stop"() : () -> ()
    %403 = vector.shape_cast %402 : vector<2x8x8xf32> to vector<16x8xf32>
    %c1_324 = arith.constant 1 : index
    %c2_325 = arith.constant 2 : index
    %c0_326 = arith.constant 0 : index
    %c0_327 = arith.constant 0 : index
    %404 = vector.load %arg11[%c1_324, %c2_325, %c0_326, %c0_327] : memref<2x4x8x32xf32, #tpu.memory_space<vmem>>, vector<1x1x8x32xf32>
    %405 = vector.shape_cast %404 : vector<1x1x8x32xf32> to vector<8x32xf32>
    %cst_328 = arith.constant dense<0.000000e+00> : vector<16x32xf32>
    %406 = tpu.matmul %403, %405, %cst_328 {dimension_numbers = #tpu.dot_dimension_numbers<[1], [0], [0], [1], [0, 0, 1, 1], [], []>} : vector<16x8xf32>, vector<8x32xf32>, vector<16x32xf32> -> vector<16x32xf32>
    %407 = arith.addf %365, %406 : vector<16x32xf32>
    %c1_329 = arith.constant 1 : index
    %c3_330 = arith.constant 3 : index
    %c0_331 = arith.constant 0 : index
    %c0_332 = arith.constant 0 : index
    %408 = vector.load %arg5[%c1_329, %c3_330, %c0_331, %c0_332] : memref<2x4x32x8xf32, #tpu.memory_space<vmem>>, vector<1x1x32x8xf32>
    %409 = vector.shape_cast %408 : vector<1x1x32x8xf32> to vector<32x8xf32>
    %cst_333 = arith.constant dense<0.000000e+00> : vector<16x8xf32>
    %410 = tpu.matmul %264, %409, %cst_333 {dimension_numbers = #tpu.dot_dimension_numbers<[1], [0], [0], [1], [0, 0, 1, 1], [], []>} : vector<16x32xf32>, vector<32x8xf32>, vector<16x8xf32> -> vector<16x8xf32>
    %c1_334 = arith.constant 1 : index
    %c3_335 = arith.constant 3 : index
    %c0_336 = arith.constant 0 : index
    %c0_337 = arith.constant 0 : index
    %411 = vector.load %arg8[%c1_334, %c3_335, %c0_336, %c0_337] : memref<2x4x1x8xf32, #tpu.memory_space<vmem>>, vector<1x1x1x8xf32>
    %412 = vector.shape_cast %411 : vector<1x1x1x8xf32> to vector<1x8xf32>
    %413 = vector.broadcast %412 : vector<1x8xf32> to vector<16x8xf32>
    %414 = arith.addf %410, %413 : vector<16x8xf32>
    %415 = vector.shape_cast %414 : vector<16x8xf32> to vector<2x8x8xf32>
    %c1_338 = arith.constant 1 : index
    %c3_339 = arith.constant 3 : index
    %c0_340 = arith.constant 0 : index
    %c0_341 = arith.constant 0 : index
    %416 = vector.load %arg6[%c1_338, %c3_339, %c0_340, %c0_341] : memref<2x4x32x8xf32, #tpu.memory_space<vmem>>, vector<1x1x32x8xf32>
    %417 = vector.shape_cast %416 : vector<1x1x32x8xf32> to vector<32x8xf32>
    %cst_342 = arith.constant dense<0.000000e+00> : vector<16x8xf32>
    %418 = tpu.matmul %264, %417, %cst_342 {dimension_numbers = #tpu.dot_dimension_numbers<[1], [0], [0], [1], [0, 0, 1, 1], [], []>} : vector<16x32xf32>, vector<32x8xf32>, vector<16x8xf32> -> vector<16x8xf32>
    %c1_343 = arith.constant 1 : index
    %c3_344 = arith.constant 3 : index
    %c0_345 = arith.constant 0 : index
    %c0_346 = arith.constant 0 : index
    %419 = vector.load %arg9[%c1_343, %c3_344, %c0_345, %c0_346] : memref<2x4x1x8xf32, #tpu.memory_space<vmem>>, vector<1x1x1x8xf32>
    %420 = vector.shape_cast %419 : vector<1x1x1x8xf32> to vector<1x8xf32>
    %421 = vector.broadcast %420 : vector<1x8xf32> to vector<16x8xf32>
    %422 = arith.addf %418, %421 : vector<16x8xf32>
    %423 = vector.shape_cast %422 : vector<16x8xf32> to vector<2x8x8xf32>
    %c1_347 = arith.constant 1 : index
    %c3_348 = arith.constant 3 : index
    %c0_349 = arith.constant 0 : index
    %c0_350 = arith.constant 0 : index
    %424 = vector.load %arg7[%c1_347, %c3_348, %c0_349, %c0_350] : memref<2x4x32x8xf32, #tpu.memory_space<vmem>>, vector<1x1x32x8xf32>
    %425 = vector.shape_cast %424 : vector<1x1x32x8xf32> to vector<32x8xf32>
    %cst_351 = arith.constant dense<0.000000e+00> : vector<16x8xf32>
    %426 = tpu.matmul %264, %425, %cst_351 {dimension_numbers = #tpu.dot_dimension_numbers<[1], [0], [0], [1], [0, 0, 1, 1], [], []>} : vector<16x32xf32>, vector<32x8xf32>, vector<16x8xf32> -> vector<16x8xf32>
    %c1_352 = arith.constant 1 : index
    %c3_353 = arith.constant 3 : index
    %c0_354 = arith.constant 0 : index
    %c0_355 = arith.constant 0 : index
    %427 = vector.load %arg10[%c1_352, %c3_353, %c0_354, %c0_355] : memref<2x4x1x8xf32, #tpu.memory_space<vmem>>, vector<1x1x1x8xf32>
    %428 = vector.shape_cast %427 : vector<1x1x1x8xf32> to vector<1x8xf32>
    %429 = vector.broadcast %428 : vector<1x8xf32> to vector<16x8xf32>
    %430 = arith.addf %426, %429 : vector<16x8xf32>
    %431 = vector.shape_cast %430 : vector<16x8xf32> to vector<2x8x8xf32>
    "tpu.trace_start"() <{level = 10 : i32, message = "bqd,bkd->bqk"}> : () -> ()
    %cst_356 = arith.constant dense<0.000000e+00> : vector<2x8x8xf32>
    %432 = tpu.matmul %415, %423, %cst_356 {dimension_numbers = #tpu.dot_dimension_numbers<[2], [2], [1], [1], [0, 0, 0, 1, 1, 1], [0], [0]>} : vector<2x8x8xf32>, vector<2x8x8xf32>, vector<2x8x8xf32> -> vector<2x8x8xf32>
    "tpu.trace_stop"() : () -> ()
    %433 = arith.addf %432, %23 : vector<2x8x8xf32>
    %cst_357 = arith.constant dense<0xFF800000> : vector<2x8xf32>
    %434 = vector.multi_reduction <maximumf>, %433, %cst_357 [2] : vector<2x8x8xf32> to vector<2x8xf32>
    %435 = vector.shape_cast %434 : vector<2x8xf32> to vector<2x8x1xf32>
    %436 = vector.broadcast %435 : vector<2x8x1xf32> to vector<2x8x8xf32>
    %437 = arith.subf %433, %436 : vector<2x8x8xf32>
    %438 = math.exp %437 : vector<2x8x8xf32>
    %cst_358 = arith.constant dense<0.000000e+00> : vector<2x8xf32>
    %439 = vector.multi_reduction <add>, %438, %cst_358 [2] : vector<2x8x8xf32> to vector<2x8xf32>
    %440 = vector.shape_cast %439 : vector<2x8xf32> to vector<2x8x1xf32>
    %441 = tpu.reciprocal %440 {approx = true} : vector<2x8x1xf32> -> vector<2x8x1xf32>
    %442 = vector.broadcast %441 : vector<2x8x1xf32> to vector<2x8x8xf32>
    %443 = arith.mulf %438, %442 : vector<2x8x8xf32>
    "tpu.trace_start"() <{level = 10 : i32, message = "bqk,bkd->bqd"}> : () -> ()
    %cst_359 = arith.constant dense<0.000000e+00> : vector<2x8x8xf32>
    %444 = tpu.matmul %443, %431, %cst_359 {dimension_numbers = #tpu.dot_dimension_numbers<[2], [1], [1], [2], [0, 0, 0, 1, 1, 2], [0], [0]>} : vector<2x8x8xf32>, vector<2x8x8xf32>, vector<2x8x8xf32> -> vector<2x8x8xf32>
    "tpu.trace_stop"() : () -> ()
    %445 = vector.shape_cast %444 : vector<2x8x8xf32> to vector<16x8xf32>
    %c1_360 = arith.constant 1 : index
    %c3_361 = arith.constant 3 : index
    %c0_362 = arith.constant 0 : index
    %c0_363 = arith.constant 0 : index
    %446 = vector.load %arg11[%c1_360, %c3_361, %c0_362, %c0_363] : memref<2x4x8x32xf32, #tpu.memory_space<vmem>>, vector<1x1x8x32xf32>
    %447 = vector.shape_cast %446 : vector<1x1x8x32xf32> to vector<8x32xf32>
    %cst_364 = arith.constant dense<0.000000e+00> : vector<16x32xf32>
    %448 = tpu.matmul %445, %447, %cst_364 {dimension_numbers = #tpu.dot_dimension_numbers<[1], [0], [0], [1], [0, 0, 1, 1], [], []>} : vector<16x8xf32>, vector<8x32xf32>, vector<16x32xf32> -> vector<16x32xf32>
    %449 = arith.addf %407, %448 : vector<16x32xf32>
    %450 = vector.broadcast %266 : vector<1x32xf32> to vector<16x32xf32>
    %451 = arith.addf %449, %450 : vector<16x32xf32>
    %452 = arith.addf %451, %451 : vector<16x32xf32>
    %cst_365 = arith.constant dense<0.000000e+00> : vector<16xf32>
    %453 = vector.multi_reduction <add>, %452, %cst_365 [1] : vector<16x32xf32> to vector<16xf32>
    %454 = vector.shape_cast %453 : vector<16xf32> to vector<16x1xf32>
    %cst_366 = arith.constant 3.200000e+01 : f32
    %455 = vector.broadcast %cst_366 : f32 to vector<16x1xf32>
    %456 = arith.divf %454, %455 : vector<16x1xf32>
    %457 = vector.broadcast %456 : vector<16x1xf32> to vector<16x32xf32>
    %458 = arith.subf %452, %457 : vector<16x32xf32>
    %459 = arith.mulf %458, %458 : vector<16x32xf32>
    %cst_367 = arith.constant dense<0.000000e+00> : vector<16xf32>
    %460 = vector.multi_reduction <add>, %459, %cst_367 [1] : vector<16x32xf32> to vector<16xf32>
    %461 = vector.shape_cast %460 : vector<16xf32> to vector<16x1xf32>
    %cst_368 = arith.constant 3.200000e+01 : f32
    %462 = vector.broadcast %cst_368 : f32 to vector<16x1xf32>
    %463 = arith.divf %461, %462 : vector<16x1xf32>
    %464 = vector.broadcast %456 : vector<16x1xf32> to vector<16x32xf32>
    %465 = arith.subf %452, %464 : vector<16x32xf32>
    %cst_369 = arith.constant 9.99999974E-6 : f32
    %466 = vector.broadcast %cst_369 : f32 to vector<16x1xf32>
    %467 = arith.addf %463, %466 : vector<16x1xf32>
    %468 = math.rsqrt %467 : vector<16x1xf32>
    %469 = vector.broadcast %468 : vector<16x1xf32> to vector<16x32xf32>
    %470 = arith.mulf %465, %469 : vector<16x32xf32>
    %471 = vector.broadcast %276 : vector<1x32xf32> to vector<16x32xf32>
    %472 = arith.mulf %470, %471 : vector<16x32xf32>
    %473 = vector.broadcast %278 : vector<1x32xf32> to vector<16x32xf32>
    %474 = arith.addf %472, %473 : vector<16x32xf32>
    %cst_370 = arith.constant dense<0.000000e+00> : vector<16x128xf32>
    %475 = tpu.matmul %474, %268, %cst_370 {dimension_numbers = #tpu.dot_dimension_numbers<[1], [0], [0], [1], [0, 0, 1, 1], [], []>} : vector<16x32xf32>, vector<32x128xf32>, vector<16x128xf32> -> vector<16x128xf32>
    %476 = vector.broadcast %270 : vector<1x128xf32> to vector<16x128xf32>
    %477 = arith.addf %475, %476 : vector<16x128xf32>
    %cst_371 = arith.constant 0.000000e+00 : f32
    %478 = vector.broadcast %cst_371 : f32 to vector<16x128xf32>
    %479 = arith.maximumf %477, %478 : vector<16x128xf32>
    %cst_372 = arith.constant dense<0.000000e+00> : vector<16x32xf32>
    %480 = tpu.matmul %479, %272, %cst_372 {dimension_numbers = #tpu.dot_dimension_numbers<[1], [0], [0], [1], [0, 0, 1, 1], [], []>} : vector<16x128xf32>, vector<128x32xf32>, vector<16x32xf32> -> vector<16x32xf32>
    %481 = vector.broadcast %274 : vector<1x32xf32> to vector<16x32xf32>
    %482 = arith.addf %480, %481 : vector<16x32xf32>
    %483 = arith.addf %474, %482 : vector<16x32xf32>
    %cst_373 = arith.constant dense<0.000000e+00> : vector<16xf32>
    %484 = vector.multi_reduction <add>, %483, %cst_373 [1] : vector<16x32xf32> to vector<16xf32>
    %485 = vector.shape_cast %484 : vector<16xf32> to vector<16x1xf32>
    %cst_374 = arith.constant 3.200000e+01 : f32
    %486 = vector.broadcast %cst_374 : f32 to vector<16x1xf32>
    %487 = arith.divf %485, %486 : vector<16x1xf32>
    %488 = vector.broadcast %487 : vector<16x1xf32> to vector<16x32xf32>
    %489 = arith.subf %483, %488 : vector<16x32xf32>
    %490 = arith.mulf %489, %489 : vector<16x32xf32>
    %cst_375 = arith.constant dense<0.000000e+00> : vector<16xf32>
    %491 = vector.multi_reduction <add>, %490, %cst_375 [1] : vector<16x32xf32> to vector<16xf32>
    %492 = vector.shape_cast %491 : vector<16xf32> to vector<16x1xf32>
    %cst_376 = arith.constant 3.200000e+01 : f32
    %493 = vector.broadcast %cst_376 : f32 to vector<16x1xf32>
    %494 = arith.divf %492, %493 : vector<16x1xf32>
    %495 = vector.broadcast %487 : vector<16x1xf32> to vector<16x32xf32>
    %496 = arith.subf %483, %495 : vector<16x32xf32>
    %cst_377 = arith.constant 9.99999974E-6 : f32
    %497 = vector.broadcast %cst_377 : f32 to vector<16x1xf32>
    %498 = arith.addf %494, %497 : vector<16x1xf32>
    %499 = math.rsqrt %498 : vector<16x1xf32>
    %500 = vector.broadcast %499 : vector<16x1xf32> to vector<16x32xf32>
    %501 = arith.mulf %496, %500 : vector<16x32xf32>
    %502 = vector.broadcast %280 : vector<1x32xf32> to vector<16x32xf32>
    %503 = arith.mulf %501, %502 : vector<16x32xf32>
    %504 = vector.broadcast %282 : vector<1x32xf32> to vector<16x32xf32>
    %505 = arith.addf %503, %504 : vector<16x32xf32>
    %506 = vector.shape_cast %505 : vector<16x32xf32> to vector<2x8x32xf32>
    %c0_378 = arith.constant 0 : index
    %c0_379 = arith.constant 0 : index
    %c0_380 = arith.constant 0 : index
    %507 = vector.load %arg21[%c0_378, %c0_379, %c0_380] : memref<2x8x32xf32, #tpu.memory_space<vmem>>, vector<2x8x32xf32>
    tpu.vector_store %arg21[%c0_378, %c0_379, %c0_380], %506 {strides = array<i32>} : memref<2x8x32xf32, #tpu.memory_space<vmem>>, vector<2x8x32xf32>,
    return
  }
}

</mosaic_0001>

<llo_original>
// kernel: transformer_forward.1
$region0: #{transformer_forward.1}
  #allocation0 [shape = 'u32[]', space=smem, size = 0x4, offset = 0x4, fixed_abs, tag = 'smem constant byte address 0x4 - core index']
  #allocation1 [shape = 'u32[144,128]{1,0:T(1,128)}', space=vmem, size = 0x12000, scoped, tag = 'internal scratch']
  %s0 = inlined_call_operand.vmem [shape: f32[2,8,16], index: 0, kind: input, shape index: {}]
  %s1 = inlined_call_operand.vmem [shape: f32[2,8], index: 1, kind: input, shape index: {}]
  %s2 = inlined_call_operand.vmem [shape: f32[8,32], index: 2, kind: input, shape index: {}]
  %s3 = inlined_call_operand.vmem [shape: f32[16,32], index: 3, kind: input, shape index: {}]
  %s4 = inlined_call_operand.vmem [shape: f32[1,32], index: 4, kind: input, shape index: {}]
  %s5 = inlined_call_operand.vmem [shape: f32[2,4,32,8], index: 5, kind: input, shape index: {}]
  %s6 = inlined_call_operand.vmem [shape: f32[2,4,32,8], index: 6, kind: input, shape index: {}]
  %s7 = inlined_call_operand.vmem [shape: f32[2,4,32,8], index: 7, kind: input, shape index: {}]
  %s8 = inlined_call_operand.vmem [shape: f32[2,4,1,8], index: 8, kind: input, shape index: {}]
  %s9 = inlined_call_operand.vmem [shape: f32[2,4,1,8], index: 9, kind: input, shape index: {}]
  %s10 = inlined_call_operand.vmem [shape: f32[2,4,1,8], index: 10, kind: input, shape index: {}]
  %s11 = inlined_call_operand.vmem [shape: f32[2,4,8,32], index: 11, kind: input, shape index: {}]
  %s12 = inlined_call_operand.vmem [shape: f32[2,1,32], index: 12, kind: input, shape index: {}]
  %s13 = inlined_call_operand.vmem [shape: f32[2,32,128], index: 13, kind: input, shape index: {}]
  %s14 = inlined_call_operand.vmem [shape: f32[2,1,128], index: 14, kind: input, shape index: {}]
  %s15 = inlined_call_operand.vmem [shape: f32[2,128,32], index: 15, kind: input, shape index: {}]
  %s16 = inlined_call_operand.vmem [shape: f32[2,1,32], index: 16, kind: input, shape index: {}]
  %s17 = inlined_call_operand.vmem [shape: f32[2,1,32], index: 17, kind: input, shape index: {}]
  %s18 = inlined_call_operand.vmem [shape: f32[2,1,32], index: 18, kind: input, shape index: {}]
  %s19 = inlined_call_operand.vmem [shape: f32[2,1,32], index: 19, kind: input, shape index: {}]
  %s20 = inlined_call_operand.vmem [shape: f32[2,1,32], index: 20, kind: input, shape index: {}]
  %s21 = inlined_call_operand.hbm [shape: f32[2,8,32], index: 21, kind: output, shape index: {}]
  %s22 = sld [smem:[#allocation0]]
  $region94: #{transformer_forward.1} parent=0
    _
  %s24 = ssub.s32 1, %s22
  %s25 = scalar_select 0, %s24, %s22
  $region1: #{transformer_forward.1} parent=0
    #allocation2 [shape = 'u8[8192]{0}', space=vmem, size = 0x2000, scoped, tag = 'output window, operand 0, single buffered']
    #allocation3 [shape = 's32[1]{0}', space=sflag, size = 0x4, scoped, tag = 'scoped memory for transformer_forward.1']
    %26 = vsyncpa [#allocation3], 0
    // Predicated region
    $region2: #{transformer_forward.1} parent=1 // pred_check
      _
    $region3: #{transformer_forward.1} parent=1 // pred_check_branch
      %28 = sbr.rel (0) target = $region5
    $region4: #{transformer_forward.1} parent=1 // pred_region
      _
    $region5: #{transformer_forward.1} parent=1 // pred_fallthru
      _
    // Predicated region
    $region6: #{transformer_forward.1} parent=1 // pred_check
      _
    $region7: #{transformer_forward.1} parent=1 // pred_check_branch
      %30 = sbr.rel (0) target = $region9
    $region8: #{transformer_forward.1} parent=1 // pred_region
      _
    $region9: #{transformer_forward.1} parent=1 // pred_fallthru
      _
    // Predicated region
    $region10: #{transformer_forward.1} parent=1 // pred_check
      _
    $region11: #{transformer_forward.1} parent=1 // pred_check_branch
      %32 = sbr.rel (0) target = $region13
    $region12: #{transformer_forward.1} parent=1 // pred_region
      _
    $region13: #{transformer_forward.1} parent=1 // pred_fallthru
      _
    // Predicated region
    $region14: #{transformer_forward.1} parent=1 // pred_check
      _
    $region15: #{transformer_forward.1} parent=1 // pred_check_branch
      %34 = sbr.rel (0) target = $region17
    $region16: #{transformer_forward.1} parent=1 // pred_region
      _
    $region17: #{transformer_forward.1} parent=1 // pred_fallthru
      _
    // Predicated region
    $region18: #{transformer_forward.1} parent=1 // pred_check
      _
    $region19: #{transformer_forward.1} parent=1 // pred_check_branch
      %36 = sbr.rel (0) target = $region21
    $region20: #{transformer_forward.1} parent=1 // pred_region
      _
    $region21: #{transformer_forward.1} parent=1 // pred_fallthru
      _
    // Predicated region
    $region22: #{transformer_forward.1} parent=1 // pred_check
      _
    $region23: #{transformer_forward.1} parent=1 // pred_check_branch
      %38 = sbr.rel (0) target = $region25
    $region24: #{transformer_forward.1} parent=1 // pred_region
      _
    $region25: #{transformer_forward.1} parent=1 // pred_fallthru
      _
    // Predicated region
    $region26: #{transformer_forward.1} parent=1 // pred_check
      _
    $region27: #{transformer_forward.1} parent=1 // pred_check_branch
      %40 = sbr.rel (0) target = $region29
    $region28: #{transformer_forward.1} parent=1 // pred_region
      _
    $region29: #{transformer_forward.1} parent=1 // pred_fallthru
      _
    // Predicated region
    $region30: #{transformer_forward.1} parent=1 // pred_check
      _
    $region31: #{transformer_forward.1} parent=1 // pred_check_branch
      %42 = sbr.rel (0) target = $region33
    $region32: #{transformer_forward.1} parent=1 // pred_region
      _
    $region33: #{transformer_forward.1} parent=1 // pred_fallthru
      _
    // Predicated region
    $region34: #{transformer_forward.1} parent=1 // pred_check
      _
    $region35: #{transformer_forward.1} parent=1 // pred_check_branch
      %44 = sbr.rel (0) target = $region37
    $region36: #{transformer_forward.1} parent=1 // pred_region
      _
    $region37: #{transformer_forward.1} parent=1 // pred_fallthru
      _
    // Predicated region
    $region38: #{transformer_forward.1} parent=1 // pred_check
      _
    $region39: #{transformer_forward.1} parent=1 // pred_check_branch
      %46 = sbr.rel (0) target = $region41
    $region40: #{transformer_forward.1} parent=1 // pred_region
      _
    $region41: #{transformer_forward.1} parent=1 // pred_fallthru
      _
    // Predicated region
    $region42: #{transformer_forward.1} parent=1 // pred_check
      _
    $region43: #{transformer_forward.1} parent=1 // pred_check_branch
      %48 = sbr.rel (0) target = $region45
    $region44: #{transformer_forward.1} parent=1 // pred_region
      _
    $region45: #{transformer_forward.1} parent=1 // pred_fallthru
      _
    // Predicated region
    $region46: #{transformer_forward.1} parent=1 // pred_check
      _
    $region47: #{transformer_forward.1} parent=1 // pred_check_branch
      %50 = sbr.rel (0) target = $region49
    $region48: #{transformer_forward.1} parent=1 // pred_region
      _
    $region49: #{transformer_forward.1} parent=1 // pred_fallthru
      _
    // Predicated region
    $region50: #{transformer_forward.1} parent=1 // pred_check
      _
    $region51: #{transformer_forward.1} parent=1 // pred_check_branch
      %52 = sbr.rel (0) target = $region53
    $region52: #{transformer_forward.1} parent=1 // pred_region
      _
    $region53: #{transformer_forward.1} parent=1 // pred_fallthru
      _
    // Predicated region
    $region54: #{transformer_forward.1} parent=1 // pred_check
      _
    $region55: #{transformer_forward.1} parent=1 // pred_check_branch
      %54 = sbr.rel (0) target = $region57
    $region56: #{transformer_forward.1} parent=1 // pred_region
      _
    $region57: #{transformer_forward.1} parent=1 // pred_fallthru
      _
    // Predicated region
    $region58: #{transformer_forward.1} parent=1 // pred_check
      _
    $region59: #{transformer_forward.1} parent=1 // pred_check_branch
      %56 = sbr.rel (0) target = $region61
    $region60: #{transformer_forward.1} parent=1 // pred_region
      _
    $region61: #{transformer_forward.1} parent=1 // pred_fallthru
      _
    // Predicated region
    $region62: #{transformer_forward.1} parent=1 // pred_check
      _
    $region63: #{transformer_forward.1} parent=1 // pred_check_branch
      %58 = sbr.rel (0) target = $region65
    $region64: #{transformer_forward.1} parent=1 // pred_region
      _
    $region65: #{transformer_forward.1} parent=1 // pred_fallthru
      _
    // Predicated region
    $region66: #{transformer_forward.1} parent=1 // pred_check
      _
    $region67: #{transformer_forward.1} parent=1 // pred_check_branch
      %60 = sbr.rel (0) target = $region69
    $region68: #{transformer_forward.1} parent=1 // pred_region
      _
    $region69: #{transformer_forward.1} parent=1 // pred_fallthru
      _
    // Predicated region
    $region70: #{transformer_forward.1} parent=1 // pred_check
      _
    $region71: #{transformer_forward.1} parent=1 // pred_check_branch
      %62 = sbr.rel (0) target = $region73
    $region72: #{transformer_forward.1} parent=1 // pred_region
      _
    $region73: #{transformer_forward.1} parent=1 // pred_fallthru
      _
    // Predicated region
    $region74: #{transformer_forward.1} parent=1 // pred_check
      _
    $region75: #{transformer_forward.1} parent=1 // pred_check_branch
      %64 = sbr.rel (0) target = $region77
    $region76: #{transformer_forward.1} parent=1 // pred_region
      _
    $region77: #{transformer_forward.1} parent=1 // pred_fallthru
      _
    // Predicated region
    $region78: #{transformer_forward.1} parent=1 // pred_check
      _
    $region79: #{transformer_forward.1} parent=1 // pred_check_branch
      %66 = sbr.rel (0) target = $region81
    $region80: #{transformer_forward.1} parent=1 // pred_region
      _
    $region81: #{transformer_forward.1} parent=1 // pred_fallthru
      _
    // Predicated region
    $region82: #{transformer_forward.1} parent=1 // pred_check
      _
    $region83: #{transformer_forward.1} parent=1 // pred_check_branch
      %68 = sbr.rel (0) target = $region85
    $region84: #{transformer_forward.1} parent=1 // pred_region
      _
    $region85: #{transformer_forward.1} parent=1 // pred_fallthru
      _
    %v69 = vld [vmem:[%s0] sm:$0xff]
    %v70 = vld [vmem:[%s0 + $0x8] sm:$0xff]
    %v71 = vld [vmem:[%s3] sm:$0xff]
    %v72 = vld [vmem:[%s3 + $0x8] sm:$0xff]
    %v73 = vld [vmem:[%s4] sm:$0x1]
    %v75 = vlaneseq
    %v76 = vshrl.u32 %v75, 7
    %v77 = vsub.s32 0, %v76
    %v78 = vrot.slane %v73, %v77
    %vm80 = vcmask 130048
    %v82 = vsel %vm80, %v69, 0
    %v85 = vsel %vm80, %v70, 0
    %87 = vmatprep.subr.mxu0 0.0
    %88 = vmatpush1.msra.mxu0 %v71
    %89 = vmatprep.subr.mxu0 0.0
    %90 = vmatpush1.msra.mxu0 %v72
    %91 = vmatprep.subr.mxu0 0.0
    %92 = vmatpush1.msra.mxu0 0.0
    %93 = vmatprep.subr.mxu0 0.0
    %94 = vmatpush1.msra.mxu0 0.0
    %95 = vmatprep.subr.mxu0 0.0
    %96 = vmatpush1.msra.mxu0 0.0
    %97 = vmatprep.subr.mxu0 0.0
    %98 = vmatpush1.msra.mxu0 0.0
    %99 = vmatprep.subr.mxu0 0.0
    %100 = vmatpush1.msra.mxu0 0.0
    %101 = vmatprep.subr.mxu0 0.0
    %102 = vmatpush1.msra.mxu0 0.0
    %103 = vmatprep.subr.mxu0 0.0
    %104 = vmatpush1.msra.mxu0 0.0
    %105 = vmatprep.subr.mxu0 0.0
    %106 = vmatpush1.msra.mxu0 0.0
    %107 = vmatprep.subr.mxu0 0.0
    %108 = vmatpush1.msra.mxu0 0.0
    %109 = vmatprep.subr.mxu0 0.0
    %110 = vmatpush1.msra.mxu0 0.0
    %111 = vmatprep.subr.mxu0 0.0
    %112 = vmatpush1.msra.mxu0 0.0
    %113 = vmatprep.subr.mxu0 0.0
    %114 = vmatpush1.msra.mxu0 0.0
    %115 = vmatprep.subr.mxu0 0.0
    %116 = vmatpush1.msra.mxu0 0.0
    %117 = vmatprep.subr.mxu0 0.0
    %118 = vmatpush1.msra.mxu0 0.0
    %119 = vmatprep.subr.mxu0 0.0
    %120 = vmatpush1.msra.mxu0 0.0
    %121 = vmatprep.subr.mxu0 0.0
    %122 = vmatpush1.msra.mxu0 0.0
    %123 = vmatprep.subr.mxu0 0.0
    %124 = vmatpush1.msra.mxu0 0.0
    %125 = vmatprep.subr.mxu0 0.0
    %126 = vmatpush1.msra.mxu0 0.0
    %127 = vmatprep.subr.mxu0 0.0
    %128 = vmatpush1.msra.mxu0 0.0
    %129 = vmatprep.subr.mxu0 0.0
    %130 = vmatpush1.msra.mxu0 0.0
    %131 = vmatprep.subr.mxu0 0.0
    %132 = vmatpush1.msra.mxu0 0.0
    %133 = vmatprep.subr.mxu0 0.0
    %134 = vmatpush1.msra.mxu0 0.0
    %135 = vmatprep.subr.mxu0 0.0
    %136 = vmatpush1.msra.mxu0 0.0
    %137 = vmatprep.subr.mxu0 0.0
    %138 = vmatpush1.msra.mxu0 0.0
    %139 = vmatprep.subr.mxu0 0.0
    %140 = vmatpush1.msra.mxu0 0.0
    %141 = vmatprep.subr.mxu0 0.0
    %142 = vmatpush1.msra.mxu0 0.0
    %143 = vmatprep.subr.mxu0 0.0
    %144 = vmatpush1.msra.mxu0 0.0
    %145 = vmatprep.subr.mxu0 0.0
    %146 = vmatpush1.msra.mxu0 0.0
    %147 = vmatprep.subr.mxu0 0.0
    %148 = vmatpush1.msra.mxu0 0.0
    %149 = vmatprep.subr.mxu0 0.0
    %150 = vmatpush1.msra.mxu0 0.0
    %151 = vmatprep.mubr.f32.mxu0 0.0
    %152 = vmatmul.mubr.f32.gmra.mrb[0].mxu0 %v82
    %v153 = vpop.f32.mrb[0].mxu0
    %v154 = vadd.f32 %v78, %v153
    %v155 = vpop.f32.mrb[0].mxu0
    %156 = vmatprep.mubr.f32.mxu0 0.0
    %157 = vmatmul.mubr.f32.gmra.mrb[0].mxu0 %v85
    %v158 = vpop.f32.mrb[0].mxu0
    %v159 = vadd.f32 %v78, %v158
    %v160 = vpop.f32.mrb[0].mxu0
    %161 = vdwg.mxu0
    %v162 = vld [vmem:[%s2] sm:$0xff]
    %v163 = vadd.f32 %v154, %v162
    %v164 = vadd.f32 %v159, %v162
    %v165 = vld [vmem:[%s1] sm:$0x3]
    %v166 = vlaneseq
    %v167 = vshrl.u32 %v166, 7
    %v168 = vsub.s32 0, %v167
    %v169 = vrot.slane %v165, %v168
    %171 = vbcast.lane.b32.xlu0 %v169, 256
    %v172 = vpop.permute.xlu0 %171
    %v173 = vlaneseq
    %v174 = vshrl.u32 %v173, 7
    %v175 = vsub.s32 1, %v174
    %v176 = vrot.slane %v165, %v175
    %178 = vbcast.lane.b32.xlu0 %v176, 256
    %v179 = vpop.permute.xlu0 %178
    %v182 = vunpack.c.l.s4 1966171168
    %v183 = vunpack.c.0.s8 %v182
    %v184 = vlaneseq
    %v185 = vshrl.u32 %v184, 7
    %v186 = vsub.s32 %v183, %v185
    %v187 = vrot.slane %v165, %v186
    %v188 = vcombine.high %v187, %v187
    %v190 = vunpack.c.l.s4 1966171168
    %v191 = vunpack.c.0.s8 %v190
    %v192 = vlaneseq
    %v193 = vshrl.u32 %v192, 7
    %v194 = vsub.s32 %v191, %v193
    %v195 = vrot.slane %v187, %v194
    %v197 = vunpack.c.l.s4 1966171168
    %v198 = vunpack.c.0.s8 %v197
    %v199 = vlaneseq
    %v200 = vshrl.u32 %v199, 7
    %v201 = vsub.s32 %v198, %v200
    %v202 = vrot.slane %v188, %v201
    %v203 = vlaneseq
    %v204 = vshrl.u32 %v203, 7
    %v205 = vsub.s32 0, %v204
    %v206 = vrot.slane %v195, %v205
    %v207 = vlaneseq
    %v208 = vshrl.u32 %v207, 7
    %v209 = vsub.s32 0, %v208
    %v210 = vrot.slane %v202, %v209
    %v213 = vmul.f32 %v172, %v206
    %v214 = vmul.f32 %v179, %v210
    %vm215 = vcmp.eq.f32.partialorder %v213, 0.0
    %vm216 = vcmp.eq.f32.partialorder %v214, 0.0
    %v217 = vsel %vm215, -1e+09, 0.0
    %v218 = vsel %vm216, -1e+09, 0.0
    %v219 = vld [vmem:[%s12] sm:$0x1]
    %v220 = vld [vmem:[%s13] sm:$0xff]
    %v221 = vld [vmem:[%s13 + $0x8] sm:$0xff]
    %v222 = vld [vmem:[%s13 + $0x10] sm:$0xff]
    %v223 = vld [vmem:[%s13 + $0x18] sm:$0xff]
    %v224 = vld [vmem:[%s14] sm:$0x1]
    %v225 = vld [vmem:[%s15] sm:$0xff]
    %v226 = vld [vmem:[%s15 + $0x8] sm:$0xff]
    %v227 = vld [vmem:[%s15 + $0x10] sm:$0xff]
    %v228 = vld [vmem:[%s15 + $0x18] sm:$0xff]
    %v229 = vld [vmem:[%s15 + $0x20] sm:$0xff]
    %v230 = vld [vmem:[%s15 + $0x28] sm:$0xff]
    %v231 = vld [vmem:[%s15 + $0x30] sm:$0xff]
    %v232 = vld [vmem:[%s15 + $0x38] sm:$0xff]
    %v233 = vld [vmem:[%s15 + $0x40] sm:$0xff]
    %v234 = vld [vmem:[%s15 + $0x48] sm:$0xff]
    %v235 = vld [vmem:[%s15 + $0x50] sm:$0xff]
    %v236 = vld [vmem:[%s15 + $0x58] sm:$0xff]
    %v237 = vld [vmem:[%s15 + $0x60] sm:$0xff]
    %v238 = vld [vmem:[%s15 + $0x68] sm:$0xff]
    %v239 = vld [vmem:[%s15 + $0x70] sm:$0xff]
    %v240 = vld [vmem:[%s15 + $0x78] sm:$0xff]
    %v241 = vld [vmem:[%s16] sm:$0x1]
    %v242 = vld [vmem:[%s17] sm:$0x1]
    %v243 = vld [vmem:[%s18] sm:$0x1]
    %v244 = vld [vmem:[%s19] sm:$0x1]
    %v245 = vld [vmem:[%s20] sm:$0x1]
    %v246 = vld [vmem:[%s5] sm:$0xff]
    %v247 = vld [vmem:[%s5 + $0x8] sm:$0xff]
    %v248 = vld [vmem:[%s5 + $0x10] sm:$0xff]
    %v249 = vld [vmem:[%s5 + $0x18] sm:$0xff]
    %v250 = vld [vmem:[%s8] sm:$0x1]
    %v252 = vlaneseq
    %v253 = vshrl.u32 %v252, 7
    %v254 = vsub.s32 0, %v253
    %v255 = vrot.slane %v250, %v254
    %vm257 = vcmask 261120
    %v259 = vsel %vm257, %v163, 0
    %v262 = vsel %vm257, %v164, 0
    %264 = vmatprep.subr.mxu0 0.0
    %265 = vmatpush1.msra.mxu0 %v246
    %266 = vmatprep.subr.mxu0 0.0
    %267 = vmatpush1.msra.mxu0 %v247
    %268 = vmatprep.subr.mxu0 0.0
    %269 = vmatpush1.msra.mxu0 %v248
    %270 = vmatprep.subr.mxu0 0.0
    %271 = vmatpush1.msra.mxu0 %v249
    %272 = vmatprep.subr.mxu0 0.0
    %273 = vmatpush1.msra.mxu0 0.0
    %274 = vmatprep.subr.mxu0 0.0
    %275 = vmatpush1.msra.mxu0 0.0
    %276 = vmatprep.subr.mxu0 0.0
    %277 = vmatpush1.msra.mxu0 0.0
    %278 = vmatprep.subr.mxu0 0.0
    %279 = vmatpush1.msra.mxu0 0.0
    %280 = vmatprep.subr.mxu0 0.0
    %281 = vmatpush1.msra.mxu0 0.0
    %282 = vmatprep.subr.mxu0 0.0
    %283 = vmatpush1.msra.mxu0 0.0
    %284 = vmatprep.subr.mxu0 0.0
    %285 = vmatpush1.msra.mxu0 0.0
    %286 = vmatprep.subr.mxu0 0.0
    %287 = vmatpush1.msra.mxu0 0.0
    %288 = vmatprep.subr.mxu0 0.0
    %289 = vmatpush1.msra.mxu0 0.0
    %290 = vmatprep.subr.mxu0 0.0
    %291 = vmatpush1.msra.mxu0 0.0
    %292 = vmatprep.subr.mxu0 0.0
    %293 = vmatpush1.msra.mxu0 0.0
    %294 = vmatprep.subr.mxu0 0.0
    %295 = vmatpush1.msra.mxu0 0.0
    %296 = vmatprep.subr.mxu0 0.0
    %297 = vmatpush1.msra.mxu0 0.0
    %298 = vmatprep.subr.mxu0 0.0
    %299 = vmatpush1.msra.mxu0 0.0
    %300 = vmatprep.subr.mxu0 0.0
    %301 = vmatpush1.msra.mxu0 0.0
    %302 = vmatprep.subr.mxu0 0.0
    %303 = vmatpush1.msra.mxu0 0.0
    %304 = vmatprep.subr.mxu0 0.0
    %305 = vmatpush1.msra.mxu0 0.0
    %306 = vmatprep.subr.mxu0 0.0
    %307 = vmatpush1.msra.mxu0 0.0
    %308 = vmatprep.subr.mxu0 0.0
    %309 = vmatpush1.msra.mxu0 0.0
    %310 = vmatprep.subr.mxu0 0.0
    %311 = vmatpush1.msra.mxu0 0.0
    %312 = vmatprep.subr.mxu0 0.0
    %313 = vmatpush1.msra.mxu0 0.0
    %314 = vmatprep.subr.mxu0 0.0
    %315 = vmatpush1.msra.mxu0 0.0
    %316 = vmatprep.subr.mxu0 0.0
    %317 = vmatpush1.msra.mxu0 0.0
    %318 = vmatprep.subr.mxu0 0.0
    %319 = vmatpush1.msra.mxu0 0.0
    %320 = vmatprep.subr.mxu0 0.0
    %321 = vmatpush1.msra.mxu0 0.0
    %322 = vmatprep.subr.mxu0 0.0
    %323 = vmatpush1.msra.mxu0 0.0
    %324 = vmatprep.subr.mxu0 0.0
    %325 = vmatpush1.msra.mxu0 0.0
    %326 = vmatprep.subr.mxu0 0.0
    %327 = vmatpush1.msra.mxu0 0.0
    %328 = vmatprep.mubr.f32.mxu0 0.0
    %329 = vmatmul.mubr.f32.gmra.mrb[0].mxu0 %v259
    %v330 = vpop.f32.mrb[0].mxu0
    %v331 = vadd.f32 %v255, %v330
    %v332 = vpop.f32.mrb[0].mxu0
    %333 = vmatprep.mubr.f32.mxu0 0.0
    %334 = vmatmul.mubr.f32.gmra.mrb[0].mxu0 %v262
    %v335 = vpop.f32.mrb[0].mxu0
    %v336 = vadd.f32 %v255, %v335
    %v337 = vpop.f32.mrb[0].mxu0
    %338 = vdwg.mxu0
    %v339 = vld [vmem:[%s6] sm:$0xff]
    %v340 = vld [vmem:[%s6 + $0x8] sm:$0xff]
    %v341 = vld [vmem:[%s6 + $0x10] sm:$0xff]
    %v342 = vld [vmem:[%s6 + $0x18] sm:$0xff]
    %v343 = vld [vmem:[%s9] sm:$0x1]
    %v345 = vlaneseq
    %v346 = vshrl.u32 %v345, 7
    %v347 = vsub.s32 0, %v346
    %v348 = vrot.slane %v343, %v347
    %350 = vmatprep.subr.mxu0 0.0
    %351 = vmatpush1.msra.mxu0 %v339
    %352 = vmatprep.subr.mxu0 0.0
    %353 = vmatpush1.msra.mxu0 %v340
    %354 = vmatprep.subr.mxu0 0.0
    %355 = vmatpush1.msra.mxu0 %v341
    %356 = vmatprep.subr.mxu0 0.0
    %357 = vmatpush1.msra.mxu0 %v342
    %358 = vmatprep.subr.mxu0 0.0
    %359 = vmatpush1.msra.mxu0 0.0
    %360 = vmatprep.subr.mxu0 0.0
    %361 = vmatpush1.msra.mxu0 0.0
    %362 = vmatprep.subr.mxu0 0.0
    %363 = vmatpush1.msra.mxu0 0.0
    %364 = vmatprep.subr.mxu0 0.0
    %365 = vmatpush1.msra.mxu0 0.0
    %366 = vmatprep.subr.mxu0 0.0
    %367 = vmatpush1.msra.mxu0 0.0
    %368 = vmatprep.subr.mxu0 0.0
    %369 = vmatpush1.msra.mxu0 0.0
    %370 = vmatprep.subr.mxu0 0.0
    %371 = vmatpush1.msra.mxu0 0.0
    %372 = vmatprep.subr.mxu0 0.0
    %373 = vmatpush1.msra.mxu0 0.0
    %374 = vmatprep.subr.mxu0 0.0
    %375 = vmatpush1.msra.mxu0 0.0
    %376 = vmatprep.subr.mxu0 0.0
    %377 = vmatpush1.msra.mxu0 0.0
    %378 = vmatprep.subr.mxu0 0.0
    %379 = vmatpush1.msra.mxu0 0.0
    %380 = vmatprep.subr.mxu0 0.0
    %381 = vmatpush1.msra.mxu0 0.0
    %382 = vmatprep.subr.mxu0 0.0
    %383 = vmatpush1.msra.mxu0 0.0
    %384 = vmatprep.subr.mxu0 0.0
    %385 = vmatpush1.msra.mxu0 0.0
    %386 = vmatprep.subr.mxu0 0.0
    %387 = vmatpush1.msra.mxu0 0.0
    %388 = vmatprep.subr.mxu0 0.0
    %389 = vmatpush1.msra.mxu0 0.0
    %390 = vmatprep.subr.mxu0 0.0
    %391 = vmatpush1.msra.mxu0 0.0
    %392 = vmatprep.subr.mxu0 0.0
    %393 = vmatpush1.msra.mxu0 0.0
    %394 = vmatprep.subr.mxu0 0.0
    %395 = vmatpush1.msra.mxu0 0.0
    %396 = vmatprep.subr.mxu0 0.0
    %397 = vmatpush1.msra.mxu0 0.0
    %398 = vmatprep.subr.mxu0 0.0
    %399 = vmatpush1.msra.mxu0 0.0
    %400 = vmatprep.subr.mxu0 0.0
    %401 = vmatpush1.msra.mxu0 0.0
    %402 = vmatprep.subr.mxu0 0.0
    %403 = vmatpush1.msra.mxu0 0.0
    %404 = vmatprep.subr.mxu0 0.0
    %405 = vmatpush1.msra.mxu0 0.0
    %406 = vmatprep.subr.mxu0 0.0
    %407 = vmatpush1.msra.mxu0 0.0
    %408 = vmatprep.subr.mxu0 0.0
    %409 = vmatpush1.msra.mxu0 0.0
    %410 = vmatprep.subr.mxu0 0.0
    %411 = vmatpush1.msra.mxu0 0.0
    %412 = vmatprep.subr.mxu0 0.0
    %413 = vmatpush1.msra.mxu0 0.0
    %414 = vmatprep.mubr.f32.mxu0 0.0
    %415 = vmatmul.mubr.f32.gmra.mrb[0].mxu0 %v259
    %v416 = vpop.f32.mrb[0].mxu0
    %v417 = vadd.f32 %v348, %v416
    %v418 = vpop.f32.mrb[0].mxu0
    %419 = vmatprep.mubr.f32.mxu0 0.0
    %420 = vmatmul.mubr.f32.gmra.mrb[0].mxu0 %v262
    %v421 = vpop.f32.mrb[0].mxu0
    %v422 = vadd.f32 %v348, %v421
    %v423 = vpop.f32.mrb[0].mxu0
    %424 = vdwg.mxu0
    %v425 = vld [vmem:[%s7] sm:$0xff]
    %v426 = vld [vmem:[%s7 + $0x8] sm:$0xff]
    %v427 = vld [vmem:[%s7 + $0x10] sm:$0xff]
    %v428 = vld [vmem:[%s7 + $0x18] sm:$0xff]
    %v429 = vld [vmem:[%s10] sm:$0x1]
    %v431 = vlaneseq
    %v432 = vshrl.u32 %v431, 7
    %v433 = vsub.s32 0, %v432
    %v434 = vrot.slane %v429, %v433
    %436 = vmatprep.subr.mxu0 0.0
    %437 = vmatpush1.msra.mxu0 %v425
    %438 = vmatprep.subr.mxu0 0.0
    %439 = vmatpush1.msra.mxu0 %v426
    %440 = vmatprep.subr.mxu0 0.0
    %441 = vmatpush1.msra.mxu0 %v427
    %442 = vmatprep.subr.mxu0 0.0
    %443 = vmatpush1.msra.mxu0 %v428
    %444 = vmatprep.subr.mxu0 0.0
    %445 = vmatpush1.msra.mxu0 0.0
    %446 = vmatprep.subr.mxu0 0.0
    %447 = vmatpush1.msra.mxu0 0.0
    %448 = vmatprep.subr.mxu0 0.0
    %449 = vmatpush1.msra.mxu0 0.0
    %450 = vmatprep.subr.mxu0 0.0
    %451 = vmatpush1.msra.mxu0 0.0
    %452 = vmatprep.subr.mxu0 0.0
    %453 = vmatpush1.msra.mxu0 0.0
    %454 = vmatprep.subr.mxu0 0.0
    %455 = vmatpush1.msra.mxu0 0.0
    %456 = vmatprep.subr.mxu0 0.0
    %457 = vmatpush1.msra.mxu0 0.0
    %458 = vmatprep.subr.mxu0 0.0
    %459 = vmatpush1.msra.mxu0 0.0
    %460 = vmatprep.subr.mxu0 0.0
    %461 = vmatpush1.msra.mxu0 0.0
    %462 = vmatprep.subr.mxu0 0.0
    %463 = vmatpush1.msra.mxu0 0.0
    %464 = vmatprep.subr.mxu0 0.0
    %465 = vmatpush1.msra.mxu0 0.0
    %466 = vmatprep.subr.mxu0 0.0
    %467 = vmatpush1.msra.mxu0 0.0
    %468 = vmatprep.subr.mxu0 0.0
    %469 = vmatpush1.msra.mxu0 0.0
    %470 = vmatprep.subr.mxu0 0.0
    %471 = vmatpush1.msra.mxu0 0.0
    %472 = vmatprep.subr.mxu0 0.0
    %473 = vmatpush1.msra.mxu0 0.0
    %474 = vmatprep.subr.mxu0 0.0
    %475 = vmatpush1.msra.mxu0 0.0
    %476 = vmatprep.subr.mxu0 0.0
    %477 = vmatpush1.msra.mxu0 0.0
    %478 = vmatprep.subr.mxu0 0.0
    %479 = vmatpush1.msra.mxu0 0.0
    %480 = vmatprep.subr.mxu0 0.0
    %481 = vmatpush1.msra.mxu0 0.0
    %482 = vmatprep.subr.mxu0 0.0
    %483 = vmatpush1.msra.mxu0 0.0
    %484 = vmatprep.subr.mxu0 0.0
    %485 = vmatpush1.msra.mxu0 0.0
    %486 = vmatprep.subr.mxu0 0.0
    %487 = vmatpush1.msra.mxu0 0.0
    %488 = vmatprep.subr.mxu0 0.0
    %489 = vmatpush1.msra.mxu0 0.0
    %490 = vmatprep.subr.mxu0 0.0
    %491 = vmatpush1.msra.mxu0 0.0
    %492 = vmatprep.subr.mxu0 0.0
    %493 = vmatpush1.msra.mxu0 0.0
    %494 = vmatprep.subr.mxu0 0.0
    %495 = vmatpush1.msra.mxu0 0.0
    %496 = vmatprep.subr.mxu0 0.0
    %497 = vmatpush1.msra.mxu0 0.0
    %498 = vmatprep.subr.mxu0 0.0
    %499 = vmatpush1.msra.mxu0 0.0
    %500 = vmatprep.mubr.f32.mxu0 0.0
    %501 = vmatmul.mubr.f32.gmra.mrb[0].mxu0 %v259
    %v502 = vpop.f32.mrb[0].mxu0
    %v503 = vadd.f32 %v434, %v502
    %v504 = vpop.f32.mrb[0].mxu0
    %505 = vmatprep.mubr.f32.mxu0 0.0
    %506 = vmatmul.mubr.f32.gmra.mrb[0].mxu0 %v262
    %v507 = vpop.f32.mrb[0].mxu0
    %v508 = vadd.f32 %v434, %v507
    %v509 = vpop.f32.mrb[0].mxu0
    %510 = vdwg.mxu0
    %vm511 = vcmask 64512
    %v513 = vsel %vm511, %v331, 0
    %v516 = vsel %vm511, %v417, 0
    %518 = vmatprep.subr.mxu0 0.0
    %519 = vmatpush1.xpose.msra.mxu0 %v516
    %520 = vmatprep.subr.mxu0 0.0
    %521 = vmatpush1.xpose.msra.mxu0 0.0
    %522 = vmatprep.subr.mxu0 0.0
    %523 = vmatpush1.xpose.msra.mxu0 0.0
    %524 = vmatprep.subr.mxu0 0.0
    %525 = vmatpush1.xpose.msra.mxu0 0.0
    %526 = vmatprep.subr.mxu0 0.0
    %527 = vmatpush1.xpose.msra.mxu0 0.0
    %528 = vmatprep.subr.mxu0 0.0
    %529 = vmatpush1.xpose.msra.mxu0 0.0
    %530 = vmatprep.subr.mxu0 0.0
    %531 = vmatpush1.xpose.msra.mxu0 0.0
    %532 = vmatprep.subr.mxu0 0.0
    %533 = vmatpush1.xpose.msra.mxu0 0.0
    %534 = vmatprep.subr.mxu0 0.0
    %535 = vmatpush1.xpose.msra.mxu0 0.0
    %536 = vmatprep.subr.mxu0 0.0
    %537 = vmatpush1.xpose.msra.mxu0 0.0
    %538 = vmatprep.subr.mxu0 0.0
    %539 = vmatpush1.xpose.msra.mxu0 0.0
    %540 = vmatprep.subr.mxu0 0.0
    %541 = vmatpush1.xpose.msra.mxu0 0.0
    %542 = vmatprep.subr.mxu0 0.0
    %543 = vmatpush1.xpose.msra.mxu0 0.0
    %544 = vmatprep.subr.mxu0 0.0
    %545 = vmatpush1.xpose.msra.mxu0 0.0
    %546 = vmatprep.subr.mxu0 0.0
    %547 = vmatpush1.xpose.msra.mxu0 0.0
    %548 = vmatprep.subr.mxu0 0.0
    %549 = vmatpush1.xpose.msra.mxu0 0.0
    %550 = vmatprep.subr.mxu0 0.0
    %551 = vmatpush1.xpose.msra.mxu0 0.0
    %552 = vmatprep.subr.mxu0 0.0
    %553 = vmatpush1.xpose.msra.mxu0 0.0
    %554 = vmatprep.subr.mxu0 0.0
    %555 = vmatpush1.xpose.msra.mxu0 0.0
    %556 = vmatprep.subr.mxu0 0.0
    %557 = vmatpush1.xpose.msra.mxu0 0.0
    %558 = vmatprep.subr.mxu0 0.0
    %559 = vmatpush1.xpose.msra.mxu0 0.0
    %560 = vmatprep.subr.mxu0 0.0
    %561 = vmatpush1.xpose.msra.mxu0 0.0
    %562 = vmatprep.subr.mxu0 0.0
    %563 = vmatpush1.xpose.msra.mxu0 0.0
    %564 = vmatprep.subr.mxu0 0.0
    %565 = vmatpush1.xpose.msra.mxu0 0.0
    %566 = vmatprep.subr.mxu0 0.0
    %567 = vmatpush1.xpose.msra.mxu0 0.0
    %568 = vmatprep.subr.mxu0 0.0
    %569 = vmatpush1.xpose.msra.mxu0 0.0
    %570 = vmatprep.subr.mxu0 0.0
    %571 = vmatpush1.xpose.msra.mxu0 0.0
    %572 = vmatprep.subr.mxu0 0.0
    %573 = vmatpush1.xpose.msra.mxu0 0.0
    %574 = vmatprep.subr.mxu0 0.0
    %575 = vmatpush1.xpose.msra.mxu0 0.0
    %576 = vmatprep.subr.mxu0 0.0
    %577 = vmatpush1.xpose.msra.mxu0 0.0
    %578 = vmatprep.subr.mxu0 0.0
    %579 = vmatpush1.xpose.msra.mxu0 0.0
    %580 = vmatprep.subr.mxu0 0.0
    %581 = vmatpush1.xpose.msra.mxu0 0.0
    %582 = vmatprep.mubr.f32.mxu0 0.0
    %583 = vmatmul.mubr.f32.gmra.mrb[0].mxu0 %v513
    %v584 = vpop.f32.mrb[0].mxu0
    %v585 = vadd.f32 %v217, %v584
    %v586 = vpop.f32.mrb[0].mxu0
    %587 = vdwg.mxu0
    %v589 = vsel %vm511, %v336, 0
    %v592 = vsel %vm511, %v422, 0
    %594 = vmatprep.subr.mxu0 0.0
    %595 = vmatpush1.xpose.msra.mxu0 %v592
    %596 = vmatprep.subr.mxu0 0.0
    %597 = vmatpush1.xpose.msra.mxu0 0.0
    %598 = vmatprep.subr.mxu0 0.0
    %599 = vmatpush1.xpose.msra.mxu0 0.0
    %600 = vmatprep.subr.mxu0 0.0
    %601 = vmatpush1.xpose.msra.mxu0 0.0
    %602 = vmatprep.subr.mxu0 0.0
    %603 = vmatpush1.xpose.msra.mxu0 0.0
    %604 = vmatprep.subr.mxu0 0.0
    %605 = vmatpush1.xpose.msra.mxu0 0.0
    %606 = vmatprep.subr.mxu0 0.0
    %607 = vmatpush1.xpose.msra.mxu0 0.0
    %608 = vmatprep.subr.mxu0 0.0
    %609 = vmatpush1.xpose.msra.mxu0 0.0
    %610 = vmatprep.subr.mxu0 0.0
    %611 = vmatpush1.xpose.msra.mxu0 0.0
    %612 = vmatprep.subr.mxu0 0.0
    %613 = vmatpush1.xpose.msra.mxu0 0.0
    %614 = vmatprep.subr.mxu0 0.0
    %615 = vmatpush1.xpose.msra.mxu0 0.0
    %616 = vmatprep.subr.mxu0 0.0
    %617 = vmatpush1.xpose.msra.mxu0 0.0
    %618 = vmatprep.subr.mxu0 0.0
    %619 = vmatpush1.xpose.msra.mxu0 0.0
    %620 = vmatprep.subr.mxu0 0.0
    %621 = vmatpush1.xpose.msra.mxu0 0.0
    %622 = vmatprep.subr.mxu0 0.0
    %623 = vmatpush1.xpose.msra.mxu0 0.0
    %624 = vmatprep.subr.mxu0 0.0
    %625 = vmatpush1.xpose.msra.mxu0 0.0
    %626 = vmatprep.subr.mxu0 0.0
    %627 = vmatpush1.xpose.msra.mxu0 0.0
    %628 = vmatprep.subr.mxu0 0.0
    %629 = vmatpush1.xpose.msra.mxu0 0.0
    %630 = vmatprep.subr.mxu0 0.0
    %631 = vmatpush1.xpose.msra.mxu0 0.0
    %632 = vmatprep.subr.mxu0 0.0
    %633 = vmatpush1.xpose.msra.mxu0 0.0
    %634 = vmatprep.subr.mxu0 0.0
    %635 = vmatpush1.xpose.msra.mxu0 0.0
    %636 = vmatprep.subr.mxu0 0.0
    %637 = vmatpush1.xpose.msra.mxu0 0.0
    %638 = vmatprep.subr.mxu0 0.0
    %639 = vmatpush1.xpose.msra.mxu0 0.0
    %640 = vmatprep.subr.mxu0 0.0
    %641 = vmatpush1.xpose.msra.mxu0 0.0
    %642 = vmatprep.subr.mxu0 0.0
    %643 = vmatpush1.xpose.msra.mxu0 0.0
    %644 = vmatprep.subr.mxu0 0.0
    %645 = vmatpush1.xpose.msra.mxu0 0.0
    %646 = vmatprep.subr.mxu0 0.0
    %647 = vmatpush1.xpose.msra.mxu0 0.0
    %648 = vmatprep.subr.mxu0 0.0
    %649 = vmatpush1.xpose.msra.mxu0 0.0
    %650 = vmatprep.subr.mxu0 0.0
    %651 = vmatpush1.xpose.msra.mxu0 0.0
    %652 = vmatprep.subr.mxu0 0.0
    %653 = vmatpush1.xpose.msra.mxu0 0.0
    %654 = vmatprep.subr.mxu0 0.0
    %655 = vmatpush1.xpose.msra.mxu0 0.0
    %656 = vmatprep.subr.mxu0 0.0
    %657 = vmatpush1.xpose.msra.mxu0 0.0
    %658 = vmatprep.mubr.f32.mxu0 0.0
    %659 = vmatmul.mubr.f32.gmra.mrb[0].mxu0 %v589
    %v660 = vpop.f32.mrb[0].mxu0
    %v661 = vadd.f32 %v218, %v660
    %v662 = vpop.f32.mrb[0].mxu0
    %663 = vdwg.mxu0
    %v664 = vsel %vm511, %v585, -inf
    %665 = vmax.xlane.f32.xlu0 %v664
    %v666 = vpop.xlane.xlu0 %665
    %v667 = vsel %vm511, %v661, -inf
    %668 = vmax.xlane.f32.xlu0 %v667
    %v669 = vpop.xlane.xlu0 %668
    %v670 = vsub.f32 %v585, %v666
    %v671 = vsub.f32 %v661, %v669
    %v672 = vmul.f32 %v670, 1.442695
    %v673 = vpow.pop %v672
    %v674 = vmul.f32 %v671, 1.442695
    %v675 = vpow.pop %v674
    %v676 = vsel %vm511, %v673, 0.0
    %677 = vadd.xlane.f32.xlu0 %v676
    %v678 = vpop.xlane.xlu0 %677
    %v679 = vsel %vm511, %v675, 0.0
    %680 = vadd.xlane.f32.xlu0 %v679
    %v681 = vpop.xlane.xlu0 %680
    %v682 = vrcp.pop %v678
    %v683 = vrcp.pop %v681
    %v684 = vmul.f32 %v673, %v682
    %v685 = vmul.f32 %v675, %v683
    %v687 = vsel %vm511, %v684, 0
    %689 = vmatprep.subr.mxu0 0.0
    %690 = vmatpush1.msra.mxu0 %v503
    %691 = vmatprep.subr.mxu0 0.0
    %692 = vmatpush1.msra.mxu0 0.0
    %693 = vmatprep.subr.mxu0 0.0
    %694 = vmatpush1.msra.mxu0 0.0
    %695 = vmatprep.subr.mxu0 0.0
    %696 = vmatpush1.msra.mxu0 0.0
    %697 = vmatprep.subr.mxu0 0.0
    %698 = vmatpush1.msra.mxu0 0.0
    %699 = vmatprep.subr.mxu0 0.0
    %700 = vmatpush1.msra.mxu0 0.0
    %701 = vmatprep.subr.mxu0 0.0
    %702 = vmatpush1.msra.mxu0 0.0
    %703 = vmatprep.subr.mxu0 0.0
    %704 = vmatpush1.msra.mxu0 0.0
    %705 = vmatprep.subr.mxu0 0.0
    %706 = vmatpush1.msra.mxu0 0.0
    %707 = vmatprep.subr.mxu0 0.0
    %708 = vmatpush1.msra.mxu0 0.0
    %709 = vmatprep.subr.mxu0 0.0
    %710 = vmatpush1.msra.mxu0 0.0
    %711 = vmatprep.subr.mxu0 0.0
    %712 = vmatpush1.msra.mxu0 0.0
    %713 = vmatprep.subr.mxu0 0.0
    %714 = vmatpush1.msra.mxu0 0.0
    %715 = vmatprep.subr.mxu0 0.0
    %716 = vmatpush1.msra.mxu0 0.0
    %717 = vmatprep.subr.mxu0 0.0
    %718 = vmatpush1.msra.mxu0 0.0
    %719 = vmatprep.subr.mxu0 0.0
    %720 = vmatpush1.msra.mxu0 0.0
    %721 = vmatprep.subr.mxu0 0.0
    %722 = vmatpush1.msra.mxu0 0.0
    %723 = vmatprep.subr.mxu0 0.0
    %724 = vmatpush1.msra.mxu0 0.0
    %725 = vmatprep.subr.mxu0 0.0
    %726 = vmatpush1.msra.mxu0 0.0
    %727 = vmatprep.subr.mxu0 0.0
    %728 = vmatpush1.msra.mxu0 0.0
    %729 = vmatprep.subr.mxu0 0.0
    %730 = vmatpush1.msra.mxu0 0.0
    %731 = vmatprep.subr.mxu0 0.0
    %732 = vmatpush1.msra.mxu0 0.0
    %733 = vmatprep.subr.mxu0 0.0
    %734 = vmatpush1.msra.mxu0 0.0
    %735 = vmatprep.subr.mxu0 0.0
    %736 = vmatpush1.msra.mxu0 0.0
    %737 = vmatprep.subr.mxu0 0.0
    %738 = vmatpush1.msra.mxu0 0.0
    %739 = vmatprep.subr.mxu0 0.0
    %740 = vmatpush1.msra.mxu0 0.0
    %741 = vmatprep.subr.mxu0 0.0
    %742 = vmatpush1.msra.mxu0 0.0
    %743 = vmatprep.subr.mxu0 0.0
    %744 = vmatpush1.msra.mxu0 0.0
    %745 = vmatprep.subr.mxu0 0.0
    %746 = vmatpush1.msra.mxu0 0.0
    %747 = vmatprep.subr.mxu0 0.0
    %748 = vmatpush1.msra.mxu0 0.0
    %749 = vmatprep.subr.mxu0 0.0
    %750 = vmatpush1.msra.mxu0 0.0
    %751 = vmatprep.subr.mxu0 0.0
    %752 = vmatpush1.msra.mxu0 0.0
    %753 = vmatprep.mubr.f32.mxu0 0.0
    %754 = vmatmul.mubr.f32.gmra.mrb[0].mxu0 %v687
    %v755 = vpop.f32.mrb[0].mxu0
    %v756 = vadd.f32 0.0, %v755
    %v757 = vpop.f32.mrb[0].mxu0
    %758 = vdwg.mxu0
    %v760 = vsel %vm511, %v685, 0
    %762 = vmatprep.subr.mxu0 0.0
    %763 = vmatpush1.msra.mxu0 %v508
    %764 = vmatprep.subr.mxu0 0.0
    %765 = vmatpush1.msra.mxu0 0.0
    %766 = vmatprep.subr.mxu0 0.0
    %767 = vmatpush1.msra.mxu0 0.0
    %768 = vmatprep.subr.mxu0 0.0
    %769 = vmatpush1.msra.mxu0 0.0
    %770 = vmatprep.subr.mxu0 0.0
    %771 = vmatpush1.msra.mxu0 0.0
    %772 = vmatprep.subr.mxu0 0.0
    %773 = vmatpush1.msra.mxu0 0.0
    %774 = vmatprep.subr.mxu0 0.0
    %775 = vmatpush1.msra.mxu0 0.0
    %776 = vmatprep.subr.mxu0 0.0
    %777 = vmatpush1.msra.mxu0 0.0
    %778 = vmatprep.subr.mxu0 0.0
    %779 = vmatpush1.msra.mxu0 0.0
    %780 = vmatprep.subr.mxu0 0.0
    %781 = vmatpush1.msra.mxu0 0.0
    %782 = vmatprep.subr.mxu0 0.0
    %783 = vmatpush1.msra.mxu0 0.0
    %784 = vmatprep.subr.mxu0 0.0
    %785 = vmatpush1.msra.mxu0 0.0
    %786 = vmatprep.subr.mxu0 0.0
    %787 = vmatpush1.msra.mxu0 0.0
    %788 = vmatprep.subr.mxu0 0.0
    %789 = vmatpush1.msra.mxu0 0.0
    %790 = vmatprep.subr.mxu0 0.0
    %791 = vmatpush1.msra.mxu0 0.0
    %792 = vmatprep.subr.mxu0 0.0
    %793 = vmatpush1.msra.mxu0 0.0
    %794 = vmatprep.subr.mxu0 0.0
    %795 = vmatpush1.msra.mxu0 0.0
    %796 = vmatprep.subr.mxu0 0.0
    %797 = vmatpush1.msra.mxu0 0.0
    %798 = vmatprep.subr.mxu0 0.0
    %799 = vmatpush1.msra.mxu0 0.0
    %800 = vmatprep.subr.mxu0 0.0
    %801 = vmatpush1.msra.mxu0 0.0
    %802 = vmatprep.subr.mxu0 0.0
    %803 = vmatpush1.msra.mxu0 0.0
    %804 = vmatprep.subr.mxu0 0.0
    %805 = vmatpush1.msra.mxu0 0.0
    %806 = vmatprep.subr.mxu0 0.0
    %807 = vmatpush1.msra.mxu0 0.0
    %808 = vmatprep.subr.mxu0 0.0
    %809 = vmatpush1.msra.mxu0 0.0
    %810 = vmatprep.subr.mxu0 0.0
    %811 = vmatpush1.msra.mxu0 0.0
    %812 = vmatprep.subr.mxu0 0.0
    %813 = vmatpush1.msra.mxu0 0.0
    %814 = vmatprep.subr.mxu0 0.0
    %815 = vmatpush1.msra.mxu0 0.0
    %816 = vmatprep.subr.mxu0 0.0
    %817 = vmatpush1.msra.mxu0 0.0
    %818 = vmatprep.subr.mxu0 0.0
    %819 = vmatpush1.msra.mxu0 0.0
    %820 = vmatprep.subr.mxu0 0.0
    %821 = vmatpush1.msra.mxu0 0.0
    %822 = vmatprep.subr.mxu0 0.0
    %823 = vmatpush1.msra.mxu0 0.0
    %824 = vmatprep.subr.mxu0 0.0
    %825 = vmatpush1.msra.mxu0 0.0
    %826 = vmatprep.mubr.f32.mxu0 0.0
    %827 = vmatmul.mubr.f32.gmra.mrb[0].mxu0 %v760
    %v828 = vpop.f32.mrb[0].mxu0
    %v829 = vadd.f32 0.0, %v828
    %v830 = vpop.f32.mrb[0].mxu0
    %831 = vdwg.mxu0
    %v832 = vld [vmem:[%s11] sm:$0xff]
    %s833 = scalar_lea.vmem %s5, 32
    %v834 = vld [vmem:[%s833] sm:$0xff]
    %v835 = vld [vmem:[%s833 + $0x8] sm:$0xff]
    %v836 = vld [vmem:[%s833 + $0x10] sm:$0xff]
    %v837 = vld [vmem:[%s833 + $0x18] sm:$0xff]
    %s838 = scalar_lea.vmem %s8, 1
    %v839 = vld [vmem:[%s838] sm:$0x1]
    %v841 = vlaneseq
    %v842 = vshrl.u32 %v841, 7
    %v843 = vsub.s32 0, %v842
    %v844 = vrot.slane %v839, %v843
    %846 = vmatprep.subr.mxu0 0.0
    %847 = vmatpush1.msra.mxu0 %v834
    %848 = vmatprep.subr.mxu0 0.0
    %849 = vmatpush1.msra.mxu0 %v835
    %850 = vmatprep.subr.mxu0 0.0
    %851 = vmatpush1.msra.mxu0 %v836
    %852 = vmatprep.subr.mxu0 0.0
    %853 = vmatpush1.msra.mxu0 %v837
    %854 = vmatprep.subr.mxu0 0.0
    %855 = vmatpush1.msra.mxu0 0.0
    %856 = vmatprep.subr.mxu0 0.0
    %857 = vmatpush1.msra.mxu0 0.0
    %858 = vmatprep.subr.mxu0 0.0
    %859 = vmatpush1.msra.mxu0 0.0
    %860 = vmatprep.subr.mxu0 0.0
    %861 = vmatpush1.msra.mxu0 0.0
    %862 = vmatprep.subr.mxu0 0.0
    %863 = vmatpush1.msra.mxu0 0.0
    %864 = vmatprep.subr.mxu0 0.0
    %865 = vmatpush1.msra.mxu0 0.0
    %866 = vmatprep.subr.mxu0 0.0
    %867 = vmatpush1.msra.mxu0 0.0
    %868 = vmatprep.subr.mxu0 0.0
    %869 = vmatpush1.msra.mxu0 0.0
    %870 = vmatprep.subr.mxu0 0.0
    %871 = vmatpush1.msra.mxu0 0.0
    %872 = vmatprep.subr.mxu0 0.0
    %873 = vmatpush1.msra.mxu0 0.0
    %874 = vmatprep.subr.mxu0 0.0
    %875 = vmatpush1.msra.mxu0 0.0
    %876 = vmatprep.subr.mxu0 0.0
    %877 = vmatpush1.msra.mxu0 0.0
    %878 = vmatprep.subr.mxu0 0.0
    %879 = vmatpush1.msra.mxu0 0.0
    %880 = vmatprep.subr.mxu0 0.0
    %881 = vmatpush1.msra.mxu0 0.0
    %882 = vmatprep.subr.mxu0 0.0
    %883 = vmatpush1.msra.mxu0 0.0
    %884 = vmatprep.subr.mxu0 0.0
    %885 = vmatpush1.msra.mxu0 0.0
    %886 = vmatprep.subr.mxu0 0.0
    %887 = vmatpush1.msra.mxu0 0.0
    %888 = vmatprep.subr.mxu0 0.0
    %889 = vmatpush1.msra.mxu0 0.0
    %890 = vmatprep.subr.mxu0 0.0
    %891 = vmatpush1.msra.mxu0 0.0
    %892 = vmatprep.subr.mxu0 0.0
    %893 = vmatpush1.msra.mxu0 0.0
    %894 = vmatprep.subr.mxu0 0.0
    %895 = vmatpush1.msra.mxu0 0.0
    %896 = vmatprep.subr.mxu0 0.0
    %897 = vmatpush1.msra.mxu0 0.0
    %898 = vmatprep.subr.mxu0 0.0
    %899 = vmatpush1.msra.mxu0 0.0
    %900 = vmatprep.subr.mxu0 0.0
    %901 = vmatpush1.msra.mxu0 0.0
    %902 = vmatprep.subr.mxu0 0.0
    %903 = vmatpush1.msra.mxu0 0.0
    %904 = vmatprep.subr.mxu0 0.0
    %905 = vmatpush1.msra.mxu0 0.0
    %906 = vmatprep.subr.mxu0 0.0
    %907 = vmatpush1.msra.mxu0 0.0
    %908 = vmatprep.subr.mxu0 0.0
    %909 = vmatpush1.msra.mxu0 0.0
    %910 = vmatprep.mubr.f32.mxu0 0.0
    %911 = vmatmul.mubr.f32.gmra.mrb[0].mxu0 %v259
    %v912 = vpop.f32.mrb[0].mxu0
    %v913 = vadd.f32 %v844, %v912
    %v914 = vpop.f32.mrb[0].mxu0
    %915 = vmatprep.mubr.f32.mxu0 0.0
    %916 = vmatmul.mubr.f32.gmra.mrb[0].mxu0 %v262
    %v917 = vpop.f32.mrb[0].mxu0
    %v918 = vadd.f32 %v844, %v917
    %v919 = vpop.f32.mrb[0].mxu0
    %920 = vdwg.mxu0
    %s921 = scalar_lea.vmem %s6, 32
    %v922 = vld [vmem:[%s921] sm:$0xff]
    %v923 = vld [vmem:[%s921 + $0x8] sm:$0xff]
    %v924 = vld [vmem:[%s921 + $0x10] sm:$0xff]
    %v925 = vld [vmem:[%s921 + $0x18] sm:$0xff]
    %s926 = scalar_lea.vmem %s9, 1
    %v927 = vld [vmem:[%s926] sm:$0x1]
    %v929 = vlaneseq
    %v930 = vshrl.u32 %v929, 7
    %v931 = vsub.s32 0, %v930
    %v932 = vrot.slane %v927, %v931
    %934 = vmatprep.subr.mxu0 0.0
    %935 = vmatpush1.msra.mxu0 %v922
    %936 = vmatprep.subr.mxu0 0.0
    %937 = vmatpush1.msra.mxu0 %v923
    %938 = vmatprep.subr.mxu0 0.0
    %939 = vmatpush1.msra.mxu0 %v924
    %940 = vmatprep.subr.mxu0 0.0
    %941 = vmatpush1.msra.mxu0 %v925
    %942 = vmatprep.subr.mxu0 0.0
    %943 = vmatpush1.msra.mxu0 0.0
    %944 = vmatprep.subr.mxu0 0.0
    %945 = vmatpush1.msra.mxu0 0.0
    %946 = vmatprep.subr.mxu0 0.0
    %947 = vmatpush1.msra.mxu0 0.0
    %948 = vmatprep.subr.mxu0 0.0
    %949 = vmatpush1.msra.mxu0 0.0
    %950 = vmatprep.subr.mxu0 0.0
    %951 = vmatpush1.msra.mxu0 0.0
    %952 = vmatprep.subr.mxu0 0.0
    %953 = vmatpush1.msra.mxu0 0.0
    %954 = vmatprep.subr.mxu0 0.0
    %955 = vmatpush1.msra.mxu0 0.0
    %956 = vmatprep.subr.mxu0 0.0
    %957 = vmatpush1.msra.mxu0 0.0
    %958 = vmatprep.subr.mxu0 0.0
    %959 = vmatpush1.msra.mxu0 0.0
    %960 = vmatprep.subr.mxu0 0.0
    %961 = vmatpush1.msra.mxu0 0.0
    %962 = vmatprep.subr.mxu0 0.0
    %963 = vmatpush1.msra.mxu0 0.0
    %964 = vmatprep.subr.mxu0 0.0
    %965 = vmatpush1.msra.mxu0 0.0
    %966 = vmatprep.subr.mxu0 0.0
    %967 = vmatpush1.msra.mxu0 0.0
    %968 = vmatprep.subr.mxu0 0.0
    %969 = vmatpush1.msra.mxu0 0.0
    %970 = vmatprep.subr.mxu0 0.0
    %971 = vmatpush1.msra.mxu0 0.0
    %972 = vmatprep.subr.mxu0 0.0
    %973 = vmatpush1.msra.mxu0 0.0
    %974 = vmatprep.subr.mxu0 0.0
    %975 = vmatpush1.msra.mxu0 0.0
    %976 = vmatprep.subr.mxu0 0.0
    %977 = vmatpush1.msra.mxu0 0.0
    %978 = vmatprep.subr.mxu0 0.0
    %979 = vmatpush1.msra.mxu0 0.0
    %980 = vmatprep.subr.mxu0 0.0
    %981 = vmatpush1.msra.mxu0 0.0
    %982 = vmatprep.subr.mxu0 0.0
    %983 = vmatpush1.msra.mxu0 0.0
    %984 = vmatprep.subr.mxu0 0.0
    %985 = vmatpush1.msra.mxu0 0.0
    %986 = vmatprep.subr.mxu0 0.0
    %987 = vmatpush1.msra.mxu0 0.0
    %988 = vmatprep.subr.mxu0 0.0
    %989 = vmatpush1.msra.mxu0 0.0
    %990 = vmatprep.subr.mxu0 0.0
    %991 = vmatpush1.msra.mxu0 0.0
    %992 = vmatprep.subr.mxu0 0.0
    %993 = vmatpush1.msra.mxu0 0.0
    %994 = vmatprep.subr.mxu0 0.0
    %995 = vmatpush1.msra.mxu0 0.0
    %996 = vmatprep.subr.mxu0 0.0
    %997 = vmatpush1.msra.mxu0 0.0
    %998 = vmatprep.mubr.f32.mxu0 0.0
    %999 = vmatmul.mubr.f32.gmra.mrb[0].mxu0 %v259
    %v1000 = vpop.f32.mrb[0].mxu0
    %v1001 = vadd.f32 %v932, %v1000
    %v1002 = vpop.f32.mrb[0].mxu0
    %1003 = vmatprep.mubr.f32.mxu0 0.0
    %1004 = vmatmul.mubr.f32.gmra.mrb[0].mxu0 %v262
    %v1005 = vpop.f32.mrb[0].mxu0
    %v1006 = vadd.f32 %v932, %v1005
    %v1007 = vpop.f32.mrb[0].mxu0
    %1008 = vdwg.mxu0
    %s1009 = scalar_lea.vmem %s7, 32
    %v1010 = vld [vmem:[%s1009] sm:$0xff]
    %v1011 = vld [vmem:[%s1009 + $0x8] sm:$0xff]
    %v1012 = vld [vmem:[%s1009 + $0x10] sm:$0xff]
    %v1013 = vld [vmem:[%s1009 + $0x18] sm:$0xff]
    %s1014 = scalar_lea.vmem %s10, 1
    %v1015 = vld [vmem:[%s1014] sm:$0x1]
    %v1017 = vlaneseq
    %v1018 = vshrl.u32 %v1017, 7
    %v1019 = vsub.s32 0, %v1018
    %v1020 = vrot.slane %v1015, %v1019
    %1022 = vmatprep.subr.mxu0 0.0
    %1023 = vmatpush1.msra.mxu0 %v1010
    %1024 = vmatprep.subr.mxu0 0.0
    %1025 = vmatpush1.msra.mxu0 %v1011
    %1026 = vmatprep.subr.mxu0 0.0
    %1027 = vmatpush1.msra.mxu0 %v1012
    %1028 = vmatprep.subr.mxu0 0.0
    %1029 = vmatpush1.msra.mxu0 %v1013
    %1030 = vmatprep.subr.mxu0 0.0
    %1031 = vmatpush1.msra.mxu0 0.0
    %1032 = vmatprep.subr.mxu0 0.0
    %1033 = vmatpush1.msra.mxu0 0.0
    %1034 = vmatprep.subr.mxu0 0.0
    %1035 = vmatpush1.msra.mxu0 0.0
    %1036 = vmatprep.subr.mxu0 0.0
    %1037 = vmatpush1.msra.mxu0 0.0
    %1038 = vmatprep.subr.mxu0 0.0
    %1039 = vmatpush1.msra.mxu0 0.0
    %1040 = vmatprep.subr.mxu0 0.0
    %1041 = vmatpush1.msra.mxu0 0.0
    %1042 = vmatprep.subr.mxu0 0.0
    %1043 = vmatpush1.msra.mxu0 0.0
    %1044 = vmatprep.subr.mxu0 0.0
    %1045 = vmatpush1.msra.mxu0 0.0
    %1046 = vmatprep.subr.mxu0 0.0
    %1047 = vmatpush1.msra.mxu0 0.0
    %1048 = vmatprep.subr.mxu0 0.0
    %1049 = vmatpush1.msra.mxu0 0.0
    %1050 = vmatprep.subr.mxu0 0.0
    %1051 = vmatpush1.msra.mxu0 0.0
    %1052 = vmatprep.subr.mxu0 0.0
    %1053 = vmatpush1.msra.mxu0 0.0
    %1054 = vmatprep.subr.mxu0 0.0
    %1055 = vmatpush1.msra.mxu0 0.0
    %1056 = vmatprep.subr.mxu0 0.0
    %1057 = vmatpush1.msra.mxu0 0.0
    %1058 = vmatprep.subr.mxu0 0.0
    %1059 = vmatpush1.msra.mxu0 0.0
    %1060 = vmatprep.subr.mxu0 0.0
    %1061 = vmatpush1.msra.mxu0 0.0
    %1062 = vmatprep.subr.mxu0 0.0
    %1063 = vmatpush1.msra.mxu0 0.0
    %1064 = vmatprep.subr.mxu0 0.0
    %1065 = vmatpush1.msra.mxu0 0.0
    %1066 = vmatprep.subr.mxu0 0.0
    %1067 = vmatpush1.msra.mxu0 0.0
    %1068 = vmatprep.subr.mxu0 0.0
    %1069 = vmatpush1.msra.mxu0 0.0
    %1070 = vmatprep.subr.mxu0 0.0
    %1071 = vmatpush1.msra.mxu0 0.0
    %1072 = vmatprep.subr.mxu0 0.0
    %1073 = vmatpush1.msra.mxu0 0.0
    %1074 = vmatprep.subr.mxu0 0.0
    %1075 = vmatpush1.msra.mxu0 0.0
    %1076 = vmatprep.subr.mxu0 0.0
    %1077 = vmatpush1.msra.mxu0 0.0
    %1078 = vmatprep.subr.mxu0 0.0
    %1079 = vmatpush1.msra.mxu0 0.0
    %1080 = vmatprep.subr.mxu0 0.0
    %1081 = vmatpush1.msra.mxu0 0.0
    %1082 = vmatprep.subr.mxu0 0.0
    %1083 = vmatpush1.msra.mxu0 0.0
    %1084 = vmatprep.subr.mxu0 0.0
    %1085 = vmatpush1.msra.mxu0 0.0
    %1086 = vmatprep.mubr.f32.mxu0 0.0
    %1087 = vmatmul.mubr.f32.gmra.mrb[0].mxu0 %v259
    %v1088 = vpop.f32.mrb[0].mxu0
    %v1089 = vadd.f32 %v1020, %v1088
    %v1090 = vpop.f32.mrb[0].mxu0
    %1091 = vmatprep.mubr.f32.mxu0 0.0
    %1092 = vmatmul.mubr.f32.gmra.mrb[0].mxu0 %v262
    %v1093 = vpop.f32.mrb[0].mxu0
    %v1094 = vadd.f32 %v1020, %v1093
    %v1095 = vpop.f32.mrb[0].mxu0
    %1096 = vdwg.mxu0
    %v1098 = vsel %vm511, %v913, 0
    %v1101 = vsel %vm511, %v1001, 0
    %1103 = vmatprep.subr.mxu0 0.0
    %1104 = vmatpush1.xpose.msra.mxu0 %v1101
    %1105 = vmatprep.subr.mxu0 0.0
    %1106 = vmatpush1.xpose.msra.mxu0 0.0
    %1107 = vmatprep.subr.mxu0 0.0
    %1108 = vmatpush1.xpose.msra.mxu0 0.0
    %1109 = vmatprep.subr.mxu0 0.0
    %1110 = vmatpush1.xpose.msra.mxu0 0.0
    %1111 = vmatprep.subr.mxu0 0.0
    %1112 = vmatpush1.xpose.msra.mxu0 0.0
    %1113 = vmatprep.subr.mxu0 0.0
    %1114 = vmatpush1.xpose.msra.mxu0 0.0
    %1115 = vmatprep.subr.mxu0 0.0
    %1116 = vmatpush1.xpose.msra.mxu0 0.0
    %1117 = vmatprep.subr.mxu0 0.0
    %1118 = vmatpush1.xpose.msra.mxu0 0.0
    %1119 = vmatprep.subr.mxu0 0.0
    %1120 = vmatpush1.xpose.msra.mxu0 0.0
    %1121 = vmatprep.subr.mxu0 0.0
    %1122 = vmatpush1.xpose.msra.mxu0 0.0
    %1123 = vmatprep.subr.mxu0 0.0
    %1124 = vmatpush1.xpose.msra.mxu0 0.0
    %1125 = vmatprep.subr.mxu0 0.0
    %1126 = vmatpush1.xpose.msra.mxu0 0.0
    %1127 = vmatprep.subr.mxu0 0.0
    %1128 = vmatpush1.xpose.msra.mxu0 0.0
    %1129 = vmatprep.subr.mxu0 0.0
    %1130 = vmatpush1.xpose.msra.mxu0 0.0
    %1131 = vmatprep.subr.mxu0 0.0
    %1132 = vmatpush1.xpose.msra.mxu0 0.0
    %1133 = vmatprep.subr.mxu0 0.0
    %1134 = vmatpush1.xpose.msra.mxu0 0.0
    %1135 = vmatprep.subr.mxu0 0.0
    %1136 = vmatpush1.xpose.msra.mxu0 0.0
    %1137 = vmatprep.subr.mxu0 0.0
    %1138 = vmatpush1.xpose.msra.mxu0 0.0
    %1139 = vmatprep.subr.mxu0 0.0
    %1140 = vmatpush1.xpose.msra.mxu0 0.0
    %1141 = vmatprep.subr.mxu0 0.0
    %1142 = vmatpush1.xpose.msra.mxu0 0.0
    %1143 = vmatprep.subr.mxu0 0.0
    %1144 = vmatpush1.xpose.msra.mxu0 0.0
    %1145 = vmatprep.subr.mxu0 0.0
    %1146 = vmatpush1.xpose.msra.mxu0 0.0
    %1147 = vmatprep.subr.mxu0 0.0
    %1148 = vmatpush1.xpose.msra.mxu0 0.0
    %1149 = vmatprep.subr.mxu0 0.0
    %1150 = vmatpush1.xpose.msra.mxu0 0.0
    %1151 = vmatprep.subr.mxu0 0.0
    %1152 = vmatpush1.xpose.msra.mxu0 0.0
    %1153 = vmatprep.subr.mxu0 0.0
    %1154 = vmatpush1.xpose.msra.mxu0 0.0
    %1155 = vmatprep.subr.mxu0 0.0
    %1156 = vmatpush1.xpose.msra.mxu0 0.0
    %1157 = vmatprep.subr.mxu0 0.0
    %1158 = vmatpush1.xpose.msra.mxu0 0.0
    %1159 = vmatprep.subr.mxu0 0.0
    %1160 = vmatpush1.xpose.msra.mxu0 0.0
    %1161 = vmatprep.subr.mxu0 0.0
    %1162 = vmatpush1.xpose.msra.mxu0 0.0
    %1163 = vmatprep.subr.mxu0 0.0
    %1164 = vmatpush1.xpose.msra.mxu0 0.0
    %1165 = vmatprep.subr.mxu0 0.0
    %1166 = vmatpush1.xpose.msra.mxu0 0.0
    %1167 = vmatprep.mubr.f32.mxu0 0.0
    %1168 = vmatmul.mubr.f32.gmra.mrb[0].mxu0 %v1098
    %v1169 = vpop.f32.mrb[0].mxu0
    %v1170 = vadd.f32 %v217, %v1169
    %v1171 = vpop.f32.mrb[0].mxu0
    %1172 = vdwg.mxu0
    %v1174 = vsel %vm511, %v918, 0
    %v1177 = vsel %vm511, %v1006, 0
    %1179 = vmatprep.subr.mxu0 0.0
    %1180 = vmatpush1.xpose.msra.mxu0 %v1177
    %1181 = vmatprep.subr.mxu0 0.0
    %1182 = vmatpush1.xpose.msra.mxu0 0.0
    %1183 = vmatprep.subr.mxu0 0.0
    %1184 = vmatpush1.xpose.msra.mxu0 0.0
    %1185 = vmatprep.subr.mxu0 0.0
    %1186 = vmatpush1.xpose.msra.mxu0 0.0
    %1187 = vmatprep.subr.mxu0 0.0
    %1188 = vmatpush1.xpose.msra.mxu0 0.0
    %1189 = vmatprep.subr.mxu0 0.0
    %1190 = vmatpush1.xpose.msra.mxu0 0.0
    %1191 = vmatprep.subr.mxu0 0.0
    %1192 = vmatpush1.xpose.msra.mxu0 0.0
    %1193 = vmatprep.subr.mxu0 0.0
    %1194 = vmatpush1.xpose.msra.mxu0 0.0
    %1195 = vmatprep.subr.mxu0 0.0
    %1196 = vmatpush1.xpose.msra.mxu0 0.0
    %1197 = vmatprep.subr.mxu0 0.0
    %1198 = vmatpush1.xpose.msra.mxu0 0.0
    %1199 = vmatprep.subr.mxu0 0.0
    %1200 = vmatpush1.xpose.msra.mxu0 0.0
    %1201 = vmatprep.subr.mxu0 0.0
    %1202 = vmatpush1.xpose.msra.mxu0 0.0
    %1203 = vmatprep.subr.mxu0 0.0
    %1204 = vmatpush1.xpose.msra.mxu0 0.0
    %1205 = vmatprep.subr.mxu0 0.0
    %1206 = vmatpush1.xpose.msra.mxu0 0.0
    %1207 = vmatprep.subr.mxu0 0.0
    %1208 = vmatpush1.xpose.msra.mxu0 0.0
    %1209 = vmatprep.subr.mxu0 0.0
    %1210 = vmatpush1.xpose.msra.mxu0 0.0
    %1211 = vmatprep.subr.mxu0 0.0
    %1212 = vmatpush1.xpose.msra.mxu0 0.0
    %1213 = vmatprep.subr.mxu0 0.0
    %1214 = vmatpush1.xpose.msra.mxu0 0.0
    %1215 = vmatprep.subr.mxu0 0.0
    %1216 = vmatpush1.xpose.msra.mxu0 0.0
    %1217 = vmatprep.subr.mxu0 0.0
    %1218 = vmatpush1.xpose.msra.mxu0 0.0
    %1219 = vmatprep.subr.mxu0 0.0
    %1220 = vmatpush1.xpose.msra.mxu0 0.0
    %1221 = vmatprep.subr.mxu0 0.0
    %1222 = vmatpush1.xpose.msra.mxu0 0.0
    %1223 = vmatprep.subr.mxu0 0.0
    %1224 = vmatpush1.xpose.msra.mxu0 0.0
    %1225 = vmatprep.subr.mxu0 0.0
    %1226 = vmatpush1.xpose.msra.mxu0 0.0
    %1227 = vmatprep.subr.mxu0 0.0
    %1228 = vmatpush1.xpose.msra.mxu0 0.0
    %1229 = vmatprep.subr.mxu0 0.0
    %1230 = vmatpush1.xpose.msra.mxu0 0.0
    %1231 = vmatprep.subr.mxu0 0.0
    %1232 = vmatpush1.xpose.msra.mxu0 0.0
    %1233 = vmatprep.subr.mxu0 0.0
    %1234 = vmatpush1.xpose.msra.mxu0 0.0
    %1235 = vmatprep.subr.mxu0 0.0
    %1236 = vmatpush1.xpose.msra.mxu0 0.0
    %1237 = vmatprep.subr.mxu0 0.0
    %1238 = vmatpush1.xpose.msra.mxu0 0.0
    %1239 = vmatprep.subr.mxu0 0.0
    %1240 = vmatpush1.xpose.msra.mxu0 0.0
    %1241 = vmatprep.subr.mxu0 0.0
    %1242 = vmatpush1.xpose.msra.mxu0 0.0
    %1243 = vmatprep.mubr.f32.mxu0 0.0
    %1244 = vmatmul.mubr.f32.gmra.mrb[0].mxu0 %v1174
    %v1245 = vpop.f32.mrb[0].mxu0
    %v1246 = vadd.f32 %v218, %v1245
    %v1247 = vpop.f32.mrb[0].mxu0
    %1248 = vdwg.mxu0
    %v1249 = vsel %vm511, %v1170, -inf
    %1250 = vmax.xlane.f32.xlu0 %v1249
    %v1251 = vpop.xlane.xlu0 %1250
    %v1252 = vsel %vm511, %v1246, -inf
    %1253 = vmax.xlane.f32.xlu0 %v1252
    %v1254 = vpop.xlane.xlu0 %1253
    %v1255 = vsub.f32 %v1170, %v1251
    %v1256 = vsub.f32 %v1246, %v1254
    %v1257 = vmul.f32 %v1255, 1.442695
    %v1258 = vpow.pop %v1257
    %v1259 = vmul.f32 %v1256, 1.442695
    %v1260 = vpow.pop %v1259
    %v1261 = vsel %vm511, %v1258, 0.0
    %1262 = vadd.xlane.f32.xlu0 %v1261
    %v1263 = vpop.xlane.xlu0 %1262
    %v1264 = vsel %vm511, %v1260, 0.0
    %1265 = vadd.xlane.f32.xlu0 %v1264
    %v1266 = vpop.xlane.xlu0 %1265
    %v1267 = vrcp.pop %v1263
    %v1268 = vrcp.pop %v1266
    %v1269 = vmul.f32 %v1258, %v1267
    %v1270 = vmul.f32 %v1260, %v1268
    %v1272 = vsel %vm511, %v1269, 0
    %1274 = vmatprep.subr.mxu0 0.0
    %1275 = vmatpush1.msra.mxu0 %v1089
    %1276 = vmatprep.subr.mxu0 0.0
    %1277 = vmatpush1.msra.mxu0 0.0
    %1278 = vmatprep.subr.mxu0 0.0
    %1279 = vmatpush1.msra.mxu0 0.0
    %1280 = vmatprep.subr.mxu0 0.0
    %1281 = vmatpush1.msra.mxu0 0.0
    %1282 = vmatprep.subr.mxu0 0.0
    %1283 = vmatpush1.msra.mxu0 0.0
    %1284 = vmatprep.subr.mxu0 0.0
    %1285 = vmatpush1.msra.mxu0 0.0
    %1286 = vmatprep.subr.mxu0 0.0
    %1287 = vmatpush1.msra.mxu0 0.0
    %1288 = vmatprep.subr.mxu0 0.0
    %1289 = vmatpush1.msra.mxu0 0.0
    %1290 = vmatprep.subr.mxu0 0.0
    %1291 = vmatpush1.msra.mxu0 0.0
    %1292 = vmatprep.subr.mxu0 0.0
    %1293 = vmatpush1.msra.mxu0 0.0
    %1294 = vmatprep.subr.mxu0 0.0
    %1295 = vmatpush1.msra.mxu0 0.0
    %1296 = vmatprep.subr.mxu0 0.0
    %1297 = vmatpush1.msra.mxu0 0.0
    %1298 = vmatprep.subr.mxu0 0.0
    %1299 = vmatpush1.msra.mxu0 0.0
    %1300 = vmatprep.subr.mxu0 0.0
    %1301 = vmatpush1.msra.mxu0 0.0
    %1302 = vmatprep.subr.mxu0 0.0
    %1303 = vmatpush1.msra.mxu0 0.0
    %1304 = vmatprep.subr.mxu0 0.0
    %1305 = vmatpush1.msra.mxu0 0.0
    %1306 = vmatprep.subr.mxu0 0.0
    %1307 = vmatpush1.msra.mxu0 0.0
    %1308 = vmatprep.subr.mxu0 0.0
    %1309 = vmatpush1.msra.mxu0 0.0
    %1310 = vmatprep.subr.mxu0 0.0
    %1311 = vmatpush1.msra.mxu0 0.0
    %1312 = vmatprep.subr.mxu0 0.0
    %1313 = vmatpush1.msra.mxu0 0.0
    %1314 = vmatprep.subr.mxu0 0.0
    %1315 = vmatpush1.msra.mxu0 0.0
    %1316 = vmatprep.subr.mxu0 0.0
    %1317 = vmatpush1.msra.mxu0 0.0
    %1318 = vmatprep.subr.mxu0 0.0
    %1319 = vmatpush1.msra.mxu0 0.0
    %1320 = vmatprep.subr.mxu0 0.0
    %1321 = vmatpush1.msra.mxu0 0.0
    %1322 = vmatprep.subr.mxu0 0.0
    %1323 = vmatpush1.msra.mxu0 0.0
    %1324 = vmatprep.subr.mxu0 0.0
    %1325 = vmatpush1.msra.mxu0 0.0
    %1326 = vmatprep.subr.mxu0 0.0
    %1327 = vmatpush1.msra.mxu0 0.0
    %1328 = vmatprep.subr.mxu0 0.0
    %1329 = vmatpush1.msra.mxu0 0.0
    %1330 = vmatprep.subr.mxu0 0.0
    %1331 = vmatpush1.msra.mxu0 0.0
    %1332 = vmatprep.subr.mxu0 0.0
    %1333 = vmatpush1.msra.mxu0 0.0
    %1334 = vmatprep.subr.mxu0 0.0
    %1335 = vmatpush1.msra.mxu0 0.0
    %1336 = vmatprep.subr.mxu0 0.0
    %1337 = vmatpush1.msra.mxu0 0.0
    %1338 = vmatprep.mubr.f32.mxu0 0.0
    %1339 = vmatmul.mubr.f32.gmra.mrb[0].mxu0 %v1272
    %v1340 = vpop.f32.mrb[0].mxu0
    %v1341 = vadd.f32 0.0, %v1340
    %v1342 = vpop.f32.mrb[0].mxu0
    %1343 = vdwg.mxu0
    %v1345 = vsel %vm511, %v1270, 0
    %1347 = vmatprep.subr.mxu0 0.0
    %1348 = vmatpush1.msra.mxu0 %v1094
    %1349 = vmatprep.subr.mxu0 0.0
    %1350 = vmatpush1.msra.mxu0 0.0
    %1351 = vmatprep.subr.mxu0 0.0
    %1352 = vmatpush1.msra.mxu0 0.0
    %1353 = vmatprep.subr.mxu0 0.0
    %1354 = vmatpush1.msra.mxu0 0.0
    %1355 = vmatprep.subr.mxu0 0.0
    %1356 = vmatpush1.msra.mxu0 0.0
    %1357 = vmatprep.subr.mxu0 0.0
    %1358 = vmatpush1.msra.mxu0 0.0
    %1359 = vmatprep.subr.mxu0 0.0
    %1360 = vmatpush1.msra.mxu0 0.0
    %1361 = vmatprep.subr.mxu0 0.0
    %1362 = vmatpush1.msra.mxu0 0.0
    %1363 = vmatprep.subr.mxu0 0.0
    %1364 = vmatpush1.msra.mxu0 0.0
    %1365 = vmatprep.subr.mxu0 0.0
    %1366 = vmatpush1.msra.mxu0 0.0
    %1367 = vmatprep.subr.mxu0 0.0
    %1368 = vmatpush1.msra.mxu0 0.0
    %1369 = vmatprep.subr.mxu0 0.0
    %1370 = vmatpush1.msra.mxu0 0.0
    %1371 = vmatprep.subr.mxu0 0.0
    %1372 = vmatpush1.msra.mxu0 0.0
    %1373 = vmatprep.subr.mxu0 0.0
    %1374 = vmatpush1.msra.mxu0 0.0
    %1375 = vmatprep.subr.mxu0 0.0
    %1376 = vmatpush1.msra.mxu0 0.0
    %1377 = vmatprep.subr.mxu0 0.0
    %1378 = vmatpush1.msra.mxu0 0.0
    %1379 = vmatprep.subr.mxu0 0.0
    %1380 = vmatpush1.msra.mxu0 0.0
    %1381 = vmatprep.subr.mxu0 0.0
    %1382 = vmatpush1.msra.mxu0 0.0
    %1383 = vmatprep.subr.mxu0 0.0
    %1384 = vmatpush1.msra.mxu0 0.0
    %1385 = vmatprep.subr.mxu0 0.0
    %1386 = vmatpush1.msra.mxu0 0.0
    %1387 = vmatprep.subr.mxu0 0.0
    %1388 = vmatpush1.msra.mxu0 0.0
    %1389 = vmatprep.subr.mxu0 0.0
    %1390 = vmatpush1.msra.mxu0 0.0
    %1391 = vmatprep.subr.mxu0 0.0
    %1392 = vmatpush1.msra.mxu0 0.0
    %1393 = vmatprep.subr.mxu0 0.0
    %1394 = vmatpush1.msra.mxu0 0.0
    %1395 = vmatprep.subr.mxu0 0.0
    %1396 = vmatpush1.msra.mxu0 0.0
    %1397 = vmatprep.subr.mxu0 0.0
    %1398 = vmatpush1.msra.mxu0 0.0
    %1399 = vmatprep.subr.mxu0 0.0
    %1400 = vmatpush1.msra.mxu0 0.0
    %1401 = vmatprep.subr.mxu0 0.0
    %1402 = vmatpush1.msra.mxu0 0.0
    %1403 = vmatprep.subr.mxu0 0.0
    %1404 = vmatpush1.msra.mxu0 0.0
    %1405 = vmatprep.subr.mxu0 0.0
    %1406 = vmatpush1.msra.mxu0 0.0
    %1407 = vmatprep.subr.mxu0 0.0
    %1408 = vmatpush1.msra.mxu0 0.0
    %1409 = vmatprep.subr.mxu0 0.0
    %1410 = vmatpush1.msra.mxu0 0.0
    %1411 = vmatprep.mubr.f32.mxu0 0.0
    %1412 = vmatmul.mubr.f32.gmra.mrb[0].mxu0 %v1345
    %v1413 = vpop.f32.mrb[0].mxu0
    %v1414 = vadd.f32 0.0, %v1413
    %v1415 = vpop.f32.mrb[0].mxu0
    %1416 = vdwg.mxu0
    %s1417 = scalar_lea.vmem %s11, 8
    %v1418 = vld [vmem:[%s1417] sm:$0xff]
    %v1420 = vsel %vm511, %v1341, 0
    %v1423 = vsel %vm511, %v1414, 0
    %1425 = vmatprep.subr.mxu0 0.0
    %1426 = vmatpush1.msra.mxu0 %v1418
    %1427 = vmatprep.subr.mxu0 0.0
    %1428 = vmatpush1.msra.mxu0 0.0
    %1429 = vmatprep.subr.mxu0 0.0
    %1430 = vmatpush1.msra.mxu0 0.0
    %1431 = vmatprep.subr.mxu0 0.0
    %1432 = vmatpush1.msra.mxu0 0.0
    %1433 = vmatprep.subr.mxu0 0.0
    %1434 = vmatpush1.msra.mxu0 0.0
    %1435 = vmatprep.subr.mxu0 0.0
    %1436 = vmatpush1.msra.mxu0 0.0
    %1437 = vmatprep.subr.mxu0 0.0
    %1438 = vmatpush1.msra.mxu0 0.0
    %1439 = vmatprep.subr.mxu0 0.0
    %1440 = vmatpush1.msra.mxu0 0.0
    %1441 = vmatprep.subr.mxu0 0.0
    %1442 = vmatpush1.msra.mxu0 0.0
    %1443 = vmatprep.subr.mxu0 0.0
    %1444 = vmatpush1.msra.mxu0 0.0
    %1445 = vmatprep.subr.mxu0 0.0
    %1446 = vmatpush1.msra.mxu0 0.0
    %1447 = vmatprep.subr.mxu0 0.0
    %1448 = vmatpush1.msra.mxu0 0.0
    %1449 = vmatprep.subr.mxu0 0.0
    %1450 = vmatpush1.msra.mxu0 0.0
    %1451 = vmatprep.subr.mxu0 0.0
    %1452 = vmatpush1.msra.mxu0 0.0
    %1453 = vmatprep.subr.mxu0 0.0
    %1454 = vmatpush1.msra.mxu0 0.0
    %1455 = vmatprep.subr.mxu0 0.0
    %1456 = vmatpush1.msra.mxu0 0.0
    %1457 = vmatprep.subr.mxu0 0.0
    %1458 = vmatpush1.msra.mxu0 0.0
    %1459 = vmatprep.subr.mxu0 0.0
    %1460 = vmatpush1.msra.mxu0 0.0
    %1461 = vmatprep.subr.mxu0 0.0
    %1462 = vmatpush1.msra.mxu0 0.0
    %1463 = vmatprep.subr.mxu0 0.0
    %1464 = vmatpush1.msra.mxu0 0.0
    %1465 = vmatprep.subr.mxu0 0.0
    %1466 = vmatpush1.msra.mxu0 0.0
    %1467 = vmatprep.subr.mxu0 0.0
    %1468 = vmatpush1.msra.mxu0 0.0
    %1469 = vmatprep.subr.mxu0 0.0
    %1470 = vmatpush1.msra.mxu0 0.0
    %1471 = vmatprep.subr.mxu0 0.0
    %1472 = vmatpush1.msra.mxu0 0.0
    %1473 = vmatprep.subr.mxu0 0.0
    %1474 = vmatpush1.msra.mxu0 0.0
    %1475 = vmatprep.subr.mxu0 0.0
    %1476 = vmatpush1.msra.mxu0 0.0
    %1477 = vmatprep.subr.mxu0 0.0
    %1478 = vmatpush1.msra.mxu0 0.0
    %1479 = vmatprep.subr.mxu0 0.0
    %1480 = vmatpush1.msra.mxu0 0.0
    %1481 = vmatprep.subr.mxu0 0.0
    %1482 = vmatpush1.msra.mxu0 0.0
    %1483 = vmatprep.subr.mxu0 0.0
    %1484 = vmatpush1.msra.mxu0 0.0
    %1485 = vmatprep.subr.mxu0 0.0
    %1486 = vmatpush1.msra.mxu0 0.0
    %1487 = vmatprep.subr.mxu0 0.0
    %1488 = vmatpush1.msra.mxu0 0.0
    %1489 = vmatprep.mubr.f32.mxu0 0.0
    %1490 = vmatmul.mubr.f32.gmra.mrb[0].mxu0 %v1420
    %v1491 = vpop.f32.mrb[0].mxu0
    %v1492 = vadd.f32 0.0, %v1491
    %v1493 = vpop.f32.mrb[0].mxu0
    %1494 = vmatprep.mubr.f32.mxu0 0.0
    %1495 = vmatmul.mubr.f32.gmra.mrb[0].mxu0 %v1423
    %v1496 = vpop.f32.mrb[0].mxu0
    %v1497 = vadd.f32 0.0, %v1496
    %v1498 = vpop.f32.mrb[0].mxu0
    %1499 = vdwg.mxu0
    %v1501 = vsel %vm511, %v756, 0
    %v1504 = vsel %vm511, %v829, 0
    %1506 = vmatprep.subr.mxu0 0.0
    %1507 = vmatpush1.msra.mxu0 %v832
    %1508 = vmatprep.subr.mxu0 0.0
    %1509 = vmatpush1.msra.mxu0 0.0
    %1510 = vmatprep.subr.mxu0 0.0
    %1511 = vmatpush1.msra.mxu0 0.0
    %1512 = vmatprep.subr.mxu0 0.0
    %1513 = vmatpush1.msra.mxu0 0.0
    %1514 = vmatprep.subr.mxu0 0.0
    %1515 = vmatpush1.msra.mxu0 0.0
    %1516 = vmatprep.subr.mxu0 0.0
    %1517 = vmatpush1.msra.mxu0 0.0
    %1518 = vmatprep.subr.mxu0 0.0
    %1519 = vmatpush1.msra.mxu0 0.0
    %1520 = vmatprep.subr.mxu0 0.0
    %1521 = vmatpush1.msra.mxu0 0.0
    %1522 = vmatprep.subr.mxu0 0.0
    %1523 = vmatpush1.msra.mxu0 0.0
    %1524 = vmatprep.subr.mxu0 0.0
    %1525 = vmatpush1.msra.mxu0 0.0
    %1526 = vmatprep.subr.mxu0 0.0
    %1527 = vmatpush1.msra.mxu0 0.0
    %1528 = vmatprep.subr.mxu0 0.0
    %1529 = vmatpush1.msra.mxu0 0.0
    %1530 = vmatprep.subr.mxu0 0.0
    %1531 = vmatpush1.msra.mxu0 0.0
    %1532 = vmatprep.subr.mxu0 0.0
    %1533 = vmatpush1.msra.mxu0 0.0
    %1534 = vmatprep.subr.mxu0 0.0
    %1535 = vmatpush1.msra.mxu0 0.0
    %1536 = vmatprep.subr.mxu0 0.0
    %1537 = vmatpush1.msra.mxu0 0.0
    %1538 = vmatprep.subr.mxu0 0.0
    %1539 = vmatpush1.msra.mxu0 0.0
    %1540 = vmatprep.subr.mxu0 0.0
    %1541 = vmatpush1.msra.mxu0 0.0
    %1542 = vmatprep.subr.mxu0 0.0
    %1543 = vmatpush1.msra.mxu0 0.0
    %1544 = vmatprep.subr.mxu0 0.0
    %1545 = vmatpush1.msra.mxu0 0.0
    %1546 = vmatprep.subr.mxu0 0.0
    %1547 = vmatpush1.msra.mxu0 0.0
    %1548 = vmatprep.subr.mxu0 0.0
    %1549 = vmatpush1.msra.mxu0 0.0
    %1550 = vmatprep.subr.mxu0 0.0
    %1551 = vmatpush1.msra.mxu0 0.0
    %1552 = vmatprep.subr.mxu0 0.0
    %1553 = vmatpush1.msra.mxu0 0.0
    %1554 = vmatprep.subr.mxu0 0.0
    %1555 = vmatpush1.msra.mxu0 0.0
    %1556 = vmatprep.subr.mxu0 0.0
    %1557 = vmatpush1.msra.mxu0 0.0
    %1558 = vmatprep.subr.mxu0 0.0
    %1559 = vmatpush1.msra.mxu0 0.0
    %1560 = vmatprep.subr.mxu0 0.0
    %1561 = vmatpush1.msra.mxu0 0.0
    %1562 = vmatprep.subr.mxu0 0.0
    %1563 = vmatpush1.msra.mxu0 0.0
    %1564 = vmatprep.subr.mxu0 0.0
    %1565 = vmatpush1.msra.mxu0 0.0
    %1566 = vmatprep.subr.mxu0 0.0
    %1567 = vmatpush1.msra.mxu0 0.0
    %1568 = vmatprep.subr.mxu0 0.0
    %1569 = vmatpush1.msra.mxu0 0.0
    %1570 = vmatprep.mubr.f32.mxu0 0.0
    %1571 = vmatmul.mubr.f32.gmra.mrb[0].mxu0 %v1501
    %v1572 = vpop.f32.mrb[0].mxu0
    %v1573 = vadd.f32 %v1492, %v1572
    %v1574 = vpop.f32.mrb[0].mxu0
    %1575 = vmatprep.mubr.f32.mxu0 0.0
    %1576 = vmatmul.mubr.f32.gmra.mrb[0].mxu0 %v1504
    %v1577 = vpop.f32.mrb[0].mxu0
    %v1578 = vadd.f32 %v1497, %v1577
    %v1579 = vpop.f32.mrb[0].mxu0
    %1580 = vdwg.mxu0
    %s1581 = scalar_lea.vmem %s5, 64
    %v1582 = vld [vmem:[%s1581] sm:$0xff]
    %v1583 = vld [vmem:[%s1581 + $0x8] sm:$0xff]
    %v1584 = vld [vmem:[%s1581 + $0x10] sm:$0xff]
    %v1585 = vld [vmem:[%s1581 + $0x18] sm:$0xff]
    %s1586 = scalar_lea.vmem %s8, 2
    %v1587 = vld [vmem:[%s1586] sm:$0x1]
    %v1589 = vlaneseq
    %v1590 = vshrl.u32 %v1589, 7
    %v1591 = vsub.s32 0, %v1590
    %v1592 = vrot.slane %v1587, %v1591
    %1594 = vmatprep.subr.mxu0 0.0
    %1595 = vmatpush1.msra.mxu0 %v1582
    %1596 = vmatprep.subr.mxu0 0.0
    %1597 = vmatpush1.msra.mxu0 %v1583
    %1598 = vmatprep.subr.mxu0 0.0
    %1599 = vmatpush1.msra.mxu0 %v1584
    %1600 = vmatprep.subr.mxu0 0.0
    %1601 = vmatpush1.msra.mxu0 %v1585
    %1602 = vmatprep.subr.mxu0 0.0
    %1603 = vmatpush1.msra.mxu0 0.0
    %1604 = vmatprep.subr.mxu0 0.0
    %1605 = vmatpush1.msra.mxu0 0.0
    %1606 = vmatprep.subr.mxu0 0.0
    %1607 = vmatpush1.msra.mxu0 0.0
    %1608 = vmatprep.subr.mxu0 0.0
    %1609 = vmatpush1.msra.mxu0 0.0
    %1610 = vmatprep.subr.mxu0 0.0
    %1611 = vmatpush1.msra.mxu0 0.0
    %1612 = vmatprep.subr.mxu0 0.0
    %1613 = vmatpush1.msra.mxu0 0.0
    %1614 = vmatprep.subr.mxu0 0.0
    %1615 = vmatpush1.msra.mxu0 0.0
    %1616 = vmatprep.subr.mxu0 0.0
    %1617 = vmatpush1.msra.mxu0 0.0
    %1618 = vmatprep.subr.mxu0 0.0
    %1619 = vmatpush1.msra.mxu0 0.0
    %1620 = vmatprep.subr.mxu0 0.0
    %1621 = vmatpush1.msra.mxu0 0.0
    %1622 = vmatprep.subr.mxu0 0.0
    %1623 = vmatpush1.msra.mxu0 0.0
    %1624 = vmatprep.subr.mxu0 0.0
    %1625 = vmatpush1.msra.mxu0 0.0
    %1626 = vmatprep.subr.mxu0 0.0
    %1627 = vmatpush1.msra.mxu0 0.0
    %1628 = vmatprep.subr.mxu0 0.0
    %1629 = vmatpush1.msra.mxu0 0.0
    %1630 = vmatprep.subr.mxu0 0.0
    %1631 = vmatpush1.msra.mxu0 0.0
    %1632 = vmatprep.subr.mxu0 0.0
    %1633 = vmatpush1.msra.mxu0 0.0
    %1634 = vmatprep.subr.mxu0 0.0
    %1635 = vmatpush1.msra.mxu0 0.0
    %1636 = vmatprep.subr.mxu0 0.0
    %1637 = vmatpush1.msra.mxu0 0.0
    %1638 = vmatprep.subr.mxu0 0.0
    %1639 = vmatpush1.msra.mxu0 0.0
    %1640 = vmatprep.subr.mxu0 0.0
    %1641 = vmatpush1.msra.mxu0 0.0
    %1642 = vmatprep.subr.mxu0 0.0
    %1643 = vmatpush1.msra.mxu0 0.0
    %1644 = vmatprep.subr.mxu0 0.0
    %1645 = vmatpush1.msra.mxu0 0.0
    %1646 = vmatprep.subr.mxu0 0.0
    %1647 = vmatpush1.msra.mxu0 0.0
    %1648 = vmatprep.subr.mxu0 0.0
    %1649 = vmatpush1.msra.mxu0 0.0
    %1650 = vmatprep.subr.mxu0 0.0
    %1651 = vmatpush1.msra.mxu0 0.0
    %1652 = vmatprep.subr.mxu0 0.0
    %1653 = vmatpush1.msra.mxu0 0.0
    %1654 = vmatprep.subr.mxu0 0.0
    %1655 = vmatpush1.msra.mxu0 0.0
    %1656 = vmatprep.subr.mxu0 0.0
    %1657 = vmatpush1.msra.mxu0 0.0
    %1658 = vmatprep.mubr.f32.mxu0 0.0
    %1659 = vmatmul.mubr.f32.gmra.mrb[0].mxu0 %v259
    %v1660 = vpop.f32.mrb[0].mxu0
    %v1661 = vadd.f32 %v1592, %v1660
    %v1662 = vpop.f32.mrb[0].mxu0
    %1663 = vmatprep.mubr.f32.mxu0 0.0
    %1664 = vmatmul.mubr.f32.gmra.mrb[0].mxu0 %v262
    %v1665 = vpop.f32.mrb[0].mxu0
    %v1666 = vadd.f32 %v1592, %v1665
    %v1667 = vpop.f32.mrb[0].mxu0
    %1668 = vdwg.mxu0
    %s1669 = scalar_lea.vmem %s6, 64
    %v1670 = vld [vmem:[%s1669] sm:$0xff]
    %v1671 = vld [vmem:[%s1669 + $0x8] sm:$0xff]
    %v1672 = vld [vmem:[%s1669 + $0x10] sm:$0xff]
    %v1673 = vld [vmem:[%s1669 + $0x18] sm:$0xff]
    %s1674 = scalar_lea.vmem %s9, 2
    %v1675 = vld [vmem:[%s1674] sm:$0x1]
    %v1677 = vlaneseq
    %v1678 = vshrl.u32 %v1677, 7
    %v1679 = vsub.s32 0, %v1678
    %v1680 = vrot.slane %v1675, %v1679
    %1682 = vmatprep.subr.mxu0 0.0
    %1683 = vmatpush1.msra.mxu0 %v1670
    %1684 = vmatprep.subr.mxu0 0.0
    %1685 = vmatpush1.msra.mxu0 %v1671
    %1686 = vmatprep.subr.mxu0 0.0
    %1687 = vmatpush1.msra.mxu0 %v1672
    %1688 = vmatprep.subr.mxu0 0.0
    %1689 = vmatpush1.msra.mxu0 %v1673
    %1690 = vmatprep.subr.mxu0 0.0
    %1691 = vmatpush1.msra.mxu0 0.0
    %1692 = vmatprep.subr.mxu0 0.0
    %1693 = vmatpush1.msra.mxu0 0.0
    %1694 = vmatprep.subr.mxu0 0.0
    %1695 = vmatpush1.msra.mxu0 0.0
    %1696 = vmatprep.subr.mxu0 0.0
    %1697 = vmatpush1.msra.mxu0 0.0
    %1698 = vmatprep.subr.mxu0 0.0
    %1699 = vmatpush1.msra.mxu0 0.0
    %1700 = vmatprep.subr.mxu0 0.0
    %1701 = vmatpush1.msra.mxu0 0.0
    %1702 = vmatprep.subr.mxu0 0.0
    %1703 = vmatpush1.msra.mxu0 0.0
    %1704 = vmatprep.subr.mxu0 0.0
    %1705 = vmatpush1.msra.mxu0 0.0
    %1706 = vmatprep.subr.mxu0 0.0
    %1707 = vmatpush1.msra.mxu0 0.0
    %1708 = vmatprep.subr.mxu0 0.0
    %1709 = vmatpush1.msra.mxu0 0.0
    %1710 = vmatprep.subr.mxu0 0.0
    %1711 = vmatpush1.msra.mxu0 0.0
    %1712 = vmatprep.subr.mxu0 0.0
    %1713 = vmatpush1.msra.mxu0 0.0
    %1714 = vmatprep.subr.mxu0 0.0
    %1715 = vmatpush1.msra.mxu0 0.0
    %1716 = vmatprep.subr.mxu0 0.0
    %1717 = vmatpush1.msra.mxu0 0.0
    %1718 = vmatprep.subr.mxu0 0.0
    %1719 = vmatpush1.msra.mxu0 0.0
    %1720 = vmatprep.subr.mxu0 0.0
    %1721 = vmatpush1.msra.mxu0 0.0
    %1722 = vmatprep.subr.mxu0 0.0
    %1723 = vmatpush1.msra.mxu0 0.0
    %1724 = vmatprep.subr.mxu0 0.0
    %1725 = vmatpush1.msra.mxu0 0.0
    %1726 = vmatprep.subr.mxu0 0.0
    %1727 = vmatpush1.msra.mxu0 0.0
    %1728 = vmatprep.subr.mxu0 0.0
    %1729 = vmatpush1.msra.mxu0 0.0
    %1730 = vmatprep.subr.mxu0 0.0
    %1731 = vmatpush1.msra.mxu0 0.0
    %1732 = vmatprep.subr.mxu0 0.0
    %1733 = vmatpush1.msra.mxu0 0.0
    %1734 = vmatprep.subr.mxu0 0.0
    %1735 = vmatpush1.msra.mxu0 0.0
    %1736 = vmatprep.subr.mxu0 0.0
    %1737 = vmatpush1.msra.mxu0 0.0
    %1738 = vmatprep.subr.mxu0 0.0
    %1739 = vmatpush1.msra.mxu0 0.0
    %1740 = vmatprep.subr.mxu0 0.0
    %1741 = vmatpush1.msra.mxu0 0.0
    %1742 = vmatprep.subr.mxu0 0.0
    %1743 = vmatpush1.msra.mxu0 0.0
    %1744 = vmatprep.subr.mxu0 0.0
    %1745 = vmatpush1.msra.mxu0 0.0
    %1746 = vmatprep.mubr.f32.mxu0 0.0
    %1747 = vmatmul.mubr.f32.gmra.mrb[0].mxu0 %v259
    %v1748 = vpop.f32.mrb[0].mxu0
    %v1749 = vadd.f32 %v1680, %v1748
    %v1750 = vpop.f32.mrb[0].mxu0
    %1751 = vmatprep.mubr.f32.mxu0 0.0
    %1752 = vmatmul.mubr.f32.gmra.mrb[0].mxu0 %v262
    %v1753 = vpop.f32.mrb[0].mxu0
    %v1754 = vadd.f32 %v1680, %v1753
    %v1755 = vpop.f32.mrb[0].mxu0
    %1756 = vdwg.mxu0
    %s1757 = scalar_lea.vmem %s7, 64
    %v1758 = vld [vmem:[%s1757] sm:$0xff]
    %v1759 = vld [vmem:[%s1757 + $0x8] sm:$0xff]
    %v1760 = vld [vmem:[%s1757 + $0x10] sm:$0xff]
    %v1761 = vld [vmem:[%s1757 + $0x18] sm:$0xff]
    %s1762 = scalar_lea.vmem %s10, 2
    %v1763 = vld [vmem:[%s1762] sm:$0x1]
    %v1765 = vlaneseq
    %v1766 = vshrl.u32 %v1765, 7
    %v1767 = vsub.s32 0, %v1766
    %v1768 = vrot.slane %v1763, %v1767
    %1770 = vmatprep.subr.mxu0 0.0
    %1771 = vmatpush1.msra.mxu0 %v1758
    %1772 = vmatprep.subr.mxu0 0.0
    %1773 = vmatpush1.msra.mxu0 %v1759
    %1774 = vmatprep.subr.mxu0 0.0
    %1775 = vmatpush1.msra.mxu0 %v1760
    %1776 = vmatprep.subr.mxu0 0.0
    %1777 = vmatpush1.msra.mxu0 %v1761
    %1778 = vmatprep.subr.mxu0 0.0
    %1779 = vmatpush1.msra.mxu0 0.0
    %1780 = vmatprep.subr.mxu0 0.0
    %1781 = vmatpush1.msra.mxu0 0.0
    %1782 = vmatprep.subr.mxu0 0.0
    %1783 = vmatpush1.msra.mxu0 0.0
    %1784 = vmatprep.subr.mxu0 0.0
    %1785 = vmatpush1.msra.mxu0 0.0
    %1786 = vmatprep.subr.mxu0 0.0
    %1787 = vmatpush1.msra.mxu0 0.0
    %1788 = vmatprep.subr.mxu0 0.0
    %1789 = vmatpush1.msra.mxu0 0.0
    %1790 = vmatprep.subr.mxu0 0.0
    %1791 = vmatpush1.msra.mxu0 0.0
    %1792 = vmatprep.subr.mxu0 0.0
    %1793 = vmatpush1.msra.mxu0 0.0
    %1794 = vmatprep.subr.mxu0 0.0
    %1795 = vmatpush1.msra.mxu0 0.0
    %1796 = vmatprep.subr.mxu0 0.0
    %1797 = vmatpush1.msra.mxu0 0.0
    %1798 = vmatprep.subr.mxu0 0.0
    %1799 = vmatpush1.msra.mxu0 0.0
    %1800 = vmatprep.subr.mxu0 0.0
    %1801 = vmatpush1.msra.mxu0 0.0
    %1802 = vmatprep.subr.mxu0 0.0
    %1803 = vmatpush1.msra.mxu0 0.0
    %1804 = vmatprep.subr.mxu0 0.0
    %1805 = vmatpush1.msra.mxu0 0.0
    %1806 = vmatprep.subr.mxu0 0.0
    %1807 = vmatpush1.msra.mxu0 0.0
    %1808 = vmatprep.subr.mxu0 0.0
    %1809 = vmatpush1.msra.mxu0 0.0
    %1810 = vmatprep.subr.mxu0 0.0
    %1811 = vmatpush1.msra.mxu0 0.0
    %1812 = vmatprep.subr.mxu0 0.0
    %1813 = vmatpush1.msra.mxu0 0.0
    %1814 = vmatprep.subr.mxu0 0.0
    %1815 = vmatpush1.msra.mxu0 0.0
    %1816 = vmatprep.subr.mxu0 0.0
    %1817 = vmatpush1.msra.mxu0 0.0
    %1818 = vmatprep.subr.mxu0 0.0
    %1819 = vmatpush1.msra.mxu0 0.0
    %1820 = vmatprep.subr.mxu0 0.0
    %1821 = vmatpush1.msra.mxu0 0.0
    %1822 = vmatprep.subr.mxu0 0.0
    %1823 = vmatpush1.msra.mxu0 0.0
    %1824 = vmatprep.subr.mxu0 0.0
    %1825 = vmatpush1.msra.mxu0 0.0
    %1826 = vmatprep.subr.mxu0 0.0
    %1827 = vmatpush1.msra.mxu0 0.0
    %1828 = vmatprep.subr.mxu0 0.0
    %1829 = vmatpush1.msra.mxu0 0.0
    %1830 = vmatprep.subr.mxu0 0.0
    %1831 = vmatpush1.msra.mxu0 0.0
    %1832 = vmatprep.subr.mxu0 0.0
    %1833 = vmatpush1.msra.mxu0 0.0
    %1834 = vmatprep.mubr.f32.mxu0 0.0
    %1835 = vmatmul.mubr.f32.gmra.mrb[0].mxu0 %v259
    %v1836 = vpop.f32.mrb[0].mxu0
    %v1837 = vadd.f32 %v1768, %v1836
    %v1838 = vpop.f32.mrb[0].mxu0
    %1839 = vmatprep.mubr.f32.mxu0 0.0
    %1840 = vmatmul.mubr.f32.gmra.mrb[0].mxu0 %v262
    %v1841 = vpop.f32.mrb[0].mxu0
    %v1842 = vadd.f32 %v1768, %v1841
    %v1843 = vpop.f32.mrb[0].mxu0
    %1844 = vdwg.mxu0
    %v1846 = vsel %vm511, %v1661, 0
    %v1849 = vsel %vm511, %v1749, 0
    %1851 = vmatprep.subr.mxu0 0.0
    %1852 = vmatpush1.xpose.msra.mxu0 %v1849
    %1853 = vmatprep.subr.mxu0 0.0
    %1854 = vmatpush1.xpose.msra.mxu0 0.0
    %1855 = vmatprep.subr.mxu0 0.0
    %1856 = vmatpush1.xpose.msra.mxu0 0.0
    %1857 = vmatprep.subr.mxu0 0.0
    %1858 = vmatpush1.xpose.msra.mxu0 0.0
    %1859 = vmatprep.subr.mxu0 0.0
    %1860 = vmatpush1.xpose.msra.mxu0 0.0
    %1861 = vmatprep.subr.mxu0 0.0
    %1862 = vmatpush1.xpose.msra.mxu0 0.0
    %1863 = vmatprep.subr.mxu0 0.0
    %1864 = vmatpush1.xpose.msra.mxu0 0.0
    %1865 = vmatprep.subr.mxu0 0.0
    %1866 = vmatpush1.xpose.msra.mxu0 0.0
    %1867 = vmatprep.subr.mxu0 0.0
    %1868 = vmatpush1.xpose.msra.mxu0 0.0
    %1869 = vmatprep.subr.mxu0 0.0
    %1870 = vmatpush1.xpose.msra.mxu0 0.0
    %1871 = vmatprep.subr.mxu0 0.0
    %1872 = vmatpush1.xpose.msra.mxu0 0.0
    %1873 = vmatprep.subr.mxu0 0.0
    %1874 = vmatpush1.xpose.msra.mxu0 0.0
    %1875 = vmatprep.subr.mxu0 0.0
    %1876 = vmatpush1.xpose.msra.mxu0 0.0
    %1877 = vmatprep.subr.mxu0 0.0
    %1878 = vmatpush1.xpose.msra.mxu0 0.0
    %1879 = vmatprep.subr.mxu0 0.0
    %1880 = vmatpush1.xpose.msra.mxu0 0.0
    %1881 = vmatprep.subr.mxu0 0.0
    %1882 = vmatpush1.xpose.msra.mxu0 0.0
    %1883 = vmatprep.subr.mxu0 0.0
    %1884 = vmatpush1.xpose.msra.mxu0 0.0
    %1885 = vmatprep.subr.mxu0 0.0
    %1886 = vmatpush1.xpose.msra.mxu0 0.0
    %1887 = vmatprep.subr.mxu0 0.0
    %1888 = vmatpush1.xpose.msra.mxu0 0.0
    %1889 = vmatprep.subr.mxu0 0.0
    %1890 = vmatpush1.xpose.msra.mxu0 0.0
    %1891 = vmatprep.subr.mxu0 0.0
    %1892 = vmatpush1.xpose.msra.mxu0 0.0
    %1893 = vmatprep.subr.mxu0 0.0
    %1894 = vmatpush1.xpose.msra.mxu0 0.0
    %1895 = vmatprep.subr.mxu0 0.0
    %1896 = vmatpush1.xpose.msra.mxu0 0.0
    %1897 = vmatprep.subr.mxu0 0.0
    %1898 = vmatpush1.xpose.msra.mxu0 0.0
    %1899 = vmatprep.subr.mxu0 0.0
    %1900 = vmatpush1.xpose.msra.mxu0 0.0
    %1901 = vmatprep.subr.mxu0 0.0
    %1902 = vmatpush1.xpose.msra.mxu0 0.0
    %1903 = vmatprep.subr.mxu0 0.0
    %1904 = vmatpush1.xpose.msra.mxu0 0.0
    %1905 = vmatprep.subr.mxu0 0.0
    %1906 = vmatpush1.xpose.msra.mxu0 0.0
    %1907 = vmatprep.subr.mxu0 0.0
    %1908 = vmatpush1.xpose.msra.mxu0 0.0
    %1909 = vmatprep.subr.mxu0 0.0
    %1910 = vmatpush1.xpose.msra.mxu0 0.0
    %1911 = vmatprep.subr.mxu0 0.0
    %1912 = vmatpush1.xpose.msra.mxu0 0.0
    %1913 = vmatprep.subr.mxu0 0.0
    %1914 = vmatpush1.xpose.msra.mxu0 0.0
    %1915 = vmatprep.mubr.f32.mxu0 0.0
    %1916 = vmatmul.mubr.f32.gmra.mrb[0].mxu0 %v1846
    %v1917 = vpop.f32.mrb[0].mxu0
    %v1918 = vadd.f32 %v217, %v1917
    %v1919 = vpop.f32.mrb[0].mxu0
    %1920 = vdwg.mxu0
    %v1922 = vsel %vm511, %v1666, 0
    %v1925 = vsel %vm511, %v1754, 0
    %1927 = vmatprep.subr.mxu0 0.0
    %1928 = vmatpush1.xpose.msra.mxu0 %v1925
    %1929 = vmatprep.subr.mxu0 0.0
    %1930 = vmatpush1.xpose.msra.mxu0 0.0
    %1931 = vmatprep.subr.mxu0 0.0
    %1932 = vmatpush1.xpose.msra.mxu0 0.0
    %1933 = vmatprep.subr.mxu0 0.0
    %1934 = vmatpush1.xpose.msra.mxu0 0.0
    %1935 = vmatprep.subr.mxu0 0.0
    %1936 = vmatpush1.xpose.msra.mxu0 0.0
    %1937 = vmatprep.subr.mxu0 0.0
    %1938 = vmatpush1.xpose.msra.mxu0 0.0
    %1939 = vmatprep.subr.mxu0 0.0
    %1940 = vmatpush1.xpose.msra.mxu0 0.0
    %1941 = vmatprep.subr.mxu0 0.0
    %1942 = vmatpush1.xpose.msra.mxu0 0.0
    %1943 = vmatprep.subr.mxu0 0.0
    %1944 = vmatpush1.xpose.msra.mxu0 0.0
    %1945 = vmatprep.subr.mxu0 0.0
    %1946 = vmatpush1.xpose.msra.mxu0 0.0
    %1947 = vmatprep.subr.mxu0 0.0
    %1948 = vmatpush1.xpose.msra.mxu0 0.0
    %1949 = vmatprep.subr.mxu0 0.0
    %1950 = vmatpush1.xpose.msra.mxu0 0.0
    %1951 = vmatprep.subr.mxu0 0.0
    %1952 = vmatpush1.xpose.msra.mxu0 0.0
    %1953 = vmatprep.subr.mxu0 0.0
    %1954 = vmatpush1.xpose.msra.mxu0 0.0
    %1955 = vmatprep.subr.mxu0 0.0
    %1956 = vmatpush1.xpose.msra.mxu0 0.0
    %1957 = vmatprep.subr.mxu0 0.0
    %1958 = vmatpush1.xpose.msra.mxu0 0.0
    %1959 = vmatprep.subr.mxu0 0.0
    %1960 = vmatpush1.xpose.msra.mxu0 0.0
    %1961 = vmatprep.subr.mxu0 0.0
    %1962 = vmatpush1.xpose.msra.mxu0 0.0
    %1963 = vmatprep.subr.mxu0 0.0
    %1964 = vmatpush1.xpose.msra.mxu0 0.0
    %1965 = vmatprep.subr.mxu0 0.0
    %1966 = vmatpush1.xpose.msra.mxu0 0.0
    %1967 = vmatprep.subr.mxu0 0.0
    %1968 = vmatpush1.xpose.msra.mxu0 0.0
    %1969 = vmatprep.subr.mxu0 0.0
    %1970 = vmatpush1.xpose.msra.mxu0 0.0
    %1971 = vmatprep.subr.mxu0 0.0
    %1972 = vmatpush1.xpose.msra.mxu0 0.0
    %1973 = vmatprep.subr.mxu0 0.0
    %1974 = vmatpush1.xpose.msra.mxu0 0.0
    %1975 = vmatprep.subr.mxu0 0.0
    %1976 = vmatpush1.xpose.msra.mxu0 0.0
    %1977 = vmatprep.subr.mxu0 0.0
    %1978 = vmatpush1.xpose.msra.mxu0 0.0
    %1979 = vmatprep.subr.mxu0 0.0
    %1980 = vmatpush1.xpose.msra.mxu0 0.0
    %1981 = vmatprep.subr.mxu0 0.0
    %1982 = vmatpush1.xpose.msra.mxu0 0.0
    %1983 = vmatprep.subr.mxu0 0.0
    %1984 = vmatpush1.xpose.msra.mxu0 0.0
    %1985 = vmatprep.subr.mxu0 0.0
    %1986 = vmatpush1.xpose.msra.mxu0 0.0
    %1987 = vmatprep.subr.mxu0 0.0
    %1988 = vmatpush1.xpose.msra.mxu0 0.0
    %1989 = vmatprep.subr.mxu0 0.0
    %1990 = vmatpush1.xpose.msra.mxu0 0.0
    %1991 = vmatprep.mubr.f32.mxu0 0.0
    %1992 = vmatmul.mubr.f32.gmra.mrb[0].mxu0 %v1922
    %v1993 = vpop.f32.mrb[0].mxu0
    %v1994 = vadd.f32 %v218, %v1993
    %v1995 = vpop.f32.mrb[0].mxu0
    %1996 = vdwg.mxu0
    %v1997 = vsel %vm511, %v1918, -inf
    %1998 = vmax.xlane.f32.xlu0 %v1997
    %v1999 = vpop.xlane.xlu0 %1998
    %v2000 = vsel %vm511, %v1994, -inf
    %2001 = vmax.xlane.f32.xlu0 %v2000
    %v2002 = vpop.xlane.xlu0 %2001
    %v2003 = vsub.f32 %v1918, %v1999
    %v2004 = vsub.f32 %v1994, %v2002
    %v2005 = vmul.f32 %v2003, 1.442695
    %v2006 = vpow.pop %v2005
    %v2007 = vmul.f32 %v2004, 1.442695
    %v2008 = vpow.pop %v2007
    %v2009 = vsel %vm511, %v2006, 0.0
    %2010 = vadd.xlane.f32.xlu0 %v2009
    %v2011 = vpop.xlane.xlu0 %2010
    %v2012 = vsel %vm511, %v2008, 0.0
    %2013 = vadd.xlane.f32.xlu0 %v2012
    %v2014 = vpop.xlane.xlu0 %2013
    %v2015 = vrcp.pop %v2011
    %v2016 = vrcp.pop %v2014
    %v2017 = vmul.f32 %v2006, %v2015
    %v2018 = vmul.f32 %v2008, %v2016
    %v2020 = vsel %vm511, %v2017, 0
    %2022 = vmatprep.subr.mxu0 0.0
    %2023 = vmatpush1.msra.mxu0 %v1837
    %2024 = vmatprep.subr.mxu0 0.0
    %2025 = vmatpush1.msra.mxu0 0.0
    %2026 = vmatprep.subr.mxu0 0.0
    %2027 = vmatpush1.msra.mxu0 0.0
    %2028 = vmatprep.subr.mxu0 0.0
    %2029 = vmatpush1.msra.mxu0 0.0
    %2030 = vmatprep.subr.mxu0 0.0
    %2031 = vmatpush1.msra.mxu0 0.0
    %2032 = vmatprep.subr.mxu0 0.0
    %2033 = vmatpush1.msra.mxu0 0.0
    %2034 = vmatprep.subr.mxu0 0.0
    %2035 = vmatpush1.msra.mxu0 0.0
    %2036 = vmatprep.subr.mxu0 0.0
    %2037 = vmatpush1.msra.mxu0 0.0
    %2038 = vmatprep.subr.mxu0 0.0
    %2039 = vmatpush1.msra.mxu0 0.0
    %2040 = vmatprep.subr.mxu0 0.0
    %2041 = vmatpush1.msra.mxu0 0.0
    %2042 = vmatprep.subr.mxu0 0.0
    %2043 = vmatpush1.msra.mxu0 0.0
    %2044 = vmatprep.subr.mxu0 0.0
    %2045 = vmatpush1.msra.mxu0 0.0
    %2046 = vmatprep.subr.mxu0 0.0
    %2047 = vmatpush1.msra.mxu0 0.0
    %2048 = vmatprep.subr.mxu0 0.0
    %2049 = vmatpush1.msra.mxu0 0.0
    %2050 = vmatprep.subr.mxu0 0.0
    %2051 = vmatpush1.msra.mxu0 0.0
    %2052 = vmatprep.subr.mxu0 0.0
    %2053 = vmatpush1.msra.mxu0 0.0
    %2054 = vmatprep.subr.mxu0 0.0
    %2055 = vmatpush1.msra.mxu0 0.0
    %2056 = vmatprep.subr.mxu0 0.0
    %2057 = vmatpush1.msra.mxu0 0.0
    %2058 = vmatprep.subr.mxu0 0.0
    %2059 = vmatpush1.msra.mxu0 0.0
    %2060 = vmatprep.subr.mxu0 0.0
    %2061 = vmatpush1.msra.mxu0 0.0
    %2062 = vmatprep.subr.mxu0 0.0
    %2063 = vmatpush1.msra.mxu0 0.0
    %2064 = vmatprep.subr.mxu0 0.0
    %2065 = vmatpush1.msra.mxu0 0.0
    %2066 = vmatprep.subr.mxu0 0.0
    %2067 = vmatpush1.msra.mxu0 0.0
    %2068 = vmatprep.subr.mxu0 0.0
    %2069 = vmatpush1.msra.mxu0 0.0
    %2070 = vmatprep.subr.mxu0 0.0
    %2071 = vmatpush1.msra.mxu0 0.0
    %2072 = vmatprep.subr.mxu0 0.0
    %2073 = vmatpush1.msra.mxu0 0.0
    %2074 = vmatprep.subr.mxu0 0.0
    %2075 = vmatpush1.msra.mxu0 0.0
    %2076 = vmatprep.subr.mxu0 0.0
    %2077 = vmatpush1.msra.mxu0 0.0
    %2078 = vmatprep.subr.mxu0 0.0
    %2079 = vmatpush1.msra.mxu0 0.0
    %2080 = vmatprep.subr.mxu0 0.0
    %2081 = vmatpush1.msra.mxu0 0.0
    %2082 = vmatprep.subr.mxu0 0.0
    %2083 = vmatpush1.msra.mxu0 0.0
    %2084 = vmatprep.subr.mxu0 0.0
    %2085 = vmatpush1.msra.mxu0 0.0
    %2086 = vmatprep.mubr.f32.mxu0 0.0
    %2087 = vmatmul.mubr.f32.gmra.mrb[0].mxu0 %v2020
    %v2088 = vpop.f32.mrb[0].mxu0
    %v2089 = vadd.f32 0.0, %v2088
    %v2090 = vpop.f32.mrb[0].mxu0
    %2091 = vdwg.mxu0
    %v2093 = vsel %vm511, %v2018, 0
    %2095 = vmatprep.subr.mxu0 0.0
    %2096 = vmatpush1.msra.mxu0 %v1842
    %2097 = vmatprep.subr.mxu0 0.0
    %2098 = vmatpush1.msra.mxu0 0.0
    %2099 = vmatprep.subr.mxu0 0.0
    %2100 = vmatpush1.msra.mxu0 0.0
    %2101 = vmatprep.subr.mxu0 0.0
    %2102 = vmatpush1.msra.mxu0 0.0
    %2103 = vmatprep.subr.mxu0 0.0
    %2104 = vmatpush1.msra.mxu0 0.0
    %2105 = vmatprep.subr.mxu0 0.0
    %2106 = vmatpush1.msra.mxu0 0.0
    %2107 = vmatprep.subr.mxu0 0.0
    %2108 = vmatpush1.msra.mxu0 0.0
    %2109 = vmatprep.subr.mxu0 0.0
    %2110 = vmatpush1.msra.mxu0 0.0
    %2111 = vmatprep.subr.mxu0 0.0
    %2112 = vmatpush1.msra.mxu0 0.0
    %2113 = vmatprep.subr.mxu0 0.0
    %2114 = vmatpush1.msra.mxu0 0.0
    %2115 = vmatprep.subr.mxu0 0.0
    %2116 = vmatpush1.msra.mxu0 0.0
    %2117 = vmatprep.subr.mxu0 0.0
    %2118 = vmatpush1.msra.mxu0 0.0
    %2119 = vmatprep.subr.mxu0 0.0
    %2120 = vmatpush1.msra.mxu0 0.0
    %2121 = vmatprep.subr.mxu0 0.0
    %2122 = vmatpush1.msra.mxu0 0.0
    %2123 = vmatprep.subr.mxu0 0.0
    %2124 = vmatpush1.msra.mxu0 0.0
    %2125 = vmatprep.subr.mxu0 0.0
    %2126 = vmatpush1.msra.mxu0 0.0
    %2127 = vmatprep.subr.mxu0 0.0
    %2128 = vmatpush1.msra.mxu0 0.0
    %2129 = vmatprep.subr.mxu0 0.0
    %2130 = vmatpush1.msra.mxu0 0.0
    %2131 = vmatprep.subr.mxu0 0.0
    %2132 = vmatpush1.msra.mxu0 0.0
    %2133 = vmatprep.subr.mxu0 0.0
    %2134 = vmatpush1.msra.mxu0 0.0
    %2135 = vmatprep.subr.mxu0 0.0
    %2136 = vmatpush1.msra.mxu0 0.0
    %2137 = vmatprep.subr.mxu0 0.0
    %2138 = vmatpush1.msra.mxu0 0.0
    %2139 = vmatprep.subr.mxu0 0.0
    %2140 = vmatpush1.msra.mxu0 0.0
    %2141 = vmatprep.subr.mxu0 0.0
    %2142 = vmatpush1.msra.mxu0 0.0
    %2143 = vmatprep.subr.mxu0 0.0
    %2144 = vmatpush1.msra.mxu0 0.0
    %2145 = vmatprep.subr.mxu0 0.0
    %2146 = vmatpush1.msra.mxu0 0.0
    %2147 = vmatprep.subr.mxu0 0.0
    %2148 = vmatpush1.msra.mxu0 0.0
    %2149 = vmatprep.subr.mxu0 0.0
    %2150 = vmatpush1.msra.mxu0 0.0
    %2151 = vmatprep.subr.mxu0 0.0
    %2152 = vmatpush1.msra.mxu0 0.0
    %2153 = vmatprep.subr.mxu0 0.0
    %2154 = vmatpush1.msra.mxu0 0.0
    %2155 = vmatprep.subr.mxu0 0.0
    %2156 = vmatpush1.msra.mxu0 0.0
    %2157 = vmatprep.subr.mxu0 0.0
    %2158 = vmatpush1.msra.mxu0 0.0
    %2159 = vmatprep.mubr.f32.mxu0 0.0
    %2160 = vmatmul.mubr.f32.gmra.mrb[0].mxu0 %v2093
    %v2161 = vpop.f32.mrb[0].mxu0
    %v2162 = vadd.f32 0.0, %v2161
    %v2163 = vpop.f32.mrb[0].mxu0
    %2164 = vdwg.mxu0
    %s2165 = scalar_lea.vmem %s11, 16
    %v2166 = vld [vmem:[%s2165] sm:$0xff]
    %v2168 = vsel %vm511, %v2089, 0
    %v2171 = vsel %vm511, %v2162, 0
    %2173 = vmatprep.subr.mxu0 0.0
    %2174 = vmatpush1.msra.mxu0 %v2166
    %2175 = vmatprep.subr.mxu0 0.0
    %2176 = vmatpush1.msra.mxu0 0.0
    %2177 = vmatprep.subr.mxu0 0.0
    %2178 = vmatpush1.msra.mxu0 0.0
    %2179 = vmatprep.subr.mxu0 0.0
    %2180 = vmatpush1.msra.mxu0 0.0
    %2181 = vmatprep.subr.mxu0 0.0
    %2182 = vmatpush1.msra.mxu0 0.0
    %2183 = vmatprep.subr.mxu0 0.0
    %2184 = vmatpush1.msra.mxu0 0.0
    %2185 = vmatprep.subr.mxu0 0.0
    %2186 = vmatpush1.msra.mxu0 0.0
    %2187 = vmatprep.subr.mxu0 0.0
    %2188 = vmatpush1.msra.mxu0 0.0
    %2189 = vmatprep.subr.mxu0 0.0
    %2190 = vmatpush1.msra.mxu0 0.0
    %2191 = vmatprep.subr.mxu0 0.0
    %2192 = vmatpush1.msra.mxu0 0.0
    %2193 = vmatprep.subr.mxu0 0.0
    %2194 = vmatpush1.msra.mxu0 0.0
    %2195 = vmatprep.subr.mxu0 0.0
    %2196 = vmatpush1.msra.mxu0 0.0
    %2197 = vmatprep.subr.mxu0 0.0
    %2198 = vmatpush1.msra.mxu0 0.0
    %2199 = vmatprep.subr.mxu0 0.0
    %2200 = vmatpush1.msra.mxu0 0.0
    %2201 = vmatprep.subr.mxu0 0.0
    %2202 = vmatpush1.msra.mxu0 0.0
    %2203 = vmatprep.subr.mxu0 0.0
    %2204 = vmatpush1.msra.mxu0 0.0
    %2205 = vmatprep.subr.mxu0 0.0
    %2206 = vmatpush1.msra.mxu0 0.0
    %2207 = vmatprep.subr.mxu0 0.0
    %2208 = vmatpush1.msra.mxu0 0.0
    %2209 = vmatprep.subr.mxu0 0.0
    %2210 = vmatpush1.msra.mxu0 0.0
    %2211 = vmatprep.subr.mxu0 0.0
    %2212 = vmatpush1.msra.mxu0 0.0
    %2213 = vmatprep.subr.mxu0 0.0
    %2214 = vmatpush1.msra.mxu0 0.0
    %2215 = vmatprep.subr.mxu0 0.0
    %2216 = vmatpush1.msra.mxu0 0.0
    %2217 = vmatprep.subr.mxu0 0.0
    %2218 = vmatpush1.msra.mxu0 0.0
    %2219 = vmatprep.subr.mxu0 0.0
    %2220 = vmatpush1.msra.mxu0 0.0
    %2221 = vmatprep.subr.mxu0 0.0
    %2222 = vmatpush1.msra.mxu0 0.0
    %2223 = vmatprep.subr.mxu0 0.0
    %2224 = vmatpush1.msra.mxu0 0.0
    %2225 = vmatprep.subr.mxu0 0.0
    %2226 = vmatpush1.msra.mxu0 0.0
    %2227 = vmatprep.subr.mxu0 0.0
    %2228 = vmatpush1.msra.mxu0 0.0
    %2229 = vmatprep.subr.mxu0 0.0
    %2230 = vmatpush1.msra.mxu0 0.0
    %2231 = vmatprep.subr.mxu0 0.0
    %2232 = vmatpush1.msra.mxu0 0.0
    %2233 = vmatprep.subr.mxu0 0.0
    %2234 = vmatpush1.msra.mxu0 0.0
    %2235 = vmatprep.subr.mxu0 0.0
    %2236 = vmatpush1.msra.mxu0 0.0
    %2237 = vmatprep.mubr.f32.mxu0 0.0
    %2238 = vmatmul.mubr.f32.gmra.mrb[0].mxu0 %v2168
    %v2239 = vpop.f32.mrb[0].mxu0
    %v2240 = vadd.f32 0.0, %v2239
    %v2241 = vpop.f32.mrb[0].mxu0
    %2242 = vmatprep.mubr.f32.mxu0 0.0
    %2243 = vmatmul.mubr.f32.gmra.mrb[0].mxu0 %v2171
    %v2244 = vpop.f32.mrb[0].mxu0
    %v2245 = vadd.f32 0.0, %v2244
    %v2246 = vpop.f32.mrb[0].mxu0
    %2247 = vdwg.mxu0
    %v2248 = vadd.f32 %v1573, %v2240
    %v2249 = vadd.f32 %v1578, %v2245
    %s2250 = scalar_lea.vmem %s5, 96
    %v2251 = vld [vmem:[%s2250] sm:$0xff]
    %v2252 = vld [vmem:[%s2250 + $0x8] sm:$0xff]
    %v2253 = vld [vmem:[%s2250 + $0x10] sm:$0xff]
    %v2254 = vld [vmem:[%s2250 + $0x18] sm:$0xff]
    %s2255 = scalar_lea.vmem %s8, 3
    %v2256 = vld [vmem:[%s2255] sm:$0x1]
    %v2258 = vlaneseq
    %v2259 = vshrl.u32 %v2258, 7
    %v2260 = vsub.s32 0, %v2259
    %v2261 = vrot.slane %v2256, %v2260
    %2263 = vmatprep.subr.mxu0 0.0
    %2264 = vmatpush1.msra.mxu0 %v2251
    %2265 = vmatprep.subr.mxu0 0.0
    %2266 = vmatpush1.msra.mxu0 %v2252
    %2267 = vmatprep.subr.mxu0 0.0
    %2268 = vmatpush1.msra.mxu0 %v2253
    %2269 = vmatprep.subr.mxu0 0.0
    %2270 = vmatpush1.msra.mxu0 %v2254
    %2271 = vmatprep.subr.mxu0 0.0
    %2272 = vmatpush1.msra.mxu0 0.0
    %2273 = vmatprep.subr.mxu0 0.0
    %2274 = vmatpush1.msra.mxu0 0.0
    %2275 = vmatprep.subr.mxu0 0.0
    %2276 = vmatpush1.msra.mxu0 0.0
    %2277 = vmatprep.subr.mxu0 0.0
    %2278 = vmatpush1.msra.mxu0 0.0
    %2279 = vmatprep.subr.mxu0 0.0
    %2280 = vmatpush1.msra.mxu0 0.0
    %2281 = vmatprep.subr.mxu0 0.0
    %2282 = vmatpush1.msra.mxu0 0.0
    %2283 = vmatprep.subr.mxu0 0.0
    %2284 = vmatpush1.msra.mxu0 0.0
    %2285 = vmatprep.subr.mxu0 0.0
    %2286 = vmatpush1.msra.mxu0 0.0
    %2287 = vmatprep.subr.mxu0 0.0
    %2288 = vmatpush1.msra.mxu0 0.0
    %2289 = vmatprep.subr.mxu0 0.0
    %2290 = vmatpush1.msra.mxu0 0.0
    %2291 = vmatprep.subr.mxu0 0.0
    %2292 = vmatpush1.msra.mxu0 0.0
    %2293 = vmatprep.subr.mxu0 0.0
    %2294 = vmatpush1.msra.mxu0 0.0
    %2295 = vmatprep.subr.mxu0 0.0
    %2296 = vmatpush1.msra.mxu0 0.0
    %2297 = vmatprep.subr.mxu0 0.0
    %2298 = vmatpush1.msra.mxu0 0.0
    %2299 = vmatprep.subr.mxu0 0.0
    %2300 = vmatpush1.msra.mxu0 0.0
    %2301 = vmatprep.subr.mxu0 0.0
    %2302 = vmatpush1.msra.mxu0 0.0
    %2303 = vmatprep.subr.mxu0 0.0
    %2304 = vmatpush1.msra.mxu0 0.0
    %2305 = vmatprep.subr.mxu0 0.0
    %2306 = vmatpush1.msra.mxu0 0.0
    %2307 = vmatprep.subr.mxu0 0.0
    %2308 = vmatpush1.msra.mxu0 0.0
    %2309 = vmatprep.subr.mxu0 0.0
    %2310 = vmatpush1.msra.mxu0 0.0
    %2311 = vmatprep.subr.mxu0 0.0
    %2312 = vmatpush1.msra.mxu0 0.0
    %2313 = vmatprep.subr.mxu0 0.0
    %2314 = vmatpush1.msra.mxu0 0.0
    %2315 = vmatprep.subr.mxu0 0.0
    %2316 = vmatpush1.msra.mxu0 0.0
    %2317 = vmatprep.subr.mxu0 0.0
    %2318 = vmatpush1.msra.mxu0 0.0
    %2319 = vmatprep.subr.mxu0 0.0
    %2320 = vmatpush1.msra.mxu0 0.0
    %2321 = vmatprep.subr.mxu0 0.0
    %2322 = vmatpush1.msra.mxu0 0.0
    %2323 = vmatprep.subr.mxu0 0.0
    %2324 = vmatpush1.msra.mxu0 0.0
    %2325 = vmatprep.subr.mxu0 0.0
    %2326 = vmatpush1.msra.mxu0 0.0
    %2327 = vmatprep.mubr.f32.mxu0 0.0
    %2328 = vmatmul.mubr.f32.gmra.mrb[0].mxu0 %v259
    %v2329 = vpop.f32.mrb[0].mxu0
    %v2330 = vadd.f32 %v2261, %v2329
    %v2331 = vpop.f32.mrb[0].mxu0
    %2332 = vmatprep.mubr.f32.mxu0 0.0
    %2333 = vmatmul.mubr.f32.gmra.mrb[0].mxu0 %v262
    %v2334 = vpop.f32.mrb[0].mxu0
    %v2335 = vadd.f32 %v2261, %v2334
    %v2336 = vpop.f32.mrb[0].mxu0
    %2337 = vdwg.mxu0
    %s2338 = scalar_lea.vmem %s6, 96
    %v2339 = vld [vmem:[%s2338] sm:$0xff]
    %v2340 = vld [vmem:[%s2338 + $0x8] sm:$0xff]
    %v2341 = vld [vmem:[%s2338 + $0x10] sm:$0xff]
    %v2342 = vld [vmem:[%s2338 + $0x18] sm:$0xff]
    %s2343 = scalar_lea.vmem %s9, 3
    %v2344 = vld [vmem:[%s2343] sm:$0x1]
    %v2346 = vlaneseq
    %v2347 = vshrl.u32 %v2346, 7
    %v2348 = vsub.s32 0, %v2347
    %v2349 = vrot.slane %v2344, %v2348
    %2351 = vmatprep.subr.mxu0 0.0
    %2352 = vmatpush1.msra.mxu0 %v2339
    %2353 = vmatprep.subr.mxu0 0.0
    %2354 = vmatpush1.msra.mxu0 %v2340
    %2355 = vmatprep.subr.mxu0 0.0
    %2356 = vmatpush1.msra.mxu0 %v2341
    %2357 = vmatprep.subr.mxu0 0.0
    %2358 = vmatpush1.msra.mxu0 %v2342
    %2359 = vmatprep.subr.mxu0 0.0
    %2360 = vmatpush1.msra.mxu0 0.0
    %2361 = vmatprep.subr.mxu0 0.0
    %2362 = vmatpush1.msra.mxu0 0.0
    %2363 = vmatprep.subr.mxu0 0.0
    %2364 = vmatpush1.msra.mxu0 0.0
    %2365 = vmatprep.subr.mxu0 0.0
    %2366 = vmatpush1.msra.mxu0 0.0
    %2367 = vmatprep.subr.mxu0 0.0
    %2368 = vmatpush1.msra.mxu0 0.0
    %2369 = vmatprep.subr.mxu0 0.0
    %2370 = vmatpush1.msra.mxu0 0.0
    %2371 = vmatprep.subr.mxu0 0.0
    %2372 = vmatpush1.msra.mxu0 0.0
    %2373 = vmatprep.subr.mxu0 0.0
    %2374 = vmatpush1.msra.mxu0 0.0
    %2375 = vmatprep.subr.mxu0 0.0
    %2376 = vmatpush1.msra.mxu0 0.0
    %2377 = vmatprep.subr.mxu0 0.0
    %2378 = vmatpush1.msra.mxu0 0.0
    %2379 = vmatprep.subr.mxu0 0.0
    %2380 = vmatpush1.msra.mxu0 0.0
    %2381 = vmatprep.subr.mxu0 0.0
    %2382 = vmatpush1.msra.mxu0 0.0
    %2383 = vmatprep.subr.mxu0 0.0
    %2384 = vmatpush1.msra.mxu0 0.0
    %2385 = vmatprep.subr.mxu0 0.0
    %2386 = vmatpush1.msra.mxu0 0.0
    %2387 = vmatprep.subr.mxu0 0.0
    %2388 = vmatpush1.msra.mxu0 0.0
    %2389 = vmatprep.subr.mxu0 0.0
    %2390 = vmatpush1.msra.mxu0 0.0
    %2391 = vmatprep.subr.mxu0 0.0
    %2392 = vmatpush1.msra.mxu0 0.0
    %2393 = vmatprep.subr.mxu0 0.0
    %2394 = vmatpush1.msra.mxu0 0.0
    %2395 = vmatprep.subr.mxu0 0.0
    %2396 = vmatpush1.msra.mxu0 0.0
    %2397 = vmatprep.subr.mxu0 0.0
    %2398 = vmatpush1.msra.mxu0 0.0
    %2399 = vmatprep.subr.mxu0 0.0
    %2400 = vmatpush1.msra.mxu0 0.0
    %2401 = vmatprep.subr.mxu0 0.0
    %2402 = vmatpush1.msra.mxu0 0.0
    %2403 = vmatprep.subr.mxu0 0.0
    %2404 = vmatpush1.msra.mxu0 0.0
    %2405 = vmatprep.subr.mxu0 0.0
    %2406 = vmatpush1.msra.mxu0 0.0
    %2407 = vmatprep.subr.mxu0 0.0
    %2408 = vmatpush1.msra.mxu0 0.0
    %2409 = vmatprep.subr.mxu0 0.0
    %2410 = vmatpush1.msra.mxu0 0.0
    %2411 = vmatprep.subr.mxu0 0.0
    %2412 = vmatpush1.msra.mxu0 0.0
    %2413 = vmatprep.subr.mxu0 0.0
    %2414 = vmatpush1.msra.mxu0 0.0
    %2415 = vmatprep.mubr.f32.mxu0 0.0
    %2416 = vmatmul.mubr.f32.gmra.mrb[0].mxu0 %v259
    %v2417 = vpop.f32.mrb[0].mxu0
    %v2418 = vadd.f32 %v2349, %v2417
    %v2419 = vpop.f32.mrb[0].mxu0
    %2420 = vmatprep.mubr.f32.mxu0 0.0
    %2421 = vmatmul.mubr.f32.gmra.mrb[0].mxu0 %v262
    %v2422 = vpop.f32.mrb[0].mxu0
    %v2423 = vadd.f32 %v2349, %v2422
    %v2424 = vpop.f32.mrb[0].mxu0
    %2425 = vdwg.mxu0
    %s2426 = scalar_lea.vmem %s7, 96
    %v2427 = vld [vmem:[%s2426] sm:$0xff]
    %v2428 = vld [vmem:[%s2426 + $0x8] sm:$0xff]
    %v2429 = vld [vmem:[%s2426 + $0x10] sm:$0xff]
    %v2430 = vld [vmem:[%s2426 + $0x18] sm:$0xff]
    %s2431 = scalar_lea.vmem %s10, 3
    %v2432 = vld [vmem:[%s2431] sm:$0x1]
    %v2434 = vlaneseq
    %v2435 = vshrl.u32 %v2434, 7
    %v2436 = vsub.s32 0, %v2435
    %v2437 = vrot.slane %v2432, %v2436
    %2439 = vmatprep.subr.mxu0 0.0
    %2440 = vmatpush1.msra.mxu0 %v2427
    %2441 = vmatprep.subr.mxu0 0.0
    %2442 = vmatpush1.msra.mxu0 %v2428
    %2443 = vmatprep.subr.mxu0 0.0
    %2444 = vmatpush1.msra.mxu0 %v2429
    %2445 = vmatprep.subr.mxu0 0.0
    %2446 = vmatpush1.msra.mxu0 %v2430
    %2447 = vmatprep.subr.mxu0 0.0
    %2448 = vmatpush1.msra.mxu0 0.0
    %2449 = vmatprep.subr.mxu0 0.0
    %2450 = vmatpush1.msra.mxu0 0.0
    %2451 = vmatprep.subr.mxu0 0.0
    %2452 = vmatpush1.msra.mxu0 0.0
    %2453 = vmatprep.subr.mxu0 0.0
    %2454 = vmatpush1.msra.mxu0 0.0
    %2455 = vmatprep.subr.mxu0 0.0
    %2456 = vmatpush1.msra.mxu0 0.0
    %2457 = vmatprep.subr.mxu0 0.0
    %2458 = vmatpush1.msra.mxu0 0.0
    %2459 = vmatprep.subr.mxu0 0.0
    %2460 = vmatpush1.msra.mxu0 0.0
    %2461 = vmatprep.subr.mxu0 0.0
    %2462 = vmatpush1.msra.mxu0 0.0
    %2463 = vmatprep.subr.mxu0 0.0
    %2464 = vmatpush1.msra.mxu0 0.0
    %2465 = vmatprep.subr.mxu0 0.0
    %2466 = vmatpush1.msra.mxu0 0.0
    %2467 = vmatprep.subr.mxu0 0.0
    %2468 = vmatpush1.msra.mxu0 0.0
    %2469 = vmatprep.subr.mxu0 0.0
    %2470 = vmatpush1.msra.mxu0 0.0
    %2471 = vmatprep.subr.mxu0 0.0
    %2472 = vmatpush1.msra.mxu0 0.0
    %2473 = vmatprep.subr.mxu0 0.0
    %2474 = vmatpush1.msra.mxu0 0.0
    %2475 = vmatprep.subr.mxu0 0.0
    %2476 = vmatpush1.msra.mxu0 0.0
    %2477 = vmatprep.subr.mxu0 0.0
    %2478 = vmatpush1.msra.mxu0 0.0
    %2479 = vmatprep.subr.mxu0 0.0
    %2480 = vmatpush1.msra.mxu0 0.0
    %2481 = vmatprep.subr.mxu0 0.0
    %2482 = vmatpush1.msra.mxu0 0.0
    %2483 = vmatprep.subr.mxu0 0.0
    %2484 = vmatpush1.msra.mxu0 0.0
    %2485 = vmatprep.subr.mxu0 0.0
    %2486 = vmatpush1.msra.mxu0 0.0
    %2487 = vmatprep.subr.mxu0 0.0
    %2488 = vmatpush1.msra.mxu0 0.0
    %2489 = vmatprep.subr.mxu0 0.0
    %2490 = vmatpush1.msra.mxu0 0.0
    %2491 = vmatprep.subr.mxu0 0.0
    %2492 = vmatpush1.msra.mxu0 0.0
    %2493 = vmatprep.subr.mxu0 0.0
    %2494 = vmatpush1.msra.mxu0 0.0
    %2495 = vmatprep.subr.mxu0 0.0
    %2496 = vmatpush1.msra.mxu0 0.0
    %2497 = vmatprep.subr.mxu0 0.0
    %2498 = vmatpush1.msra.mxu0 0.0
    %2499 = vmatprep.subr.mxu0 0.0
    %2500 = vmatpush1.msra.mxu0 0.0
    %2501 = vmatprep.subr.mxu0 0.0
    %2502 = vmatpush1.msra.mxu0 0.0
    %2503 = vmatprep.mubr.f32.mxu0 0.0
    %2504 = vmatmul.mubr.f32.gmra.mrb[0].mxu0 %v259
    %v2505 = vpop.f32.mrb[0].mxu0
    %v2506 = vadd.f32 %v2437, %v2505
    %v2507 = vpop.f32.mrb[0].mxu0
    %2508 = vmatprep.mubr.f32.mxu0 0.0
    %2509 = vmatmul.mubr.f32.gmra.mrb[0].mxu0 %v262
    %v2510 = vpop.f32.mrb[0].mxu0
    %v2511 = vadd.f32 %v2437, %v2510
    %v2512 = vpop.f32.mrb[0].mxu0
    %2513 = vdwg.mxu0
    %v2515 = vsel %vm511, %v2330, 0
    %v2518 = vsel %vm511, %v2418, 0
    %2520 = vmatprep.subr.mxu0 0.0
    %2521 = vmatpush1.xpose.msra.mxu0 %v2518
    %2522 = vmatprep.subr.mxu0 0.0
    %2523 = vmatpush1.xpose.msra.mxu0 0.0
    %2524 = vmatprep.subr.mxu0 0.0
    %2525 = vmatpush1.xpose.msra.mxu0 0.0
    %2526 = vmatprep.subr.mxu0 0.0
    %2527 = vmatpush1.xpose.msra.mxu0 0.0
    %2528 = vmatprep.subr.mxu0 0.0
    %2529 = vmatpush1.xpose.msra.mxu0 0.0
    %2530 = vmatprep.subr.mxu0 0.0
    %2531 = vmatpush1.xpose.msra.mxu0 0.0
    %2532 = vmatprep.subr.mxu0 0.0
    %2533 = vmatpush1.xpose.msra.mxu0 0.0
    %2534 = vmatprep.subr.mxu0 0.0
    %2535 = vmatpush1.xpose.msra.mxu0 0.0
    %2536 = vmatprep.subr.mxu0 0.0
    %2537 = vmatpush1.xpose.msra.mxu0 0.0
    %2538 = vmatprep.subr.mxu0 0.0
    %2539 = vmatpush1.xpose.msra.mxu0 0.0
    %2540 = vmatprep.subr.mxu0 0.0
    %2541 = vmatpush1.xpose.msra.mxu0 0.0
    %2542 = vmatprep.subr.mxu0 0.0
    %2543 = vmatpush1.xpose.msra.mxu0 0.0
    %2544 = vmatprep.subr.mxu0 0.0
    %2545 = vmatpush1.xpose.msra.mxu0 0.0
    %2546 = vmatprep.subr.mxu0 0.0
    %2547 = vmatpush1.xpose.msra.mxu0 0.0
    %2548 = vmatprep.subr.mxu0 0.0
    %2549 = vmatpush1.xpose.msra.mxu0 0.0
    %2550 = vmatprep.subr.mxu0 0.0
    %2551 = vmatpush1.xpose.msra.mxu0 0.0
    %2552 = vmatprep.subr.mxu0 0.0
    %2553 = vmatpush1.xpose.msra.mxu0 0.0
    %2554 = vmatprep.subr.mxu0 0.0
    %2555 = vmatpush1.xpose.msra.mxu0 0.0
    %2556 = vmatprep.subr.mxu0 0.0
    %2557 = vmatpush1.xpose.msra.mxu0 0.0
    %2558 = vmatprep.subr.mxu0 0.0
    %2559 = vmatpush1.xpose.msra.mxu0 0.0
    %2560 = vmatprep.subr.mxu0 0.0
    %2561 = vmatpush1.xpose.msra.mxu0 0.0
    %2562 = vmatprep.subr.mxu0 0.0
    %2563 = vmatpush1.xpose.msra.mxu0 0.0
    %2564 = vmatprep.subr.mxu0 0.0
    %2565 = vmatpush1.xpose.msra.mxu0 0.0
    %2566 = vmatprep.subr.mxu0 0.0
    %2567 = vmatpush1.xpose.msra.mxu0 0.0
    %2568 = vmatprep.subr.mxu0 0.0
    %2569 = vmatpush1.xpose.msra.mxu0 0.0
    %2570 = vmatprep.subr.mxu0 0.0
    %2571 = vmatpush1.xpose.msra.mxu0 0.0
    %2572 = vmatprep.subr.mxu0 0.0
    %2573 = vmatpush1.xpose.msra.mxu0 0.0
    %2574 = vmatprep.subr.mxu0 0.0
    %2575 = vmatpush1.xpose.msra.mxu0 0.0
    %2576 = vmatprep.subr.mxu0 0.0
    %2577 = vmatpush1.xpose.msra.mxu0 0.0
    %2578 = vmatprep.subr.mxu0 0.0
    %2579 = vmatpush1.xpose.msra.mxu0 0.0
    %2580 = vmatprep.subr.mxu0 0.0
    %2581 = vmatpush1.xpose.msra.mxu0 0.0
    %2582 = vmatprep.subr.mxu0 0.0
    %2583 = vmatpush1.xpose.msra.mxu0 0.0
    %2584 = vmatprep.mubr.f32.mxu0 0.0
    %2585 = vmatmul.mubr.f32.gmra.mrb[0].mxu0 %v2515
    %v2586 = vpop.f32.mrb[0].mxu0
    %v2587 = vadd.f32 %v217, %v2586
    %v2588 = vpop.f32.mrb[0].mxu0
    %2589 = vdwg.mxu0
    %v2591 = vsel %vm511, %v2335, 0
    %v2594 = vsel %vm511, %v2423, 0
    %2596 = vmatprep.subr.mxu0 0.0
    %2597 = vmatpush1.xpose.msra.mxu0 %v2594
    %2598 = vmatprep.subr.mxu0 0.0
    %2599 = vmatpush1.xpose.msra.mxu0 0.0
    %2600 = vmatprep.subr.mxu0 0.0
    %2601 = vmatpush1.xpose.msra.mxu0 0.0
    %2602 = vmatprep.subr.mxu0 0.0
    %2603 = vmatpush1.xpose.msra.mxu0 0.0
    %2604 = vmatprep.subr.mxu0 0.0
    %2605 = vmatpush1.xpose.msra.mxu0 0.0
    %2606 = vmatprep.subr.mxu0 0.0
    %2607 = vmatpush1.xpose.msra.mxu0 0.0
    %2608 = vmatprep.subr.mxu0 0.0
    %2609 = vmatpush1.xpose.msra.mxu0 0.0
    %2610 = vmatprep.subr.mxu0 0.0
    %2611 = vmatpush1.xpose.msra.mxu0 0.0
    %2612 = vmatprep.subr.mxu0 0.0
    %2613 = vmatpush1.xpose.msra.mxu0 0.0
    %2614 = vmatprep.subr.mxu0 0.0
    %2615 = vmatpush1.xpose.msra.mxu0 0.0
    %2616 = vmatprep.subr.mxu0 0.0
    %2617 = vmatpush1.xpose.msra.mxu0 0.0
    %2618 = vmatprep.subr.mxu0 0.0
    %2619 = vmatpush1.xpose.msra.mxu0 0.0
    %2620 = vmatprep.subr.mxu0 0.0
    %2621 = vmatpush1.xpose.msra.mxu0 0.0
    %2622 = vmatprep.subr.mxu0 0.0
    %2623 = vmatpush1.xpose.msra.mxu0 0.0
    %2624 = vmatprep.subr.mxu0 0.0
    %2625 = vmatpush1.xpose.msra.mxu0 0.0
    %2626 = vmatprep.subr.mxu0 0.0
    %2627 = vmatpush1.xpose.msra.mxu0 0.0
    %2628 = vmatprep.subr.mxu0 0.0
    %2629 = vmatpush1.xpose.msra.mxu0 0.0
    %2630 = vmatprep.subr.mxu0 0.0
    %2631 = vmatpush1.xpose.msra.mxu0 0.0
    %2632 = vmatprep.subr.mxu0 0.0
    %2633 = vmatpush1.xpose.msra.mxu0 0.0
    %2634 = vmatprep.subr.mxu0 0.0
    %2635 = vmatpush1.xpose.msra.mxu0 0.0
    %2636 = vmatprep.subr.mxu0 0.0
    %2637 = vmatpush1.xpose.msra.mxu0 0.0
    %2638 = vmatprep.subr.mxu0 0.0
    %2639 = vmatpush1.xpose.msra.mxu0 0.0
    %2640 = vmatprep.subr.mxu0 0.0
    %2641 = vmatpush1.xpose.msra.mxu0 0.0
    %2642 = vmatprep.subr.mxu0 0.0
    %2643 = vmatpush1.xpose.msra.mxu0 0.0
    %2644 = vmatprep.subr.mxu0 0.0
    %2645 = vmatpush1.xpose.msra.mxu0 0.0
    %2646 = vmatprep.subr.mxu0 0.0
    %2647 = vmatpush1.xpose.msra.mxu0 0.0
    %2648 = vmatprep.subr.mxu0 0.0
    %2649 = vmatpush1.xpose.msra.mxu0 0.0
    %2650 = vmatprep.subr.mxu0 0.0
    %2651 = vmatpush1.xpose.msra.mxu0 0.0
    %2652 = vmatprep.subr.mxu0 0.0
    %2653 = vmatpush1.xpose.msra.mxu0 0.0
    %2654 = vmatprep.subr.mxu0 0.0
    %2655 = vmatpush1.xpose.msra.mxu0 0.0
    %2656 = vmatprep.subr.mxu0 0.0
    %2657 = vmatpush1.xpose.msra.mxu0 0.0
    %2658 = vmatprep.subr.mxu0 0.0
    %2659 = vmatpush1.xpose.msra.mxu0 0.0
    %2660 = vmatprep.mubr.f32.mxu0 0.0
    %2661 = vmatmul.mubr.f32.gmra.mrb[0].mxu0 %v2591
    %v2662 = vpop.f32.mrb[0].mxu0
    %v2663 = vadd.f32 %v218, %v2662
    %v2664 = vpop.f32.mrb[0].mxu0
    %2665 = vdwg.mxu0
    %v2666 = vsel %vm511, %v2587, -inf
    %2667 = vmax.xlane.f32.xlu0 %v2666
    %v2668 = vpop.xlane.xlu0 %2667
    %v2669 = vsel %vm511, %v2663, -inf
    %2670 = vmax.xlane.f32.xlu0 %v2669
    %v2671 = vpop.xlane.xlu0 %2670
    %v2672 = vsub.f32 %v2587, %v2668
    %v2673 = vsub.f32 %v2663, %v2671
    %v2674 = vmul.f32 %v2672, 1.442695
    %v2675 = vpow.pop %v2674
    %v2676 = vmul.f32 %v2673, 1.442695
    %v2677 = vpow.pop %v2676
    %v2678 = vsel %vm511, %v2675, 0.0
    %2679 = vadd.xlane.f32.xlu0 %v2678
    %v2680 = vpop.xlane.xlu0 %2679
    %v2681 = vsel %vm511, %v2677, 0.0
    %2682 = vadd.xlane.f32.xlu0 %v2681
    %v2683 = vpop.xlane.xlu0 %2682
    %v2684 = vrcp.pop %v2680
    %v2685 = vrcp.pop %v2683
    %v2686 = vmul.f32 %v2675, %v2684
    %v2687 = vmul.f32 %v2677, %v2685
    %v2689 = vsel %vm511, %v2686, 0
    %2691 = vmatprep.subr.mxu0 0.0
    %2692 = vmatpush1.msra.mxu0 %v2506
    %2693 = vmatprep.subr.mxu0 0.0
    %2694 = vmatpush1.msra.mxu0 0.0
    %2695 = vmatprep.subr.mxu0 0.0
    %2696 = vmatpush1.msra.mxu0 0.0
    %2697 = vmatprep.subr.mxu0 0.0
    %2698 = vmatpush1.msra.mxu0 0.0
    %2699 = vmatprep.subr.mxu0 0.0
    %2700 = vmatpush1.msra.mxu0 0.0
    %2701 = vmatprep.subr.mxu0 0.0
    %2702 = vmatpush1.msra.mxu0 0.0
    %2703 = vmatprep.subr.mxu0 0.0
    %2704 = vmatpush1.msra.mxu0 0.0
    %2705 = vmatprep.subr.mxu0 0.0
    %2706 = vmatpush1.msra.mxu0 0.0
    %2707 = vmatprep.subr.mxu0 0.0
    %2708 = vmatpush1.msra.mxu0 0.0
    %2709 = vmatprep.subr.mxu0 0.0
    %2710 = vmatpush1.msra.mxu0 0.0
    %2711 = vmatprep.subr.mxu0 0.0
    %2712 = vmatpush1.msra.mxu0 0.0
    %2713 = vmatprep.subr.mxu0 0.0
    %2714 = vmatpush1.msra.mxu0 0.0
    %2715 = vmatprep.subr.mxu0 0.0
    %2716 = vmatpush1.msra.mxu0 0.0
    %2717 = vmatprep.subr.mxu0 0.0
    %2718 = vmatpush1.msra.mxu0 0.0
    %2719 = vmatprep.subr.mxu0 0.0
    %2720 = vmatpush1.msra.mxu0 0.0
    %2721 = vmatprep.subr.mxu0 0.0
    %2722 = vmatpush1.msra.mxu0 0.0
    %2723 = vmatprep.subr.mxu0 0.0
    %2724 = vmatpush1.msra.mxu0 0.0
    %2725 = vmatprep.subr.mxu0 0.0
    %2726 = vmatpush1.msra.mxu0 0.0
    %2727 = vmatprep.subr.mxu0 0.0
    %2728 = vmatpush1.msra.mxu0 0.0
    %2729 = vmatprep.subr.mxu0 0.0
    %2730 = vmatpush1.msra.mxu0 0.0
    %2731 = vmatprep.subr.mxu0 0.0
    %2732 = vmatpush1.msra.mxu0 0.0
    %2733 = vmatprep.subr.mxu0 0.0
    %2734 = vmatpush1.msra.mxu0 0.0
    %2735 = vmatprep.subr.mxu0 0.0
    %2736 = vmatpush1.msra.mxu0 0.0
    %2737 = vmatprep.subr.mxu0 0.0
    %2738 = vmatpush1.msra.mxu0 0.0
    %2739 = vmatprep.subr.mxu0 0.0
    %2740 = vmatpush1.msra.mxu0 0.0
    %2741 = vmatprep.subr.mxu0 0.0
    %2742 = vmatpush1.msra.mxu0 0.0
    %2743 = vmatprep.subr.mxu0 0.0
    %2744 = vmatpush1.msra.mxu0 0.0
    %2745 = vmatprep.subr.mxu0 0.0
    %2746 = vmatpush1.msra.mxu0 0.0
    %2747 = vmatprep.subr.mxu0 0.0
    %2748 = vmatpush1.msra.mxu0 0.0
    %2749 = vmatprep.subr.mxu0 0.0
    %2750 = vmatpush1.msra.mxu0 0.0
    %2751 = vmatprep.subr.mxu0 0.0
    %2752 = vmatpush1.msra.mxu0 0.0
    %2753 = vmatprep.subr.mxu0 0.0
    %2754 = vmatpush1.msra.mxu0 0.0
    %2755 = vmatprep.mubr.f32.mxu0 0.0
    %2756 = vmatmul.mubr.f32.gmra.mrb[0].mxu0 %v2689
    %v2757 = vpop.f32.mrb[0].mxu0
    %v2758 = vadd.f32 0.0, %v2757
    %v2759 = vpop.f32.mrb[0].mxu0
    %2760 = vdwg.mxu0
    %v2762 = vsel %vm511, %v2687, 0
    %2764 = vmatprep.subr.mxu0 0.0
    %2765 = vmatpush1.msra.mxu0 %v2511
    %2766 = vmatprep.subr.mxu0 0.0
    %2767 = vmatpush1.msra.mxu0 0.0
    %2768 = vmatprep.subr.mxu0 0.0
    %2769 = vmatpush1.msra.mxu0 0.0
    %2770 = vmatprep.subr.mxu0 0.0
    %2771 = vmatpush1.msra.mxu0 0.0
    %2772 = vmatprep.subr.mxu0 0.0
    %2773 = vmatpush1.msra.mxu0 0.0
    %2774 = vmatprep.subr.mxu0 0.0
    %2775 = vmatpush1.msra.mxu0 0.0
    %2776 = vmatprep.subr.mxu0 0.0
    %2777 = vmatpush1.msra.mxu0 0.0
    %2778 = vmatprep.subr.mxu0 0.0
    %2779 = vmatpush1.msra.mxu0 0.0
    %2780 = vmatprep.subr.mxu0 0.0
    %2781 = vmatpush1.msra.mxu0 0.0
    %2782 = vmatprep.subr.mxu0 0.0
    %2783 = vmatpush1.msra.mxu0 0.0
    %2784 = vmatprep.subr.mxu0 0.0
    %2785 = vmatpush1.msra.mxu0 0.0
    %2786 = vmatprep.subr.mxu0 0.0
    %2787 = vmatpush1.msra.mxu0 0.0
    %2788 = vmatprep.subr.mxu0 0.0
    %2789 = vmatpush1.msra.mxu0 0.0
    %2790 = vmatprep.subr.mxu0 0.0
    %2791 = vmatpush1.msra.mxu0 0.0
    %2792 = vmatprep.subr.mxu0 0.0
    %2793 = vmatpush1.msra.mxu0 0.0
    %2794 = vmatprep.subr.mxu0 0.0
    %2795 = vmatpush1.msra.mxu0 0.0
    %2796 = vmatprep.subr.mxu0 0.0
    %2797 = vmatpush1.msra.mxu0 0.0
    %2798 = vmatprep.subr.mxu0 0.0
    %2799 = vmatpush1.msra.mxu0 0.0
    %2800 = vmatprep.subr.mxu0 0.0
    %2801 = vmatpush1.msra.mxu0 0.0
    %2802 = vmatprep.subr.mxu0 0.0
    %2803 = vmatpush1.msra.mxu0 0.0
    %2804 = vmatprep.subr.mxu0 0.0
    %2805 = vmatpush1.msra.mxu0 0.0
    %2806 = vmatprep.subr.mxu0 0.0
    %2807 = vmatpush1.msra.mxu0 0.0
    %2808 = vmatprep.subr.mxu0 0.0
    %2809 = vmatpush1.msra.mxu0 0.0
    %2810 = vmatprep.subr.mxu0 0.0
    %2811 = vmatpush1.msra.mxu0 0.0
    %2812 = vmatprep.subr.mxu0 0.0
    %2813 = vmatpush1.msra.mxu0 0.0
    %2814 = vmatprep.subr.mxu0 0.0
    %2815 = vmatpush1.msra.mxu0 0.0
    %2816 = vmatprep.subr.mxu0 0.0
    %2817 = vmatpush1.msra.mxu0 0.0
    %2818 = vmatprep.subr.mxu0 0.0
    %2819 = vmatpush1.msra.mxu0 0.0
    %2820 = vmatprep.subr.mxu0 0.0
    %2821 = vmatpush1.msra.mxu0 0.0
    %2822 = vmatprep.subr.mxu0 0.0
    %2823 = vmatpush1.msra.mxu0 0.0
    %2824 = vmatprep.subr.mxu0 0.0
    %2825 = vmatpush1.msra.mxu0 0.0
    %2826 = vmatprep.subr.mxu0 0.0
    %2827 = vmatpush1.msra.mxu0 0.0
    %2828 = vmatprep.mubr.f32.mxu0 0.0
    %2829 = vmatmul.mubr.f32.gmra.mrb[0].mxu0 %v2762
    %v2830 = vpop.f32.mrb[0].mxu0
    %v2831 = vadd.f32 0.0, %v2830
    %v2832 = vpop.f32.mrb[0].mxu0
    %2833 = vdwg.mxu0
    %s2834 = scalar_lea.vmem %s11, 24
    %v2835 = vld [vmem:[%s2834] sm:$0xff]
    %v2837 = vsel %vm511, %v2758, 0
    %v2840 = vsel %vm511, %v2831, 0
    %2842 = vmatprep.subr.mxu0 0.0
    %2843 = vmatpush1.msra.mxu0 %v2835
    %2844 = vmatprep.subr.mxu0 0.0
    %2845 = vmatpush1.msra.mxu0 0.0
    %2846 = vmatprep.subr.mxu0 0.0
    %2847 = vmatpush1.msra.mxu0 0.0
    %2848 = vmatprep.subr.mxu0 0.0
    %2849 = vmatpush1.msra.mxu0 0.0
    %2850 = vmatprep.subr.mxu0 0.0
    %2851 = vmatpush1.msra.mxu0 0.0
    %2852 = vmatprep.subr.mxu0 0.0
    %2853 = vmatpush1.msra.mxu0 0.0
    %2854 = vmatprep.subr.mxu0 0.0
    %2855 = vmatpush1.msra.mxu0 0.0
    %2856 = vmatprep.subr.mxu0 0.0
    %2857 = vmatpush1.msra.mxu0 0.0
    %2858 = vmatprep.subr.mxu0 0.0
    %2859 = vmatpush1.msra.mxu0 0.0
    %2860 = vmatprep.subr.mxu0 0.0
    %2861 = vmatpush1.msra.mxu0 0.0
    %2862 = vmatprep.subr.mxu0 0.0
    %2863 = vmatpush1.msra.mxu0 0.0
    %2864 = vmatprep.subr.mxu0 0.0
    %2865 = vmatpush1.msra.mxu0 0.0
    %2866 = vmatprep.subr.mxu0 0.0
    %2867 = vmatpush1.msra.mxu0 0.0
    %2868 = vmatprep.subr.mxu0 0.0
    %2869 = vmatpush1.msra.mxu0 0.0
    %2870 = vmatprep.subr.mxu0 0.0
    %2871 = vmatpush1.msra.mxu0 0.0
    %2872 = vmatprep.subr.mxu0 0.0
    %2873 = vmatpush1.msra.mxu0 0.0
    %2874 = vmatprep.subr.mxu0 0.0
    %2875 = vmatpush1.msra.mxu0 0.0
    %2876 = vmatprep.subr.mxu0 0.0
    %2877 = vmatpush1.msra.mxu0 0.0
    %2878 = vmatprep.subr.mxu0 0.0
    %2879 = vmatpush1.msra.mxu0 0.0
    %2880 = vmatprep.subr.mxu0 0.0
    %2881 = vmatpush1.msra.mxu0 0.0
    %2882 = vmatprep.subr.mxu0 0.0
    %2883 = vmatpush1.msra.mxu0 0.0
    %2884 = vmatprep.subr.mxu0 0.0
    %2885 = vmatpush1.msra.mxu0 0.0
    %2886 = vmatprep.subr.mxu0 0.0
    %2887 = vmatpush1.msra.mxu0 0.0
    %2888 = vmatprep.subr.mxu0 0.0
    %2889 = vmatpush1.msra.mxu0 0.0
    %2890 = vmatprep.subr.mxu0 0.0
    %2891 = vmatpush1.msra.mxu0 0.0
    %2892 = vmatprep.subr.mxu0 0.0
    %2893 = vmatpush1.msra.mxu0 0.0
    %2894 = vmatprep.subr.mxu0 0.0
    %2895 = vmatpush1.msra.mxu0 0.0
    %2896 = vmatprep.subr.mxu0 0.0
    %2897 = vmatpush1.msra.mxu0 0.0
    %2898 = vmatprep.subr.mxu0 0.0
    %2899 = vmatpush1.msra.mxu0 0.0
    %2900 = vmatprep.subr.mxu0 0.0
    %2901 = vmatpush1.msra.mxu0 0.0
    %2902 = vmatprep.subr.mxu0 0.0
    %2903 = vmatpush1.msra.mxu0 0.0
    %2904 = vmatprep.subr.mxu0 0.0
    %2905 = vmatpush1.msra.mxu0 0.0
    %2906 = vmatprep.mubr.f32.mxu0 0.0
    %2907 = vmatmul.mubr.f32.gmra.mrb[0].mxu0 %v2837
    %v2908 = vpop.f32.mrb[0].mxu0
    %v2909 = vadd.f32 0.0, %v2908
    %v2910 = vpop.f32.mrb[0].mxu0
    %2911 = vmatprep.mubr.f32.mxu0 0.0
    %2912 = vmatmul.mubr.f32.gmra.mrb[0].mxu0 %v2840
    %v2913 = vpop.f32.mrb[0].mxu0
    %v2914 = vadd.f32 0.0, %v2913
    %v2915 = vpop.f32.mrb[0].mxu0
    %2916 = vdwg.mxu0
    %v2917 = vadd.f32 %v2248, %v2909
    %v2918 = vadd.f32 %v2249, %v2914
    %v2920 = vlaneseq
    %v2921 = vshrl.u32 %v2920, 7
    %v2922 = vsub.s32 0, %v2921
    %v2923 = vrot.slane %v219, %v2922
    %v2925 = vadd.f32 %v2917, %v2923
    %v2926 = vadd.f32 %v2918, %v2923
    %v2927 = vadd.f32 %v2925, %v2925
    %v2928 = vadd.f32 %v2926, %v2926
    %v2929 = vsel %vm257, %v2927, 0.0
    %2930 = vadd.xlane.f32.xlu0 %v2929
    %v2931 = vpop.xlane.xlu0 %2930
    %v2932 = vsel %vm257, %v2928, 0.0
    %2933 = vadd.xlane.f32.xlu0 %v2932
    %v2934 = vpop.xlane.xlu0 %2933
    %v2935 = vrcp.pop 32.0
    %v2936 = vmul.f32 %v2931, %v2935
    %v2937 = vmul.f32 %v2934, %v2935
    %v2938 = vsub.f32 %v2927, %v2936
    %v2939 = vsub.f32 %v2928, %v2937
    %v2940 = vmul.f32 %v2938, %v2938
    %v2941 = vmul.f32 %v2939, %v2939
    %v2942 = vsel %vm257, %v2940, 0.0
    %2943 = vadd.xlane.f32.xlu0 %v2942
    %v2944 = vpop.xlane.xlu0 %2943
    %v2945 = vsel %vm257, %v2941, 0.0
    %2946 = vadd.xlane.f32.xlu0 %v2945
    %v2947 = vpop.xlane.xlu0 %2946
    %v2948 = vmul.f32 %v2944, %v2935
    %v2949 = vmul.f32 %v2947, %v2935
    %v2950 = vadd.f32 %v2948, 1e-05
    %v2951 = vadd.f32 %v2949, 1e-05
    %v2952 = vrsqrt.pop %v2950
    %v2953 = vrsqrt.pop %v2951
    %v2954 = vmul.f32 %v2938, %v2952
    %v2955 = vmul.f32 %v2939, %v2953
    %v2957 = vlaneseq
    %v2958 = vshrl.u32 %v2957, 7
    %v2959 = vsub.s32 0, %v2958
    %v2960 = vrot.slane %v242, %v2959
    %v2962 = vmul.f32 %v2954, %v2960
    %v2963 = vmul.f32 %v2955, %v2960
    %v2965 = vlaneseq
    %v2966 = vshrl.u32 %v2965, 7
    %v2967 = vsub.s32 0, %v2966
    %v2968 = vrot.slane %v243, %v2967
    %v2970 = vadd.f32 %v2962, %v2968
    %v2971 = vadd.f32 %v2963, %v2968
    %v2973 = vlaneseq
    %v2974 = vshrl.u32 %v2973, 7
    %v2975 = vsub.s32 0, %v2974
    %v2976 = vrot.slane %v224, %v2975
    %v2979 = vsel %vm257, %v2970, 0
    %v2982 = vsel %vm257, %v2971, 0
    %2984 = vmatprep.subr.mxu0 0.0
    %2985 = vmatpush1.msra.mxu0 %v220
    %2986 = vmatprep.subr.mxu0 0.0
    %2987 = vmatpush1.msra.mxu0 %v221
    %2988 = vmatprep.subr.mxu0 0.0
    %2989 = vmatpush1.msra.mxu0 %v222
    %2990 = vmatprep.subr.mxu0 0.0
    %2991 = vmatpush1.msra.mxu0 %v223
    %2992 = vmatprep.subr.mxu0 0.0
    %2993 = vmatpush1.msra.mxu0 0.0
    %2994 = vmatprep.subr.mxu0 0.0
    %2995 = vmatpush1.msra.mxu0 0.0
    %2996 = vmatprep.subr.mxu0 0.0
    %2997 = vmatpush1.msra.mxu0 0.0
    %2998 = vmatprep.subr.mxu0 0.0
    %2999 = vmatpush1.msra.mxu0 0.0
    %3000 = vmatprep.subr.mxu0 0.0
    %3001 = vmatpush1.msra.mxu0 0.0
    %3002 = vmatprep.subr.mxu0 0.0
    %3003 = vmatpush1.msra.mxu0 0.0
    %3004 = vmatprep.subr.mxu0 0.0
    %3005 = vmatpush1.msra.mxu0 0.0
    %3006 = vmatprep.subr.mxu0 0.0
    %3007 = vmatpush1.msra.mxu0 0.0
    %3008 = vmatprep.subr.mxu0 0.0
    %3009 = vmatpush1.msra.mxu0 0.0
    %3010 = vmatprep.subr.mxu0 0.0
    %3011 = vmatpush1.msra.mxu0 0.0
    %3012 = vmatprep.subr.mxu0 0.0
    %3013 = vmatpush1.msra.mxu0 0.0
    %3014 = vmatprep.subr.mxu0 0.0
    %3015 = vmatpush1.msra.mxu0 0.0
    %3016 = vmatprep.subr.mxu0 0.0
    %3017 = vmatpush1.msra.mxu0 0.0
    %3018 = vmatprep.subr.mxu0 0.0
    %3019 = vmatpush1.msra.mxu0 0.0
    %3020 = vmatprep.subr.mxu0 0.0
    %3021 = vmatpush1.msra.mxu0 0.0
    %3022 = vmatprep.subr.mxu0 0.0
    %3023 = vmatpush1.msra.mxu0 0.0
    %3024 = vmatprep.subr.mxu0 0.0
    %3025 = vmatpush1.msra.mxu0 0.0
    %3026 = vmatprep.subr.mxu0 0.0
    %3027 = vmatpush1.msra.mxu0 0.0
    %3028 = vmatprep.subr.mxu0 0.0
    %3029 = vmatpush1.msra.mxu0 0.0
    %3030 = vmatprep.subr.mxu0 0.0
    %3031 = vmatpush1.msra.mxu0 0.0
    %3032 = vmatprep.subr.mxu0 0.0
    %3033 = vmatpush1.msra.mxu0 0.0
    %3034 = vmatprep.subr.mxu0 0.0
    %3035 = vmatpush1.msra.mxu0 0.0
    %3036 = vmatprep.subr.mxu0 0.0
    %3037 = vmatpush1.msra.mxu0 0.0
    %3038 = vmatprep.subr.mxu0 0.0
    %3039 = vmatpush1.msra.mxu0 0.0
    %3040 = vmatprep.subr.mxu0 0.0
    %3041 = vmatpush1.msra.mxu0 0.0
    %3042 = vmatprep.subr.mxu0 0.0
    %3043 = vmatpush1.msra.mxu0 0.0
    %3044 = vmatprep.subr.mxu0 0.0
    %3045 = vmatpush1.msra.mxu0 0.0
    %3046 = vmatprep.subr.mxu0 0.0
    %3047 = vmatpush1.msra.mxu0 0.0
    %3048 = vmatprep.mubr.f32.mxu0 0.0
    %3049 = vmatmul.mubr.f32.gmra.mrb[0].mxu0 %v2979
    %v3050 = vpop.f32.mrb[0].mxu0
    %v3051 = vadd.f32 %v2976, %v3050
    %v3052 = vpop.f32.mrb[0].mxu0
    %3053 = vmatprep.mubr.f32.mxu0 0.0
    %3054 = vmatmul.mubr.f32.gmra.mrb[0].mxu0 %v2982
    %v3055 = vpop.f32.mrb[0].mxu0
    %v3056 = vadd.f32 %v2976, %v3055
    %v3057 = vpop.f32.mrb[0].mxu0
    %3058 = vdwg.mxu0
    %v3059 = vmax.f32 %v3051, 0.0
    %v3060 = vmax.f32 %v3056, 0.0
    %v3062 = vlaneseq
    %v3063 = vshrl.u32 %v3062, 7
    %v3064 = vsub.s32 0, %v3063
    %v3065 = vrot.slane %v241, %v3064
    %3067 = vmatprep.subr.mxu0 0.0
    %3068 = vmatpush1.msra.mxu0 %v225
    %3069 = vmatprep.subr.mxu0 0.0
    %3070 = vmatpush1.msra.mxu0 %v226
    %3071 = vmatprep.subr.mxu0 0.0
    %3072 = vmatpush1.msra.mxu0 %v227
    %3073 = vmatprep.subr.mxu0 0.0
    %3074 = vmatpush1.msra.mxu0 %v228
    %3075 = vmatprep.subr.mxu0 0.0
    %3076 = vmatpush1.msra.mxu0 %v229
    %3077 = vmatprep.subr.mxu0 0.0
    %3078 = vmatpush1.msra.mxu0 %v230
    %3079 = vmatprep.subr.mxu0 0.0
    %3080 = vmatpush1.msra.mxu0 %v231
    %3081 = vmatprep.subr.mxu0 0.0
    %3082 = vmatpush1.msra.mxu0 %v232
    %3083 = vmatprep.subr.mxu0 0.0
    %3084 = vmatpush1.msra.mxu0 %v233
    %3085 = vmatprep.subr.mxu0 0.0
    %3086 = vmatpush1.msra.mxu0 %v234
    %3087 = vmatprep.subr.mxu0 0.0
    %3088 = vmatpush1.msra.mxu0 %v235
    %3089 = vmatprep.subr.mxu0 0.0
    %3090 = vmatpush1.msra.mxu0 %v236
    %3091 = vmatprep.subr.mxu0 0.0
    %3092 = vmatpush1.msra.mxu0 %v237
    %3093 = vmatprep.subr.mxu0 0.0
    %3094 = vmatpush1.msra.mxu0 %v238
    %3095 = vmatprep.subr.mxu0 0.0
    %3096 = vmatpush1.msra.mxu0 %v239
    %3097 = vmatprep.subr.mxu0 0.0
    %3098 = vmatpush1.msra.mxu0 %v240
    %3099 = vmatprep.subr.mxu0 0.0
    %3100 = vmatpush1.msra.mxu0 0.0
    %3101 = vmatprep.subr.mxu0 0.0
    %3102 = vmatpush1.msra.mxu0 0.0
    %3103 = vmatprep.subr.mxu0 0.0
    %3104 = vmatpush1.msra.mxu0 0.0
    %3105 = vmatprep.subr.mxu0 0.0
    %3106 = vmatpush1.msra.mxu0 0.0
    %3107 = vmatprep.subr.mxu0 0.0
    %3108 = vmatpush1.msra.mxu0 0.0
    %3109 = vmatprep.subr.mxu0 0.0
    %3110 = vmatpush1.msra.mxu0 0.0
    %3111 = vmatprep.subr.mxu0 0.0
    %3112 = vmatpush1.msra.mxu0 0.0
    %3113 = vmatprep.subr.mxu0 0.0
    %3114 = vmatpush1.msra.mxu0 0.0
    %3115 = vmatprep.subr.mxu0 0.0
    %3116 = vmatpush1.msra.mxu0 0.0
    %3117 = vmatprep.subr.mxu0 0.0
    %3118 = vmatpush1.msra.mxu0 0.0
    %3119 = vmatprep.subr.mxu0 0.0
    %3120 = vmatpush1.msra.mxu0 0.0
    %3121 = vmatprep.subr.mxu0 0.0
    %3122 = vmatpush1.msra.mxu0 0.0
    %3123 = vmatprep.subr.mxu0 0.0
    %3124 = vmatpush1.msra.mxu0 0.0
    %3125 = vmatprep.subr.mxu0 0.0
    %3126 = vmatpush1.msra.mxu0 0.0
    %3127 = vmatprep.subr.mxu0 0.0
    %3128 = vmatpush1.msra.mxu0 0.0
    %3129 = vmatprep.subr.mxu0 0.0
    %3130 = vmatpush1.msra.mxu0 0.0
    %3131 = vmatprep.mubr.f32.mxu0 0.0
    %3132 = vmatmul.mubr.f32.gmra.mrb[0].mxu0 %v3059
    %v3133 = vpop.f32.mrb[0].mxu0
    %v3134 = vadd.f32 %v3065, %v3133
    %v3135 = vpop.f32.mrb[0].mxu0
    %3136 = vmatprep.mubr.f32.mxu0 0.0
    %3137 = vmatmul.mubr.f32.gmra.mrb[0].mxu0 %v3060
    %v3138 = vpop.f32.mrb[0].mxu0
    %v3139 = vadd.f32 %v3065, %v3138
    %v3140 = vpop.f32.mrb[0].mxu0
    %3141 = vdwg.mxu0
    %v3142 = vadd.f32 %v2970, %v3134
    %v3143 = vadd.f32 %v2971, %v3139
    %v3144 = vsel %vm257, %v3142, 0.0
    %3145 = vadd.xlane.f32.xlu0 %v3144
    %v3146 = vpop.xlane.xlu0 %3145
    %v3147 = vsel %vm257, %v3143, 0.0
    %3148 = vadd.xlane.f32.xlu0 %v3147
    %v3149 = vpop.xlane.xlu0 %3148
    %v3150 = vmul.f32 %v3146, %v2935
    %v3151 = vmul.f32 %v3149, %v2935
    %v3152 = vsub.f32 %v3142, %v3150
    %v3153 = vsub.f32 %v3143, %v3151
    %v3154 = vmul.f32 %v3152, %v3152
    %v3155 = vmul.f32 %v3153, %v3153
    %v3156 = vsel %vm257, %v3154, 0.0
    %3157 = vadd.xlane.f32.xlu0 %v3156
    %v3158 = vpop.xlane.xlu0 %3157
    %v3159 = vsel %vm257, %v3155, 0.0
    %3160 = vadd.xlane.f32.xlu0 %v3159
    %v3161 = vpop.xlane.xlu0 %3160
    %v3162 = vmul.f32 %v3158, %v2935
    %v3163 = vmul.f32 %v3161, %v2935
    %v3164 = vadd.f32 %v3162, 1e-05
    %v3165 = vadd.f32 %v3163, 1e-05
    %v3166 = vrsqrt.pop %v3164
    %v3167 = vrsqrt.pop %v3165
    %v3168 = vmul.f32 %v3152, %v3166
    %v3169 = vmul.f32 %v3153, %v3167
    %v3171 = vlaneseq
    %v3172 = vshrl.u32 %v3171, 7
    %v3173 = vsub.s32 0, %v3172
    %v3174 = vrot.slane %v244, %v3173
    %v3176 = vmul.f32 %v3168, %v3174
    %v3177 = vmul.f32 %v3169, %v3174
    %v3179 = vlaneseq
    %v3180 = vshrl.u32 %v3179, 7
    %v3181 = vsub.s32 0, %v3180
    %v3182 = vrot.slane %v245, %v3181
    %v3184 = vadd.f32 %v3176, %v3182
    %v3185 = vadd.f32 %v3177, %v3182
    %s3186 = scalar_lea.vmem %s12, 1
    %v3187 = vld [vmem:[%s3186] sm:$0x1]
    %s3188 = scalar_lea.vmem %s13, 32
    %v3189 = vld [vmem:[%s3188] sm:$0xff]
    %v3190 = vld [vmem:[%s3188 + $0x8] sm:$0xff]
    %v3191 = vld [vmem:[%s3188 + $0x10] sm:$0xff]
    %v3192 = vld [vmem:[%s3188 + $0x18] sm:$0xff]
    %s3193 = scalar_lea.vmem %s14, 1
    %v3194 = vld [vmem:[%s3193] sm:$0x1]
    %s3195 = scalar_lea.vmem %s15, 128
    %v3196 = vld [vmem:[%s3195] sm:$0xff]
    %v3197 = vld [vmem:[%s3195 + $0x8] sm:$0xff]
    %v3198 = vld [vmem:[%s3195 + $0x10] sm:$0xff]
    %v3199 = vld [vmem:[%s3195 + $0x18] sm:$0xff]
    %v3200 = vld [vmem:[%s3195 + $0x20] sm:$0xff]
    %v3201 = vld [vmem:[%s3195 + $0x28] sm:$0xff]
    %v3202 = vld [vmem:[%s3195 + $0x30] sm:$0xff]
    %v3203 = vld [vmem:[%s3195 + $0x38] sm:$0xff]
    %v3204 = vld [vmem:[%s3195 + $0x40] sm:$0xff]
    %v3205 = vld [vmem:[%s3195 + $0x48] sm:$0xff]
    %v3206 = vld [vmem:[%s3195 + $0x50] sm:$0xff]
    %v3207 = vld [vmem:[%s3195 + $0x58] sm:$0xff]
    %v3208 = vld [vmem:[%s3195 + $0x60] sm:$0xff]
    %v3209 = vld [vmem:[%s3195 + $0x68] sm:$0xff]
    %v3210 = vld [vmem:[%s3195 + $0x70] sm:$0xff]
    %v3211 = vld [vmem:[%s3195 + $0x78] sm:$0xff]
    %s3212 = scalar_lea.vmem %s16, 1
    %v3213 = vld [vmem:[%s3212] sm:$0x1]
    %s3214 = scalar_lea.vmem %s17, 1
    %v3215 = vld [vmem:[%s3214] sm:$0x1]
    %s3216 = scalar_lea.vmem %s18, 1
    %v3217 = vld [vmem:[%s3216] sm:$0x1]
    %s3218 = scalar_lea.vmem %s19, 1
    %v3219 = vld [vmem:[%s3218] sm:$0x1]
    %s3220 = scalar_lea.vmem %s20, 1
    %v3221 = vld [vmem:[%s3220] sm:$0x1]
    %s3222 = scalar_lea.vmem %s5, 128
    %v3223 = vld [vmem:[%s3222] sm:$0xff]
    %v3224 = vld [vmem:[%s3222 + $0x8] sm:$0xff]
    %v3225 = vld [vmem:[%s3222 + $0x10] sm:$0xff]
    %v3226 = vld [vmem:[%s3222 + $0x18] sm:$0xff]
    %s3227 = scalar_lea.vmem %s8, 4
    %v3228 = vld [vmem:[%s3227] sm:$0x1]
    %v3230 = vlaneseq
    %v3231 = vshrl.u32 %v3230, 7
    %v3232 = vsub.s32 0, %v3231
    %v3233 = vrot.slane %v3228, %v3232
    %v3236 = vsel %vm257, %v3184, 0
    %v3239 = vsel %vm257, %v3185, 0
    %3241 = vmatprep.subr.mxu0 0.0
    %3242 = vmatpush1.msra.mxu0 %v3223
    %3243 = vmatprep.subr.mxu0 0.0
    %3244 = vmatpush1.msra.mxu0 %v3224
    %3245 = vmatprep.subr.mxu0 0.0
    %3246 = vmatpush1.msra.mxu0 %v3225
    %3247 = vmatprep.subr.mxu0 0.0
    %3248 = vmatpush1.msra.mxu0 %v3226
    %3249 = vmatprep.subr.mxu0 0.0
    %3250 = vmatpush1.msra.mxu0 0.0
    %3251 = vmatprep.subr.mxu0 0.0
    %3252 = vmatpush1.msra.mxu0 0.0
    %3253 = vmatprep.subr.mxu0 0.0
    %3254 = vmatpush1.msra.mxu0 0.0
    %3255 = vmatprep.subr.mxu0 0.0
    %3256 = vmatpush1.msra.mxu0 0.0
    %3257 = vmatprep.subr.mxu0 0.0
    %3258 = vmatpush1.msra.mxu0 0.0
    %3259 = vmatprep.subr.mxu0 0.0
    %3260 = vmatpush1.msra.mxu0 0.0
    %3261 = vmatprep.subr.mxu0 0.0
    %3262 = vmatpush1.msra.mxu0 0.0
    %3263 = vmatprep.subr.mxu0 0.0
    %3264 = vmatpush1.msra.mxu0 0.0
    %3265 = vmatprep.subr.mxu0 0.0
    %3266 = vmatpush1.msra.mxu0 0.0
    %3267 = vmatprep.subr.mxu0 0.0
    %3268 = vmatpush1.msra.mxu0 0.0
    %3269 = vmatprep.subr.mxu0 0.0
    %3270 = vmatpush1.msra.mxu0 0.0
    %3271 = vmatprep.subr.mxu0 0.0
    %3272 = vmatpush1.msra.mxu0 0.0
    %3273 = vmatprep.subr.mxu0 0.0
    %3274 = vmatpush1.msra.mxu0 0.0
    %3275 = vmatprep.subr.mxu0 0.0
    %3276 = vmatpush1.msra.mxu0 0.0
    %3277 = vmatprep.subr.mxu0 0.0
    %3278 = vmatpush1.msra.mxu0 0.0
    %3279 = vmatprep.subr.mxu0 0.0
    %3280 = vmatpush1.msra.mxu0 0.0
    %3281 = vmatprep.subr.mxu0 0.0
    %3282 = vmatpush1.msra.mxu0 0.0
    %3283 = vmatprep.subr.mxu0 0.0
    %3284 = vmatpush1.msra.mxu0 0.0
    %3285 = vmatprep.subr.mxu0 0.0
    %3286 = vmatpush1.msra.mxu0 0.0
    %3287 = vmatprep.subr.mxu0 0.0
    %3288 = vmatpush1.msra.mxu0 0.0
    %3289 = vmatprep.subr.mxu0 0.0
    %3290 = vmatpush1.msra.mxu0 0.0
    %3291 = vmatprep.subr.mxu0 0.0
    %3292 = vmatpush1.msra.mxu0 0.0
    %3293 = vmatprep.subr.mxu0 0.0
    %3294 = vmatpush1.msra.mxu0 0.0
    %3295 = vmatprep.subr.mxu0 0.0
    %3296 = vmatpush1.msra.mxu0 0.0
    %3297 = vmatprep.subr.mxu0 0.0
    %3298 = vmatpush1.msra.mxu0 0.0
    %3299 = vmatprep.subr.mxu0 0.0
    %3300 = vmatpush1.msra.mxu0 0.0
    %3301 = vmatprep.subr.mxu0 0.0
    %3302 = vmatpush1.msra.mxu0 0.0
    %3303 = vmatprep.subr.mxu0 0.0
    %3304 = vmatpush1.msra.mxu0 0.0
    %3305 = vmatprep.mubr.f32.mxu0 0.0
    %3306 = vmatmul.mubr.f32.gmra.mrb[0].mxu0 %v3236
    %v3307 = vpop.f32.mrb[0].mxu0
    %v3308 = vadd.f32 %v3233, %v3307
    %v3309 = vpop.f32.mrb[0].mxu0
    %3310 = vmatprep.mubr.f32.mxu0 0.0
    %3311 = vmatmul.mubr.f32.gmra.mrb[0].mxu0 %v3239
    %v3312 = vpop.f32.mrb[0].mxu0
    %v3313 = vadd.f32 %v3233, %v3312
    %v3314 = vpop.f32.mrb[0].mxu0
    %3315 = vdwg.mxu0
    %s3316 = scalar_lea.vmem %s6, 128
    %v3317 = vld [vmem:[%s3316] sm:$0xff]
    %v3318 = vld [vmem:[%s3316 + $0x8] sm:$0xff]
    %v3319 = vld [vmem:[%s3316 + $0x10] sm:$0xff]
    %v3320 = vld [vmem:[%s3316 + $0x18] sm:$0xff]
    %s3321 = scalar_lea.vmem %s9, 4
    %v3322 = vld [vmem:[%s3321] sm:$0x1]
    %v3324 = vlaneseq
    %v3325 = vshrl.u32 %v3324, 7
    %v3326 = vsub.s32 0, %v3325
    %v3327 = vrot.slane %v3322, %v3326
    %3329 = vmatprep.subr.mxu0 0.0
    %3330 = vmatpush1.msra.mxu0 %v3317
    %3331 = vmatprep.subr.mxu0 0.0
    %3332 = vmatpush1.msra.mxu0 %v3318
    %3333 = vmatprep.subr.mxu0 0.0
    %3334 = vmatpush1.msra.mxu0 %v3319
    %3335 = vmatprep.subr.mxu0 0.0
    %3336 = vmatpush1.msra.mxu0 %v3320
    %3337 = vmatprep.subr.mxu0 0.0
    %3338 = vmatpush1.msra.mxu0 0.0
    %3339 = vmatprep.subr.mxu0 0.0
    %3340 = vmatpush1.msra.mxu0 0.0
    %3341 = vmatprep.subr.mxu0 0.0
    %3342 = vmatpush1.msra.mxu0 0.0
    %3343 = vmatprep.subr.mxu0 0.0
    %3344 = vmatpush1.msra.mxu0 0.0
    %3345 = vmatprep.subr.mxu0 0.0
    %3346 = vmatpush1.msra.mxu0 0.0
    %3347 = vmatprep.subr.mxu0 0.0
    %3348 = vmatpush1.msra.mxu0 0.0
    %3349 = vmatprep.subr.mxu0 0.0
    %3350 = vmatpush1.msra.mxu0 0.0
    %3351 = vmatprep.subr.mxu0 0.0
    %3352 = vmatpush1.msra.mxu0 0.0
    %3353 = vmatprep.subr.mxu0 0.0
    %3354 = vmatpush1.msra.mxu0 0.0
    %3355 = vmatprep.subr.mxu0 0.0
    %3356 = vmatpush1.msra.mxu0 0.0
    %3357 = vmatprep.subr.mxu0 0.0
    %3358 = vmatpush1.msra.mxu0 0.0
    %3359 = vmatprep.subr.mxu0 0.0
    %3360 = vmatpush1.msra.mxu0 0.0
    %3361 = vmatprep.subr.mxu0 0.0
    %3362 = vmatpush1.msra.mxu0 0.0
    %3363 = vmatprep.subr.mxu0 0.0
    %3364 = vmatpush1.msra.mxu0 0.0
    %3365 = vmatprep.subr.mxu0 0.0
    %3366 = vmatpush1.msra.mxu0 0.0
    %3367 = vmatprep.subr.mxu0 0.0
    %3368 = vmatpush1.msra.mxu0 0.0
    %3369 = vmatprep.subr.mxu0 0.0
    %3370 = vmatpush1.msra.mxu0 0.0
    %3371 = vmatprep.subr.mxu0 0.0
    %3372 = vmatpush1.msra.mxu0 0.0
    %3373 = vmatprep.subr.mxu0 0.0
    %3374 = vmatpush1.msra.mxu0 0.0
    %3375 = vmatprep.subr.mxu0 0.0
    %3376 = vmatpush1.msra.mxu0 0.0
    %3377 = vmatprep.subr.mxu0 0.0
    %3378 = vmatpush1.msra.mxu0 0.0
    %3379 = vmatprep.subr.mxu0 0.0
    %3380 = vmatpush1.msra.mxu0 0.0
    %3381 = vmatprep.subr.mxu0 0.0
    %3382 = vmatpush1.msra.mxu0 0.0
    %3383 = vmatprep.subr.mxu0 0.0
    %3384 = vmatpush1.msra.mxu0 0.0
    %3385 = vmatprep.subr.mxu0 0.0
    %3386 = vmatpush1.msra.mxu0 0.0
    %3387 = vmatprep.subr.mxu0 0.0
    %3388 = vmatpush1.msra.mxu0 0.0
    %3389 = vmatprep.subr.mxu0 0.0
    %3390 = vmatpush1.msra.mxu0 0.0
    %3391 = vmatprep.subr.mxu0 0.0
    %3392 = vmatpush1.msra.mxu0 0.0
    %3393 = vmatprep.mubr.f32.mxu0 0.0
    %3394 = vmatmul.mubr.f32.gmra.mrb[0].mxu0 %v3236
    %v3395 = vpop.f32.mrb[0].mxu0
    %v3396 = vadd.f32 %v3327, %v3395
    %v3397 = vpop.f32.mrb[0].mxu0
    %3398 = vmatprep.mubr.f32.mxu0 0.0
    %3399 = vmatmul.mubr.f32.gmra.mrb[0].mxu0 %v3239
    %v3400 = vpop.f32.mrb[0].mxu0
    %v3401 = vadd.f32 %v3327, %v3400
    %v3402 = vpop.f32.mrb[0].mxu0
    %3403 = vdwg.mxu0
    %s3404 = scalar_lea.vmem %s7, 128
    %v3405 = vld [vmem:[%s3404] sm:$0xff]
    %v3406 = vld [vmem:[%s3404 + $0x8] sm:$0xff]
    %v3407 = vld [vmem:[%s3404 + $0x10] sm:$0xff]
    %v3408 = vld [vmem:[%s3404 + $0x18] sm:$0xff]
    %s3409 = scalar_lea.vmem %s10, 4
    %v3410 = vld [vmem:[%s3409] sm:$0x1]
    %v3412 = vlaneseq
    %v3413 = vshrl.u32 %v3412, 7
    %v3414 = vsub.s32 0, %v3413
    %v3415 = vrot.slane %v3410, %v3414
    %3417 = vmatprep.subr.mxu0 0.0
    %3418 = vmatpush1.msra.mxu0 %v3405
    %3419 = vmatprep.subr.mxu0 0.0
    %3420 = vmatpush1.msra.mxu0 %v3406
    %3421 = vmatprep.subr.mxu0 0.0
    %3422 = vmatpush1.msra.mxu0 %v3407
    %3423 = vmatprep.subr.mxu0 0.0
    %3424 = vmatpush1.msra.mxu0 %v3408
    %3425 = vmatprep.subr.mxu0 0.0
    %3426 = vmatpush1.msra.mxu0 0.0
    %3427 = vmatprep.subr.mxu0 0.0
    %3428 = vmatpush1.msra.mxu0 0.0
    %3429 = vmatprep.subr.mxu0 0.0
    %3430 = vmatpush1.msra.mxu0 0.0
    %3431 = vmatprep.subr.mxu0 0.0
    %3432 = vmatpush1.msra.mxu0 0.0
    %3433 = vmatprep.subr.mxu0 0.0
    %3434 = vmatpush1.msra.mxu0 0.0
    %3435 = vmatprep.subr.mxu0 0.0
    %3436 = vmatpush1.msra.mxu0 0.0
    %3437 = vmatprep.subr.mxu0 0.0
    %3438 = vmatpush1.msra.mxu0 0.0
    %3439 = vmatprep.subr.mxu0 0.0
    %3440 = vmatpush1.msra.mxu0 0.0
    %3441 = vmatprep.subr.mxu0 0.0
    %3442 = vmatpush1.msra.mxu0 0.0
    %3443 = vmatprep.subr.mxu0 0.0
    %3444 = vmatpush1.msra.mxu0 0.0
    %3445 = vmatprep.subr.mxu0 0.0
    %3446 = vmatpush1.msra.mxu0 0.0
    %3447 = vmatprep.subr.mxu0 0.0
    %3448 = vmatpush1.msra.mxu0 0.0
    %3449 = vmatprep.subr.mxu0 0.0
    %3450 = vmatpush1.msra.mxu0 0.0
    %3451 = vmatprep.subr.mxu0 0.0
    %3452 = vmatpush1.msra.mxu0 0.0
    %3453 = vmatprep.subr.mxu0 0.0
    %3454 = vmatpush1.msra.mxu0 0.0
    %3455 = vmatprep.subr.mxu0 0.0
    %3456 = vmatpush1.msra.mxu0 0.0
    %3457 = vmatprep.subr.mxu0 0.0
    %3458 = vmatpush1.msra.mxu0 0.0
    %3459 = vmatprep.subr.mxu0 0.0
    %3460 = vmatpush1.msra.mxu0 0.0
    %3461 = vmatprep.subr.mxu0 0.0
    %3462 = vmatpush1.msra.mxu0 0.0
    %3463 = vmatprep.subr.mxu0 0.0
    %3464 = vmatpush1.msra.mxu0 0.0
    %3465 = vmatprep.subr.mxu0 0.0
    %3466 = vmatpush1.msra.mxu0 0.0
    %3467 = vmatprep.subr.mxu0 0.0
    %3468 = vmatpush1.msra.mxu0 0.0
    %3469 = vmatprep.subr.mxu0 0.0
    %3470 = vmatpush1.msra.mxu0 0.0
    %3471 = vmatprep.subr.mxu0 0.0
    %3472 = vmatpush1.msra.mxu0 0.0
    %3473 = vmatprep.subr.mxu0 0.0
    %3474 = vmatpush1.msra.mxu0 0.0
    %3475 = vmatprep.subr.mxu0 0.0
    %3476 = vmatpush1.msra.mxu0 0.0
    %3477 = vmatprep.subr.mxu0 0.0
    %3478 = vmatpush1.msra.mxu0 0.0
    %3479 = vmatprep.subr.mxu0 0.0
    %3480 = vmatpush1.msra.mxu0 0.0
    %3481 = vmatprep.mubr.f32.mxu0 0.0
    %3482 = vmatmul.mubr.f32.gmra.mrb[0].mxu0 %v3236
    %v3483 = vpop.f32.mrb[0].mxu0
    %v3484 = vadd.f32 %v3415, %v3483
    %v3485 = vpop.f32.mrb[0].mxu0
    %3486 = vmatprep.mubr.f32.mxu0 0.0
    %3487 = vmatmul.mubr.f32.gmra.mrb[0].mxu0 %v3239
    %v3488 = vpop.f32.mrb[0].mxu0
    %v3489 = vadd.f32 %v3415, %v3488
    %v3490 = vpop.f32.mrb[0].mxu0
    %3491 = vdwg.mxu0
    %v3493 = vsel %vm511, %v3308, 0
    %v3496 = vsel %vm511, %v3396, 0
    %3498 = vmatprep.subr.mxu0 0.0
    %3499 = vmatpush1.xpose.msra.mxu0 %v3496
    %3500 = vmatprep.subr.mxu0 0.0
    %3501 = vmatpush1.xpose.msra.mxu0 0.0
    %3502 = vmatprep.subr.mxu0 0.0
    %3503 = vmatpush1.xpose.msra.mxu0 0.0
    %3504 = vmatprep.subr.mxu0 0.0
    %3505 = vmatpush1.xpose.msra.mxu0 0.0
    %3506 = vmatprep.subr.mxu0 0.0
    %3507 = vmatpush1.xpose.msra.mxu0 0.0
    %3508 = vmatprep.subr.mxu0 0.0
    %3509 = vmatpush1.xpose.msra.mxu0 0.0
    %3510 = vmatprep.subr.mxu0 0.0
    %3511 = vmatpush1.xpose.msra.mxu0 0.0
    %3512 = vmatprep.subr.mxu0 0.0
    %3513 = vmatpush1.xpose.msra.mxu0 0.0
    %3514 = vmatprep.subr.mxu0 0.0
    %3515 = vmatpush1.xpose.msra.mxu0 0.0
    %3516 = vmatprep.subr.mxu0 0.0
    %3517 = vmatpush1.xpose.msra.mxu0 0.0
    %3518 = vmatprep.subr.mxu0 0.0
    %3519 = vmatpush1.xpose.msra.mxu0 0.0
    %3520 = vmatprep.subr.mxu0 0.0
    %3521 = vmatpush1.xpose.msra.mxu0 0.0
    %3522 = vmatprep.subr.mxu0 0.0
    %3523 = vmatpush1.xpose.msra.mxu0 0.0
    %3524 = vmatprep.subr.mxu0 0.0
    %3525 = vmatpush1.xpose.msra.mxu0 0.0
    %3526 = vmatprep.subr.mxu0 0.0
    %3527 = vmatpush1.xpose.msra.mxu0 0.0
    %3528 = vmatprep.subr.mxu0 0.0
    %3529 = vmatpush1.xpose.msra.mxu0 0.0
    %3530 = vmatprep.subr.mxu0 0.0
    %3531 = vmatpush1.xpose.msra.mxu0 0.0
    %3532 = vmatprep.subr.mxu0 0.0
    %3533 = vmatpush1.xpose.msra.mxu0 0.0
    %3534 = vmatprep.subr.mxu0 0.0
    %3535 = vmatpush1.xpose.msra.mxu0 0.0
    %3536 = vmatprep.subr.mxu0 0.0
    %3537 = vmatpush1.xpose.msra.mxu0 0.0
    %3538 = vmatprep.subr.mxu0 0.0
    %3539 = vmatpush1.xpose.msra.mxu0 0.0
    %3540 = vmatprep.subr.mxu0 0.0
    %3541 = vmatpush1.xpose.msra.mxu0 0.0
    %3542 = vmatprep.subr.mxu0 0.0
    %3543 = vmatpush1.xpose.msra.mxu0 0.0
    %3544 = vmatprep.subr.mxu0 0.0
    %3545 = vmatpush1.xpose.msra.mxu0 0.0
    %3546 = vmatprep.subr.mxu0 0.0
    %3547 = vmatpush1.xpose.msra.mxu0 0.0
    %3548 = vmatprep.subr.mxu0 0.0
    %3549 = vmatpush1.xpose.msra.mxu0 0.0
    %3550 = vmatprep.subr.mxu0 0.0
    %3551 = vmatpush1.xpose.msra.mxu0 0.0
    %3552 = vmatprep.subr.mxu0 0.0
    %3553 = vmatpush1.xpose.msra.mxu0 0.0
    %3554 = vmatprep.subr.mxu0 0.0
    %3555 = vmatpush1.xpose.msra.mxu0 0.0
    %3556 = vmatprep.subr.mxu0 0.0
    %3557 = vmatpush1.xpose.msra.mxu0 0.0
    %3558 = vmatprep.subr.mxu0 0.0
    %3559 = vmatpush1.xpose.msra.mxu0 0.0
    %3560 = vmatprep.subr.mxu0 0.0
    %3561 = vmatpush1.xpose.msra.mxu0 0.0
    %3562 = vmatprep.mubr.f32.mxu0 0.0
    %3563 = vmatmul.mubr.f32.gmra.mrb[0].mxu0 %v3493
    %v3564 = vpop.f32.mrb[0].mxu0
    %v3565 = vadd.f32 %v217, %v3564
    %v3566 = vpop.f32.mrb[0].mxu0
    %3567 = vdwg.mxu0
    %v3569 = vsel %vm511, %v3313, 0
    %v3572 = vsel %vm511, %v3401, 0
    %3574 = vmatprep.subr.mxu0 0.0
    %3575 = vmatpush1.xpose.msra.mxu0 %v3572
    %3576 = vmatprep.subr.mxu0 0.0
    %3577 = vmatpush1.xpose.msra.mxu0 0.0
    %3578 = vmatprep.subr.mxu0 0.0
    %3579 = vmatpush1.xpose.msra.mxu0 0.0
    %3580 = vmatprep.subr.mxu0 0.0
    %3581 = vmatpush1.xpose.msra.mxu0 0.0
    %3582 = vmatprep.subr.mxu0 0.0
    %3583 = vmatpush1.xpose.msra.mxu0 0.0
    %3584 = vmatprep.subr.mxu0 0.0
    %3585 = vmatpush1.xpose.msra.mxu0 0.0
    %3586 = vmatprep.subr.mxu0 0.0
    %3587 = vmatpush1.xpose.msra.mxu0 0.0
    %3588 = vmatprep.subr.mxu0 0.0
    %3589 = vmatpush1.xpose.msra.mxu0 0.0
    %3590 = vmatprep.subr.mxu0 0.0
    %3591 = vmatpush1.xpose.msra.mxu0 0.0
    %3592 = vmatprep.subr.mxu0 0.0
    %3593 = vmatpush1.xpose.msra.mxu0 0.0
    %3594 = vmatprep.subr.mxu0 0.0
    %3595 = vmatpush1.xpose.msra.mxu0 0.0
    %3596 = vmatprep.subr.mxu0 0.0
    %3597 = vmatpush1.xpose.msra.mxu0 0.0
    %3598 = vmatprep.subr.mxu0 0.0
    %3599 = vmatpush1.xpose.msra.mxu0 0.0
    %3600 = vmatprep.subr.mxu0 0.0
    %3601 = vmatpush1.xpose.msra.mxu0 0.0
    %3602 = vmatprep.subr.mxu0 0.0
    %3603 = vmatpush1.xpose.msra.mxu0 0.0
    %3604 = vmatprep.subr.mxu0 0.0
    %3605 = vmatpush1.xpose.msra.mxu0 0.0
    %3606 = vmatprep.subr.mxu0 0.0
    %3607 = vmatpush1.xpose.msra.mxu0 0.0
    %3608 = vmatprep.subr.mxu0 0.0
    %3609 = vmatpush1.xpose.msra.mxu0 0.0
    %3610 = vmatprep.subr.mxu0 0.0
    %3611 = vmatpush1.xpose.msra.mxu0 0.0
    %3612 = vmatprep.subr.mxu0 0.0
    %3613 = vmatpush1.xpose.msra.mxu0 0.0
    %3614 = vmatprep.subr.mxu0 0.0
    %3615 = vmatpush1.xpose.msra.mxu0 0.0
    %3616 = vmatprep.subr.mxu0 0.0
    %3617 = vmatpush1.xpose.msra.mxu0 0.0
    %3618 = vmatprep.subr.mxu0 0.0
    %3619 = vmatpush1.xpose.msra.mxu0 0.0
    %3620 = vmatprep.subr.mxu0 0.0
    %3621 = vmatpush1.xpose.msra.mxu0 0.0
    %3622 = vmatprep.subr.mxu0 0.0
    %3623 = vmatpush1.xpose.msra.mxu0 0.0
    %3624 = vmatprep.subr.mxu0 0.0
    %3625 = vmatpush1.xpose.msra.mxu0 0.0
    %3626 = vmatprep.subr.mxu0 0.0
    %3627 = vmatpush1.xpose.msra.mxu0 0.0
    %3628 = vmatprep.subr.mxu0 0.0
    %3629 = vmatpush1.xpose.msra.mxu0 0.0
    %3630 = vmatprep.subr.mxu0 0.0
    %3631 = vmatpush1.xpose.msra.mxu0 0.0
    %3632 = vmatprep.subr.mxu0 0.0
    %3633 = vmatpush1.xpose.msra.mxu0 0.0
    %3634 = vmatprep.subr.mxu0 0.0
    %3635 = vmatpush1.xpose.msra.mxu0 0.0
    %3636 = vmatprep.subr.mxu0 0.0
    %3637 = vmatpush1.xpose.msra.mxu0 0.0
    %3638 = vmatprep.mubr.f32.mxu0 0.0
    %3639 = vmatmul.mubr.f32.gmra.mrb[0].mxu0 %v3569
    %v3640 = vpop.f32.mrb[0].mxu0
    %v3641 = vadd.f32 %v218, %v3640
    %v3642 = vpop.f32.mrb[0].mxu0
    %3643 = vdwg.mxu0
    %v3644 = vsel %vm511, %v3565, -inf
    %3645 = vmax.xlane.f32.xlu0 %v3644
    %v3646 = vpop.xlane.xlu0 %3645
    %v3647 = vsel %vm511, %v3641, -inf
    %3648 = vmax.xlane.f32.xlu0 %v3647
    %v3649 = vpop.xlane.xlu0 %3648
    %v3650 = vsub.f32 %v3565, %v3646
    %v3651 = vsub.f32 %v3641, %v3649
    %v3652 = vmul.f32 %v3650, 1.442695
    %v3653 = vpow.pop %v3652
    %v3654 = vmul.f32 %v3651, 1.442695
    %v3655 = vpow.pop %v3654
    %v3656 = vsel %vm511, %v3653, 0.0
    %3657 = vadd.xlane.f32.xlu0 %v3656
    %v3658 = vpop.xlane.xlu0 %3657
    %v3659 = vsel %vm511, %v3655, 0.0
    %3660 = vadd.xlane.f32.xlu0 %v3659
    %v3661 = vpop.xlane.xlu0 %3660
    %v3662 = vrcp.pop %v3658
    %v3663 = vrcp.pop %v3661
    %v3664 = vmul.f32 %v3653, %v3662
    %v3665 = vmul.f32 %v3655, %v3663
    %v3667 = vsel %vm511, %v3664, 0
    %3669 = vmatprep.subr.mxu0 0.0
    %3670 = vmatpush1.msra.mxu0 %v3484
    %3671 = vmatprep.subr.mxu0 0.0
    %3672 = vmatpush1.msra.mxu0 0.0
    %3673 = vmatprep.subr.mxu0 0.0
    %3674 = vmatpush1.msra.mxu0 0.0
    %3675 = vmatprep.subr.mxu0 0.0
    %3676 = vmatpush1.msra.mxu0 0.0
    %3677 = vmatprep.subr.mxu0 0.0
    %3678 = vmatpush1.msra.mxu0 0.0
    %3679 = vmatprep.subr.mxu0 0.0
    %3680 = vmatpush1.msra.mxu0 0.0
    %3681 = vmatprep.subr.mxu0 0.0
    %3682 = vmatpush1.msra.mxu0 0.0
    %3683 = vmatprep.subr.mxu0 0.0
    %3684 = vmatpush1.msra.mxu0 0.0
    %3685 = vmatprep.subr.mxu0 0.0
    %3686 = vmatpush1.msra.mxu0 0.0
    %3687 = vmatprep.subr.mxu0 0.0
    %3688 = vmatpush1.msra.mxu0 0.0
    %3689 = vmatprep.subr.mxu0 0.0
    %3690 = vmatpush1.msra.mxu0 0.0
    %3691 = vmatprep.subr.mxu0 0.0
    %3692 = vmatpush1.msra.mxu0 0.0
    %3693 = vmatprep.subr.mxu0 0.0
    %3694 = vmatpush1.msra.mxu0 0.0
    %3695 = vmatprep.subr.mxu0 0.0
    %3696 = vmatpush1.msra.mxu0 0.0
    %3697 = vmatprep.subr.mxu0 0.0
    %3698 = vmatpush1.msra.mxu0 0.0
    %3699 = vmatprep.subr.mxu0 0.0
    %3700 = vmatpush1.msra.mxu0 0.0
    %3701 = vmatprep.subr.mxu0 0.0
    %3702 = vmatpush1.msra.mxu0 0.0
    %3703 = vmatprep.subr.mxu0 0.0
    %3704 = vmatpush1.msra.mxu0 0.0
    %3705 = vmatprep.subr.mxu0 0.0
    %3706 = vmatpush1.msra.mxu0 0.0
    %3707 = vmatprep.subr.mxu0 0.0
    %3708 = vmatpush1.msra.mxu0 0.0
    %3709 = vmatprep.subr.mxu0 0.0
    %3710 = vmatpush1.msra.mxu0 0.0
    %3711 = vmatprep.subr.mxu0 0.0
    %3712 = vmatpush1.msra.mxu0 0.0
    %3713 = vmatprep.subr.mxu0 0.0
    %3714 = vmatpush1.msra.mxu0 0.0
    %3715 = vmatprep.subr.mxu0 0.0
    %3716 = vmatpush1.msra.mxu0 0.0
    %3717 = vmatprep.subr.mxu0 0.0
    %3718 = vmatpush1.msra.mxu0 0.0
    %3719 = vmatprep.subr.mxu0 0.0
    %3720 = vmatpush1.msra.mxu0 0.0
    %3721 = vmatprep.subr.mxu0 0.0
    %3722 = vmatpush1.msra.mxu0 0.0
    %3723 = vmatprep.subr.mxu0 0.0
    %3724 = vmatpush1.msra.mxu0 0.0
    %3725 = vmatprep.subr.mxu0 0.0
    %3726 = vmatpush1.msra.mxu0 0.0
    %3727 = vmatprep.subr.mxu0 0.0
    %3728 = vmatpush1.msra.mxu0 0.0
    %3729 = vmatprep.subr.mxu0 0.0
    %3730 = vmatpush1.msra.mxu0 0.0
    %3731 = vmatprep.subr.mxu0 0.0
    %3732 = vmatpush1.msra.mxu0 0.0
    %3733 = vmatprep.mubr.f32.mxu0 0.0
    %3734 = vmatmul.mubr.f32.gmra.mrb[0].mxu0 %v3667
    %v3735 = vpop.f32.mrb[0].mxu0
    %v3736 = vadd.f32 0.0, %v3735
    %v3737 = vpop.f32.mrb[0].mxu0
    %3738 = vdwg.mxu0
    %v3740 = vsel %vm511, %v3665, 0
    %3742 = vmatprep.subr.mxu0 0.0
    %3743 = vmatpush1.msra.mxu0 %v3489
    %3744 = vmatprep.subr.mxu0 0.0
    %3745 = vmatpush1.msra.mxu0 0.0
    %3746 = vmatprep.subr.mxu0 0.0
    %3747 = vmatpush1.msra.mxu0 0.0
    %3748 = vmatprep.subr.mxu0 0.0
    %3749 = vmatpush1.msra.mxu0 0.0
    %3750 = vmatprep.subr.mxu0 0.0
    %3751 = vmatpush1.msra.mxu0 0.0
    %3752 = vmatprep.subr.mxu0 0.0
    %3753 = vmatpush1.msra.mxu0 0.0
    %3754 = vmatprep.subr.mxu0 0.0
    %3755 = vmatpush1.msra.mxu0 0.0
    %3756 = vmatprep.subr.mxu0 0.0
    %3757 = vmatpush1.msra.mxu0 0.0
    %3758 = vmatprep.subr.mxu0 0.0
    %3759 = vmatpush1.msra.mxu0 0.0
    %3760 = vmatprep.subr.mxu0 0.0
    %3761 = vmatpush1.msra.mxu0 0.0
    %3762 = vmatprep.subr.mxu0 0.0
    %3763 = vmatpush1.msra.mxu0 0.0
    %3764 = vmatprep.subr.mxu0 0.0
    %3765 = vmatpush1.msra.mxu0 0.0
    %3766 = vmatprep.subr.mxu0 0.0
    %3767 = vmatpush1.msra.mxu0 0.0
    %3768 = vmatprep.subr.mxu0 0.0
    %3769 = vmatpush1.msra.mxu0 0.0
    %3770 = vmatprep.subr.mxu0 0.0
    %3771 = vmatpush1.msra.mxu0 0.0
    %3772 = vmatprep.subr.mxu0 0.0
    %3773 = vmatpush1.msra.mxu0 0.0
    %3774 = vmatprep.subr.mxu0 0.0
    %3775 = vmatpush1.msra.mxu0 0.0
    %3776 = vmatprep.subr.mxu0 0.0
    %3777 = vmatpush1.msra.mxu0 0.0
    %3778 = vmatprep.subr.mxu0 0.0
    %3779 = vmatpush1.msra.mxu0 0.0
    %3780 = vmatprep.subr.mxu0 0.0
    %3781 = vmatpush1.msra.mxu0 0.0
    %3782 = vmatprep.subr.mxu0 0.0
    %3783 = vmatpush1.msra.mxu0 0.0
    %3784 = vmatprep.subr.mxu0 0.0
    %3785 = vmatpush1.msra.mxu0 0.0
    %3786 = vmatprep.subr.mxu0 0.0
    %3787 = vmatpush1.msra.mxu0 0.0
    %3788 = vmatprep.subr.mxu0 0.0
    %3789 = vmatpush1.msra.mxu0 0.0
    %3790 = vmatprep.subr.mxu0 0.0
    %3791 = vmatpush1.msra.mxu0 0.0
    %3792 = vmatprep.subr.mxu0 0.0
    %3793 = vmatpush1.msra.mxu0 0.0
    %3794 = vmatprep.subr.mxu0 0.0
    %3795 = vmatpush1.msra.mxu0 0.0
    %3796 = vmatprep.subr.mxu0 0.0
    %3797 = vmatpush1.msra.mxu0 0.0
    %3798 = vmatprep.subr.mxu0 0.0
    %3799 = vmatpush1.msra.mxu0 0.0
    %3800 = vmatprep.subr.mxu0 0.0
    %3801 = vmatpush1.msra.mxu0 0.0
    %3802 = vmatprep.subr.mxu0 0.0
    %3803 = vmatpush1.msra.mxu0 0.0
    %3804 = vmatprep.subr.mxu0 0.0
    %3805 = vmatpush1.msra.mxu0 0.0
    %3806 = vmatprep.mubr.f32.mxu0 0.0
    %3807 = vmatmul.mubr.f32.gmra.mrb[0].mxu0 %v3740
    %v3808 = vpop.f32.mrb[0].mxu0
    %v3809 = vadd.f32 0.0, %v3808
    %v3810 = vpop.f32.mrb[0].mxu0
    %3811 = vdwg.mxu0
    %s3812 = scalar_lea.vmem %s11, 32
    %v3813 = vld [vmem:[%s3812] sm:$0xff]
    %s3814 = scalar_lea.vmem %s5, 160
    %v3815 = vld [vmem:[%s3814] sm:$0xff]
    %v3816 = vld [vmem:[%s3814 + $0x8] sm:$0xff]
    %v3817 = vld [vmem:[%s3814 + $0x10] sm:$0xff]
    %v3818 = vld [vmem:[%s3814 + $0x18] sm:$0xff]
    %s3819 = scalar_lea.vmem %s8, 5
    %v3820 = vld [vmem:[%s3819] sm:$0x1]
    %v3822 = vlaneseq
    %v3823 = vshrl.u32 %v3822, 7
    %v3824 = vsub.s32 0, %v3823
    %v3825 = vrot.slane %v3820, %v3824
    %3827 = vmatprep.subr.mxu0 0.0
    %3828 = vmatpush1.msra.mxu0 %v3815
    %3829 = vmatprep.subr.mxu0 0.0
    %3830 = vmatpush1.msra.mxu0 %v3816
    %3831 = vmatprep.subr.mxu0 0.0
    %3832 = vmatpush1.msra.mxu0 %v3817
    %3833 = vmatprep.subr.mxu0 0.0
    %3834 = vmatpush1.msra.mxu0 %v3818
    %3835 = vmatprep.subr.mxu0 0.0
    %3836 = vmatpush1.msra.mxu0 0.0
    %3837 = vmatprep.subr.mxu0 0.0
    %3838 = vmatpush1.msra.mxu0 0.0
    %3839 = vmatprep.subr.mxu0 0.0
    %3840 = vmatpush1.msra.mxu0 0.0
    %3841 = vmatprep.subr.mxu0 0.0
    %3842 = vmatpush1.msra.mxu0 0.0
    %3843 = vmatprep.subr.mxu0 0.0
    %3844 = vmatpush1.msra.mxu0 0.0
    %3845 = vmatprep.subr.mxu0 0.0
    %3846 = vmatpush1.msra.mxu0 0.0
    %3847 = vmatprep.subr.mxu0 0.0
    %3848 = vmatpush1.msra.mxu0 0.0
    %3849 = vmatprep.subr.mxu0 0.0
    %3850 = vmatpush1.msra.mxu0 0.0
    %3851 = vmatprep.subr.mxu0 0.0
    %3852 = vmatpush1.msra.mxu0 0.0
    %3853 = vmatprep.subr.mxu0 0.0
    %3854 = vmatpush1.msra.mxu0 0.0
    %3855 = vmatprep.subr.mxu0 0.0
    %3856 = vmatpush1.msra.mxu0 0.0
    %3857 = vmatprep.subr.mxu0 0.0
    %3858 = vmatpush1.msra.mxu0 0.0
    %3859 = vmatprep.subr.mxu0 0.0
    %3860 = vmatpush1.msra.mxu0 0.0
    %3861 = vmatprep.subr.mxu0 0.0
    %3862 = vmatpush1.msra.mxu0 0.0
    %3863 = vmatprep.subr.mxu0 0.0
    %3864 = vmatpush1.msra.mxu0 0.0
    %3865 = vmatprep.subr.mxu0 0.0
    %3866 = vmatpush1.msra.mxu0 0.0
    %3867 = vmatprep.subr.mxu0 0.0
    %3868 = vmatpush1.msra.mxu0 0.0
    %3869 = vmatprep.subr.mxu0 0.0
    %3870 = vmatpush1.msra.mxu0 0.0
    %3871 = vmatprep.subr.mxu0 0.0
    %3872 = vmatpush1.msra.mxu0 0.0
    %3873 = vmatprep.subr.mxu0 0.0
    %3874 = vmatpush1.msra.mxu0 0.0
    %3875 = vmatprep.subr.mxu0 0.0
    %3876 = vmatpush1.msra.mxu0 0.0
    %3877 = vmatprep.subr.mxu0 0.0
    %3878 = vmatpush1.msra.mxu0 0.0
    %3879 = vmatprep.subr.mxu0 0.0
    %3880 = vmatpush1.msra.mxu0 0.0
    %3881 = vmatprep.subr.mxu0 0.0
    %3882 = vmatpush1.msra.mxu0 0.0
    %3883 = vmatprep.subr.mxu0 0.0
    %3884 = vmatpush1.msra.mxu0 0.0
    %3885 = vmatprep.subr.mxu0 0.0
    %3886 = vmatpush1.msra.mxu0 0.0
    %3887 = vmatprep.subr.mxu0 0.0
    %3888 = vmatpush1.msra.mxu0 0.0
    %3889 = vmatprep.subr.mxu0 0.0
    %3890 = vmatpush1.msra.mxu0 0.0
    %3891 = vmatprep.mubr.f32.mxu0 0.0
    %3892 = vmatmul.mubr.f32.gmra.mrb[0].mxu0 %v3236
    %v3893 = vpop.f32.mrb[0].mxu0
    %v3894 = vadd.f32 %v3825, %v3893
    %v3895 = vpop.f32.mrb[0].mxu0
    %3896 = vmatprep.mubr.f32.mxu0 0.0
    %3897 = vmatmul.mubr.f32.gmra.mrb[0].mxu0 %v3239
    %v3898 = vpop.f32.mrb[0].mxu0
    %v3899 = vadd.f32 %v3825, %v3898
    %v3900 = vpop.f32.mrb[0].mxu0
    %3901 = vdwg.mxu0
    %s3902 = scalar_lea.vmem %s6, 160
    %v3903 = vld [vmem:[%s3902] sm:$0xff]
    %v3904 = vld [vmem:[%s3902 + $0x8] sm:$0xff]
    %v3905 = vld [vmem:[%s3902 + $0x10] sm:$0xff]
    %v3906 = vld [vmem:[%s3902 + $0x18] sm:$0xff]
    %s3907 = scalar_lea.vmem %s9, 5
    %v3908 = vld [vmem:[%s3907] sm:$0x1]
    %v3910 = vlaneseq
    %v3911 = vshrl.u32 %v3910, 7
    %v3912 = vsub.s32 0, %v3911
    %v3913 = vrot.slane %v3908, %v3912
    %3915 = vmatprep.subr.mxu0 0.0
    %3916 = vmatpush1.msra.mxu0 %v3903
    %3917 = vmatprep.subr.mxu0 0.0
    %3918 = vmatpush1.msra.mxu0 %v3904
    %3919 = vmatprep.subr.mxu0 0.0
    %3920 = vmatpush1.msra.mxu0 %v3905
    %3921 = vmatprep.subr.mxu0 0.0
    %3922 = vmatpush1.msra.mxu0 %v3906
    %3923 = vmatprep.subr.mxu0 0.0
    %3924 = vmatpush1.msra.mxu0 0.0
    %3925 = vmatprep.subr.mxu0 0.0
    %3926 = vmatpush1.msra.mxu0 0.0
    %3927 = vmatprep.subr.mxu0 0.0
    %3928 = vmatpush1.msra.mxu0 0.0
    %3929 = vmatprep.subr.mxu0 0.0
    %3930 = vmatpush1.msra.mxu0 0.0
    %3931 = vmatprep.subr.mxu0 0.0
    %3932 = vmatpush1.msra.mxu0 0.0
    %3933 = vmatprep.subr.mxu0 0.0
    %3934 = vmatpush1.msra.mxu0 0.0
    %3935 = vmatprep.subr.mxu0 0.0
    %3936 = vmatpush1.msra.mxu0 0.0
    %3937 = vmatprep.subr.mxu0 0.0
    %3938 = vmatpush1.msra.mxu0 0.0
    %3939 = vmatprep.subr.mxu0 0.0
    %3940 = vmatpush1.msra.mxu0 0.0
    %3941 = vmatprep.subr.mxu0 0.0
    %3942 = vmatpush1.msra.mxu0 0.0
    %3943 = vmatprep.subr.mxu0 0.0
    %3944 = vmatpush1.msra.mxu0 0.0
    %3945 = vmatprep.subr.mxu0 0.0
    %3946 = vmatpush1.msra.mxu0 0.0
    %3947 = vmatprep.subr.mxu0 0.0
    %3948 = vmatpush1.msra.mxu0 0.0
    %3949 = vmatprep.subr.mxu0 0.0
    %3950 = vmatpush1.msra.mxu0 0.0
    %3951 = vmatprep.subr.mxu0 0.0
    %3952 = vmatpush1.msra.mxu0 0.0
    %3953 = vmatprep.subr.mxu0 0.0
    %3954 = vmatpush1.msra.mxu0 0.0
    %3955 = vmatprep.subr.mxu0 0.0
    %3956 = vmatpush1.msra.mxu0 0.0
    %3957 = vmatprep.subr.mxu0 0.0
    %3958 = vmatpush1.msra.mxu0 0.0
    %3959 = vmatprep.subr.mxu0 0.0
    %3960 = vmatpush1.msra.mxu0 0.0
    %3961 = vmatprep.subr.mxu0 0.0
    %3962 = vmatpush1.msra.mxu0 0.0
    %3963 = vmatprep.subr.mxu0 0.0
    %3964 = vmatpush1.msra.mxu0 0.0
    %3965 = vmatprep.subr.mxu0 0.0
    %3966 = vmatpush1.msra.mxu0 0.0
    %3967 = vmatprep.subr.mxu0 0.0
    %3968 = vmatpush1.msra.mxu0 0.0
    %3969 = vmatprep.subr.mxu0 0.0
    %3970 = vmatpush1.msra.mxu0 0.0
    %3971 = vmatprep.subr.mxu0 0.0
    %3972 = vmatpush1.msra.mxu0 0.0
    %3973 = vmatprep.subr.mxu0 0.0
    %3974 = vmatpush1.msra.mxu0 0.0
    %3975 = vmatprep.subr.mxu0 0.0
    %3976 = vmatpush1.msra.mxu0 0.0
    %3977 = vmatprep.subr.mxu0 0.0
    %3978 = vmatpush1.msra.mxu0 0.0
    %3979 = vmatprep.mubr.f32.mxu0 0.0
    %3980 = vmatmul.mubr.f32.gmra.mrb[0].mxu0 %v3236
    %v3981 = vpop.f32.mrb[0].mxu0
    %v3982 = vadd.f32 %v3913, %v3981
    %v3983 = vpop.f32.mrb[0].mxu0
    %3984 = vmatprep.mubr.f32.mxu0 0.0
    %3985 = vmatmul.mubr.f32.gmra.mrb[0].mxu0 %v3239
    %v3986 = vpop.f32.mrb[0].mxu0
    %v3987 = vadd.f32 %v3913, %v3986
    %v3988 = vpop.f32.mrb[0].mxu0
    %3989 = vdwg.mxu0
    %s3990 = scalar_lea.vmem %s7, 160
    %v3991 = vld [vmem:[%s3990] sm:$0xff]
    %v3992 = vld [vmem:[%s3990 + $0x8] sm:$0xff]
    %v3993 = vld [vmem:[%s3990 + $0x10] sm:$0xff]
    %v3994 = vld [vmem:[%s3990 + $0x18] sm:$0xff]
    %s3995 = scalar_lea.vmem %s10, 5
    %v3996 = vld [vmem:[%s3995] sm:$0x1]
    %v3998 = vlaneseq
    %v3999 = vshrl.u32 %v3998, 7
    %v4000 = vsub.s32 0, %v3999
    %v4001 = vrot.slane %v3996, %v4000
    %4003 = vmatprep.subr.mxu0 0.0
    %4004 = vmatpush1.msra.mxu0 %v3991
    %4005 = vmatprep.subr.mxu0 0.0
    %4006 = vmatpush1.msra.mxu0 %v3992
    %4007 = vmatprep.subr.mxu0 0.0
    %4008 = vmatpush1.msra.mxu0 %v3993
    %4009 = vmatprep.subr.mxu0 0.0
    %4010 = vmatpush1.msra.mxu0 %v3994
    %4011 = vmatprep.subr.mxu0 0.0
    %4012 = vmatpush1.msra.mxu0 0.0
    %4013 = vmatprep.subr.mxu0 0.0
    %4014 = vmatpush1.msra.mxu0 0.0
    %4015 = vmatprep.subr.mxu0 0.0
    %4016 = vmatpush1.msra.mxu0 0.0
    %4017 = vmatprep.subr.mxu0 0.0
    %4018 = vmatpush1.msra.mxu0 0.0
    %4019 = vmatprep.subr.mxu0 0.0
    %4020 = vmatpush1.msra.mxu0 0.0
    %4021 = vmatprep.subr.mxu0 0.0
    %4022 = vmatpush1.msra.mxu0 0.0
    %4023 = vmatprep.subr.mxu0 0.0
    %4024 = vmatpush1.msra.mxu0 0.0
    %4025 = vmatprep.subr.mxu0 0.0
    %4026 = vmatpush1.msra.mxu0 0.0
    %4027 = vmatprep.subr.mxu0 0.0
    %4028 = vmatpush1.msra.mxu0 0.0
    %4029 = vmatprep.subr.mxu0 0.0
    %4030 = vmatpush1.msra.mxu0 0.0
    %4031 = vmatprep.subr.mxu0 0.0
    %4032 = vmatpush1.msra.mxu0 0.0
    %4033 = vmatprep.subr.mxu0 0.0
    %4034 = vmatpush1.msra.mxu0 0.0
    %4035 = vmatprep.subr.mxu0 0.0
    %4036 = vmatpush1.msra.mxu0 0.0
    %4037 = vmatprep.subr.mxu0 0.0
    %4038 = vmatpush1.msra.mxu0 0.0
    %4039 = vmatprep.subr.mxu0 0.0
    %4040 = vmatpush1.msra.mxu0 0.0
    %4041 = vmatprep.subr.mxu0 0.0
    %4042 = vmatpush1.msra.mxu0 0.0
    %4043 = vmatprep.subr.mxu0 0.0
    %4044 = vmatpush1.msra.mxu0 0.0
    %4045 = vmatprep.subr.mxu0 0.0
    %4046 = vmatpush1.msra.mxu0 0.0
    %4047 = vmatprep.subr.mxu0 0.0
    %4048 = vmatpush1.msra.mxu0 0.0
    %4049 = vmatprep.subr.mxu0 0.0
    %4050 = vmatpush1.msra.mxu0 0.0
    %4051 = vmatprep.subr.mxu0 0.0
    %4052 = vmatpush1.msra.mxu0 0.0
    %4053 = vmatprep.subr.mxu0 0.0
    %4054 = vmatpush1.msra.mxu0 0.0
    %4055 = vmatprep.subr.mxu0 0.0
    %4056 = vmatpush1.msra.mxu0 0.0
    %4057 = vmatprep.subr.mxu0 0.0
    %4058 = vmatpush1.msra.mxu0 0.0
    %4059 = vmatprep.subr.mxu0 0.0
    %4060 = vmatpush1.msra.mxu0 0.0
    %4061 = vmatprep.subr.mxu0 0.0
    %4062 = vmatpush1.msra.mxu0 0.0
    %4063 = vmatprep.subr.mxu0 0.0
    %4064 = vmatpush1.msra.mxu0 0.0
    %4065 = vmatprep.subr.mxu0 0.0
    %4066 = vmatpush1.msra.mxu0 0.0
    %4067 = vmatprep.mubr.f32.mxu0 0.0
    %4068 = vmatmul.mubr.f32.gmra.mrb[0].mxu0 %v3236
    %v4069 = vpop.f32.mrb[0].mxu0
    %v4070 = vadd.f32 %v4001, %v4069
    %v4071 = vpop.f32.mrb[0].mxu0
    %4072 = vmatprep.mubr.f32.mxu0 0.0
    %4073 = vmatmul.mubr.f32.gmra.mrb[0].mxu0 %v3239
    %v4074 = vpop.f32.mrb[0].mxu0
    %v4075 = vadd.f32 %v4001, %v4074
    %v4076 = vpop.f32.mrb[0].mxu0
    %4077 = vdwg.mxu0
    %v4079 = vsel %vm511, %v3894, 0
    %v4082 = vsel %vm511, %v3982, 0
    %4084 = vmatprep.subr.mxu0 0.0
    %4085 = vmatpush1.xpose.msra.mxu0 %v4082
    %4086 = vmatprep.subr.mxu0 0.0
    %4087 = vmatpush1.xpose.msra.mxu0 0.0
    %4088 = vmatprep.subr.mxu0 0.0
    %4089 = vmatpush1.xpose.msra.mxu0 0.0
    %4090 = vmatprep.subr.mxu0 0.0
    %4091 = vmatpush1.xpose.msra.mxu0 0.0
    %4092 = vmatprep.subr.mxu0 0.0
    %4093 = vmatpush1.xpose.msra.mxu0 0.0
    %4094 = vmatprep.subr.mxu0 0.0
    %4095 = vmatpush1.xpose.msra.mxu0 0.0
    %4096 = vmatprep.subr.mxu0 0.0
    %4097 = vmatpush1.xpose.msra.mxu0 0.0
    %4098 = vmatprep.subr.mxu0 0.0
    %4099 = vmatpush1.xpose.msra.mxu0 0.0
    %4100 = vmatprep.subr.mxu0 0.0
    %4101 = vmatpush1.xpose.msra.mxu0 0.0
    %4102 = vmatprep.subr.mxu0 0.0
    %4103 = vmatpush1.xpose.msra.mxu0 0.0
    %4104 = vmatprep.subr.mxu0 0.0
    %4105 = vmatpush1.xpose.msra.mxu0 0.0
    %4106 = vmatprep.subr.mxu0 0.0
    %4107 = vmatpush1.xpose.msra.mxu0 0.0
    %4108 = vmatprep.subr.mxu0 0.0
    %4109 = vmatpush1.xpose.msra.mxu0 0.0
    %4110 = vmatprep.subr.mxu0 0.0
    %4111 = vmatpush1.xpose.msra.mxu0 0.0
    %4112 = vmatprep.subr.mxu0 0.0
    %4113 = vmatpush1.xpose.msra.mxu0 0.0
    %4114 = vmatprep.subr.mxu0 0.0
    %4115 = vmatpush1.xpose.msra.mxu0 0.0
    %4116 = vmatprep.subr.mxu0 0.0
    %4117 = vmatpush1.xpose.msra.mxu0 0.0
    %4118 = vmatprep.subr.mxu0 0.0
    %4119 = vmatpush1.xpose.msra.mxu0 0.0
    %4120 = vmatprep.subr.mxu0 0.0
    %4121 = vmatpush1.xpose.msra.mxu0 0.0
    %4122 = vmatprep.subr.mxu0 0.0
    %4123 = vmatpush1.xpose.msra.mxu0 0.0
    %4124 = vmatprep.subr.mxu0 0.0
    %4125 = vmatpush1.xpose.msra.mxu0 0.0
    %4126 = vmatprep.subr.mxu0 0.0
    %4127 = vmatpush1.xpose.msra.mxu0 0.0
    %4128 = vmatprep.subr.mxu0 0.0
    %4129 = vmatpush1.xpose.msra.mxu0 0.0
    %4130 = vmatprep.subr.mxu0 0.0
    %4131 = vmatpush1.xpose.msra.mxu0 0.0
    %4132 = vmatprep.subr.mxu0 0.0
    %4133 = vmatpush1.xpose.msra.mxu0 0.0
    %4134 = vmatprep.subr.mxu0 0.0
    %4135 = vmatpush1.xpose.msra.mxu0 0.0
    %4136 = vmatprep.subr.mxu0 0.0
    %4137 = vmatpush1.xpose.msra.mxu0 0.0
    %4138 = vmatprep.subr.mxu0 0.0
    %4139 = vmatpush1.xpose.msra.mxu0 0.0
    %4140 = vmatprep.subr.mxu0 0.0
    %4141 = vmatpush1.xpose.msra.mxu0 0.0
    %4142 = vmatprep.subr.mxu0 0.0
    %4143 = vmatpush1.xpose.msra.mxu0 0.0
    %4144 = vmatprep.subr.mxu0 0.0
    %4145 = vmatpush1.xpose.msra.mxu0 0.0
    %4146 = vmatprep.subr.mxu0 0.0
    %4147 = vmatpush1.xpose.msra.mxu0 0.0
    %4148 = vmatprep.mubr.f32.mxu0 0.0
    %4149 = vmatmul.mubr.f32.gmra.mrb[0].mxu0 %v4079
    %v4150 = vpop.f32.mrb[0].mxu0
    %v4151 = vadd.f32 %v217, %v4150
    %v4152 = vpop.f32.mrb[0].mxu0
    %4153 = vdwg.mxu0
    %v4155 = vsel %vm511, %v3899, 0
    %v4158 = vsel %vm511, %v3987, 0
    %4160 = vmatprep.subr.mxu0 0.0
    %4161 = vmatpush1.xpose.msra.mxu0 %v4158
    %4162 = vmatprep.subr.mxu0 0.0
    %4163 = vmatpush1.xpose.msra.mxu0 0.0
    %4164 = vmatprep.subr.mxu0 0.0
    %4165 = vmatpush1.xpose.msra.mxu0 0.0
    %4166 = vmatprep.subr.mxu0 0.0
    %4167 = vmatpush1.xpose.msra.mxu0 0.0
    %4168 = vmatprep.subr.mxu0 0.0
    %4169 = vmatpush1.xpose.msra.mxu0 0.0
    %4170 = vmatprep.subr.mxu0 0.0
    %4171 = vmatpush1.xpose.msra.mxu0 0.0
    %4172 = vmatprep.subr.mxu0 0.0
    %4173 = vmatpush1.xpose.msra.mxu0 0.0
    %4174 = vmatprep.subr.mxu0 0.0
    %4175 = vmatpush1.xpose.msra.mxu0 0.0
    %4176 = vmatprep.subr.mxu0 0.0
    %4177 = vmatpush1.xpose.msra.mxu0 0.0
    %4178 = vmatprep.subr.mxu0 0.0
    %4179 = vmatpush1.xpose.msra.mxu0 0.0
    %4180 = vmatprep.subr.mxu0 0.0
    %4181 = vmatpush1.xpose.msra.mxu0 0.0
    %4182 = vmatprep.subr.mxu0 0.0
    %4183 = vmatpush1.xpose.msra.mxu0 0.0
    %4184 = vmatprep.subr.mxu0 0.0
    %4185 = vmatpush1.xpose.msra.mxu0 0.0
    %4186 = vmatprep.subr.mxu0 0.0
    %4187 = vmatpush1.xpose.msra.mxu0 0.0
    %4188 = vmatprep.subr.mxu0 0.0
    %4189 = vmatpush1.xpose.msra.mxu0 0.0
    %4190 = vmatprep.subr.mxu0 0.0
    %4191 = vmatpush1.xpose.msra.mxu0 0.0
    %4192 = vmatprep.subr.mxu0 0.0
    %4193 = vmatpush1.xpose.msra.mxu0 0.0
    %4194 = vmatprep.subr.mxu0 0.0
    %4195 = vmatpush1.xpose.msra.mxu0 0.0
    %4196 = vmatprep.subr.mxu0 0.0
    %4197 = vmatpush1.xpose.msra.mxu0 0.0
    %4198 = vmatprep.subr.mxu0 0.0
    %4199 = vmatpush1.xpose.msra.mxu0 0.0
    %4200 = vmatprep.subr.mxu0 0.0
    %4201 = vmatpush1.xpose.msra.mxu0 0.0
    %4202 = vmatprep.subr.mxu0 0.0
    %4203 = vmatpush1.xpose.msra.mxu0 0.0
    %4204 = vmatprep.subr.mxu0 0.0
    %4205 = vmatpush1.xpose.msra.mxu0 0.0
    %4206 = vmatprep.subr.mxu0 0.0
    %4207 = vmatpush1.xpose.msra.mxu0 0.0
    %4208 = vmatprep.subr.mxu0 0.0
    %4209 = vmatpush1.xpose.msra.mxu0 0.0
    %4210 = vmatprep.subr.mxu0 0.0
    %4211 = vmatpush1.xpose.msra.mxu0 0.0
    %4212 = vmatprep.subr.mxu0 0.0
    %4213 = vmatpush1.xpose.msra.mxu0 0.0
    %4214 = vmatprep.subr.mxu0 0.0
    %4215 = vmatpush1.xpose.msra.mxu0 0.0
    %4216 = vmatprep.subr.mxu0 0.0
    %4217 = vmatpush1.xpose.msra.mxu0 0.0
    %4218 = vmatprep.subr.mxu0 0.0
    %4219 = vmatpush1.xpose.msra.mxu0 0.0
    %4220 = vmatprep.subr.mxu0 0.0
    %4221 = vmatpush1.xpose.msra.mxu0 0.0
    %4222 = vmatprep.subr.mxu0 0.0
    %4223 = vmatpush1.xpose.msra.mxu0 0.0
    %4224 = vmatprep.mubr.f32.mxu0 0.0
    %4225 = vmatmul.mubr.f32.gmra.mrb[0].mxu0 %v4155
    %v4226 = vpop.f32.mrb[0].mxu0
    %v4227 = vadd.f32 %v218, %v4226
    %v4228 = vpop.f32.mrb[0].mxu0
    %4229 = vdwg.mxu0
    %v4230 = vsel %vm511, %v4151, -inf
    %4231 = vmax.xlane.f32.xlu0 %v4230
    %v4232 = vpop.xlane.xlu0 %4231
    %v4233 = vsel %vm511, %v4227, -inf
    %4234 = vmax.xlane.f32.xlu0 %v4233
    %v4235 = vpop.xlane.xlu0 %4234
    %v4236 = vsub.f32 %v4151, %v4232
    %v4237 = vsub.f32 %v4227, %v4235
    %v4238 = vmul.f32 %v4236, 1.442695
    %v4239 = vpow.pop %v4238
    %v4240 = vmul.f32 %v4237, 1.442695
    %v4241 = vpow.pop %v4240
    %v4242 = vsel %vm511, %v4239, 0.0
    %4243 = vadd.xlane.f32.xlu0 %v4242
    %v4244 = vpop.xlane.xlu0 %4243
    %v4245 = vsel %vm511, %v4241, 0.0
    %4246 = vadd.xlane.f32.xlu0 %v4245
    %v4247 = vpop.xlane.xlu0 %4246
    %v4248 = vrcp.pop %v4244
    %v4249 = vrcp.pop %v4247
    %v4250 = vmul.f32 %v4239, %v4248
    %v4251 = vmul.f32 %v4241, %v4249
    %v4253 = vsel %vm511, %v4250, 0
    %4255 = vmatprep.subr.mxu0 0.0
    %4256 = vmatpush1.msra.mxu0 %v4070
    %4257 = vmatprep.subr.mxu0 0.0
    %4258 = vmatpush1.msra.mxu0 0.0
    %4259 = vmatprep.subr.mxu0 0.0
    %4260 = vmatpush1.msra.mxu0 0.0
    %4261 = vmatprep.subr.mxu0 0.0
    %4262 = vmatpush1.msra.mxu0 0.0
    %4263 = vmatprep.subr.mxu0 0.0
    %4264 = vmatpush1.msra.mxu0 0.0
    %4265 = vmatprep.subr.mxu0 0.0
    %4266 = vmatpush1.msra.mxu0 0.0
    %4267 = vmatprep.subr.mxu0 0.0
    %4268 = vmatpush1.msra.mxu0 0.0
    %4269 = vmatprep.subr.mxu0 0.0
    %4270 = vmatpush1.msra.mxu0 0.0
    %4271 = vmatprep.subr.mxu0 0.0
    %4272 = vmatpush1.msra.mxu0 0.0
    %4273 = vmatprep.subr.mxu0 0.0
    %4274 = vmatpush1.msra.mxu0 0.0
    %4275 = vmatprep.subr.mxu0 0.0
    %4276 = vmatpush1.msra.mxu0 0.0
    %4277 = vmatprep.subr.mxu0 0.0
    %4278 = vmatpush1.msra.mxu0 0.0
    %4279 = vmatprep.subr.mxu0 0.0
    %4280 = vmatpush1.msra.mxu0 0.0
    %4281 = vmatprep.subr.mxu0 0.0
    %4282 = vmatpush1.msra.mxu0 0.0
    %4283 = vmatprep.subr.mxu0 0.0
    %4284 = vmatpush1.msra.mxu0 0.0
    %4285 = vmatprep.subr.mxu0 0.0
    %4286 = vmatpush1.msra.mxu0 0.0
    %4287 = vmatprep.subr.mxu0 0.0
    %4288 = vmatpush1.msra.mxu0 0.0
    %4289 = vmatprep.subr.mxu0 0.0
    %4290 = vmatpush1.msra.mxu0 0.0
    %4291 = vmatprep.subr.mxu0 0.0
    %4292 = vmatpush1.msra.mxu0 0.0
    %4293 = vmatprep.subr.mxu0 0.0
    %4294 = vmatpush1.msra.mxu0 0.0
    %4295 = vmatprep.subr.mxu0 0.0
    %4296 = vmatpush1.msra.mxu0 0.0
    %4297 = vmatprep.subr.mxu0 0.0
    %4298 = vmatpush1.msra.mxu0 0.0
    %4299 = vmatprep.subr.mxu0 0.0
    %4300 = vmatpush1.msra.mxu0 0.0
    %4301 = vmatprep.subr.mxu0 0.0
    %4302 = vmatpush1.msra.mxu0 0.0
    %4303 = vmatprep.subr.mxu0 0.0
    %4304 = vmatpush1.msra.mxu0 0.0
    %4305 = vmatprep.subr.mxu0 0.0
    %4306 = vmatpush1.msra.mxu0 0.0
    %4307 = vmatprep.subr.mxu0 0.0
    %4308 = vmatpush1.msra.mxu0 0.0
    %4309 = vmatprep.subr.mxu0 0.0
    %4310 = vmatpush1.msra.mxu0 0.0
    %4311 = vmatprep.subr.mxu0 0.0
    %4312 = vmatpush1.msra.mxu0 0.0
    %4313 = vmatprep.subr.mxu0 0.0
    %4314 = vmatpush1.msra.mxu0 0.0
    %4315 = vmatprep.subr.mxu0 0.0
    %4316 = vmatpush1.msra.mxu0 0.0
    %4317 = vmatprep.subr.mxu0 0.0
    %4318 = vmatpush1.msra.mxu0 0.0
    %4319 = vmatprep.mubr.f32.mxu0 0.0
    %4320 = vmatmul.mubr.f32.gmra.mrb[0].mxu0 %v4253
    %v4321 = vpop.f32.mrb[0].mxu0
    %v4322 = vadd.f32 0.0, %v4321
    %v4323 = vpop.f32.mrb[0].mxu0
    %4324 = vdwg.mxu0
    %v4326 = vsel %vm511, %v4251, 0
    %4328 = vmatprep.subr.mxu0 0.0
    %4329 = vmatpush1.msra.mxu0 %v4075
    %4330 = vmatprep.subr.mxu0 0.0
    %4331 = vmatpush1.msra.mxu0 0.0
    %4332 = vmatprep.subr.mxu0 0.0
    %4333 = vmatpush1.msra.mxu0 0.0
    %4334 = vmatprep.subr.mxu0 0.0
    %4335 = vmatpush1.msra.mxu0 0.0
    %4336 = vmatprep.subr.mxu0 0.0
    %4337 = vmatpush1.msra.mxu0 0.0
    %4338 = vmatprep.subr.mxu0 0.0
    %4339 = vmatpush1.msra.mxu0 0.0
    %4340 = vmatprep.subr.mxu0 0.0
    %4341 = vmatpush1.msra.mxu0 0.0
    %4342 = vmatprep.subr.mxu0 0.0
    %4343 = vmatpush1.msra.mxu0 0.0
    %4344 = vmatprep.subr.mxu0 0.0
    %4345 = vmatpush1.msra.mxu0 0.0
    %4346 = vmatprep.subr.mxu0 0.0
    %4347 = vmatpush1.msra.mxu0 0.0
    %4348 = vmatprep.subr.mxu0 0.0
    %4349 = vmatpush1.msra.mxu0 0.0
    %4350 = vmatprep.subr.mxu0 0.0
    %4351 = vmatpush1.msra.mxu0 0.0
    %4352 = vmatprep.subr.mxu0 0.0
    %4353 = vmatpush1.msra.mxu0 0.0
    %4354 = vmatprep.subr.mxu0 0.0
    %4355 = vmatpush1.msra.mxu0 0.0
    %4356 = vmatprep.subr.mxu0 0.0
    %4357 = vmatpush1.msra.mxu0 0.0
    %4358 = vmatprep.subr.mxu0 0.0
    %4359 = vmatpush1.msra.mxu0 0.0
    %4360 = vmatprep.subr.mxu0 0.0
    %4361 = vmatpush1.msra.mxu0 0.0
    %4362 = vmatprep.subr.mxu0 0.0
    %4363 = vmatpush1.msra.mxu0 0.0
    %4364 = vmatprep.subr.mxu0 0.0
    %4365 = vmatpush1.msra.mxu0 0.0
    %4366 = vmatprep.subr.mxu0 0.0
    %4367 = vmatpush1.msra.mxu0 0.0
    %4368 = vmatprep.subr.mxu0 0.0
    %4369 = vmatpush1.msra.mxu0 0.0
    %4370 = vmatprep.subr.mxu0 0.0
    %4371 = vmatpush1.msra.mxu0 0.0
    %4372 = vmatprep.subr.mxu0 0.0
    %4373 = vmatpush1.msra.mxu0 0.0
    %4374 = vmatprep.subr.mxu0 0.0
    %4375 = vmatpush1.msra.mxu0 0.0
    %4376 = vmatprep.subr.mxu0 0.0
    %4377 = vmatpush1.msra.mxu0 0.0
    %4378 = vmatprep.subr.mxu0 0.0
    %4379 = vmatpush1.msra.mxu0 0.0
    %4380 = vmatprep.subr.mxu0 0.0
    %4381 = vmatpush1.msra.mxu0 0.0
    %4382 = vmatprep.subr.mxu0 0.0
    %4383 = vmatpush1.msra.mxu0 0.0
    %4384 = vmatprep.subr.mxu0 0.0
    %4385 = vmatpush1.msra.mxu0 0.0
    %4386 = vmatprep.subr.mxu0 0.0
    %4387 = vmatpush1.msra.mxu0 0.0
    %4388 = vmatprep.subr.mxu0 0.0
    %4389 = vmatpush1.msra.mxu0 0.0
    %4390 = vmatprep.subr.mxu0 0.0
    %4391 = vmatpush1.msra.mxu0 0.0
    %4392 = vmatprep.mubr.f32.mxu0 0.0
    %4393 = vmatmul.mubr.f32.gmra.mrb[0].mxu0 %v4326
    %v4394 = vpop.f32.mrb[0].mxu0
    %v4395 = vadd.f32 0.0, %v4394
    %v4396 = vpop.f32.mrb[0].mxu0
    %4397 = vdwg.mxu0
    %s4398 = scalar_lea.vmem %s11, 40
    %v4399 = vld [vmem:[%s4398] sm:$0xff]
    %v4401 = vsel %vm511, %v4322, 0
    %v4404 = vsel %vm511, %v4395, 0
    %4406 = vmatprep.subr.mxu0 0.0
    %4407 = vmatpush1.msra.mxu0 %v4399
    %4408 = vmatprep.subr.mxu0 0.0
    %4409 = vmatpush1.msra.mxu0 0.0
    %4410 = vmatprep.subr.mxu0 0.0
    %4411 = vmatpush1.msra.mxu0 0.0
    %4412 = vmatprep.subr.mxu0 0.0
    %4413 = vmatpush1.msra.mxu0 0.0
    %4414 = vmatprep.subr.mxu0 0.0
    %4415 = vmatpush1.msra.mxu0 0.0
    %4416 = vmatprep.subr.mxu0 0.0
    %4417 = vmatpush1.msra.mxu0 0.0
    %4418 = vmatprep.subr.mxu0 0.0
    %4419 = vmatpush1.msra.mxu0 0.0
    %4420 = vmatprep.subr.mxu0 0.0
    %4421 = vmatpush1.msra.mxu0 0.0
    %4422 = vmatprep.subr.mxu0 0.0
    %4423 = vmatpush1.msra.mxu0 0.0
    %4424 = vmatprep.subr.mxu0 0.0
    %4425 = vmatpush1.msra.mxu0 0.0
    %4426 = vmatprep.subr.mxu0 0.0
    %4427 = vmatpush1.msra.mxu0 0.0
    %4428 = vmatprep.subr.mxu0 0.0
    %4429 = vmatpush1.msra.mxu0 0.0
    %4430 = vmatprep.subr.mxu0 0.0
    %4431 = vmatpush1.msra.mxu0 0.0
    %4432 = vmatprep.subr.mxu0 0.0
    %4433 = vmatpush1.msra.mxu0 0.0
    %4434 = vmatprep.subr.mxu0 0.0
    %4435 = vmatpush1.msra.mxu0 0.0
    %4436 = vmatprep.subr.mxu0 0.0
    %4437 = vmatpush1.msra.mxu0 0.0
    %4438 = vmatprep.subr.mxu0 0.0
    %4439 = vmatpush1.msra.mxu0 0.0
    %4440 = vmatprep.subr.mxu0 0.0
    %4441 = vmatpush1.msra.mxu0 0.0
    %4442 = vmatprep.subr.mxu0 0.0
    %4443 = vmatpush1.msra.mxu0 0.0
    %4444 = vmatprep.subr.mxu0 0.0
    %4445 = vmatpush1.msra.mxu0 0.0
    %4446 = vmatprep.subr.mxu0 0.0
    %4447 = vmatpush1.msra.mxu0 0.0
    %4448 = vmatprep.subr.mxu0 0.0
    %4449 = vmatpush1.msra.mxu0 0.0
    %4450 = vmatprep.subr.mxu0 0.0
    %4451 = vmatpush1.msra.mxu0 0.0
    %4452 = vmatprep.subr.mxu0 0.0
    %4453 = vmatpush1.msra.mxu0 0.0
    %4454 = vmatprep.subr.mxu0 0.0
    %4455 = vmatpush1.msra.mxu0 0.0
    %4456 = vmatprep.subr.mxu0 0.0
    %4457 = vmatpush1.msra.mxu0 0.0
    %4458 = vmatprep.subr.mxu0 0.0
    %4459 = vmatpush1.msra.mxu0 0.0
    %4460 = vmatprep.subr.mxu0 0.0
    %4461 = vmatpush1.msra.mxu0 0.0
    %4462 = vmatprep.subr.mxu0 0.0
    %4463 = vmatpush1.msra.mxu0 0.0
    %4464 = vmatprep.subr.mxu0 0.0
    %4465 = vmatpush1.msra.mxu0 0.0
    %4466 = vmatprep.subr.mxu0 0.0
    %4467 = vmatpush1.msra.mxu0 0.0
    %4468 = vmatprep.subr.mxu0 0.0
    %4469 = vmatpush1.msra.mxu0 0.0
    %4470 = vmatprep.mubr.f32.mxu0 0.0
    %4471 = vmatmul.mubr.f32.gmra.mrb[0].mxu0 %v4401
    %v4472 = vpop.f32.mrb[0].mxu0
    %v4473 = vadd.f32 0.0, %v4472
    %v4474 = vpop.f32.mrb[0].mxu0
    %4475 = vmatprep.mubr.f32.mxu0 0.0
    %4476 = vmatmul.mubr.f32.gmra.mrb[0].mxu0 %v4404
    %v4477 = vpop.f32.mrb[0].mxu0
    %v4478 = vadd.f32 0.0, %v4477
    %v4479 = vpop.f32.mrb[0].mxu0
    %4480 = vdwg.mxu0
    %v4482 = vsel %vm511, %v3736, 0
    %v4485 = vsel %vm511, %v3809, 0
    %4487 = vmatprep.subr.mxu0 0.0
    %4488 = vmatpush1.msra.mxu0 %v3813
    %4489 = vmatprep.subr.mxu0 0.0
    %4490 = vmatpush1.msra.mxu0 0.0
    %4491 = vmatprep.subr.mxu0 0.0
    %4492 = vmatpush1.msra.mxu0 0.0
    %4493 = vmatprep.subr.mxu0 0.0
    %4494 = vmatpush1.msra.mxu0 0.0
    %4495 = vmatprep.subr.mxu0 0.0
    %4496 = vmatpush1.msra.mxu0 0.0
    %4497 = vmatprep.subr.mxu0 0.0
    %4498 = vmatpush1.msra.mxu0 0.0
    %4499 = vmatprep.subr.mxu0 0.0
    %4500 = vmatpush1.msra.mxu0 0.0
    %4501 = vmatprep.subr.mxu0 0.0
    %4502 = vmatpush1.msra.mxu0 0.0
    %4503 = vmatprep.subr.mxu0 0.0
    %4504 = vmatpush1.msra.mxu0 0.0
    %4505 = vmatprep.subr.mxu0 0.0
    %4506 = vmatpush1.msra.mxu0 0.0
    %4507 = vmatprep.subr.mxu0 0.0
    %4508 = vmatpush1.msra.mxu0 0.0
    %4509 = vmatprep.subr.mxu0 0.0
    %4510 = vmatpush1.msra.mxu0 0.0
    %4511 = vmatprep.subr.mxu0 0.0
    %4512 = vmatpush1.msra.mxu0 0.0
    %4513 = vmatprep.subr.mxu0 0.0
    %4514 = vmatpush1.msra.mxu0 0.0
    %4515 = vmatprep.subr.mxu0 0.0
    %4516 = vmatpush1.msra.mxu0 0.0
    %4517 = vmatprep.subr.mxu0 0.0
    %4518 = vmatpush1.msra.mxu0 0.0
    %4519 = vmatprep.subr.mxu0 0.0
    %4520 = vmatpush1.msra.mxu0 0.0
    %4521 = vmatprep.subr.mxu0 0.0
    %4522 = vmatpush1.msra.mxu0 0.0
    %4523 = vmatprep.subr.mxu0 0.0
    %4524 = vmatpush1.msra.mxu0 0.0
    %4525 = vmatprep.subr.mxu0 0.0
    %4526 = vmatpush1.msra.mxu0 0.0
    %4527 = vmatprep.subr.mxu0 0.0
    %4528 = vmatpush1.msra.mxu0 0.0
    %4529 = vmatprep.subr.mxu0 0.0
    %4530 = vmatpush1.msra.mxu0 0.0
    %4531 = vmatprep.subr.mxu0 0.0
    %4532 = vmatpush1.msra.mxu0 0.0
    %4533 = vmatprep.subr.mxu0 0.0
    %4534 = vmatpush1.msra.mxu0 0.0
    %4535 = vmatprep.subr.mxu0 0.0
    %4536 = vmatpush1.msra.mxu0 0.0
    %4537 = vmatprep.subr.mxu0 0.0
    %4538 = vmatpush1.msra.mxu0 0.0
    %4539 = vmatprep.subr.mxu0 0.0
    %4540 = vmatpush1.msra.mxu0 0.0
    %4541 = vmatprep.subr.mxu0 0.0
    %4542 = vmatpush1.msra.mxu0 0.0
    %4543 = vmatprep.subr.mxu0 0.0
    %4544 = vmatpush1.msra.mxu0 0.0
    %4545 = vmatprep.subr.mxu0 0.0
    %4546 = vmatpush1.msra.mxu0 0.0
    %4547 = vmatprep.subr.mxu0 0.0
    %4548 = vmatpush1.msra.mxu0 0.0
    %4549 = vmatprep.subr.mxu0 0.0
    %4550 = vmatpush1.msra.mxu0 0.0
    %4551 = vmatprep.mubr.f32.mxu0 0.0
    %4552 = vmatmul.mubr.f32.gmra.mrb[0].mxu0 %v4482
    %v4553 = vpop.f32.mrb[0].mxu0
    %v4554 = vadd.f32 %v4473, %v4553
    %v4555 = vpop.f32.mrb[0].mxu0
    %4556 = vmatprep.mubr.f32.mxu0 0.0
    %4557 = vmatmul.mubr.f32.gmra.mrb[0].mxu0 %v4485
    %v4558 = vpop.f32.mrb[0].mxu0
    %v4559 = vadd.f32 %v4478, %v4558
    %v4560 = vpop.f32.mrb[0].mxu0
    %4561 = vdwg.mxu0
    %s4562 = scalar_lea.vmem %s5, 192
    %v4563 = vld [vmem:[%s4562] sm:$0xff]
    %v4564 = vld [vmem:[%s4562 + $0x8] sm:$0xff]
    %v4565 = vld [vmem:[%s4562 + $0x10] sm:$0xff]
    %v4566 = vld [vmem:[%s4562 + $0x18] sm:$0xff]
    %s4567 = scalar_lea.vmem %s8, 6
    %v4568 = vld [vmem:[%s4567] sm:$0x1]
    %v4570 = vlaneseq
    %v4571 = vshrl.u32 %v4570, 7
    %v4572 = vsub.s32 0, %v4571
    %v4573 = vrot.slane %v4568, %v4572
    %4575 = vmatprep.subr.mxu0 0.0
    %4576 = vmatpush1.msra.mxu0 %v4563
    %4577 = vmatprep.subr.mxu0 0.0
    %4578 = vmatpush1.msra.mxu0 %v4564
    %4579 = vmatprep.subr.mxu0 0.0
    %4580 = vmatpush1.msra.mxu0 %v4565
    %4581 = vmatprep.subr.mxu0 0.0
    %4582 = vmatpush1.msra.mxu0 %v4566
    %4583 = vmatprep.subr.mxu0 0.0
    %4584 = vmatpush1.msra.mxu0 0.0
    %4585 = vmatprep.subr.mxu0 0.0
    %4586 = vmatpush1.msra.mxu0 0.0
    %4587 = vmatprep.subr.mxu0 0.0
    %4588 = vmatpush1.msra.mxu0 0.0
    %4589 = vmatprep.subr.mxu0 0.0
    %4590 = vmatpush1.msra.mxu0 0.0
    %4591 = vmatprep.subr.mxu0 0.0
    %4592 = vmatpush1.msra.mxu0 0.0
    %4593 = vmatprep.subr.mxu0 0.0
    %4594 = vmatpush1.msra.mxu0 0.0
    %4595 = vmatprep.subr.mxu0 0.0
    %4596 = vmatpush1.msra.mxu0 0.0
    %4597 = vmatprep.subr.mxu0 0.0
    %4598 = vmatpush1.msra.mxu0 0.0
    %4599 = vmatprep.subr.mxu0 0.0
    %4600 = vmatpush1.msra.mxu0 0.0
    %4601 = vmatprep.subr.mxu0 0.0
    %4602 = vmatpush1.msra.mxu0 0.0
    %4603 = vmatprep.subr.mxu0 0.0
    %4604 = vmatpush1.msra.mxu0 0.0
    %4605 = vmatprep.subr.mxu0 0.0
    %4606 = vmatpush1.msra.mxu0 0.0
    %4607 = vmatprep.subr.mxu0 0.0
    %4608 = vmatpush1.msra.mxu0 0.0
    %4609 = vmatprep.subr.mxu0 0.0
    %4610 = vmatpush1.msra.mxu0 0.0
    %4611 = vmatprep.subr.mxu0 0.0
    %4612 = vmatpush1.msra.mxu0 0.0
    %4613 = vmatprep.subr.mxu0 0.0
    %4614 = vmatpush1.msra.mxu0 0.0
    %4615 = vmatprep.subr.mxu0 0.0
    %4616 = vmatpush1.msra.mxu0 0.0
    %4617 = vmatprep.subr.mxu0 0.0
    %4618 = vmatpush1.msra.mxu0 0.0
    %4619 = vmatprep.subr.mxu0 0.0
    %4620 = vmatpush1.msra.mxu0 0.0
    %4621 = vmatprep.subr.mxu0 0.0
    %4622 = vmatpush1.msra.mxu0 0.0
    %4623 = vmatprep.subr.mxu0 0.0
    %4624 = vmatpush1.msra.mxu0 0.0
    %4625 = vmatprep.subr.mxu0 0.0
    %4626 = vmatpush1.msra.mxu0 0.0
    %4627 = vmatprep.subr.mxu0 0.0
    %4628 = vmatpush1.msra.mxu0 0.0
    %4629 = vmatprep.subr.mxu0 0.0
    %4630 = vmatpush1.msra.mxu0 0.0
    %4631 = vmatprep.subr.mxu0 0.0
    %4632 = vmatpush1.msra.mxu0 0.0
    %4633 = vmatprep.subr.mxu0 0.0
    %4634 = vmatpush1.msra.mxu0 0.0
    %4635 = vmatprep.subr.mxu0 0.0
    %4636 = vmatpush1.msra.mxu0 0.0
    %4637 = vmatprep.subr.mxu0 0.0
    %4638 = vmatpush1.msra.mxu0 0.0
    %4639 = vmatprep.mubr.f32.mxu0 0.0
    %4640 = vmatmul.mubr.f32.gmra.mrb[0].mxu0 %v3236
    %v4641 = vpop.f32.mrb[0].mxu0
    %v4642 = vadd.f32 %v4573, %v4641
    %v4643 = vpop.f32.mrb[0].mxu0
    %4644 = vmatprep.mubr.f32.mxu0 0.0
    %4645 = vmatmul.mubr.f32.gmra.mrb[0].mxu0 %v3239
    %v4646 = vpop.f32.mrb[0].mxu0
    %v4647 = vadd.f32 %v4573, %v4646
    %v4648 = vpop.f32.mrb[0].mxu0
    %4649 = vdwg.mxu0
    %s4650 = scalar_lea.vmem %s6, 192
    %v4651 = vld [vmem:[%s4650] sm:$0xff]
    %v4652 = vld [vmem:[%s4650 + $0x8] sm:$0xff]
    %v4653 = vld [vmem:[%s4650 + $0x10] sm:$0xff]
    %v4654 = vld [vmem:[%s4650 + $0x18] sm:$0xff]
    %s4655 = scalar_lea.vmem %s9, 6
    %v4656 = vld [vmem:[%s4655] sm:$0x1]
    %v4658 = vlaneseq
    %v4659 = vshrl.u32 %v4658, 7
    %v4660 = vsub.s32 0, %v4659
    %v4661 = vrot.slane %v4656, %v4660
    %4663 = vmatprep.subr.mxu0 0.0
    %4664 = vmatpush1.msra.mxu0 %v4651
    %4665 = vmatprep.subr.mxu0 0.0
    %4666 = vmatpush1.msra.mxu0 %v4652
    %4667 = vmatprep.subr.mxu0 0.0
    %4668 = vmatpush1.msra.mxu0 %v4653
    %4669 = vmatprep.subr.mxu0 0.0
    %4670 = vmatpush1.msra.mxu0 %v4654
    %4671 = vmatprep.subr.mxu0 0.0
    %4672 = vmatpush1.msra.mxu0 0.0
    %4673 = vmatprep.subr.mxu0 0.0
    %4674 = vmatpush1.msra.mxu0 0.0
    %4675 = vmatprep.subr.mxu0 0.0
    %4676 = vmatpush1.msra.mxu0 0.0
    %4677 = vmatprep.subr.mxu0 0.0
    %4678 = vmatpush1.msra.mxu0 0.0
    %4679 = vmatprep.subr.mxu0 0.0
    %4680 = vmatpush1.msra.mxu0 0.0
    %4681 = vmatprep.subr.mxu0 0.0
    %4682 = vmatpush1.msra.mxu0 0.0
    %4683 = vmatprep.subr.mxu0 0.0
    %4684 = vmatpush1.msra.mxu0 0.0
    %4685 = vmatprep.subr.mxu0 0.0
    %4686 = vmatpush1.msra.mxu0 0.0
    %4687 = vmatprep.subr.mxu0 0.0
    %4688 = vmatpush1.msra.mxu0 0.0
    %4689 = vmatprep.subr.mxu0 0.0
    %4690 = vmatpush1.msra.mxu0 0.0
    %4691 = vmatprep.subr.mxu0 0.0
    %4692 = vmatpush1.msra.mxu0 0.0
    %4693 = vmatprep.subr.mxu0 0.0
    %4694 = vmatpush1.msra.mxu0 0.0
    %4695 = vmatprep.subr.mxu0 0.0
    %4696 = vmatpush1.msra.mxu0 0.0
    %4697 = vmatprep.subr.mxu0 0.0
    %4698 = vmatpush1.msra.mxu0 0.0
    %4699 = vmatprep.subr.mxu0 0.0
    %4700 = vmatpush1.msra.mxu0 0.0
    %4701 = vmatprep.subr.mxu0 0.0
    %4702 = vmatpush1.msra.mxu0 0.0
    %4703 = vmatprep.subr.mxu0 0.0
    %4704 = vmatpush1.msra.mxu0 0.0
    %4705 = vmatprep.subr.mxu0 0.0
    %4706 = vmatpush1.msra.mxu0 0.0
    %4707 = vmatprep.subr.mxu0 0.0
    %4708 = vmatpush1.msra.mxu0 0.0
    %4709 = vmatprep.subr.mxu0 0.0
    %4710 = vmatpush1.msra.mxu0 0.0
    %4711 = vmatprep.subr.mxu0 0.0
    %4712 = vmatpush1.msra.mxu0 0.0
    %4713 = vmatprep.subr.mxu0 0.0
    %4714 = vmatpush1.msra.mxu0 0.0
    %4715 = vmatprep.subr.mxu0 0.0
    %4716 = vmatpush1.msra.mxu0 0.0
    %4717 = vmatprep.subr.mxu0 0.0
    %4718 = vmatpush1.msra.mxu0 0.0
    %4719 = vmatprep.subr.mxu0 0.0
    %4720 = vmatpush1.msra.mxu0 0.0
    %4721 = vmatprep.subr.mxu0 0.0
    %4722 = vmatpush1.msra.mxu0 0.0
    %4723 = vmatprep.subr.mxu0 0.0
    %4724 = vmatpush1.msra.mxu0 0.0
    %4725 = vmatprep.subr.mxu0 0.0
    %4726 = vmatpush1.msra.mxu0 0.0
    %4727 = vmatprep.mubr.f32.mxu0 0.0
    %4728 = vmatmul.mubr.f32.gmra.mrb[0].mxu0 %v3236
    %v4729 = vpop.f32.mrb[0].mxu0
    %v4730 = vadd.f32 %v4661, %v4729
    %v4731 = vpop.f32.mrb[0].mxu0
    %4732 = vmatprep.mubr.f32.mxu0 0.0
    %4733 = vmatmul.mubr.f32.gmra.mrb[0].mxu0 %v3239
    %v4734 = vpop.f32.mrb[0].mxu0
    %v4735 = vadd.f32 %v4661, %v4734
    %v4736 = vpop.f32.mrb[0].mxu0
    %4737 = vdwg.mxu0
    %s4738 = scalar_lea.vmem %s7, 192
    %v4739 = vld [vmem:[%s4738] sm:$0xff]
    %v4740 = vld [vmem:[%s4738 + $0x8] sm:$0xff]
    %v4741 = vld [vmem:[%s4738 + $0x10] sm:$0xff]
    %v4742 = vld [vmem:[%s4738 + $0x18] sm:$0xff]
    %s4743 = scalar_lea.vmem %s10, 6
    %v4744 = vld [vmem:[%s4743] sm:$0x1]
    %v4746 = vlaneseq
    %v4747 = vshrl.u32 %v4746, 7
    %v4748 = vsub.s32 0, %v4747
    %v4749 = vrot.slane %v4744, %v4748
    %4751 = vmatprep.subr.mxu0 0.0
    %4752 = vmatpush1.msra.mxu0 %v4739
    %4753 = vmatprep.subr.mxu0 0.0
    %4754 = vmatpush1.msra.mxu0 %v4740
    %4755 = vmatprep.subr.mxu0 0.0
    %4756 = vmatpush1.msra.mxu0 %v4741
    %4757 = vmatprep.subr.mxu0 0.0
    %4758 = vmatpush1.msra.mxu0 %v4742
    %4759 = vmatprep.subr.mxu0 0.0
    %4760 = vmatpush1.msra.mxu0 0.0
    %4761 = vmatprep.subr.mxu0 0.0
    %4762 = vmatpush1.msra.mxu0 0.0
    %4763 = vmatprep.subr.mxu0 0.0
    %4764 = vmatpush1.msra.mxu0 0.0
    %4765 = vmatprep.subr.mxu0 0.0
    %4766 = vmatpush1.msra.mxu0 0.0
    %4767 = vmatprep.subr.mxu0 0.0
    %4768 = vmatpush1.msra.mxu0 0.0
    %4769 = vmatprep.subr.mxu0 0.0
    %4770 = vmatpush1.msra.mxu0 0.0
    %4771 = vmatprep.subr.mxu0 0.0
    %4772 = vmatpush1.msra.mxu0 0.0
    %4773 = vmatprep.subr.mxu0 0.0
    %4774 = vmatpush1.msra.mxu0 0.0
    %4775 = vmatprep.subr.mxu0 0.0
    %4776 = vmatpush1.msra.mxu0 0.0
    %4777 = vmatprep.subr.mxu0 0.0
    %4778 = vmatpush1.msra.mxu0 0.0
    %4779 = vmatprep.subr.mxu0 0.0
    %4780 = vmatpush1.msra.mxu0 0.0
    %4781 = vmatprep.subr.mxu0 0.0
    %4782 = vmatpush1.msra.mxu0 0.0
    %4783 = vmatprep.subr.mxu0 0.0
    %4784 = vmatpush1.msra.mxu0 0.0
    %4785 = vmatprep.subr.mxu0 0.0
    %4786 = vmatpush1.msra.mxu0 0.0
    %4787 = vmatprep.subr.mxu0 0.0
    %4788 = vmatpush1.msra.mxu0 0.0
    %4789 = vmatprep.subr.mxu0 0.0
    %4790 = vmatpush1.msra.mxu0 0.0
    %4791 = vmatprep.subr.mxu0 0.0
    %4792 = vmatpush1.msra.mxu0 0.0
    %4793 = vmatprep.subr.mxu0 0.0
    %4794 = vmatpush1.msra.mxu0 0.0
    %4795 = vmatprep.subr.mxu0 0.0
    %4796 = vmatpush1.msra.mxu0 0.0
    %4797 = vmatprep.subr.mxu0 0.0
    %4798 = vmatpush1.msra.mxu0 0.0
    %4799 = vmatprep.subr.mxu0 0.0
    %4800 = vmatpush1.msra.mxu0 0.0
    %4801 = vmatprep.subr.mxu0 0.0
    %4802 = vmatpush1.msra.mxu0 0.0
    %4803 = vmatprep.subr.mxu0 0.0
    %4804 = vmatpush1.msra.mxu0 0.0
    %4805 = vmatprep.subr.mxu0 0.0
    %4806 = vmatpush1.msra.mxu0 0.0
    %4807 = vmatprep.subr.mxu0 0.0
    %4808 = vmatpush1.msra.mxu0 0.0
    %4809 = vmatprep.subr.mxu0 0.0
    %4810 = vmatpush1.msra.mxu0 0.0
    %4811 = vmatprep.subr.mxu0 0.0
    %4812 = vmatpush1.msra.mxu0 0.0
    %4813 = vmatprep.subr.mxu0 0.0
    %4814 = vmatpush1.msra.mxu0 0.0
    %4815 = vmatprep.mubr.f32.mxu0 0.0
    %4816 = vmatmul.mubr.f32.gmra.mrb[0].mxu0 %v3236
    %v4817 = vpop.f32.mrb[0].mxu0
    %v4818 = vadd.f32 %v4749, %v4817
    %v4819 = vpop.f32.mrb[0].mxu0
    %4820 = vmatprep.mubr.f32.mxu0 0.0
    %4821 = vmatmul.mubr.f32.gmra.mrb[0].mxu0 %v3239
    %v4822 = vpop.f32.mrb[0].mxu0
    %v4823 = vadd.f32 %v4749, %v4822
    %v4824 = vpop.f32.mrb[0].mxu0
    %4825 = vdwg.mxu0
    %v4827 = vsel %vm511, %v4642, 0
    %v4830 = vsel %vm511, %v4730, 0
    %4832 = vmatprep.subr.mxu0 0.0
    %4833 = vmatpush1.xpose.msra.mxu0 %v4830
    %4834 = vmatprep.subr.mxu0 0.0
    %4835 = vmatpush1.xpose.msra.mxu0 0.0
    %4836 = vmatprep.subr.mxu0 0.0
    %4837 = vmatpush1.xpose.msra.mxu0 0.0
    %4838 = vmatprep.subr.mxu0 0.0
    %4839 = vmatpush1.xpose.msra.mxu0 0.0
    %4840 = vmatprep.subr.mxu0 0.0
    %4841 = vmatpush1.xpose.msra.mxu0 0.0
    %4842 = vmatprep.subr.mxu0 0.0
    %4843 = vmatpush1.xpose.msra.mxu0 0.0
    %4844 = vmatprep.subr.mxu0 0.0
    %4845 = vmatpush1.xpose.msra.mxu0 0.0
    %4846 = vmatprep.subr.mxu0 0.0
    %4847 = vmatpush1.xpose.msra.mxu0 0.0
    %4848 = vmatprep.subr.mxu0 0.0
    %4849 = vmatpush1.xpose.msra.mxu0 0.0
    %4850 = vmatprep.subr.mxu0 0.0
    %4851 = vmatpush1.xpose.msra.mxu0 0.0
    %4852 = vmatprep.subr.mxu0 0.0
    %4853 = vmatpush1.xpose.msra.mxu0 0.0
    %4854 = vmatprep.subr.mxu0 0.0
    %4855 = vmatpush1.xpose.msra.mxu0 0.0
    %4856 = vmatprep.subr.mxu0 0.0
    %4857 = vmatpush1.xpose.msra.mxu0 0.0
    %4858 = vmatprep.subr.mxu0 0.0
    %4859 = vmatpush1.xpose.msra.mxu0 0.0
    %4860 = vmatprep.subr.mxu0 0.0
    %4861 = vmatpush1.xpose.msra.mxu0 0.0
    %4862 = vmatprep.subr.mxu0 0.0
    %4863 = vmatpush1.xpose.msra.mxu0 0.0
    %4864 = vmatprep.subr.mxu0 0.0
    %4865 = vmatpush1.xpose.msra.mxu0 0.0
    %4866 = vmatprep.subr.mxu0 0.0
    %4867 = vmatpush1.xpose.msra.mxu0 0.0
    %4868 = vmatprep.subr.mxu0 0.0
    %4869 = vmatpush1.xpose.msra.mxu0 0.0
    %4870 = vmatprep.subr.mxu0 0.0
    %4871 = vmatpush1.xpose.msra.mxu0 0.0
    %4872 = vmatprep.subr.mxu0 0.0
    %4873 = vmatpush1.xpose.msra.mxu0 0.0
    %4874 = vmatprep.subr.mxu0 0.0
    %4875 = vmatpush1.xpose.msra.mxu0 0.0
    %4876 = vmatprep.subr.mxu0 0.0
    %4877 = vmatpush1.xpose.msra.mxu0 0.0
    %4878 = vmatprep.subr.mxu0 0.0
    %4879 = vmatpush1.xpose.msra.mxu0 0.0
    %4880 = vmatprep.subr.mxu0 0.0
    %4881 = vmatpush1.xpose.msra.mxu0 0.0
    %4882 = vmatprep.subr.mxu0 0.0
    %4883 = vmatpush1.xpose.msra.mxu0 0.0
    %4884 = vmatprep.subr.mxu0 0.0
    %4885 = vmatpush1.xpose.msra.mxu0 0.0
    %4886 = vmatprep.subr.mxu0 0.0
    %4887 = vmatpush1.xpose.msra.mxu0 0.0
    %4888 = vmatprep.subr.mxu0 0.0
    %4889 = vmatpush1.xpose.msra.mxu0 0.0
    %4890 = vmatprep.subr.mxu0 0.0
    %4891 = vmatpush1.xpose.msra.mxu0 0.0
    %4892 = vmatprep.subr.mxu0 0.0
    %4893 = vmatpush1.xpose.msra.mxu0 0.0
    %4894 = vmatprep.subr.mxu0 0.0
    %4895 = vmatpush1.xpose.msra.mxu0 0.0
    %4896 = vmatprep.mubr.f32.mxu0 0.0
    %4897 = vmatmul.mubr.f32.gmra.mrb[0].mxu0 %v4827
    %v4898 = vpop.f32.mrb[0].mxu0
    %v4899 = vadd.f32 %v217, %v4898
    %v4900 = vpop.f32.mrb[0].mxu0
    %4901 = vdwg.mxu0
    %v4903 = vsel %vm511, %v4647, 0
    %v4906 = vsel %vm511, %v4735, 0
    %4908 = vmatprep.subr.mxu0 0.0
    %4909 = vmatpush1.xpose.msra.mxu0 %v4906
    %4910 = vmatprep.subr.mxu0 0.0
    %4911 = vmatpush1.xpose.msra.mxu0 0.0
    %4912 = vmatprep.subr.mxu0 0.0
    %4913 = vmatpush1.xpose.msra.mxu0 0.0
    %4914 = vmatprep.subr.mxu0 0.0
    %4915 = vmatpush1.xpose.msra.mxu0 0.0
    %4916 = vmatprep.subr.mxu0 0.0
    %4917 = vmatpush1.xpose.msra.mxu0 0.0
    %4918 = vmatprep.subr.mxu0 0.0
    %4919 = vmatpush1.xpose.msra.mxu0 0.0
    %4920 = vmatprep.subr.mxu0 0.0
    %4921 = vmatpush1.xpose.msra.mxu0 0.0
    %4922 = vmatprep.subr.mxu0 0.0
    %4923 = vmatpush1.xpose.msra.mxu0 0.0
    %4924 = vmatprep.subr.mxu0 0.0
    %4925 = vmatpush1.xpose.msra.mxu0 0.0
    %4926 = vmatprep.subr.mxu0 0.0
    %4927 = vmatpush1.xpose.msra.mxu0 0.0
    %4928 = vmatprep.subr.mxu0 0.0
    %4929 = vmatpush1.xpose.msra.mxu0 0.0
    %4930 = vmatprep.subr.mxu0 0.0
    %4931 = vmatpush1.xpose.msra.mxu0 0.0
    %4932 = vmatprep.subr.mxu0 0.0
    %4933 = vmatpush1.xpose.msra.mxu0 0.0
    %4934 = vmatprep.subr.mxu0 0.0
    %4935 = vmatpush1.xpose.msra.mxu0 0.0
    %4936 = vmatprep.subr.mxu0 0.0
    %4937 = vmatpush1.xpose.msra.mxu0 0.0
    %4938 = vmatprep.subr.mxu0 0.0
    %4939 = vmatpush1.xpose.msra.mxu0 0.0
    %4940 = vmatprep.subr.mxu0 0.0
    %4941 = vmatpush1.xpose.msra.mxu0 0.0
    %4942 = vmatprep.subr.mxu0 0.0
    %4943 = vmatpush1.xpose.msra.mxu0 0.0
    %4944 = vmatprep.subr.mxu0 0.0
    %4945 = vmatpush1.xpose.msra.mxu0 0.0
    %4946 = vmatprep.subr.mxu0 0.0
    %4947 = vmatpush1.xpose.msra.mxu0 0.0
    %4948 = vmatprep.subr.mxu0 0.0
    %4949 = vmatpush1.xpose.msra.mxu0 0.0
    %4950 = vmatprep.subr.mxu0 0.0
    %4951 = vmatpush1.xpose.msra.mxu0 0.0
    %4952 = vmatprep.subr.mxu0 0.0
    %4953 = vmatpush1.xpose.msra.mxu0 0.0
    %4954 = vmatprep.subr.mxu0 0.0
    %4955 = vmatpush1.xpose.msra.mxu0 0.0
    %4956 = vmatprep.subr.mxu0 0.0
    %4957 = vmatpush1.xpose.msra.mxu0 0.0
    %4958 = vmatprep.subr.mxu0 0.0
    %4959 = vmatpush1.xpose.msra.mxu0 0.0
    %4960 = vmatprep.subr.mxu0 0.0
    %4961 = vmatpush1.xpose.msra.mxu0 0.0
    %4962 = vmatprep.subr.mxu0 0.0
    %4963 = vmatpush1.xpose.msra.mxu0 0.0
    %4964 = vmatprep.subr.mxu0 0.0
    %4965 = vmatpush1.xpose.msra.mxu0 0.0
    %4966 = vmatprep.subr.mxu0 0.0
    %4967 = vmatpush1.xpose.msra.mxu0 0.0
    %4968 = vmatprep.subr.mxu0 0.0
    %4969 = vmatpush1.xpose.msra.mxu0 0.0
    %4970 = vmatprep.subr.mxu0 0.0
    %4971 = vmatpush1.xpose.msra.mxu0 0.0
    %4972 = vmatprep.mubr.f32.mxu0 0.0
    %4973 = vmatmul.mubr.f32.gmra.mrb[0].mxu0 %v4903
    %v4974 = vpop.f32.mrb[0].mxu0
    %v4975 = vadd.f32 %v218, %v4974
    %v4976 = vpop.f32.mrb[0].mxu0
    %4977 = vdwg.mxu0
    %v4978 = vsel %vm511, %v4899, -inf
    %4979 = vmax.xlane.f32.xlu0 %v4978
    %v4980 = vpop.xlane.xlu0 %4979
    %v4981 = vsel %vm511, %v4975, -inf
    %4982 = vmax.xlane.f32.xlu0 %v4981
    %v4983 = vpop.xlane.xlu0 %4982
    %v4984 = vsub.f32 %v4899, %v4980
    %v4985 = vsub.f32 %v4975, %v4983
    %v4986 = vmul.f32 %v4984, 1.442695
    %v4987 = vpow.pop %v4986
    %v4988 = vmul.f32 %v4985, 1.442695
    %v4989 = vpow.pop %v4988
    %v4990 = vsel %vm511, %v4987, 0.0
    %4991 = vadd.xlane.f32.xlu0 %v4990
    %v4992 = vpop.xlane.xlu0 %4991
    %v4993 = vsel %vm511, %v4989, 0.0
    %4994 = vadd.xlane.f32.xlu0 %v4993
    %v4995 = vpop.xlane.xlu0 %4994
    %v4996 = vrcp.pop %v4992
    %v4997 = vrcp.pop %v4995
    %v4998 = vmul.f32 %v4987, %v4996
    %v4999 = vmul.f32 %v4989, %v4997
    %v5001 = vsel %vm511, %v4998, 0
    %5003 = vmatprep.subr.mxu0 0.0
    %5004 = vmatpush1.msra.mxu0 %v4818
    %5005 = vmatprep.subr.mxu0 0.0
    %5006 = vmatpush1.msra.mxu0 0.0
    %5007 = vmatprep.subr.mxu0 0.0
    %5008 = vmatpush1.msra.mxu0 0.0
    %5009 = vmatprep.subr.mxu0 0.0
    %5010 = vmatpush1.msra.mxu0 0.0
    %5011 = vmatprep.subr.mxu0 0.0
    %5012 = vmatpush1.msra.mxu0 0.0
    %5013 = vmatprep.subr.mxu0 0.0
    %5014 = vmatpush1.msra.mxu0 0.0
    %5015 = vmatprep.subr.mxu0 0.0
    %5016 = vmatpush1.msra.mxu0 0.0
    %5017 = vmatprep.subr.mxu0 0.0
    %5018 = vmatpush1.msra.mxu0 0.0
    %5019 = vmatprep.subr.mxu0 0.0
    %5020 = vmatpush1.msra.mxu0 0.0
    %5021 = vmatprep.subr.mxu0 0.0
    %5022 = vmatpush1.msra.mxu0 0.0
    %5023 = vmatprep.subr.mxu0 0.0
    %5024 = vmatpush1.msra.mxu0 0.0
    %5025 = vmatprep.subr.mxu0 0.0
    %5026 = vmatpush1.msra.mxu0 0.0
    %5027 = vmatprep.subr.mxu0 0.0
    %5028 = vmatpush1.msra.mxu0 0.0
    %5029 = vmatprep.subr.mxu0 0.0
    %5030 = vmatpush1.msra.mxu0 0.0
    %5031 = vmatprep.subr.mxu0 0.0
    %5032 = vmatpush1.msra.mxu0 0.0
    %5033 = vmatprep.subr.mxu0 0.0
    %5034 = vmatpush1.msra.mxu0 0.0
    %5035 = vmatprep.subr.mxu0 0.0
    %5036 = vmatpush1.msra.mxu0 0.0
    %5037 = vmatprep.subr.mxu0 0.0
    %5038 = vmatpush1.msra.mxu0 0.0
    %5039 = vmatprep.subr.mxu0 0.0
    %5040 = vmatpush1.msra.mxu0 0.0
    %5041 = vmatprep.subr.mxu0 0.0
    %5042 = vmatpush1.msra.mxu0 0.0
    %5043 = vmatprep.subr.mxu0 0.0
    %5044 = vmatpush1.msra.mxu0 0.0
    %5045 = vmatprep.subr.mxu0 0.0
    %5046 = vmatpush1.msra.mxu0 0.0
    %5047 = vmatprep.subr.mxu0 0.0
    %5048 = vmatpush1.msra.mxu0 0.0
    %5049 = vmatprep.subr.mxu0 0.0
    %5050 = vmatpush1.msra.mxu0 0.0
    %5051 = vmatprep.subr.mxu0 0.0
    %5052 = vmatpush1.msra.mxu0 0.0
    %5053 = vmatprep.subr.mxu0 0.0
    %5054 = vmatpush1.msra.mxu0 0.0
    %5055 = vmatprep.subr.mxu0 0.0
    %5056 = vmatpush1.msra.mxu0 0.0
    %5057 = vmatprep.subr.mxu0 0.0
    %5058 = vmatpush1.msra.mxu0 0.0
    %5059 = vmatprep.subr.mxu0 0.0
    %5060 = vmatpush1.msra.mxu0 0.0
    %5061 = vmatprep.subr.mxu0 0.0
    %5062 = vmatpush1.msra.mxu0 0.0
    %5063 = vmatprep.subr.mxu0 0.0
    %5064 = vmatpush1.msra.mxu0 0.0
    %5065 = vmatprep.subr.mxu0 0.0
    %5066 = vmatpush1.msra.mxu0 0.0
    %5067 = vmatprep.mubr.f32.mxu0 0.0
    %5068 = vmatmul.mubr.f32.gmra.mrb[0].mxu0 %v5001
    %v5069 = vpop.f32.mrb[0].mxu0
    %v5070 = vadd.f32 0.0, %v5069
    %v5071 = vpop.f32.mrb[0].mxu0
    %5072 = vdwg.mxu0
    %v5074 = vsel %vm511, %v4999, 0
    %5076 = vmatprep.subr.mxu0 0.0
    %5077 = vmatpush1.msra.mxu0 %v4823
    %5078 = vmatprep.subr.mxu0 0.0
    %5079 = vmatpush1.msra.mxu0 0.0
    %5080 = vmatprep.subr.mxu0 0.0
    %5081 = vmatpush1.msra.mxu0 0.0
    %5082 = vmatprep.subr.mxu0 0.0
    %5083 = vmatpush1.msra.mxu0 0.0
    %5084 = vmatprep.subr.mxu0 0.0
    %5085 = vmatpush1.msra.mxu0 0.0
    %5086 = vmatprep.subr.mxu0 0.0
    %5087 = vmatpush1.msra.mxu0 0.0
    %5088 = vmatprep.subr.mxu0 0.0
    %5089 = vmatpush1.msra.mxu0 0.0
    %5090 = vmatprep.subr.mxu0 0.0
    %5091 = vmatpush1.msra.mxu0 0.0
    %5092 = vmatprep.subr.mxu0 0.0
    %5093 = vmatpush1.msra.mxu0 0.0
    %5094 = vmatprep.subr.mxu0 0.0
    %5095 = vmatpush1.msra.mxu0 0.0
    %5096 = vmatprep.subr.mxu0 0.0
    %5097 = vmatpush1.msra.mxu0 0.0
    %5098 = vmatprep.subr.mxu0 0.0
    %5099 = vmatpush1.msra.mxu0 0.0
    %5100 = vmatprep.subr.mxu0 0.0
    %5101 = vmatpush1.msra.mxu0 0.0
    %5102 = vmatprep.subr.mxu0 0.0
    %5103 = vmatpush1.msra.mxu0 0.0
    %5104 = vmatprep.subr.mxu0 0.0
    %5105 = vmatpush1.msra.mxu0 0.0
    %5106 = vmatprep.subr.mxu0 0.0
    %5107 = vmatpush1.msra.mxu0 0.0
    %5108 = vmatprep.subr.mxu0 0.0
    %5109 = vmatpush1.msra.mxu0 0.0
    %5110 = vmatprep.subr.mxu0 0.0
    %5111 = vmatpush1.msra.mxu0 0.0
    %5112 = vmatprep.subr.mxu0 0.0
    %5113 = vmatpush1.msra.mxu0 0.0
    %5114 = vmatprep.subr.mxu0 0.0
    %5115 = vmatpush1.msra.mxu0 0.0
    %5116 = vmatprep.subr.mxu0 0.0
    %5117 = vmatpush1.msra.mxu0 0.0
    %5118 = vmatprep.subr.mxu0 0.0
    %5119 = vmatpush1.msra.mxu0 0.0
    %5120 = vmatprep.subr.mxu0 0.0
    %5121 = vmatpush1.msra.mxu0 0.0
    %5122 = vmatprep.subr.mxu0 0.0
    %5123 = vmatpush1.msra.mxu0 0.0
    %5124 = vmatprep.subr.mxu0 0.0
    %5125 = vmatpush1.msra.mxu0 0.0
    %5126 = vmatprep.subr.mxu0 0.0
    %5127 = vmatpush1.msra.mxu0 0.0
    %5128 = vmatprep.subr.mxu0 0.0
    %5129 = vmatpush1.msra.mxu0 0.0
    %5130 = vmatprep.subr.mxu0 0.0
    %5131 = vmatpush1.msra.mxu0 0.0
    %5132 = vmatprep.subr.mxu0 0.0
    %5133 = vmatpush1.msra.mxu0 0.0
    %5134 = vmatprep.subr.mxu0 0.0
    %5135 = vmatpush1.msra.mxu0 0.0
    %5136 = vmatprep.subr.mxu0 0.0
    %5137 = vmatpush1.msra.mxu0 0.0
    %5138 = vmatprep.subr.mxu0 0.0
    %5139 = vmatpush1.msra.mxu0 0.0
    %5140 = vmatprep.mubr.f32.mxu0 0.0
    %5141 = vmatmul.mubr.f32.gmra.mrb[0].mxu0 %v5074
    %v5142 = vpop.f32.mrb[0].mxu0
    %v5143 = vadd.f32 0.0, %v5142
    %v5144 = vpop.f32.mrb[0].mxu0
    %5145 = vdwg.mxu0
    %s5146 = scalar_lea.vmem %s11, 48
    %v5147 = vld [vmem:[%s5146] sm:$0xff]
    %v5149 = vsel %vm511, %v5070, 0
    %v5152 = vsel %vm511, %v5143, 0
    %5154 = vmatprep.subr.mxu0 0.0
    %5155 = vmatpush1.msra.mxu0 %v5147
    %5156 = vmatprep.subr.mxu0 0.0
    %5157 = vmatpush1.msra.mxu0 0.0
    %5158 = vmatprep.subr.mxu0 0.0
    %5159 = vmatpush1.msra.mxu0 0.0
    %5160 = vmatprep.subr.mxu0 0.0
    %5161 = vmatpush1.msra.mxu0 0.0
    %5162 = vmatprep.subr.mxu0 0.0
    %5163 = vmatpush1.msra.mxu0 0.0
    %5164 = vmatprep.subr.mxu0 0.0
    %5165 = vmatpush1.msra.mxu0 0.0
    %5166 = vmatprep.subr.mxu0 0.0
    %5167 = vmatpush1.msra.mxu0 0.0
    %5168 = vmatprep.subr.mxu0 0.0
    %5169 = vmatpush1.msra.mxu0 0.0
    %5170 = vmatprep.subr.mxu0 0.0
    %5171 = vmatpush1.msra.mxu0 0.0
    %5172 = vmatprep.subr.mxu0 0.0
    %5173 = vmatpush1.msra.mxu0 0.0
    %5174 = vmatprep.subr.mxu0 0.0
    %5175 = vmatpush1.msra.mxu0 0.0
    %5176 = vmatprep.subr.mxu0 0.0
    %5177 = vmatpush1.msra.mxu0 0.0
    %5178 = vmatprep.subr.mxu0 0.0
    %5179 = vmatpush1.msra.mxu0 0.0
    %5180 = vmatprep.subr.mxu0 0.0
    %5181 = vmatpush1.msra.mxu0 0.0
    %5182 = vmatprep.subr.mxu0 0.0
    %5183 = vmatpush1.msra.mxu0 0.0
    %5184 = vmatprep.subr.mxu0 0.0
    %5185 = vmatpush1.msra.mxu0 0.0
    %5186 = vmatprep.subr.mxu0 0.0
    %5187 = vmatpush1.msra.mxu0 0.0
    %5188 = vmatprep.subr.mxu0 0.0
    %5189 = vmatpush1.msra.mxu0 0.0
    %5190 = vmatprep.subr.mxu0 0.0
    %5191 = vmatpush1.msra.mxu0 0.0
    %5192 = vmatprep.subr.mxu0 0.0
    %5193 = vmatpush1.msra.mxu0 0.0
    %5194 = vmatprep.subr.mxu0 0.0
    %5195 = vmatpush1.msra.mxu0 0.0
    %5196 = vmatprep.subr.mxu0 0.0
    %5197 = vmatpush1.msra.mxu0 0.0
    %5198 = vmatprep.subr.mxu0 0.0
    %5199 = vmatpush1.msra.mxu0 0.0
    %5200 = vmatprep.subr.mxu0 0.0
    %5201 = vmatpush1.msra.mxu0 0.0
    %5202 = vmatprep.subr.mxu0 0.0
    %5203 = vmatpush1.msra.mxu0 0.0
    %5204 = vmatprep.subr.mxu0 0.0
    %5205 = vmatpush1.msra.mxu0 0.0
    %5206 = vmatprep.subr.mxu0 0.0
    %5207 = vmatpush1.msra.mxu0 0.0
    %5208 = vmatprep.subr.mxu0 0.0
    %5209 = vmatpush1.msra.mxu0 0.0
    %5210 = vmatprep.subr.mxu0 0.0
    %5211 = vmatpush1.msra.mxu0 0.0
    %5212 = vmatprep.subr.mxu0 0.0
    %5213 = vmatpush1.msra.mxu0 0.0
    %5214 = vmatprep.subr.mxu0 0.0
    %5215 = vmatpush1.msra.mxu0 0.0
    %5216 = vmatprep.subr.mxu0 0.0
    %5217 = vmatpush1.msra.mxu0 0.0
    %5218 = vmatprep.mubr.f32.mxu0 0.0
    %5219 = vmatmul.mubr.f32.gmra.mrb[0].mxu0 %v5149
    %v5220 = vpop.f32.mrb[0].mxu0
    %v5221 = vadd.f32 0.0, %v5220
    %v5222 = vpop.f32.mrb[0].mxu0
    %5223 = vmatprep.mubr.f32.mxu0 0.0
    %5224 = vmatmul.mubr.f32.gmra.mrb[0].mxu0 %v5152
    %v5225 = vpop.f32.mrb[0].mxu0
    %v5226 = vadd.f32 0.0, %v5225
    %v5227 = vpop.f32.mrb[0].mxu0
    %5228 = vdwg.mxu0
    %v5229 = vadd.f32 %v4554, %v5221
    %v5230 = vadd.f32 %v4559, %v5226
    %s5231 = scalar_lea.vmem %s5, 224
    %v5232 = vld [vmem:[%s5231] sm:$0xff]
    %v5233 = vld [vmem:[%s5231 + $0x8] sm:$0xff]
    %v5234 = vld [vmem:[%s5231 + $0x10] sm:$0xff]
    %v5235 = vld [vmem:[%s5231 + $0x18] sm:$0xff]
    %s5236 = scalar_lea.vmem %s8, 7
    %v5237 = vld [vmem:[%s5236] sm:$0x1]
    %v5239 = vlaneseq
    %v5240 = vshrl.u32 %v5239, 7
    %v5241 = vsub.s32 0, %v5240
    %v5242 = vrot.slane %v5237, %v5241
    %5244 = vmatprep.subr.mxu0 0.0
    %5245 = vmatpush1.msra.mxu0 %v5232
    %5246 = vmatprep.subr.mxu0 0.0
    %5247 = vmatpush1.msra.mxu0 %v5233
    %5248 = vmatprep.subr.mxu0 0.0
    %5249 = vmatpush1.msra.mxu0 %v5234
    %5250 = vmatprep.subr.mxu0 0.0
    %5251 = vmatpush1.msra.mxu0 %v5235
    %5252 = vmatprep.subr.mxu0 0.0
    %5253 = vmatpush1.msra.mxu0 0.0
    %5254 = vmatprep.subr.mxu0 0.0
    %5255 = vmatpush1.msra.mxu0 0.0
    %5256 = vmatprep.subr.mxu0 0.0
    %5257 = vmatpush1.msra.mxu0 0.0
    %5258 = vmatprep.subr.mxu0 0.0
    %5259 = vmatpush1.msra.mxu0 0.0
    %5260 = vmatprep.subr.mxu0 0.0
    %5261 = vmatpush1.msra.mxu0 0.0
    %5262 = vmatprep.subr.mxu0 0.0
    %5263 = vmatpush1.msra.mxu0 0.0
    %5264 = vmatprep.subr.mxu0 0.0
    %5265 = vmatpush1.msra.mxu0 0.0
    %5266 = vmatprep.subr.mxu0 0.0
    %5267 = vmatpush1.msra.mxu0 0.0
    %5268 = vmatprep.subr.mxu0 0.0
    %5269 = vmatpush1.msra.mxu0 0.0
    %5270 = vmatprep.subr.mxu0 0.0
    %5271 = vmatpush1.msra.mxu0 0.0
    %5272 = vmatprep.subr.mxu0 0.0
    %5273 = vmatpush1.msra.mxu0 0.0
    %5274 = vmatprep.subr.mxu0 0.0
    %5275 = vmatpush1.msra.mxu0 0.0
    %5276 = vmatprep.subr.mxu0 0.0
    %5277 = vmatpush1.msra.mxu0 0.0
    %5278 = vmatprep.subr.mxu0 0.0
    %5279 = vmatpush1.msra.mxu0 0.0
    %5280 = vmatprep.subr.mxu0 0.0
    %5281 = vmatpush1.msra.mxu0 0.0
    %5282 = vmatprep.subr.mxu0 0.0
    %5283 = vmatpush1.msra.mxu0 0.0
    %5284 = vmatprep.subr.mxu0 0.0
    %5285 = vmatpush1.msra.mxu0 0.0
    %5286 = vmatprep.subr.mxu0 0.0
    %5287 = vmatpush1.msra.mxu0 0.0
    %5288 = vmatprep.subr.mxu0 0.0
    %5289 = vmatpush1.msra.mxu0 0.0
    %5290 = vmatprep.subr.mxu0 0.0
    %5291 = vmatpush1.msra.mxu0 0.0
    %5292 = vmatprep.subr.mxu0 0.0
    %5293 = vmatpush1.msra.mxu0 0.0
    %5294 = vmatprep.subr.mxu0 0.0
    %5295 = vmatpush1.msra.mxu0 0.0
    %5296 = vmatprep.subr.mxu0 0.0
    %5297 = vmatpush1.msra.mxu0 0.0
    %5298 = vmatprep.subr.mxu0 0.0
    %5299 = vmatpush1.msra.mxu0 0.0
    %5300 = vmatprep.subr.mxu0 0.0
    %5301 = vmatpush1.msra.mxu0 0.0
    %5302 = vmatprep.subr.mxu0 0.0
    %5303 = vmatpush1.msra.mxu0 0.0
    %5304 = vmatprep.subr.mxu0 0.0
    %5305 = vmatpush1.msra.mxu0 0.0
    %5306 = vmatprep.subr.mxu0 0.0
    %5307 = vmatpush1.msra.mxu0 0.0
    %5308 = vmatprep.mubr.f32.mxu0 0.0
    %5309 = vmatmul.mubr.f32.gmra.mrb[0].mxu0 %v3236
    %v5310 = vpop.f32.mrb[0].mxu0
    %v5311 = vadd.f32 %v5242, %v5310
    %v5312 = vpop.f32.mrb[0].mxu0
    %5313 = vmatprep.mubr.f32.mxu0 0.0
    %5314 = vmatmul.mubr.f32.gmra.mrb[0].mxu0 %v3239
    %v5315 = vpop.f32.mrb[0].mxu0
    %v5316 = vadd.f32 %v5242, %v5315
    %v5317 = vpop.f32.mrb[0].mxu0
    %5318 = vdwg.mxu0
    %s5319 = scalar_lea.vmem %s6, 224
    %v5320 = vld [vmem:[%s5319] sm:$0xff]
    %v5321 = vld [vmem:[%s5319 + $0x8] sm:$0xff]
    %v5322 = vld [vmem:[%s5319 + $0x10] sm:$0xff]
    %v5323 = vld [vmem:[%s5319 + $0x18] sm:$0xff]
    %s5324 = scalar_lea.vmem %s9, 7
    %v5325 = vld [vmem:[%s5324] sm:$0x1]
    %v5327 = vlaneseq
    %v5328 = vshrl.u32 %v5327, 7
    %v5329 = vsub.s32 0, %v5328
    %v5330 = vrot.slane %v5325, %v5329
    %5332 = vmatprep.subr.mxu0 0.0
    %5333 = vmatpush1.msra.mxu0 %v5320
    %5334 = vmatprep.subr.mxu0 0.0
    %5335 = vmatpush1.msra.mxu0 %v5321
    %5336 = vmatprep.subr.mxu0 0.0
    %5337 = vmatpush1.msra.mxu0 %v5322
    %5338 = vmatprep.subr.mxu0 0.0
    %5339 = vmatpush1.msra.mxu0 %v5323
    %5340 = vmatprep.subr.mxu0 0.0
    %5341 = vmatpush1.msra.mxu0 0.0
    %5342 = vmatprep.subr.mxu0 0.0
    %5343 = vmatpush1.msra.mxu0 0.0
    %5344 = vmatprep.subr.mxu0 0.0
    %5345 = vmatpush1.msra.mxu0 0.0
    %5346 = vmatprep.subr.mxu0 0.0
    %5347 = vmatpush1.msra.mxu0 0.0
    %5348 = vmatprep.subr.mxu0 0.0
    %5349 = vmatpush1.msra.mxu0 0.0
    %5350 = vmatprep.subr.mxu0 0.0
    %5351 = vmatpush1.msra.mxu0 0.0
    %5352 = vmatprep.subr.mxu0 0.0
    %5353 = vmatpush1.msra.mxu0 0.0
    %5354 = vmatprep.subr.mxu0 0.0
    %5355 = vmatpush1.msra.mxu0 0.0
    %5356 = vmatprep.subr.mxu0 0.0
    %5357 = vmatpush1.msra.mxu0 0.0
    %5358 = vmatprep.subr.mxu0 0.0
    %5359 = vmatpush1.msra.mxu0 0.0
    %5360 = vmatprep.subr.mxu0 0.0
    %5361 = vmatpush1.msra.mxu0 0.0
    %5362 = vmatprep.subr.mxu0 0.0
    %5363 = vmatpush1.msra.mxu0 0.0
    %5364 = vmatprep.subr.mxu0 0.0
    %5365 = vmatpush1.msra.mxu0 0.0
    %5366 = vmatprep.subr.mxu0 0.0
    %5367 = vmatpush1.msra.mxu0 0.0
    %5368 = vmatprep.subr.mxu0 0.0
    %5369 = vmatpush1.msra.mxu0 0.0
    %5370 = vmatprep.subr.mxu0 0.0
    %5371 = vmatpush1.msra.mxu0 0.0
    %5372 = vmatprep.subr.mxu0 0.0
    %5373 = vmatpush1.msra.mxu0 0.0
    %5374 = vmatprep.subr.mxu0 0.0
    %5375 = vmatpush1.msra.mxu0 0.0
    %5376 = vmatprep.subr.mxu0 0.0
    %5377 = vmatpush1.msra.mxu0 0.0
    %5378 = vmatprep.subr.mxu0 0.0
    %5379 = vmatpush1.msra.mxu0 0.0
    %5380 = vmatprep.subr.mxu0 0.0
    %5381 = vmatpush1.msra.mxu0 0.0
    %5382 = vmatprep.subr.mxu0 0.0
    %5383 = vmatpush1.msra.mxu0 0.0
    %5384 = vmatprep.subr.mxu0 0.0
    %5385 = vmatpush1.msra.mxu0 0.0
    %5386 = vmatprep.subr.mxu0 0.0
    %5387 = vmatpush1.msra.mxu0 0.0
    %5388 = vmatprep.subr.mxu0 0.0
    %5389 = vmatpush1.msra.mxu0 0.0
    %5390 = vmatprep.subr.mxu0 0.0
    %5391 = vmatpush1.msra.mxu0 0.0
    %5392 = vmatprep.subr.mxu0 0.0
    %5393 = vmatpush1.msra.mxu0 0.0
    %5394 = vmatprep.subr.mxu0 0.0
    %5395 = vmatpush1.msra.mxu0 0.0
    %5396 = vmatprep.mubr.f32.mxu0 0.0
    %5397 = vmatmul.mubr.f32.gmra.mrb[0].mxu0 %v3236
    %v5398 = vpop.f32.mrb[0].mxu0
    %v5399 = vadd.f32 %v5330, %v5398
    %v5400 = vpop.f32.mrb[0].mxu0
    %5401 = vmatprep.mubr.f32.mxu0 0.0
    %5402 = vmatmul.mubr.f32.gmra.mrb[0].mxu0 %v3239
    %v5403 = vpop.f32.mrb[0].mxu0
    %v5404 = vadd.f32 %v5330, %v5403
    %v5405 = vpop.f32.mrb[0].mxu0
    %5406 = vdwg.mxu0
    %s5407 = scalar_lea.vmem %s7, 224
    %v5408 = vld [vmem:[%s5407] sm:$0xff]
    %v5409 = vld [vmem:[%s5407 + $0x8] sm:$0xff]
    %v5410 = vld [vmem:[%s5407 + $0x10] sm:$0xff]
    %v5411 = vld [vmem:[%s5407 + $0x18] sm:$0xff]
    %s5412 = scalar_lea.vmem %s10, 7
    %v5413 = vld [vmem:[%s5412] sm:$0x1]
    %v5415 = vlaneseq
    %v5416 = vshrl.u32 %v5415, 7
    %v5417 = vsub.s32 0, %v5416
    %v5418 = vrot.slane %v5413, %v5417
    %5420 = vmatprep.subr.mxu0 0.0
    %5421 = vmatpush1.msra.mxu0 %v5408
    %5422 = vmatprep.subr.mxu0 0.0
    %5423 = vmatpush1.msra.mxu0 %v5409
    %5424 = vmatprep.subr.mxu0 0.0
    %5425 = vmatpush1.msra.mxu0 %v5410
    %5426 = vmatprep.subr.mxu0 0.0
    %5427 = vmatpush1.msra.mxu0 %v5411
    %5428 = vmatprep.subr.mxu0 0.0
    %5429 = vmatpush1.msra.mxu0 0.0
    %5430 = vmatprep.subr.mxu0 0.0
    %5431 = vmatpush1.msra.mxu0 0.0
    %5432 = vmatprep.subr.mxu0 0.0
    %5433 = vmatpush1.msra.mxu0 0.0
    %5434 = vmatprep.subr.mxu0 0.0
    %5435 = vmatpush1.msra.mxu0 0.0
    %5436 = vmatprep.subr.mxu0 0.0
    %5437 = vmatpush1.msra.mxu0 0.0
    %5438 = vmatprep.subr.mxu0 0.0
    %5439 = vmatpush1.msra.mxu0 0.0
    %5440 = vmatprep.subr.mxu0 0.0
    %5441 = vmatpush1.msra.mxu0 0.0
    %5442 = vmatprep.subr.mxu0 0.0
    %5443 = vmatpush1.msra.mxu0 0.0
    %5444 = vmatprep.subr.mxu0 0.0
    %5445 = vmatpush1.msra.mxu0 0.0
    %5446 = vmatprep.subr.mxu0 0.0
    %5447 = vmatpush1.msra.mxu0 0.0
    %5448 = vmatprep.subr.mxu0 0.0
    %5449 = vmatpush1.msra.mxu0 0.0
    %5450 = vmatprep.subr.mxu0 0.0
    %5451 = vmatpush1.msra.mxu0 0.0
    %5452 = vmatprep.subr.mxu0 0.0
    %5453 = vmatpush1.msra.mxu0 0.0
    %5454 = vmatprep.subr.mxu0 0.0
    %5455 = vmatpush1.msra.mxu0 0.0
    %5456 = vmatprep.subr.mxu0 0.0
    %5457 = vmatpush1.msra.mxu0 0.0
    %5458 = vmatprep.subr.mxu0 0.0
    %5459 = vmatpush1.msra.mxu0 0.0
    %5460 = vmatprep.subr.mxu0 0.0
    %5461 = vmatpush1.msra.mxu0 0.0
    %5462 = vmatprep.subr.mxu0 0.0
    %5463 = vmatpush1.msra.mxu0 0.0
    %5464 = vmatprep.subr.mxu0 0.0
    %5465 = vmatpush1.msra.mxu0 0.0
    %5466 = vmatprep.subr.mxu0 0.0
    %5467 = vmatpush1.msra.mxu0 0.0
    %5468 = vmatprep.subr.mxu0 0.0
    %5469 = vmatpush1.msra.mxu0 0.0
    %5470 = vmatprep.subr.mxu0 0.0
    %5471 = vmatpush1.msra.mxu0 0.0
    %5472 = vmatprep.subr.mxu0 0.0
    %5473 = vmatpush1.msra.mxu0 0.0
    %5474 = vmatprep.subr.mxu0 0.0
    %5475 = vmatpush1.msra.mxu0 0.0
    %5476 = vmatprep.subr.mxu0 0.0
    %5477 = vmatpush1.msra.mxu0 0.0
    %5478 = vmatprep.subr.mxu0 0.0
    %5479 = vmatpush1.msra.mxu0 0.0
    %5480 = vmatprep.subr.mxu0 0.0
    %5481 = vmatpush1.msra.mxu0 0.0
    %5482 = vmatprep.subr.mxu0 0.0
    %5483 = vmatpush1.msra.mxu0 0.0
    %5484 = vmatprep.mubr.f32.mxu0 0.0
    %5485 = vmatmul.mubr.f32.gmra.mrb[0].mxu0 %v3236
    %v5486 = vpop.f32.mrb[0].mxu0
    %v5487 = vadd.f32 %v5418, %v5486
    %v5488 = vpop.f32.mrb[0].mxu0
    %5489 = vmatprep.mubr.f32.mxu0 0.0
    %5490 = vmatmul.mubr.f32.gmra.mrb[0].mxu0 %v3239
    %v5491 = vpop.f32.mrb[0].mxu0
    %v5492 = vadd.f32 %v5418, %v5491
    %v5493 = vpop.f32.mrb[0].mxu0
    %5494 = vdwg.mxu0
    %v5496 = vsel %vm511, %v5311, 0
    %v5499 = vsel %vm511, %v5399, 0
    %5501 = vmatprep.subr.mxu0 0.0
    %5502 = vmatpush1.xpose.msra.mxu0 %v5499
    %5503 = vmatprep.subr.mxu0 0.0
    %5504 = vmatpush1.xpose.msra.mxu0 0.0
    %5505 = vmatprep.subr.mxu0 0.0
    %5506 = vmatpush1.xpose.msra.mxu0 0.0
    %5507 = vmatprep.subr.mxu0 0.0
    %5508 = vmatpush1.xpose.msra.mxu0 0.0
    %5509 = vmatprep.subr.mxu0 0.0
    %5510 = vmatpush1.xpose.msra.mxu0 0.0
    %5511 = vmatprep.subr.mxu0 0.0
    %5512 = vmatpush1.xpose.msra.mxu0 0.0
    %5513 = vmatprep.subr.mxu0 0.0
    %5514 = vmatpush1.xpose.msra.mxu0 0.0
    %5515 = vmatprep.subr.mxu0 0.0
    %5516 = vmatpush1.xpose.msra.mxu0 0.0
    %5517 = vmatprep.subr.mxu0 0.0
    %5518 = vmatpush1.xpose.msra.mxu0 0.0
    %5519 = vmatprep.subr.mxu0 0.0
    %5520 = vmatpush1.xpose.msra.mxu0 0.0
    %5521 = vmatprep.subr.mxu0 0.0
    %5522 = vmatpush1.xpose.msra.mxu0 0.0
    %5523 = vmatprep.subr.mxu0 0.0
    %5524 = vmatpush1.xpose.msra.mxu0 0.0
    %5525 = vmatprep.subr.mxu0 0.0
    %5526 = vmatpush1.xpose.msra.mxu0 0.0
    %5527 = vmatprep.subr.mxu0 0.0
    %5528 = vmatpush1.xpose.msra.mxu0 0.0
    %5529 = vmatprep.subr.mxu0 0.0
    %5530 = vmatpush1.xpose.msra.mxu0 0.0
    %5531 = vmatprep.subr.mxu0 0.0
    %5532 = vmatpush1.xpose.msra.mxu0 0.0
    %5533 = vmatprep.subr.mxu0 0.0
    %5534 = vmatpush1.xpose.msra.mxu0 0.0
    %5535 = vmatprep.subr.mxu0 0.0
    %5536 = vmatpush1.xpose.msra.mxu0 0.0
    %5537 = vmatprep.subr.mxu0 0.0
    %5538 = vmatpush1.xpose.msra.mxu0 0.0
    %5539 = vmatprep.subr.mxu0 0.0
    %5540 = vmatpush1.xpose.msra.mxu0 0.0
    %5541 = vmatprep.subr.mxu0 0.0
    %5542 = vmatpush1.xpose.msra.mxu0 0.0
    %5543 = vmatprep.subr.mxu0 0.0
    %5544 = vmatpush1.xpose.msra.mxu0 0.0
    %5545 = vmatprep.subr.mxu0 0.0
    %5546 = vmatpush1.xpose.msra.mxu0 0.0
    %5547 = vmatprep.subr.mxu0 0.0
    %5548 = vmatpush1.xpose.msra.mxu0 0.0
    %5549 = vmatprep.subr.mxu0 0.0
    %5550 = vmatpush1.xpose.msra.mxu0 0.0
    %5551 = vmatprep.subr.mxu0 0.0
    %5552 = vmatpush1.xpose.msra.mxu0 0.0
    %5553 = vmatprep.subr.mxu0 0.0
    %5554 = vmatpush1.xpose.msra.mxu0 0.0
    %5555 = vmatprep.subr.mxu0 0.0
    %5556 = vmatpush1.xpose.msra.mxu0 0.0
    %5557 = vmatprep.subr.mxu0 0.0
    %5558 = vmatpush1.xpose.msra.mxu0 0.0
    %5559 = vmatprep.subr.mxu0 0.0
    %5560 = vmatpush1.xpose.msra.mxu0 0.0
    %5561 = vmatprep.subr.mxu0 0.0
    %5562 = vmatpush1.xpose.msra.mxu0 0.0
    %5563 = vmatprep.subr.mxu0 0.0
    %5564 = vmatpush1.xpose.msra.mxu0 0.0
    %5565 = vmatprep.mubr.f32.mxu0 0.0
    %5566 = vmatmul.mubr.f32.gmra.mrb[0].mxu0 %v5496
    %v5567 = vpop.f32.mrb[0].mxu0
    %v5568 = vadd.f32 %v217, %v5567
    %v5569 = vpop.f32.mrb[0].mxu0
    %5570 = vdwg.mxu0
    %v5572 = vsel %vm511, %v5316, 0
    %v5575 = vsel %vm511, %v5404, 0
    %5577 = vmatprep.subr.mxu0 0.0
    %5578 = vmatpush1.xpose.msra.mxu0 %v5575
    %5579 = vmatprep.subr.mxu0 0.0
    %5580 = vmatpush1.xpose.msra.mxu0 0.0
    %5581 = vmatprep.subr.mxu0 0.0
    %5582 = vmatpush1.xpose.msra.mxu0 0.0
    %5583 = vmatprep.subr.mxu0 0.0
    %5584 = vmatpush1.xpose.msra.mxu0 0.0
    %5585 = vmatprep.subr.mxu0 0.0
    %5586 = vmatpush1.xpose.msra.mxu0 0.0
    %5587 = vmatprep.subr.mxu0 0.0
    %5588 = vmatpush1.xpose.msra.mxu0 0.0
    %5589 = vmatprep.subr.mxu0 0.0
    %5590 = vmatpush1.xpose.msra.mxu0 0.0
    %5591 = vmatprep.subr.mxu0 0.0
    %5592 = vmatpush1.xpose.msra.mxu0 0.0
    %5593 = vmatprep.subr.mxu0 0.0
    %5594 = vmatpush1.xpose.msra.mxu0 0.0
    %5595 = vmatprep.subr.mxu0 0.0
    %5596 = vmatpush1.xpose.msra.mxu0 0.0
    %5597 = vmatprep.subr.mxu0 0.0
    %5598 = vmatpush1.xpose.msra.mxu0 0.0
    %5599 = vmatprep.subr.mxu0 0.0
    %5600 = vmatpush1.xpose.msra.mxu0 0.0
    %5601 = vmatprep.subr.mxu0 0.0
    %5602 = vmatpush1.xpose.msra.mxu0 0.0
    %5603 = vmatprep.subr.mxu0 0.0
    %5604 = vmatpush1.xpose.msra.mxu0 0.0
    %5605 = vmatprep.subr.mxu0 0.0
    %5606 = vmatpush1.xpose.msra.mxu0 0.0
    %5607 = vmatprep.subr.mxu0 0.0
    %5608 = vmatpush1.xpose.msra.mxu0 0.0
    %5609 = vmatprep.subr.mxu0 0.0
    %5610 = vmatpush1.xpose.msra.mxu0 0.0
    %5611 = vmatprep.subr.mxu0 0.0
    %5612 = vmatpush1.xpose.msra.mxu0 0.0
    %5613 = vmatprep.subr.mxu0 0.0
    %5614 = vmatpush1.xpose.msra.mxu0 0.0
    %5615 = vmatprep.subr.mxu0 0.0
    %5616 = vmatpush1.xpose.msra.mxu0 0.0
    %5617 = vmatprep.subr.mxu0 0.0
    %5618 = vmatpush1.xpose.msra.mxu0 0.0
    %5619 = vmatprep.subr.mxu0 0.0
    %5620 = vmatpush1.xpose.msra.mxu0 0.0
    %5621 = vmatprep.subr.mxu0 0.0
    %5622 = vmatpush1.xpose.msra.mxu0 0.0
    %5623 = vmatprep.subr.mxu0 0.0
    %5624 = vmatpush1.xpose.msra.mxu0 0.0
    %5625 = vmatprep.subr.mxu0 0.0
    %5626 = vmatpush1.xpose.msra.mxu0 0.0
    %5627 = vmatprep.subr.mxu0 0.0
    %5628 = vmatpush1.xpose.msra.mxu0 0.0
    %5629 = vmatprep.subr.mxu0 0.0
    %5630 = vmatpush1.xpose.msra.mxu0 0.0
    %5631 = vmatprep.subr.mxu0 0.0
    %5632 = vmatpush1.xpose.msra.mxu0 0.0
    %5633 = vmatprep.subr.mxu0 0.0
    %5634 = vmatpush1.xpose.msra.mxu0 0.0
    %5635 = vmatprep.subr.mxu0 0.0
    %5636 = vmatpush1.xpose.msra.mxu0 0.0
    %5637 = vmatprep.subr.mxu0 0.0
    %5638 = vmatpush1.xpose.msra.mxu0 0.0
    %5639 = vmatprep.subr.mxu0 0.0
    %5640 = vmatpush1.xpose.msra.mxu0 0.0
    %5641 = vmatprep.mubr.f32.mxu0 0.0
    %5642 = vmatmul.mubr.f32.gmra.mrb[0].mxu0 %v5572
    %v5643 = vpop.f32.mrb[0].mxu0
    %v5644 = vadd.f32 %v218, %v5643
    %v5645 = vpop.f32.mrb[0].mxu0
    %5646 = vdwg.mxu0
    %v5647 = vsel %vm511, %v5568, -inf
    %5648 = vmax.xlane.f32.xlu0 %v5647
    %v5649 = vpop.xlane.xlu0 %5648
    %v5650 = vsel %vm511, %v5644, -inf
    %5651 = vmax.xlane.f32.xlu0 %v5650
    %v5652 = vpop.xlane.xlu0 %5651
    %v5653 = vsub.f32 %v5568, %v5649
    %v5654 = vsub.f32 %v5644, %v5652
    %v5655 = vmul.f32 %v5653, 1.442695
    %v5656 = vpow.pop %v5655
    %v5657 = vmul.f32 %v5654, 1.442695
    %v5658 = vpow.pop %v5657
    %v5659 = vsel %vm511, %v5656, 0.0
    %5660 = vadd.xlane.f32.xlu0 %v5659
    %v5661 = vpop.xlane.xlu0 %5660
    %v5662 = vsel %vm511, %v5658, 0.0
    %5663 = vadd.xlane.f32.xlu0 %v5662
    %v5664 = vpop.xlane.xlu0 %5663
    %v5665 = vrcp.pop %v5661
    %v5666 = vrcp.pop %v5664
    %v5667 = vmul.f32 %v5656, %v5665
    %v5668 = vmul.f32 %v5658, %v5666
    %v5670 = vsel %vm511, %v5667, 0
    %5672 = vmatprep.subr.mxu0 0.0
    %5673 = vmatpush1.msra.mxu0 %v5487
    %5674 = vmatprep.subr.mxu0 0.0
    %5675 = vmatpush1.msra.mxu0 0.0
    %5676 = vmatprep.subr.mxu0 0.0
    %5677 = vmatpush1.msra.mxu0 0.0
    %5678 = vmatprep.subr.mxu0 0.0
    %5679 = vmatpush1.msra.mxu0 0.0
    %5680 = vmatprep.subr.mxu0 0.0
    %5681 = vmatpush1.msra.mxu0 0.0
    %5682 = vmatprep.subr.mxu0 0.0
    %5683 = vmatpush1.msra.mxu0 0.0
    %5684 = vmatprep.subr.mxu0 0.0
    %5685 = vmatpush1.msra.mxu0 0.0
    %5686 = vmatprep.subr.mxu0 0.0
    %5687 = vmatpush1.msra.mxu0 0.0
    %5688 = vmatprep.subr.mxu0 0.0
    %5689 = vmatpush1.msra.mxu0 0.0
    %5690 = vmatprep.subr.mxu0 0.0
    %5691 = vmatpush1.msra.mxu0 0.0
    %5692 = vmatprep.subr.mxu0 0.0
    %5693 = vmatpush1.msra.mxu0 0.0
    %5694 = vmatprep.subr.mxu0 0.0
    %5695 = vmatpush1.msra.mxu0 0.0
    %5696 = vmatprep.subr.mxu0 0.0
    %5697 = vmatpush1.msra.mxu0 0.0
    %5698 = vmatprep.subr.mxu0 0.0
    %5699 = vmatpush1.msra.mxu0 0.0
    %5700 = vmatprep.subr.mxu0 0.0
    %5701 = vmatpush1.msra.mxu0 0.0
    %5702 = vmatprep.subr.mxu0 0.0
    %5703 = vmatpush1.msra.mxu0 0.0
    %5704 = vmatprep.subr.mxu0 0.0
    %5705 = vmatpush1.msra.mxu0 0.0
    %5706 = vmatprep.subr.mxu0 0.0
    %5707 = vmatpush1.msra.mxu0 0.0
    %5708 = vmatprep.subr.mxu0 0.0
    %5709 = vmatpush1.msra.mxu0 0.0
    %5710 = vmatprep.subr.mxu0 0.0
    %5711 = vmatpush1.msra.mxu0 0.0
    %5712 = vmatprep.subr.mxu0 0.0
    %5713 = vmatpush1.msra.mxu0 0.0
    %5714 = vmatprep.subr.mxu0 0.0
    %5715 = vmatpush1.msra.mxu0 0.0
    %5716 = vmatprep.subr.mxu0 0.0
    %5717 = vmatpush1.msra.mxu0 0.0
    %5718 = vmatprep.subr.mxu0 0.0
    %5719 = vmatpush1.msra.mxu0 0.0
    %5720 = vmatprep.subr.mxu0 0.0
    %5721 = vmatpush1.msra.mxu0 0.0
    %5722 = vmatprep.subr.mxu0 0.0
    %5723 = vmatpush1.msra.mxu0 0.0
    %5724 = vmatprep.subr.mxu0 0.0
    %5725 = vmatpush1.msra.mxu0 0.0
    %5726 = vmatprep.subr.mxu0 0.0
    %5727 = vmatpush1.msra.mxu0 0.0
    %5728 = vmatprep.subr.mxu0 0.0
    %5729 = vmatpush1.msra.mxu0 0.0
    %5730 = vmatprep.subr.mxu0 0.0
    %5731 = vmatpush1.msra.mxu0 0.0
    %5732 = vmatprep.subr.mxu0 0.0
    %5733 = vmatpush1.msra.mxu0 0.0
    %5734 = vmatprep.subr.mxu0 0.0
    %5735 = vmatpush1.msra.mxu0 0.0
    %5736 = vmatprep.mubr.f32.mxu0 0.0
    %5737 = vmatmul.mubr.f32.gmra.mrb[0].mxu0 %v5670
    %v5738 = vpop.f32.mrb[0].mxu0
    %v5739 = vadd.f32 0.0, %v5738
    %v5740 = vpop.f32.mrb[0].mxu0
    %5741 = vdwg.mxu0
    %v5743 = vsel %vm511, %v5668, 0
    %5745 = vmatprep.subr.mxu0 0.0
    %5746 = vmatpush1.msra.mxu0 %v5492
    %5747 = vmatprep.subr.mxu0 0.0
    %5748 = vmatpush1.msra.mxu0 0.0
    %5749 = vmatprep.subr.mxu0 0.0
    %5750 = vmatpush1.msra.mxu0 0.0
    %5751 = vmatprep.subr.mxu0 0.0
    %5752 = vmatpush1.msra.mxu0 0.0
    %5753 = vmatprep.subr.mxu0 0.0
    %5754 = vmatpush1.msra.mxu0 0.0
    %5755 = vmatprep.subr.mxu0 0.0
    %5756 = vmatpush1.msra.mxu0 0.0
    %5757 = vmatprep.subr.mxu0 0.0
    %5758 = vmatpush1.msra.mxu0 0.0
    %5759 = vmatprep.subr.mxu0 0.0
    %5760 = vmatpush1.msra.mxu0 0.0
    %5761 = vmatprep.subr.mxu0 0.0
    %5762 = vmatpush1.msra.mxu0 0.0
    %5763 = vmatprep.subr.mxu0 0.0
    %5764 = vmatpush1.msra.mxu0 0.0
    %5765 = vmatprep.subr.mxu0 0.0
    %5766 = vmatpush1.msra.mxu0 0.0
    %5767 = vmatprep.subr.mxu0 0.0
    %5768 = vmatpush1.msra.mxu0 0.0
    %5769 = vmatprep.subr.mxu0 0.0
    %5770 = vmatpush1.msra.mxu0 0.0
    %5771 = vmatprep.subr.mxu0 0.0
    %5772 = vmatpush1.msra.mxu0 0.0
    %5773 = vmatprep.subr.mxu0 0.0
    %5774 = vmatpush1.msra.mxu0 0.0
    %5775 = vmatprep.subr.mxu0 0.0
    %5776 = vmatpush1.msra.mxu0 0.0
    %5777 = vmatprep.subr.mxu0 0.0
    %5778 = vmatpush1.msra.mxu0 0.0
    %5779 = vmatprep.subr.mxu0 0.0
    %5780 = vmatpush1.msra.mxu0 0.0
    %5781 = vmatprep.subr.mxu0 0.0
    %5782 = vmatpush1.msra.mxu0 0.0
    %5783 = vmatprep.subr.mxu0 0.0
    %5784 = vmatpush1.msra.mxu0 0.0
    %5785 = vmatprep.subr.mxu0 0.0
    %5786 = vmatpush1.msra.mxu0 0.0
    %5787 = vmatprep.subr.mxu0 0.0
    %5788 = vmatpush1.msra.mxu0 0.0
    %5789 = vmatprep.subr.mxu0 0.0
    %5790 = vmatpush1.msra.mxu0 0.0
    %5791 = vmatprep.subr.mxu0 0.0
    %5792 = vmatpush1.msra.mxu0 0.0
    %5793 = vmatprep.subr.mxu0 0.0
    %5794 = vmatpush1.msra.mxu0 0.0
    %5795 = vmatprep.subr.mxu0 0.0
    %5796 = vmatpush1.msra.mxu0 0.0
    %5797 = vmatprep.subr.mxu0 0.0
    %5798 = vmatpush1.msra.mxu0 0.0
    %5799 = vmatprep.subr.mxu0 0.0
    %5800 = vmatpush1.msra.mxu0 0.0
    %5801 = vmatprep.subr.mxu0 0.0
    %5802 = vmatpush1.msra.mxu0 0.0
    %5803 = vmatprep.subr.mxu0 0.0
    %5804 = vmatpush1.msra.mxu0 0.0
    %5805 = vmatprep.subr.mxu0 0.0
    %5806 = vmatpush1.msra.mxu0 0.0
    %5807 = vmatprep.subr.mxu0 0.0
    %5808 = vmatpush1.msra.mxu0 0.0
    %5809 = vmatprep.mubr.f32.mxu0 0.0
    %5810 = vmatmul.mubr.f32.gmra.mrb[0].mxu0 %v5743
    %v5811 = vpop.f32.mrb[0].mxu0
    %v5812 = vadd.f32 0.0, %v5811
    %v5813 = vpop.f32.mrb[0].mxu0
    %5814 = vdwg.mxu0
    %s5815 = scalar_lea.vmem %s11, 56
    %v5816 = vld [vmem:[%s5815] sm:$0xff]
    %v5818 = vsel %vm511, %v5739, 0
    %v5821 = vsel %vm511, %v5812, 0
    %5823 = vmatprep.subr.mxu0 0.0
    %5824 = vmatpush1.msra.mxu0 %v5816
    %5825 = vmatprep.subr.mxu0 0.0
    %5826 = vmatpush1.msra.mxu0 0.0
    %5827 = vmatprep.subr.mxu0 0.0
    %5828 = vmatpush1.msra.mxu0 0.0
    %5829 = vmatprep.subr.mxu0 0.0
    %5830 = vmatpush1.msra.mxu0 0.0
    %5831 = vmatprep.subr.mxu0 0.0
    %5832 = vmatpush1.msra.mxu0 0.0
    %5833 = vmatprep.subr.mxu0 0.0
    %5834 = vmatpush1.msra.mxu0 0.0
    %5835 = vmatprep.subr.mxu0 0.0
    %5836 = vmatpush1.msra.mxu0 0.0
    %5837 = vmatprep.subr.mxu0 0.0
    %5838 = vmatpush1.msra.mxu0 0.0
    %5839 = vmatprep.subr.mxu0 0.0
    %5840 = vmatpush1.msra.mxu0 0.0
    %5841 = vmatprep.subr.mxu0 0.0
    %5842 = vmatpush1.msra.mxu0 0.0
    %5843 = vmatprep.subr.mxu0 0.0
    %5844 = vmatpush1.msra.mxu0 0.0
    %5845 = vmatprep.subr.mxu0 0.0
    %5846 = vmatpush1.msra.mxu0 0.0
    %5847 = vmatprep.subr.mxu0 0.0
    %5848 = vmatpush1.msra.mxu0 0.0
    %5849 = vmatprep.subr.mxu0 0.0
    %5850 = vmatpush1.msra.mxu0 0.0
    %5851 = vmatprep.subr.mxu0 0.0
    %5852 = vmatpush1.msra.mxu0 0.0
    %5853 = vmatprep.subr.mxu0 0.0
    %5854 = vmatpush1.msra.mxu0 0.0
    %5855 = vmatprep.subr.mxu0 0.0
    %5856 = vmatpush1.msra.mxu0 0.0
    %5857 = vmatprep.subr.mxu0 0.0
    %5858 = vmatpush1.msra.mxu0 0.0
    %5859 = vmatprep.subr.mxu0 0.0
    %5860 = vmatpush1.msra.mxu0 0.0
    %5861 = vmatprep.subr.mxu0 0.0
    %5862 = vmatpush1.msra.mxu0 0.0
    %5863 = vmatprep.subr.mxu0 0.0
    %5864 = vmatpush1.msra.mxu0 0.0
    %5865 = vmatprep.subr.mxu0 0.0
    %5866 = vmatpush1.msra.mxu0 0.0
    %5867 = vmatprep.subr.mxu0 0.0
    %5868 = vmatpush1.msra.mxu0 0.0
    %5869 = vmatprep.subr.mxu0 0.0
    %5870 = vmatpush1.msra.mxu0 0.0
    %5871 = vmatprep.subr.mxu0 0.0
    %5872 = vmatpush1.msra.mxu0 0.0
    %5873 = vmatprep.subr.mxu0 0.0
    %5874 = vmatpush1.msra.mxu0 0.0
    %5875 = vmatprep.subr.mxu0 0.0
    %5876 = vmatpush1.msra.mxu0 0.0
    %5877 = vmatprep.subr.mxu0 0.0
    %5878 = vmatpush1.msra.mxu0 0.0
    %5879 = vmatprep.subr.mxu0 0.0
    %5880 = vmatpush1.msra.mxu0 0.0
    %5881 = vmatprep.subr.mxu0 0.0
    %5882 = vmatpush1.msra.mxu0 0.0
    %5883 = vmatprep.subr.mxu0 0.0
    %5884 = vmatpush1.msra.mxu0 0.0
    %5885 = vmatprep.subr.mxu0 0.0
    %5886 = vmatpush1.msra.mxu0 0.0
    %5887 = vmatprep.mubr.f32.mxu0 0.0
    %5888 = vmatmul.mubr.f32.gmra.mrb[0].mxu0 %v5818
    %v5889 = vpop.f32.mrb[0].mxu0
    %v5890 = vadd.f32 0.0, %v5889
    %v5891 = vpop.f32.mrb[0].mxu0
    %5892 = vmatprep.mubr.f32.mxu0 0.0
    %5893 = vmatmul.mubr.f32.gmra.mrb[0].mxu0 %v5821
    %v5894 = vpop.f32.mrb[0].mxu0
    %v5895 = vadd.f32 0.0, %v5894
    %v5896 = vpop.f32.mrb[0].mxu0
    %5897 = vdwg.mxu0
    %v5898 = vadd.f32 %v5229, %v5890
    %v5899 = vadd.f32 %v5230, %v5895
    %v5901 = vlaneseq
    %v5902 = vshrl.u32 %v5901, 7
    %v5903 = vsub.s32 0, %v5902
    %v5904 = vrot.slane %v3187, %v5903
    %v5906 = vadd.f32 %v5898, %v5904
    %v5907 = vadd.f32 %v5899, %v5904
    %v5908 = vadd.f32 %v5906, %v5906
    %v5909 = vadd.f32 %v5907, %v5907
    %v5910 = vsel %vm257, %v5908, 0.0
    %5911 = vadd.xlane.f32.xlu0 %v5910
    %v5912 = vpop.xlane.xlu0 %5911
    %v5913 = vsel %vm257, %v5909, 0.0
    %5914 = vadd.xlane.f32.xlu0 %v5913
    %v5915 = vpop.xlane.xlu0 %5914
    %v5916 = vmul.f32 %v5912, %v2935
    %v5917 = vmul.f32 %v5915, %v2935
    %v5918 = vsub.f32 %v5908, %v5916
    %v5919 = vsub.f32 %v5909, %v5917
    %v5920 = vmul.f32 %v5918, %v5918
    %v5921 = vmul.f32 %v5919, %v5919
    %v5922 = vsel %vm257, %v5920, 0.0
    %5923 = vadd.xlane.f32.xlu0 %v5922
    %v5924 = vpop.xlane.xlu0 %5923
    %v5925 = vsel %vm257, %v5921, 0.0
    %5926 = vadd.xlane.f32.xlu0 %v5925
    %v5927 = vpop.xlane.xlu0 %5926
    %v5928 = vmul.f32 %v5924, %v2935
    %v5929 = vmul.f32 %v5927, %v2935
    %v5930 = vadd.f32 %v5928, 1e-05
    %v5931 = vadd.f32 %v5929, 1e-05
    %v5932 = vrsqrt.pop %v5930
    %v5933 = vrsqrt.pop %v5931
    %v5934 = vmul.f32 %v5918, %v5932
    %v5935 = vmul.f32 %v5919, %v5933
    %v5937 = vlaneseq
    %v5938 = vshrl.u32 %v5937, 7
    %v5939 = vsub.s32 0, %v5938
    %v5940 = vrot.slane %v3215, %v5939
    %v5942 = vmul.f32 %v5934, %v5940
    %v5943 = vmul.f32 %v5935, %v5940
    %v5945 = vlaneseq
    %v5946 = vshrl.u32 %v5945, 7
    %v5947 = vsub.s32 0, %v5946
    %v5948 = vrot.slane %v3217, %v5947
    %v5950 = vadd.f32 %v5942, %v5948
    %v5951 = vadd.f32 %v5943, %v5948
    %v5953 = vlaneseq
    %v5954 = vshrl.u32 %v5953, 7
    %v5955 = vsub.s32 0, %v5954
    %v5956 = vrot.slane %v3194, %v5955
    %v5959 = vsel %vm257, %v5950, 0
    %v5962 = vsel %vm257, %v5951, 0
    %5964 = vmatprep.subr.mxu0 0.0
    %5965 = vmatpush1.msra.mxu0 %v3189
    %5966 = vmatprep.subr.mxu0 0.0
    %5967 = vmatpush1.msra.mxu0 %v3190
    %5968 = vmatprep.subr.mxu0 0.0
    %5969 = vmatpush1.msra.mxu0 %v3191
    %5970 = vmatprep.subr.mxu0 0.0
    %5971 = vmatpush1.msra.mxu0 %v3192
    %5972 = vmatprep.subr.mxu0 0.0
    %5973 = vmatpush1.msra.mxu0 0.0
    %5974 = vmatprep.subr.mxu0 0.0
    %5975 = vmatpush1.msra.mxu0 0.0
    %5976 = vmatprep.subr.mxu0 0.0
    %5977 = vmatpush1.msra.mxu0 0.0
    %5978 = vmatprep.subr.mxu0 0.0
    %5979 = vmatpush1.msra.mxu0 0.0
    %5980 = vmatprep.subr.mxu0 0.0
    %5981 = vmatpush1.msra.mxu0 0.0
    %5982 = vmatprep.subr.mxu0 0.0
    %5983 = vmatpush1.msra.mxu0 0.0
    %5984 = vmatprep.subr.mxu0 0.0
    %5985 = vmatpush1.msra.mxu0 0.0
    %5986 = vmatprep.subr.mxu0 0.0
    %5987 = vmatpush1.msra.mxu0 0.0
    %5988 = vmatprep.subr.mxu0 0.0
    %5989 = vmatpush1.msra.mxu0 0.0
    %5990 = vmatprep.subr.mxu0 0.0
    %5991 = vmatpush1.msra.mxu0 0.0
    %5992 = vmatprep.subr.mxu0 0.0
    %5993 = vmatpush1.msra.mxu0 0.0
    %5994 = vmatprep.subr.mxu0 0.0
    %5995 = vmatpush1.msra.mxu0 0.0
    %5996 = vmatprep.subr.mxu0 0.0
    %5997 = vmatpush1.msra.mxu0 0.0
    %5998 = vmatprep.subr.mxu0 0.0
    %5999 = vmatpush1.msra.mxu0 0.0
    %6000 = vmatprep.subr.mxu0 0.0
    %6001 = vmatpush1.msra.mxu0 0.0
    %6002 = vmatprep.subr.mxu0 0.0
    %6003 = vmatpush1.msra.mxu0 0.0
    %6004 = vmatprep.subr.mxu0 0.0
    %6005 = vmatpush1.msra.mxu0 0.0
    %6006 = vmatprep.subr.mxu0 0.0
    %6007 = vmatpush1.msra.mxu0 0.0
    %6008 = vmatprep.subr.mxu0 0.0
    %6009 = vmatpush1.msra.mxu0 0.0
    %6010 = vmatprep.subr.mxu0 0.0
    %6011 = vmatpush1.msra.mxu0 0.0
    %6012 = vmatprep.subr.mxu0 0.0
    %6013 = vmatpush1.msra.mxu0 0.0
    %6014 = vmatprep.subr.mxu0 0.0
    %6015 = vmatpush1.msra.mxu0 0.0
    %6016 = vmatprep.subr.mxu0 0.0
    %6017 = vmatpush1.msra.mxu0 0.0
    %6018 = vmatprep.subr.mxu0 0.0
    %6019 = vmatpush1.msra.mxu0 0.0
    %6020 = vmatprep.subr.mxu0 0.0
    %6021 = vmatpush1.msra.mxu0 0.0
    %6022 = vmatprep.subr.mxu0 0.0
    %6023 = vmatpush1.msra.mxu0 0.0
    %6024 = vmatprep.subr.mxu0 0.0
    %6025 = vmatpush1.msra.mxu0 0.0
    %6026 = vmatprep.subr.mxu0 0.0
    %6027 = vmatpush1.msra.mxu0 0.0
    %6028 = vmatprep.mubr.f32.mxu0 0.0
    %6029 = vmatmul.mubr.f32.gmra.mrb[0].mxu0 %v5959
    %v6030 = vpop.f32.mrb[0].mxu0
    %v6031 = vadd.f32 %v5956, %v6030
    %v6032 = vpop.f32.mrb[0].mxu0
    %6033 = vmatprep.mubr.f32.mxu0 0.0
    %6034 = vmatmul.mubr.f32.gmra.mrb[0].mxu0 %v5962
    %v6035 = vpop.f32.mrb[0].mxu0
    %v6036 = vadd.f32 %v5956, %v6035
    %v6037 = vpop.f32.mrb[0].mxu0
    %6038 = vdwg.mxu0
    %v6039 = vmax.f32 %v6031, 0.0
    %v6040 = vmax.f32 %v6036, 0.0
    %v6042 = vlaneseq
    %v6043 = vshrl.u32 %v6042, 7
    %v6044 = vsub.s32 0, %v6043
    %v6045 = vrot.slane %v3213, %v6044
    %6047 = vmatprep.subr.mxu0 0.0
    %6048 = vmatpush1.msra.mxu0 %v3196
    %6049 = vmatprep.subr.mxu0 0.0
    %6050 = vmatpush1.msra.mxu0 %v3197
    %6051 = vmatprep.subr.mxu0 0.0
    %6052 = vmatpush1.msra.mxu0 %v3198
    %6053 = vmatprep.subr.mxu0 0.0
    %6054 = vmatpush1.msra.mxu0 %v3199
    %6055 = vmatprep.subr.mxu0 0.0
    %6056 = vmatpush1.msra.mxu0 %v3200
    %6057 = vmatprep.subr.mxu0 0.0
    %6058 = vmatpush1.msra.mxu0 %v3201
    %6059 = vmatprep.subr.mxu0 0.0
    %6060 = vmatpush1.msra.mxu0 %v3202
    %6061 = vmatprep.subr.mxu0 0.0
    %6062 = vmatpush1.msra.mxu0 %v3203
    %6063 = vmatprep.subr.mxu0 0.0
    %6064 = vmatpush1.msra.mxu0 %v3204
    %6065 = vmatprep.subr.mxu0 0.0
    %6066 = vmatpush1.msra.mxu0 %v3205
    %6067 = vmatprep.subr.mxu0 0.0
    %6068 = vmatpush1.msra.mxu0 %v3206
    %6069 = vmatprep.subr.mxu0 0.0
    %6070 = vmatpush1.msra.mxu0 %v3207
    %6071 = vmatprep.subr.mxu0 0.0
    %6072 = vmatpush1.msra.mxu0 %v3208
    %6073 = vmatprep.subr.mxu0 0.0
    %6074 = vmatpush1.msra.mxu0 %v3209
    %6075 = vmatprep.subr.mxu0 0.0
    %6076 = vmatpush1.msra.mxu0 %v3210
    %6077 = vmatprep.subr.mxu0 0.0
    %6078 = vmatpush1.msra.mxu0 %v3211
    %6079 = vmatprep.subr.mxu0 0.0
    %6080 = vmatpush1.msra.mxu0 0.0
    %6081 = vmatprep.subr.mxu0 0.0
    %6082 = vmatpush1.msra.mxu0 0.0
    %6083 = vmatprep.subr.mxu0 0.0
    %6084 = vmatpush1.msra.mxu0 0.0
    %6085 = vmatprep.subr.mxu0 0.0
    %6086 = vmatpush1.msra.mxu0 0.0
    %6087 = vmatprep.subr.mxu0 0.0
    %6088 = vmatpush1.msra.mxu0 0.0
    %6089 = vmatprep.subr.mxu0 0.0
    %6090 = vmatpush1.msra.mxu0 0.0
    %6091 = vmatprep.subr.mxu0 0.0
    %6092 = vmatpush1.msra.mxu0 0.0
    %6093 = vmatprep.subr.mxu0 0.0
    %6094 = vmatpush1.msra.mxu0 0.0
    %6095 = vmatprep.subr.mxu0 0.0
    %6096 = vmatpush1.msra.mxu0 0.0
    %6097 = vmatprep.subr.mxu0 0.0
    %6098 = vmatpush1.msra.mxu0 0.0
    %6099 = vmatprep.subr.mxu0 0.0
    %6100 = vmatpush1.msra.mxu0 0.0
    %6101 = vmatprep.subr.mxu0 0.0
    %6102 = vmatpush1.msra.mxu0 0.0
    %6103 = vmatprep.subr.mxu0 0.0
    %6104 = vmatpush1.msra.mxu0 0.0
    %6105 = vmatprep.subr.mxu0 0.0
    %6106 = vmatpush1.msra.mxu0 0.0
    %6107 = vmatprep.subr.mxu0 0.0
    %6108 = vmatpush1.msra.mxu0 0.0
    %6109 = vmatprep.subr.mxu0 0.0
    %6110 = vmatpush1.msra.mxu0 0.0
    %6111 = vmatprep.mubr.f32.mxu0 0.0
    %6112 = vmatmul.mubr.f32.gmra.mrb[0].mxu0 %v6039
    %v6113 = vpop.f32.mrb[0].mxu0
    %v6114 = vadd.f32 %v6045, %v6113
    %v6115 = vpop.f32.mrb[0].mxu0
    %6116 = vmatprep.mubr.f32.mxu0 0.0
    %6117 = vmatmul.mubr.f32.gmra.mrb[0].mxu0 %v6040
    %v6118 = vpop.f32.mrb[0].mxu0
    %v6119 = vadd.f32 %v6045, %v6118
    %v6120 = vpop.f32.mrb[0].mxu0
    %6121 = vdwg.mxu0
    %v6122 = vadd.f32 %v5950, %v6114
    %v6123 = vadd.f32 %v5951, %v6119
    %v6124 = vsel %vm257, %v6122, 0.0
    %6125 = vadd.xlane.f32.xlu0 %v6124
    %v6126 = vpop.xlane.xlu0 %6125
    %v6127 = vsel %vm257, %v6123, 0.0
    %6128 = vadd.xlane.f32.xlu0 %v6127
    %v6129 = vpop.xlane.xlu0 %6128
    %v6130 = vmul.f32 %v6126, %v2935
    %v6131 = vmul.f32 %v6129, %v2935
    %v6132 = vsub.f32 %v6122, %v6130
    %v6133 = vsub.f32 %v6123, %v6131
    %v6134 = vmul.f32 %v6132, %v6132
    %v6135 = vmul.f32 %v6133, %v6133
    %v6136 = vsel %vm257, %v6134, 0.0
    %6137 = vadd.xlane.f32.xlu0 %v6136
    %v6138 = vpop.xlane.xlu0 %6137
    %v6139 = vsel %vm257, %v6135, 0.0
    %6140 = vadd.xlane.f32.xlu0 %v6139
    %v6141 = vpop.xlane.xlu0 %6140
    %v6142 = vmul.f32 %v6138, %v2935
    %v6143 = vmul.f32 %v6141, %v2935
    %v6144 = vadd.f32 %v6142, 1e-05
    %v6145 = vadd.f32 %v6143, 1e-05
    %v6146 = vrsqrt.pop %v6144
    %v6147 = vrsqrt.pop %v6145
    %v6148 = vmul.f32 %v6132, %v6146
    %v6149 = vmul.f32 %v6133, %v6147
    %v6151 = vlaneseq
    %v6152 = vshrl.u32 %v6151, 7
    %v6153 = vsub.s32 0, %v6152
    %v6154 = vrot.slane %v3219, %v6153
    %v6156 = vmul.f32 %v6148, %v6154
    %v6157 = vmul.f32 %v6149, %v6154
    %v6159 = vlaneseq
    %v6160 = vshrl.u32 %v6159, 7
    %v6161 = vsub.s32 0, %v6160
    %v6162 = vrot.slane %v3221, %v6161
    %v6164 = vadd.f32 %v6156, %v6162
    %v6165 = vadd.f32 %v6157, %v6162
    %6166 = vst.msk [vmem:[#allocation2] sm:$0xff] %vm257, %v6164
    %6167 = vst.msk [vmem:[#allocation2 + $0x8] sm:$0xff] %vm257, %v6165
    // Predicated region
    $region86: #{transformer_forward.1} parent=1 // pred_check
      _
    $region87: #{transformer_forward.1} parent=1 // pred_check_branch
      %6169 = sbr.rel (0) target = $region89
    $region88: #{transformer_forward.1} parent=1 // pred_region
      %s6171 = ssub.s32 256, 256
      %6172 = vsyncadd [#allocation3], %s6171
      %s6173 = sshll.u32 [#allocation2], 4
      %s6174 = int_to_ptr.vmem [resolvable:$true] %s6173
      %6179 = dma.vmem_to_hbm [thread:$0]  %s6174, 256, %s21, [#allocation3], 128, 128, 8
    $region89: #{transformer_forward.1} parent=1 // pred_fallthru
      _
    // Predicated region
    $region90: #{transformer_forward.1} parent=1 // pred_check
      _
    $region91: #{transformer_forward.1} parent=1 // pred_check_branch
      %6181 = sbr.rel (0) target = $region93
    $region92: #{transformer_forward.1} parent=1 // pred_region
      %6182 = dma.done [#allocation3], 256
    $region93: #{transformer_forward.1} parent=1 // pred_fallthru
      _
    %6183 = vsyncpa [#allocation3], 1

</llo_original>
